<compile_context>
chip_gen: v7x
topology: tpu7x:2x2x1
jax: 0.10.0
libtpu: 0.0.40
codegen_flags: <defaults>
</compile_context>

<pallas_src>
import functools
import numpy as np
import jax
import jax.numpy as jnp
from jax.experimental import pallas as pl
from jax.experimental.pallas import tpu as pltpu

_INV_SQRT2 = 0.7071067811865476
_BN_EPS = 1e-5


# ----------------------------- small helpers -----------------------------

def _round_up(x, m):
    return ((x + m - 1) // m) * m


def _pick_tile(dim, target, align):
    return min(target, _round_up(dim, align))


def _pad2d(a, rows, cols):
    r, c = a.shape
    if r == rows and c == cols:
        return a
    return jnp.pad(a, ((0, rows - r), (0, cols - c)))


def _attn_tile(n, target=128):
    """Largest multiple-of-8 tile <= target that divides n; else the full axis."""
    best = None
    t = 8
    while t <= min(n, target):
        if n % t == 0:
            best = t
        t += 8
    return best if best is not None else n


def _gelu(y):
    return 0.5 * y * (1.0 + jax.lax.erf(y * _INV_SQRT2))


# ----------------------------- fused tiled linear -----------------------------

def _linear_kernel(*refs, act, has_row, has_col, has_res):
    idx = 0
    x_ref = refs[idx]; idx += 1
    w_ref = refs[idx]; idx += 1
    b_ref = refs[idx]; idx += 1
    if has_row:
        rs_ref, rb_ref = refs[idx], refs[idx + 1]; idx += 2
    if has_col:
        cs_ref, cb_ref = refs[idx], refs[idx + 1]; idx += 2
    if has_res:
        res_ref = refs[idx]; idx += 1
    o_ref, acc_ref = refs[idx], refs[idx + 1]

    k = pl.program_id(2)

    @pl.when(k == 0)
    def _():
        acc_ref[...] = jnp.zeros_like(acc_ref)

    x = x_ref[...]
    if has_row:            # per-token BatchNorm affine folded into the matmul input
        x = x * rs_ref[...] + rb_ref[...]
    if has_col:            # BatchNorm affine folded along the contraction axis
        x = x * cs_ref[...] + cb_ref[...]
    acc_ref[...] += jnp.dot(x.astype(jnp.bfloat16),
                            w_ref[...].astype(jnp.bfloat16),
                            preferred_element_type=jnp.float32)

    @pl.when(k == pl.num_programs(2) - 1)
    def _():
        y = acc_ref[...] + b_ref[...]
        if act == "gelu":
            y = _gelu(y)
        if has_res:
            y = y + res_ref[...]
        o_ref[...] = y.astype(o_ref.dtype)


def pallas_linear(x2d, w, b=None, *, act=None,
                  row_scale=None, row_shift=None,
                  col_scale=None, col_shift=None,
                  residual=None, tm=256, tn=256, tk=512):
    M, K = x2d.shape
    Kw, N = w.shape
    assert Kw == K
    tm = _pick_tile(M, tm, 8)
    tn = _pick_tile(N, tn, 128)
    tk = _pick_tile(K, tk, 128)
    Mp, Np, Kp = _round_up(M, tm), _round_up(N, tn), _round_up(K, tk)

    args = [_pad2d(x2d, Mp, Kp), _pad2d(w, Kp, Np)]
    in_specs = [pl.BlockSpec((tm, tk), lambda i, j, k: (i, k)),
                pl.BlockSpec((tk, tn), lambda i, j, k: (k, j))]
    bias = jnp.zeros((1, N), jnp.float32) if b is None else b.reshape(1, N)
    args.append(_pad2d(bias, 1, Np))
    in_specs.append(pl.BlockSpec((1, tn), lambda i, j, k: (0, j)))

    has_row = row_scale is not None
    has_col = col_scale is not None
    has_res = residual is not None
    if has_row:
        args += [_pad2d(row_scale.reshape(M, 1), Mp, 1),
                 _pad2d(row_shift.reshape(M, 1), Mp, 1)]
        in_specs += [pl.BlockSpec((tm, 1), lambda i, j, k: (i, 0))] * 2
    if has_col:
        args += [_pad2d(col_scale.reshape(1, K), 1, Kp),
                 _pad2d(col_shift.reshape(1, K), 1, Kp)]
        in_specs += [pl.BlockSpec((1, tk), lambda i, j, k: (0, k))] * 2
    if has_res:
        args.append(_pad2d(residual, Mp, Np))
        in_specs.append(pl.BlockSpec((tm, tn), lambda i, j, k: (i, j)))

    out = pl.pallas_call(
        functools.partial(_linear_kernel, act=act, has_row=has_row,
                          has_col=has_col, has_res=has_res),
        out_shape=jax.ShapeDtypeStruct((Mp, Np), jnp.float32),
        grid=(Mp // tm, Np // tn, Kp // tk),
        in_specs=in_specs,
        out_specs=pl.BlockSpec((tm, tn), lambda i, j, k: (i, j)),
        scratch_shapes=[pltpu.VMEM((tm, tn), jnp.float32)],
        compiler_params=pltpu.CompilerParams(
            dimension_semantics=("parallel", "parallel", "arbitrary")),
    )(*args)
    return out[:M, :N]


# ----------------------------- fused MLP (fc1 + GELU + fc2 + residual) -----------------------------

def _mlp_kernel(x_ref, rs_ref, rb_ref, w1_ref, b1_ref, w2_ref, b2_ref, res_ref,
                o_ref, h_sc):
    @pl.when(pl.program_id(1) == 0)
    def _():
        x = x_ref[...] * rs_ref[...] + rb_ref[...]          # norm2 affine fused
        h = jnp.dot(x.astype(jnp.bfloat16), w1_ref[...].astype(jnp.bfloat16),
                    preferred_element_type=jnp.float32) + b1_ref[...]
        h_sc[...] = _gelu(h).astype(jnp.bfloat16)           # hidden stays in VMEM

    o = jnp.dot(h_sc[...], w2_ref[...].astype(jnp.bfloat16),
                preferred_element_type=jnp.float32) + b2_ref[...]
    o_ref[...] = (o + res_ref[...]).astype(o_ref.dtype)


def pallas_mlp(x2d, row_scale, row_shift, mp, residual, tm=256, tn=256):
    M, K = x2d.shape
    H = mp["fc1_w"].shape[1]
    N = mp["fc2_w"].shape[1]
    tm = _pick_tile(M, tm, 8)
    tn = _pick_tile(N, tn, 128)
    Mp, Np = _round_up(M, tm), _round_up(N, tn)
    Kp, Hp = _round_up(K, 128), _round_up(H, 128)
    # TODO(synk): for very large embed/hidden dims the fc1 weight block should also be
    # K-tiled (reduction grid axis) to stay inside the default scoped VMEM on v7x.
    args = [
        _pad2d(x2d, Mp, Kp),
        _pad2d(row_scale.reshape(M, 1), Mp, 1),
        _pad2d(row_shift.reshape(M, 1), Mp, 1),
        _pad2d(mp["fc1_w"], Kp, Hp),
        _pad2d(mp["fc1_b"].reshape(1, H), 1, Hp),
        _pad2d(mp["fc2_w"], Hp, Np),
        _pad2d(mp["fc2_b"].reshape(1, N), 1, Np),
        _pad2d(residual, Mp, Np),
    ]
    in_specs = [
        pl.BlockSpec((tm, Kp), lambda i, j: (i, 0)),
        pl.BlockSpec((tm, 1), lambda i, j: (i, 0)),
        pl.BlockSpec((tm, 1), lambda i, j: (i, 0)),
        pl.BlockSpec((Kp, Hp), lambda i, j: (0, 0)),
        pl.BlockSpec((1, Hp), lambda i, j: (0, 0)),
        pl.BlockSpec((Hp, tn), lambda i, j: (0, j)),
        pl.BlockSpec((1, tn), lambda i, j: (0, j)),
        pl.BlockSpec((tm, tn), lambda i, j: (i, j)),
    ]
    out = pl.pallas_call(
        _mlp_kernel,
        out_shape=jax.ShapeDtypeStruct((Mp, Np), jnp.float32),
        grid=(Mp // tm, Np // tn),
        in_specs=in_specs,
        out_specs=pl.BlockSpec((tm, tn), lambda i, j: (i, j)),
        scratch_shapes=[pltpu.VMEM((tm, Hp), jnp.bfloat16)],
        compiler_params=pltpu.CompilerParams(
            dimension_semantics=("parallel", "arbitrary")),
    )(*args)
    return out[:M, :N]


# ----------------------------- flash attention -----------------------------

def _flash_attn_kernel(q_ref, k_ref, v_ref, o_ref, m_sc, l_sc, acc_sc, *, scale):
    kv = pl.program_id(2)

    @pl.when(kv == 0)
    def _():
        m_sc[...] = jnp.full_like(m_sc, -jnp.inf)
        l_sc[...] = jnp.zeros_like(l_sc)
        acc_sc[...] = jnp.zeros_like(acc_sc)

    q = q_ref[0].astype(jnp.bfloat16)
    k = k_ref[0].astype(jnp.bfloat16)
    v = v_ref[0].astype(jnp.bfloat16)
    # contract last dims directly -> no explicit K transpose (XLU stays free)
    s = jax.lax.dot_general(q, k, (((1,), (1,)), ((), ())),
                            preferred_element_type=jnp.float32) * scale
    m_prev = m_sc[...]
    m_new = jnp.maximum(m_prev, jnp.max(s, axis=-1, keepdims=True))
    alpha = jnp.exp(m_prev - m_new)                      # softmax math kept in f32
    p = jnp.exp(s - m_new)
    l_sc[...] = alpha * l_sc[...] + jnp.sum(p, axis=-1, keepdims=True)
    acc_sc[...] = alpha * acc_sc[...] + jax.lax.dot_general(
        p.astype(jnp.bfloat16), v, (((1,), (0,)), ((), ())),
        preferred_element_type=jnp.float32)
    m_sc[...] = m_new

    @pl.when(kv == pl.num_programs(2) - 1)
    def _():
        o_ref[0] = (acc_sc[...] *
                    pl.reciprocal(l_sc[...], approx=True)).astype(o_ref.dtype)


def pallas_flash_mha(q, k, v, scale):
    # q, k, v: (B*H, N, Dh); online-softmax flash attention, KV streamed in tiles.
    BH, N, Dh = q.shape
    tq = _attn_tile(N)
    tk = _attn_tile(N)
    q_spec = pl.BlockSpec((1, tq, Dh), lambda b, i, j: (b, i, 0))
    kv_spec = pl.BlockSpec((1, tk, Dh), lambda b, i, j: (b, j, 0))
    # TODO(synk): batch several heads per grid step so the output last dim becomes a
    # multiple of 128 (lane-dense stores / fuller MXU) when Dh < 128.
    return pl.pallas_call(
        functools.partial(_flash_attn_kernel, scale=scale),
        out_shape=jax.ShapeDtypeStruct((BH, N, Dh), jnp.float32),
        grid=(BH, N // tq, N // tk),
        in_specs=[q_spec, kv_spec, kv_spec],
        out_specs=q_spec,
        scratch_shapes=[pltpu.VMEM((tq, 1), jnp.float32),
                        pltpu.VMEM((tq, 1), jnp.float32),
                        pltpu.VMEM((tq, Dh), jnp.float32)],
        compiler_params=pltpu.CompilerParams(
            dimension_semantics=("parallel", "parallel", "arbitrary")),
    )(q, k, v)


# ----------------------------- tiny column affine (final head BN only) -----------------------------

def _affine_kernel(x_ref, s_ref, b_ref, o_ref):
    o_ref[...] = x_ref[...] * s_ref[...] + b_ref[...]


def pallas_affine_cols(x2d, scale, shift):
    M, C = x2d.shape
    return pl.pallas_call(
        _affine_kernel,
        out_shape=jax.ShapeDtypeStruct((M, C), jnp.float32),
        grid=(1,),
        in_specs=[pl.BlockSpec((M, C), lambda i: (0, 0)),
                  pl.BlockSpec((1, C), lambda i: (0, 0)),
                  pl.BlockSpec((1, C), lambda i: (0, 0))],
        out_specs=pl.BlockSpec((M, C), lambda i: (0, 0)),
    )(x2d, scale.reshape(1, C), shift.reshape(1, C))


# ----------------------------- model pieces -----------------------------

def _bn_scale_shift(bn):
    gamma, beta, mean, var = bn
    scale = gamma * jax.lax.rsqrt(var + _BN_EPS)
    shift = beta - mean * scale
    return scale, shift


def _bn_row_affine(bn, B):
    # BatchNorm1d(num_patch) on (B, N, C): channel axis is the token axis N ->
    # per-row scale/shift of the flattened (B*N, C) matmul input.
    scale, shift = _bn_scale_shift(bn)
    N = scale.shape[0]
    rs = jnp.broadcast_to(scale[None, :], (B, N)).reshape(B * N)
    rb = jnp.broadcast_to(shift[None, :], (B, N)).reshape(B * N)
    return rs, rb


def unfold(x, k, stride, pad):
    # matches torch.nn.Unfold: output (B, C*k*k, L), index = c*k*k + ki*k + kj
    B, C, H, W = x.shape
    xp = jnp.pad(x, ((0, 0), (0, 0), (pad, pad), (pad, pad)))
    Ho = (H + 2 * pad - k) // stride + 1
    Wo = (W + 2 * pad - k) // stride + 1
    patches = []
    for ki in range(k):
        for kj in range(k):
            patches.append(xp[:, :, ki:ki + Ho * stride:stride, kj:kj + Wo * stride:stride])
    p = jnp.stack(patches, axis=2)          # (B, C, k*k, Ho, Wo)
    return p.reshape(B, C * k * k, Ho * Wo)


def token_transformer(p, x, in_dim):
    # Token_transformer: x1 = v + proj(attn(norm1(x))); out = x1 + mlp(norm2(x1))
    B, N, C = x.shape
    x_flat = x.reshape(B * N, C)
    rs1, rb1 = _bn_row_affine(p["norm1"], B)
    qkv = pallas_linear(x_flat, p["attn"]["qkv_w"], p["attn"]["qkv_b"],
                        row_scale=rs1, row_shift=rb1)            # (B*N, 3*in_dim)
    q = qkv[:, 0 * in_dim:1 * in_dim].reshape(B, N, in_dim)      # 1 head -> plain slices
    k = qkv[:, 1 * in_dim:2 * in_dim].reshape(B, N, in_dim)
    v = qkv[:, 2 * in_dim:3 * in_dim].reshape(B, N, in_dim)
    scale = float(C) ** -0.5     # reference: head_dim = dim // num_heads (INPUT dim)
    o = pallas_flash_mha(q, k, v, scale)
    x1 = pallas_linear(o.reshape(B * N, in_dim),
                       p["attn"]["proj_w"], p["attn"]["proj_b"],
                       residual=qkv[:, 2 * in_dim:3 * in_dim])   # skip = v + proj(out)
    rs2, rb2 = _bn_row_affine(p["norm2"], B)
    x2 = pallas_mlp(x1, rs2, rb2, p["mlp"], residual=x1)
    return x2.reshape(B, N, in_dim)


def block_forward(p, x, num_heads):
    B, N, C = x.shape
    hd = C // num_heads
    x_flat = x.reshape(B * N, C)
    rs1, rb1 = _bn_row_affine(p["norm1"], B)
    qkv = pallas_linear(x_flat, p["attn"]["qkv_w"], p["attn"]["qkv_b"],
                        row_scale=rs1, row_shift=rb1)            # (B*N, 3C)
    qkv = qkv.reshape(B, N, 3, num_heads, hd)
    q = jnp.transpose(qkv[:, :, 0], (0, 2, 1, 3)).reshape(B * num_heads, N, hd)
    k = jnp.transpose(qkv[:, :, 1], (0, 2, 1, 3)).reshape(B * num_heads, N, hd)
    v = jnp.transpose(qkv[:, :, 2], (0, 2, 1, 3)).reshape(B * num_heads, N, hd)
    o = pallas_flash_mha(q, k, v, hd ** -0.5)
    o = jnp.transpose(o.reshape(B, num_heads, N, hd), (0, 2, 1, 3)).reshape(B * N, C)
    x1 = pallas_linear(o, p["attn"]["proj_w"], p["attn"]["proj_b"],
                       residual=x_flat)                          # x = x + attn(norm1(x))
    rs2, rb2 = _bn_row_affine(p["norm2"], B)
    x2 = pallas_mlp(x1, rs2, rb2, p["mlp"], residual=x1)         # x = x + mlp(norm2(x))
    return x2.reshape(B, N, C)


def t2t_module_forward(p, x, token_dim, embed_dim, pos_embed):
    x = jnp.transpose(unfold(x, 5, 2, 2), (0, 2, 1))
    x = token_transformer(p["attn1"], x, token_dim)
    B, N, C = x.shape
    s = int(np.sqrt(N))
    x = jnp.transpose(x, (0, 2, 1)).reshape(B, C, s, s)
    x = jnp.transpose(unfold(x, 3, 2, 1), (0, 2, 1))
    x = token_transformer(p["attn2"], x, token_dim)
    B, N, C = x.shape
    s = int(np.sqrt(N))
    x = jnp.transpose(x, (0, 2, 1)).reshape(B, C, s, s)
    x = jnp.transpose(unfold(x, 3, 2, 1), (0, 2, 1))
    B, N, C = x.shape
    # project linear, with the positional-embedding add folded into its epilogue
    pos = jnp.broadcast_to(pos_embed, (B, N, embed_dim)).reshape(B * N, embed_dim)
    x = pallas_linear(x.reshape(B * N, C), p["project_w"], p["project_b"], residual=pos)
    return x.reshape(B, N, embed_dim)


def t2t_vit_forward(params, x, cfg):
    x = t2t_module_forward(params["t2t"], x, cfg["token_dim"], cfg["embed_dim"],
                           params["pos_embed"])                  # incl. + pos_embed
    for bp in params["blocks"]:
        x = block_forward(bp, x, cfg["num_heads"])
    B, N, C = x.shape
    # final BatchNorm1d(n_patch) folded into head fc1 as a per-K affine on the
    # flattened (N*C) feature axis
    s_n, b_n = _bn_scale_shift(params["norm"])
    h = pallas_linear(x.reshape(B, N * C), params["head_fc1_w"], params["head_fc1_b"],
                      col_scale=jnp.repeat(s_n, C), col_shift=jnp.repeat(b_n, C))
    # head BatchNorm1d(embed_dim) folded into head fc2 as a per-K affine
    s1, b1 = _bn_scale_shift(params["head_bn1"])
    logits = pallas_linear(h, params["head_fc2_w"], params["head_fc2_b"],
                           col_scale=s1, col_shift=b1)
    # final BatchNorm1d(num_classes): tiny standalone affine (vectors broadcast in-kernel)
    s2, b2 = _bn_scale_shift(params["head_bn2"])
    return pallas_affine_cols(logits, s2, b2)


# ----------------------------- parameters -----------------------------

def get_sinusoid_encoding(n_position, d_hid):
    pos = np.arange(n_position, dtype=np.float64)[:, None]
    i = np.arange(d_hid, dtype=np.float64)[None, :]
    angle = pos / np.power(10000.0, 2.0 * np.floor(i / 2.0) / d_hid)
    table = np.zeros((n_position, d_hid), dtype=np.float64)
    table[:, 0::2] = np.sin(angle[:, 0::2])
    table[:, 1::2] = np.cos(angle[:, 1::2])
    return jnp.asarray(table[None], dtype=jnp.float32)


def _trunc_normal(key, shape, std=0.02):
    return std * jax.random.truncated_normal(key, -2.0, 2.0, shape, jnp.float32)


def init_params(key, cfg):
    keys = iter(jax.random.split(key, 64))

    def linear(fan_in, fan_out):
        return _trunc_normal(next(keys), (fan_in, fan_out)), jnp.zeros((fan_out,), jnp.float32)

    def bn(n):
        return (jnp.ones((n,), jnp.float32), jnp.zeros((n,), jnp.float32),
                jnp.zeros((n,), jnp.float32), jnp.ones((n,), jnp.float32))

    def token_transformer_params(num_patch, dim, in_dim, mlp_ratio):
        qkv_w, qkv_b = linear(dim, in_dim * 3)
        proj_w, proj_b = linear(in_dim, in_dim)
        hidden = int(in_dim * mlp_ratio)
        fc1_w, fc1_b = linear(in_dim, hidden)
        fc2_w, fc2_b = linear(hidden, in_dim)
        return {"norm1": bn(num_patch),
                "attn": {"qkv_w": qkv_w, "qkv_b": qkv_b, "proj_w": proj_w, "proj_b": proj_b},
                "norm2": bn(num_patch),
                "mlp": {"fc1_w": fc1_w, "fc1_b": fc1_b, "fc2_w": fc2_w, "fc2_b": fc2_b}}

    def block_params(num_patches, dim, mlp_ratio):
        qkv_w, _ = linear(dim, dim * 3)              # qkv_bias=False -> no bias stored
        proj_w, proj_b = linear(dim, dim)
        hidden = int(dim * mlp_ratio)
        fc1_w, fc1_b = linear(dim, hidden)
        fc2_w, fc2_b = linear(hidden, dim)
        return {"norm1": bn(num_patches),
                "attn": {"qkv_w": qkv_w, "qkv_b": None, "proj_w": proj_w, "proj_b": proj_b},
                "norm2": bn(num_patches),
                "mlp": {"fc1_w": fc1_w, "fc1_b": fc1_b, "fc2_w": fc2_w, "fc2_b": fc2_b}}

    img, in_chans = cfg["img_size"], cfg["in_chans"]
    token_dim, embed_dim = cfg["token_dim"], cfg["embed_dim"]
    n_patch = (img // 8) ** 2

    project_w, project_b = linear(token_dim * 3 * 3, embed_dim)
    t2t = {"attn1": token_transformer_params((img // 2) ** 2, in_chans * 5 * 5, token_dim, 1.0),
           "attn2": token_transformer_params((img // 4) ** 2, token_dim * 3 * 3, token_dim, 1.0),
           "project_w": project_w, "project_b": project_b}

    blocks = [block_params(n_patch, embed_dim, cfg["mlp_ratio"]) for _ in range(cfg["depth"])]

    head_fc1_w, head_fc1_b = linear(embed_dim * n_patch, embed_dim)
    head_fc2_w, head_fc2_b = linear(embed_dim, cfg["num_classes"])

    return {"t2t": t2t,
            "pos_embed": get_sinusoid_encoding(n_patch, embed_dim),
            "blocks": blocks,
            "norm": bn(n_patch),
            "head_fc1_w": head_fc1_w, "head_fc1_b": head_fc1_b, "head_bn1": bn(embed_dim),
            "head_fc2_w": head_fc2_w, "head_fc2_b": head_fc2_b, "head_bn2": bn(cfg["num_classes"])}


# ----------------------------- main -----------------------------

if __name__ == "__main__":
    # small config: 16x16 image -> 8x8 -> 4x4 -> 2x2 tokens (n_patch = 4)
    cfg = dict(in_chans=3, img_size=16, token_dim=16, embed_dim=32,
               depth=2, num_heads=2, mlp_ratio=4.0, num_classes=10)

    key = jax.random.PRNGKey(0)
    pkey, xkey = jax.random.split(key)
    params = init_params(pkey, cfg)
    x = jax.random.normal(xkey, (2, cfg["in_chans"], cfg["img_size"], cfg["img_size"]),
                          dtype=jnp.float32)

    fwd = jax.jit(functools.partial(t2t_vit_forward, cfg=cfg))
    out = fwd(params, x)
    jax.block_until_ready(out)
    assert out.shape == (2, cfg["num_classes"]) and out.dtype == jnp.float32
    print("KERNEL_OK")
</pallas_src>

<mosaic_0001>
module attributes {stable_mosaic.version = 11 : i64} {
  func.func @_linear_kernel(%arg0: i32, %arg1: i32, %arg2: i32, %arg3: memref<128x128xf32, #tpu.memory_space<vmem>>, %arg4: memref<128x128xf32, #tpu.memory_space<vmem>>, %arg5: memref<1x128xf32, #tpu.memory_space<vmem>>, %arg6: memref<128x1xf32, #tpu.memory_space<vmem>>, %arg7: memref<128x1xf32, #tpu.memory_space<vmem>>, %arg8: memref<128x128xf32, #tpu.memory_space<vmem>>, %arg9: memref<128x128xf32, #tpu.memory_space<vmem>>) attributes {dimension_semantics = [#tpu.dimension_semantics<parallel>, #tpu.dimension_semantics<parallel>, #tpu.dimension_semantics<arbitrary>], iteration_bounds = array<i64: 1, 1, 1>, scalar_prefetch = 0 : i64, scratch_operands = 1 : i64, tpu.core_type = #tpu.core_type<tc>, window_params = [{transform_indices = @transform_0, window_bounds = array<i64: 128, 128>}, {transform_indices = @transform_1, window_bounds = array<i64: 128, 128>}, {transform_indices = @transform_2, window_bounds = array<i64: 1, 128>}, {transform_indices = @transform_3, window_bounds = array<i64: 128, 1>}, {transform_indices = @transform_4, window_bounds = array<i64: 128, 1>}, {transform_indices = @transform_5, window_bounds = array<i64: 128, 128>}]} {
    %c0_i32 = arith.constant 0 : i32
    %0 = arith.cmpi eq, %arg2, %c0_i32 : i32
    %1 = arith.extui %0 : i1 to i32
    %c0_i32_0 = arith.constant 0 : i32
    %2 = arith.cmpi ne, %1, %c0_i32_0 : i32
    scf.if %2 {
      %cst_14 = arith.constant 0.000000e+00 : f32
      %20 = vector.broadcast %cst_14 : f32 to vector<128x128xf32>
      %c0_15 = arith.constant 0 : index
      %c0_16 = arith.constant 0 : index
      %21 = vector.load %arg9[%c0_15, %c0_16] : memref<128x128xf32, #tpu.memory_space<vmem>>, vector<128x128xf32>
      tpu.vector_store %arg9[%c0_15, %c0_16], %20 {strides = array<i32>} : memref<128x128xf32, #tpu.memory_space<vmem>>, vector<128x128xf32>,
    } else {
    }
    %c0 = arith.constant 0 : index
    %c0_1 = arith.constant 0 : index
    %3 = vector.load %arg3[%c0, %c0_1] : memref<128x128xf32, #tpu.memory_space<vmem>>, vector<128x128xf32>
    %c0_2 = arith.constant 0 : index
    %c0_3 = arith.constant 0 : index
    %4 = vector.load %arg6[%c0_2, %c0_3] : memref<128x1xf32, #tpu.memory_space<vmem>>, vector<128x1xf32>
    %5 = vector.broadcast %4 : vector<128x1xf32> to vector<128x128xf32>
    %6 = arith.mulf %3, %5 : vector<128x128xf32>
    %c0_4 = arith.constant 0 : index
    %c0_5 = arith.constant 0 : index
    %7 = vector.load %arg7[%c0_4, %c0_5] : memref<128x1xf32, #tpu.memory_space<vmem>>, vector<128x1xf32>
    %8 = vector.broadcast %7 : vector<128x1xf32> to vector<128x128xf32>
    %9 = arith.addf %6, %8 : vector<128x128xf32>
    %c0_6 = arith.constant 0 : index
    %c0_7 = arith.constant 0 : index
    %10 = vector.load %arg9[%c0_6, %c0_7] : memref<128x128xf32, #tpu.memory_space<vmem>>, vector<128x128xf32>
    %11 = arith.truncf %9 : vector<128x128xf32> to vector<128x128xbf16>
    %c0_8 = arith.constant 0 : index
    %c0_9 = arith.constant 0 : index
    %12 = vector.load %arg4[%c0_8, %c0_9] : memref<128x128xf32, #tpu.memory_space<vmem>>, vector<128x128xf32>
    %13 = arith.truncf %12 : vector<128x128xf32> to vector<128x128xbf16>
    %cst = arith.constant dense<0.000000e+00> : vector<128x128xf32>
    %14 = tpu.matmul %11, %13, %cst {dimension_numbers = #tpu.dot_dimension_numbers<[1], [0], [0], [1], [0, 0, 1, 1], [], []>} : vector<128x128xbf16>, vector<128x128xbf16>, vector<128x128xf32> -> vector<128x128xf32>
    %15 = arith.addf %10, %14 : vector<128x128xf32>
    %c0_10 = arith.constant 0 : index
    %c0_11 = arith.constant 0 : index
    %16 = vector.load %arg9[%c0_10, %c0_11] : memref<128x128xf32, #tpu.memory_space<vmem>>, vector<128x128xf32>
    tpu.vector_store %arg9[%c0_10, %c0_11], %15 {strides = array<i32>} : memref<128x128xf32, #tpu.memory_space<vmem>>, vector<128x128xf32>,
    %c0_i32_12 = arith.constant 0 : i32
    %17 = arith.cmpi eq, %arg2, %c0_i32_12 : i32
    %18 = arith.extui %17 : i1 to i32
    %c0_i32_13 = arith.constant 0 : i32
    %19 = arith.cmpi ne, %18, %c0_i32_13 : i32
    scf.if %19 {
      %c0_14 = arith.constant 0 : index
      %c0_15 = arith.constant 0 : index
      %20 = vector.load %arg9[%c0_14, %c0_15] : memref<128x128xf32, #tpu.memory_space<vmem>>, vector<128x128xf32>
      %c0_16 = arith.constant 0 : index
      %c0_17 = arith.constant 0 : index
      %21 = vector.load %arg5[%c0_16, %c0_17] : memref<1x128xf32, #tpu.memory_space<vmem>>, vector<1x128xf32>
      %22 = vector.broadcast %21 : vector<1x128xf32> to vector<128x128xf32>
      %23 = arith.addf %20, %22 : vector<128x128xf32>
      %c0_18 = arith.constant 0 : index
      %c0_19 = arith.constant 0 : index
      %24 = vector.load %arg8[%c0_18, %c0_19] : memref<128x128xf32, #tpu.memory_space<vmem>>, vector<128x128xf32>
      tpu.vector_store %arg8[%c0_18, %c0_19], %23 {strides = array<i32>} : memref<128x128xf32, #tpu.memory_space<vmem>>, vector<128x128xf32>,
    } else {
    }
    return
  }
  func.func @transform_0(%arg0: i32, %arg1: i32, %arg2: i32) -> (i32, i32) {
    %c0_i32 = arith.constant 0 : i32
    return %arg0, %arg2 : i32, i32
  }
  func.func @transform_1(%arg0: i32, %arg1: i32, %arg2: i32) -> (i32, i32) {
    %c0_i32 = arith.constant 0 : i32
    return %arg2, %arg1 : i32, i32
  }
  func.func @transform_2(%arg0: i32, %arg1: i32, %arg2: i32) -> (i32, i32) {
    %c0_i32 = arith.constant 0 : i32
    %c0_i32_0 = arith.constant 0 : i32
    return %c0_i32, %arg1 : i32, i32
  }
  func.func @transform_3(%arg0: i32, %arg1: i32, %arg2: i32) -> (i32, i32) {
    %c0_i32 = arith.constant 0 : i32
    %c0_i32_0 = arith.constant 0 : i32
    return %arg0, %c0_i32 : i32, i32
  }
  func.func @transform_4(%arg0: i32, %arg1: i32, %arg2: i32) -> (i32, i32) {
    %c0_i32 = arith.constant 0 : i32
    %c0_i32_0 = arith.constant 0 : i32
    return %arg0, %c0_i32 : i32, i32
  }
  func.func @transform_5(%arg0: i32, %arg1: i32, %arg2: i32) -> (i32, i32) {
    %c0_i32 = arith.constant 0 : i32
    return %arg0, %arg1 : i32, i32
  }
}

module attributes {stable_mosaic.version = 11 : i64} {
  func.func @_flash_attn_kernel(%arg0: i32, %arg1: i32, %arg2: i32, %arg3: memref<1x64x16xf32, #tpu.memory_space<vmem>>, %arg4: memref<1x64x16xf32, #tpu.memory_space<vmem>>, %arg5: memref<1x64x16xf32, #tpu.memory_space<vmem>>, %arg6: memref<1x64x16xf32, #tpu.memory_space<vmem>>, %arg7: memref<64x1xf32, #tpu.memory_space<vmem>>, %arg8: memref<64x1xf32, #tpu.memory_space<vmem>>, %arg9: memref<64x16xf32, #tpu.memory_space<vmem>>) attributes {dimension_semantics = [#tpu.dimension_semantics<parallel>, #tpu.dimension_semantics<parallel>, #tpu.dimension_semantics<arbitrary>], iteration_bounds = array<i64: 2, 1, 1>, scalar_prefetch = 0 : i64, scratch_operands = 3 : i64, tpu.core_type = #tpu.core_type<tc>, window_params = [{transform_indices = @transform_0, window_bounds = array<i64: 1, 64, 16>}, {transform_indices = @transform_1, window_bounds = array<i64: 1, 64, 16>}, {transform_indices = @transform_2, window_bounds = array<i64: 1, 64, 16>}, {transform_indices = @transform_3, window_bounds = array<i64: 1, 64, 16>}]} {
    %c0_i32 = arith.constant 0 : i32
    %0 = arith.cmpi eq, %arg2, %c0_i32 : i32
    %1 = arith.extui %0 : i1 to i32
    %c0_i32_0 = arith.constant 0 : i32
    %2 = arith.cmpi ne, %1, %c0_i32_0 : i32
    scf.if %2 {
      %cst_27 = arith.constant 0xFF800000 : f32
      %41 = vector.broadcast %cst_27 : f32 to vector<64x1xf32>
      %c0_28 = arith.constant 0 : index
      %c0_29 = arith.constant 0 : index
      %42 = vector.load %arg7[%c0_28, %c0_29] : memref<64x1xf32, #tpu.memory_space<vmem>>, vector<64x1xf32>
      tpu.vector_store %arg7[%c0_28, %c0_29], %41 {strides = array<i32>} : memref<64x1xf32, #tpu.memory_space<vmem>>, vector<64x1xf32>,
      %cst_30 = arith.constant 0.000000e+00 : f32
      %43 = vector.broadcast %cst_30 : f32 to vector<64x1xf32>
      %c0_31 = arith.constant 0 : index
      %c0_32 = arith.constant 0 : index
      %44 = vector.load %arg8[%c0_31, %c0_32] : memref<64x1xf32, #tpu.memory_space<vmem>>, vector<64x1xf32>
      tpu.vector_store %arg8[%c0_31, %c0_32], %43 {strides = array<i32>} : memref<64x1xf32, #tpu.memory_space<vmem>>, vector<64x1xf32>,
      %cst_33 = arith.constant 0.000000e+00 : f32
      %45 = vector.broadcast %cst_33 : f32 to vector<64x16xf32>
      %c0_34 = arith.constant 0 : index
      %c0_35 = arith.constant 0 : index
      %46 = vector.load %arg9[%c0_34, %c0_35] : memref<64x16xf32, #tpu.memory_space<vmem>>, vector<64x16xf32>
      tpu.vector_store %arg9[%c0_34, %c0_35], %45 {strides = array<i32>} : memref<64x16xf32, #tpu.memory_space<vmem>>, vector<64x16xf32>,
    } else {
    }
    %c0 = arith.constant 0 : index
    %c0_1 = arith.constant 0 : index
    %c0_2 = arith.constant 0 : index
    %3 = vector.load %arg3[%c0, %c0_1, %c0_2] : memref<1x64x16xf32, #tpu.memory_space<vmem>>, vector<1x64x16xf32>
    %4 = vector.shape_cast %3 : vector<1x64x16xf32> to vector<64x16xf32>
    %5 = arith.truncf %4 : vector<64x16xf32> to vector<64x16xbf16>
    %c0_3 = arith.constant 0 : index
    %c0_4 = arith.constant 0 : index
    %c0_5 = arith.constant 0 : index
    %6 = vector.load %arg4[%c0_3, %c0_4, %c0_5] : memref<1x64x16xf32, #tpu.memory_space<vmem>>, vector<1x64x16xf32>
    %7 = vector.shape_cast %6 : vector<1x64x16xf32> to vector<64x16xf32>
    %8 = arith.truncf %7 : vector<64x16xf32> to vector<64x16xbf16>
    %c0_6 = arith.constant 0 : index
    %c0_7 = arith.constant 0 : index
    %c0_8 = arith.constant 0 : index
    %9 = vector.load %arg5[%c0_6, %c0_7, %c0_8] : memref<1x64x16xf32, #tpu.memory_space<vmem>>, vector<1x64x16xf32>
    %10 = vector.shape_cast %9 : vector<1x64x16xf32> to vector<64x16xf32>
    %11 = arith.truncf %10 : vector<64x16xf32> to vector<64x16xbf16>
    %cst = arith.constant dense<0.000000e+00> : vector<64x64xf32>
    %12 = tpu.matmul %5, %8, %cst {dimension_numbers = #tpu.dot_dimension_numbers<[1], [1], [0], [0], [0, 0, 1, 0], [], []>} : vector<64x16xbf16>, vector<64x16xbf16>, vector<64x64xf32> -> vector<64x64xf32>
    %cst_9 = arith.constant 0.115470052 : f32
    %13 = vector.broadcast %cst_9 : f32 to vector<64x64xf32>
    %14 = arith.mulf %12, %13 : vector<64x64xf32>
    %c0_10 = arith.constant 0 : index
    %c0_11 = arith.constant 0 : index
    %15 = vector.load %arg7[%c0_10, %c0_11] : memref<64x1xf32, #tpu.memory_space<vmem>>, vector<64x1xf32>
    %cst_12 = arith.constant dense<0xFF800000> : vector<64xf32>
    %16 = vector.multi_reduction <maximumf>, %14, %cst_12 [1] : vector<64x64xf32> to vector<64xf32>
    %17 = vector.shape_cast %16 : vector<64xf32> to vector<64x1xf32>
    %18 = arith.maximumf %15, %17 : vector<64x1xf32>
    %19 = arith.subf %15, %18 : vector<64x1xf32>
    %20 = math.exp %19 : vector<64x1xf32>
    %21 = vector.broadcast %18 : vector<64x1xf32> to vector<64x64xf32>
    %22 = arith.subf %14, %21 : vector<64x64xf32>
    %23 = math.exp %22 : vector<64x64xf32>
    %c0_13 = arith.constant 0 : index
    %c0_14 = arith.constant 0 : index
    %24 = vector.load %arg8[%c0_13, %c0_14] : memref<64x1xf32, #tpu.memory_space<vmem>>, vector<64x1xf32>
    %25 = arith.mulf %20, %24 : vector<64x1xf32>
    %cst_15 = arith.constant dense<0.000000e+00> : vector<64xf32>
    %26 = vector.multi_reduction <add>, %23, %cst_15 [1] : vector<64x64xf32> to vector<64xf32>
    %27 = vector.shape_cast %26 : vector<64xf32> to vector<64x1xf32>
    %28 = arith.addf %25, %27 : vector<64x1xf32>
    %c0_16 = arith.constant 0 : index
    %c0_17 = arith.constant 0 : index
    %29 = vector.load %arg8[%c0_16, %c0_17] : memref<64x1xf32, #tpu.memory_space<vmem>>, vector<64x1xf32>
    tpu.vector_store %arg8[%c0_16, %c0_17], %28 {strides = array<i32>} : memref<64x1xf32, #tpu.memory_space<vmem>>, vector<64x1xf32>,
    %c0_18 = arith.constant 0 : index
    %c0_19 = arith.constant 0 : index
    %30 = vector.load %arg9[%c0_18, %c0_19] : memref<64x16xf32, #tpu.memory_space<vmem>>, vector<64x16xf32>
    %31 = vector.broadcast %20 : vector<64x1xf32> to vector<64x16xf32>
    %32 = arith.mulf %31, %30 : vector<64x16xf32>
    %33 = arith.truncf %23 : vector<64x64xf32> to vector<64x64xbf16>
    %cst_20 = arith.constant dense<0.000000e+00> : vector<64x16xf32>
    %34 = tpu.matmul %33, %11, %cst_20 {dimension_numbers = #tpu.dot_dimension_numbers<[1], [0], [0], [1], [0, 0, 1, 1], [], []>} : vector<64x64xbf16>, vector<64x16xbf16>, vector<64x16xf32> -> vector<64x16xf32>
    %35 = arith.addf %32, %34 : vector<64x16xf32>
    %c0_21 = arith.constant 0 : index
    %c0_22 = arith.constant 0 : index
    %36 = vector.load %arg9[%c0_21, %c0_22] : memref<64x16xf32, #tpu.memory_space<vmem>>, vector<64x16xf32>
    tpu.vector_store %arg9[%c0_21, %c0_22], %35 {strides = array<i32>} : memref<64x16xf32, #tpu.memory_space<vmem>>, vector<64x16xf32>,
    %c0_23 = arith.constant 0 : index
    %c0_24 = arith.constant 0 : index
    %37 = vector.load %arg7[%c0_23, %c0_24] : memref<64x1xf32, #tpu.memory_space<vmem>>, vector<64x1xf32>
    tpu.vector_store %arg7[%c0_23, %c0_24], %18 {strides = array<i32>} : memref<64x1xf32, #tpu.memory_space<vmem>>, vector<64x1xf32>,
    %c0_i32_25 = arith.constant 0 : i32
    %38 = arith.cmpi eq, %arg2, %c0_i32_25 : i32
    %39 = arith.extui %38 : i1 to i32
    %c0_i32_26 = arith.constant 0 : i32
    %40 = arith.cmpi ne, %39, %c0_i32_26 : i32
    scf.if %40 {
      %c0_27 = arith.constant 0 : index
      %c0_28 = arith.constant 0 : index
      %41 = vector.load %arg9[%c0_27, %c0_28] : memref<64x16xf32, #tpu.memory_space<vmem>>, vector<64x16xf32>
      %c0_29 = arith.constant 0 : index
      %c0_30 = arith.constant 0 : index
      %42 = vector.load %arg8[%c0_29, %c0_30] : memref<64x1xf32, #tpu.memory_space<vmem>>, vector<64x1xf32>
      %43 = tpu.reciprocal %42 {approx = true} : vector<64x1xf32> -> vector<64x1xf32>
      %44 = vector.broadcast %43 : vector<64x1xf32> to vector<64x16xf32>
      %45 = arith.mulf %41, %44 : vector<64x16xf32>
      %c0_31 = arith.constant 0 : index
      %c0_32 = arith.constant 0 : index
      %c0_33 = arith.constant 0 : index
      %46 = vector.load %arg6[%c0_31, %c0_32, %c0_33] : memref<1x64x16xf32, #tpu.memory_space<vmem>>, vector<1x64x16xf32>
      %47 = vector.shape_cast %46 : vector<1x64x16xf32> to vector<64x16xf32>
      %48 = vector.shape_cast %45 : vector<64x16xf32> to vector<1x64x16xf32>
      tpu.vector_store %arg6[%c0_31, %c0_32, %c0_33], %48 {strides = array<i32>} : memref<1x64x16xf32, #tpu.memory_space<vmem>>, vector<1x64x16xf32>,
    } else {
    }
    return
  }
  func.func @transform_0(%arg0: i32, %arg1: i32, %arg2: i32) -> (i32, i32, i32) {
    %c0_i32 = arith.constant 0 : i32
    %c0_i32_0 = arith.constant 0 : i32
    return %arg0, %arg1, %c0_i32 : i32, i32, i32
  }
  func.func @transform_1(%arg0: i32, %arg1: i32, %arg2: i32) -> (i32, i32, i32) {
    %c0_i32 = arith.constant 0 : i32
    %c0_i32_0 = arith.constant 0 : i32
    return %arg0, %arg2, %c0_i32 : i32, i32, i32
  }
  func.func @transform_2(%arg0: i32, %arg1: i32, %arg2: i32) -> (i32, i32, i32) {
    %c0_i32 = arith.constant 0 : i32
    %c0_i32_0 = arith.constant 0 : i32
    return %arg0, %arg2, %c0_i32 : i32, i32, i32
  }
  func.func @transform_3(%arg0: i32, %arg1: i32, %arg2: i32) -> (i32, i32, i32) {
    %c0_i32 = arith.constant 0 : i32
    %c0_i32_0 = arith.constant 0 : i32
    return %arg0, %arg1, %c0_i32 : i32, i32, i32
  }
}

module attributes {stable_mosaic.version = 11 : i64} {
  func.func @_linear_kernel(%arg0: i32, %arg1: i32, %arg2: i32, %arg3: memref<128x128xf32, #tpu.memory_space<vmem>>, %arg4: memref<128x128xf32, #tpu.memory_space<vmem>>, %arg5: memref<1x128xf32, #tpu.memory_space<vmem>>, %arg6: memref<128x128xf32, #tpu.memory_space<vmem>>, %arg7: memref<128x128xf32, #tpu.memory_space<vmem>>, %arg8: memref<128x128xf32, #tpu.memory_space<vmem>>) attributes {dimension_semantics = [#tpu.dimension_semantics<parallel>, #tpu.dimension_semantics<parallel>, #tpu.dimension_semantics<arbitrary>], iteration_bounds = array<i64: 1, 1, 1>, scalar_prefetch = 0 : i64, scratch_operands = 1 : i64, tpu.core_type = #tpu.core_type<tc>, window_params = [{transform_indices = @transform_0, window_bounds = array<i64: 128, 128>}, {transform_indices = @transform_1, window_bounds = array<i64: 128, 128>}, {transform_indices = @transform_2, window_bounds = array<i64: 1, 128>}, {transform_indices = @transform_3, window_bounds = array<i64: 128, 128>}, {transform_indices = @transform_4, window_bounds = array<i64: 128, 128>}]} {
    %c0_i32 = arith.constant 0 : i32
    %0 = arith.cmpi eq, %arg2, %c0_i32 : i32
    %1 = arith.extui %0 : i1 to i32
    %c0_i32_0 = arith.constant 0 : i32
    %2 = arith.cmpi ne, %1, %c0_i32_0 : i32
    scf.if %2 {
      %cst_10 = arith.constant 0.000000e+00 : f32
      %14 = vector.broadcast %cst_10 : f32 to vector<128x128xf32>
      %c0_11 = arith.constant 0 : index
      %c0_12 = arith.constant 0 : index
      %15 = vector.load %arg8[%c0_11, %c0_12] : memref<128x128xf32, #tpu.memory_space<vmem>>, vector<128x128xf32>
      tpu.vector_store %arg8[%c0_11, %c0_12], %14 {strides = array<i32>} : memref<128x128xf32, #tpu.memory_space<vmem>>, vector<128x128xf32>,
    } else {
    }
    %c0 = arith.constant 0 : index
    %c0_1 = arith.constant 0 : index
    %3 = vector.load %arg3[%c0, %c0_1] : memref<128x128xf32, #tpu.memory_space<vmem>>, vector<128x128xf32>
    %c0_2 = arith.constant 0 : index
    %c0_3 = arith.constant 0 : index
    %4 = vector.load %arg8[%c0_2, %c0_3] : memref<128x128xf32, #tpu.memory_space<vmem>>, vector<128x128xf32>
    %5 = arith.truncf %3 : vector<128x128xf32> to vector<128x128xbf16>
    %c0_4 = arith.constant 0 : index
    %c0_5 = arith.constant 0 : index
    %6 = vector.load %arg4[%c0_4, %c0_5] : memref<128x128xf32, #tpu.memory_space<vmem>>, vector<128x128xf32>
    %7 = arith.truncf %6 : vector<128x128xf32> to vector<128x128xbf16>
    %cst = arith.constant dense<0.000000e+00> : vector<128x128xf32>
    %8 = tpu.matmul %5, %7, %cst {dimension_numbers = #tpu.dot_dimension_numbers<[1], [0], [0], [1], [0, 0, 1, 1], [], []>} : vector<128x128xbf16>, vector<128x128xbf16>, vector<128x128xf32> -> vector<128x128xf32>
    %9 = arith.addf %4, %8 : vector<128x128xf32>
    %c0_6 = arith.constant 0 : index
    %c0_7 = arith.constant 0 : index
    %10 = vector.load %arg8[%c0_6, %c0_7] : memref<128x128xf32, #tpu.memory_space<vmem>>, vector<128x128xf32>
    tpu.vector_store %arg8[%c0_6, %c0_7], %9 {strides = array<i32>} : memref<128x128xf32, #tpu.memory_space<vmem>>, vector<128x128xf32>,
    %c0_i32_8 = arith.constant 0 : i32
    %11 = arith.cmpi eq, %arg2, %c0_i32_8 : i32
    %12 = arith.extui %11 : i1 to i32
    %c0_i32_9 = arith.constant 0 : i32
    %13 = arith.cmpi ne, %12, %c0_i32_9 : i32
    scf.if %13 {
      %c0_10 = arith.constant 0 : index
      %c0_11 = arith.constant 0 : index
      %14 = vector.load %arg8[%c0_10, %c0_11] : memref<128x128xf32, #tpu.memory_space<vmem>>, vector<128x128xf32>
      %c0_12 = arith.constant 0 : index
      %c0_13 = arith.constant 0 : index
      %15 = vector.load %arg5[%c0_12, %c0_13] : memref<1x128xf32, #tpu.memory_space<vmem>>, vector<1x128xf32>
      %16 = vector.broadcast %15 : vector<1x128xf32> to vector<128x128xf32>
      %17 = arith.addf %14, %16 : vector<128x128xf32>
      %c0_14 = arith.constant 0 : index
      %c0_15 = arith.constant 0 : index
      %18 = vector.load %arg6[%c0_14, %c0_15] : memref<128x128xf32, #tpu.memory_space<vmem>>, vector<128x128xf32>
      %19 = arith.addf %17, %18 : vector<128x128xf32>
      %c0_16 = arith.constant 0 : index
      %c0_17 = arith.constant 0 : index
      %20 = vector.load %arg7[%c0_16, %c0_17] : memref<128x128xf32, #tpu.memory_space<vmem>>, vector<128x128xf32>
      tpu.vector_store %arg7[%c0_16, %c0_17], %19 {strides = array<i32>} : memref<128x128xf32, #tpu.memory_space<vmem>>, vector<128x128xf32>,
    } else {
    }
    return
  }
  func.func @transform_0(%arg0: i32, %arg1: i32, %arg2: i32) -> (i32, i32) {
    %c0_i32 = arith.constant 0 : i32
    return %arg0, %arg2 : i32, i32
  }
  func.func @transform_1(%arg0: i32, %arg1: i32, %arg2: i32) -> (i32, i32) {
    %c0_i32 = arith.constant 0 : i32
    return %arg2, %arg1 : i32, i32
  }
  func.func @transform_2(%arg0: i32, %arg1: i32, %arg2: i32) -> (i32, i32) {
    %c0_i32 = arith.constant 0 : i32
    %c0_i32_0 = arith.constant 0 : i32
    return %c0_i32, %arg1 : i32, i32
  }
  func.func @transform_3(%arg0: i32, %arg1: i32, %arg2: i32) -> (i32, i32) {
    %c0_i32 = arith.constant 0 : i32
    return %arg0, %arg1 : i32, i32
  }
  func.func @transform_4(%arg0: i32, %arg1: i32, %arg2: i32) -> (i32, i32) {
    %c0_i32 = arith.constant 0 : i32
    return %arg0, %arg1 : i32, i32
  }
}

module attributes {stable_mosaic.version = 11 : i64} {
  func.func @_mlp_kernel(%arg0: i32, %arg1: i32, %arg2: memref<128x128xf32, #tpu.memory_space<vmem>>, %arg3: memref<128x1xf32, #tpu.memory_space<vmem>>, %arg4: memref<128x1xf32, #tpu.memory_space<vmem>>, %arg5: memref<128x128xf32, #tpu.memory_space<vmem>>, %arg6: memref<1x128xf32, #tpu.memory_space<vmem>>, %arg7: memref<128x128xf32, #tpu.memory_space<vmem>>, %arg8: memref<1x128xf32, #tpu.memory_space<vmem>>, %arg9: memref<128x128xf32, #tpu.memory_space<vmem>>, %arg10: memref<128x128xf32, #tpu.memory_space<vmem>>, %arg11: memref<128x128xbf16, #tpu.memory_space<vmem>>) attributes {dimension_semantics = [#tpu.dimension_semantics<parallel>, #tpu.dimension_semantics<arbitrary>], iteration_bounds = array<i64: 1, 1>, scalar_prefetch = 0 : i64, scratch_operands = 1 : i64, tpu.core_type = #tpu.core_type<tc>, window_params = [{transform_indices = @transform_0, window_bounds = array<i64: 128, 128>}, {transform_indices = @transform_1, window_bounds = array<i64: 128, 1>}, {transform_indices = @transform_2, window_bounds = array<i64: 128, 1>}, {pipeline_mode = #tpu.pipeline_mode<synchronous>, transform_indices = @transform_3, window_bounds = array<i64: 128, 128>}, {pipeline_mode = #tpu.pipeline_mode<synchronous>, transform_indices = @transform_4, window_bounds = array<i64: 1, 128>}, {transform_indices = @transform_5, window_bounds = array<i64: 128, 128>}, {transform_indices = @transform_6, window_bounds = array<i64: 1, 128>}, {transform_indices = @transform_7, window_bounds = array<i64: 128, 128>}, {transform_indices = @transform_8, window_bounds = array<i64: 128, 128>}]} {
    %c0_i32 = arith.constant 0 : i32
    %0 = arith.cmpi eq, %arg1, %c0_i32 : i32
    %1 = arith.extui %0 : i1 to i32
    %c0_i32_0 = arith.constant 0 : i32
    %2 = arith.cmpi ne, %1, %c0_i32_0 : i32
    scf.if %2 {
      %c0_10 = arith.constant 0 : index
      %c0_11 = arith.constant 0 : index
      %13 = vector.load %arg2[%c0_10, %c0_11] : memref<128x128xf32, #tpu.memory_space<vmem>>, vector<128x128xf32>
      %c0_12 = arith.constant 0 : index
      %c0_13 = arith.constant 0 : index
      %14 = vector.load %arg3[%c0_12, %c0_13] : memref<128x1xf32, #tpu.memory_space<vmem>>, vector<128x1xf32>
      %15 = vector.broadcast %14 : vector<128x1xf32> to vector<128x128xf32>
      %16 = arith.mulf %13, %15 : vector<128x128xf32>
      %c0_14 = arith.constant 0 : index
      %c0_15 = arith.constant 0 : index
      %17 = vector.load %arg4[%c0_14, %c0_15] : memref<128x1xf32, #tpu.memory_space<vmem>>, vector<128x1xf32>
      %18 = vector.broadcast %17 : vector<128x1xf32> to vector<128x128xf32>
      %19 = arith.addf %16, %18 : vector<128x128xf32>
      %20 = arith.truncf %19 : vector<128x128xf32> to vector<128x128xbf16>
      %c0_16 = arith.constant 0 : index
      %c0_17 = arith.constant 0 : index
      %21 = vector.load %arg5[%c0_16, %c0_17] : memref<128x128xf32, #tpu.memory_space<vmem>>, vector<128x128xf32>
      %22 = arith.truncf %21 : vector<128x128xf32> to vector<128x128xbf16>
      %cst_18 = arith.constant dense<0.000000e+00> : vector<128x128xf32>
      %23 = tpu.matmul %20, %22, %cst_18 {dimension_numbers = #tpu.dot_dimension_numbers<[1], [0], [0], [1], [0, 0, 1, 1], [], []>} : vector<128x128xbf16>, vector<128x128xbf16>, vector<128x128xf32> -> vector<128x128xf32>
      %c0_19 = arith.constant 0 : index
      %c0_20 = arith.constant 0 : index
      %24 = vector.load %arg6[%c0_19, %c0_20] : memref<1x128xf32, #tpu.memory_space<vmem>>, vector<1x128xf32>
      %25 = vector.broadcast %24 : vector<1x128xf32> to vector<128x128xf32>
      %26 = arith.addf %23, %25 : vector<128x128xf32>
      %cst_21 = arith.constant 5.000000e-01 : f32
      %27 = vector.broadcast %cst_21 : f32 to vector<128x128xf32>
      %28 = arith.mulf %27, %26 : vector<128x128xf32>
      %cst_22 = arith.constant 0.707106769 : f32
      %29 = vector.broadcast %cst_22 : f32 to vector<128x128xf32>
      %30 = arith.mulf %26, %29 : vector<128x128xf32>
      %31 = math.erf %30 : vector<128x128xf32>
      %cst_23 = arith.constant 1.000000e+00 : f32
      %32 = vector.broadcast %cst_23 : f32 to vector<128x128xf32>
      %33 = arith.addf %32, %31 : vector<128x128xf32>
      %34 = arith.mulf %28, %33 : vector<128x128xf32>
      %35 = arith.truncf %34 : vector<128x128xf32> to vector<128x128xbf16>
      %c0_24 = arith.constant 0 : index
      %c0_25 = arith.constant 0 : index
      %36 = vector.load %arg11[%c0_24, %c0_25] : memref<128x128xbf16, #tpu.memory_space<vmem>>, vector<128x128xbf16>
      tpu.vector_store %arg11[%c0_24, %c0_25], %35 {strides = array<i32>} : memref<128x128xbf16, #tpu.memory_space<vmem>>, vector<128x128xbf16>,
    } else {
    }
    %c0 = arith.constant 0 : index
    %c0_1 = arith.constant 0 : index
    %3 = vector.load %arg11[%c0, %c0_1] : memref<128x128xbf16, #tpu.memory_space<vmem>>, vector<128x128xbf16>
    %c0_2 = arith.constant 0 : index
    %c0_3 = arith.constant 0 : index
    %4 = vector.load %arg7[%c0_2, %c0_3] : memref<128x128xf32, #tpu.memory_space<vmem>>, vector<128x128xf32>
    %5 = arith.truncf %4 : vector<128x128xf32> to vector<128x128xbf16>
    %cst = arith.constant dense<0.000000e+00> : vector<128x128xf32>
    %6 = tpu.matmul %3, %5, %cst {dimension_numbers = #tpu.dot_dimension_numbers<[1], [0], [0], [1], [0, 0, 1, 1], [], []>} : vector<128x128xbf16>, vector<128x128xbf16>, vector<128x128xf32> -> vector<128x128xf32>
    %c0_4 = arith.constant 0 : index
    %c0_5 = arith.constant 0 : index
    %7 = vector.load %arg8[%c0_4, %c0_5] : memref<1x128xf32, #tpu.memory_space<vmem>>, vector<1x128xf32>
    %8 = vector.broadcast %7 : vector<1x128xf32> to vector<128x128xf32>
    %9 = arith.addf %6, %8 : vector<128x128xf32>
    %c0_6 = arith.constant 0 : index
    %c0_7 = arith.constant 0 : index
    %10 = vector.load %arg9[%c0_6, %c0_7] : memref<128x128xf32, #tpu.memory_space<vmem>>, vector<128x128xf32>
    %11 = arith.addf %9, %10 : vector<128x128xf32>
    %c0_8 = arith.constant 0 : index
    %c0_9 = arith.constant 0 : index
    %12 = vector.load %arg10[%c0_8, %c0_9] : memref<128x128xf32, #tpu.memory_space<vmem>>, vector<128x128xf32>
    tpu.vector_store %arg10[%c0_8, %c0_9], %11 {strides = array<i32>} : memref<128x128xf32, #tpu.memory_space<vmem>>, vector<128x128xf32>,
    return
  }
  func.func @transform_0(%arg0: i32, %arg1: i32) -> (i32, i32) {
    %c0_i32 = arith.constant 0 : i32
    %c0_i32_0 = arith.constant 0 : i32
    return %arg0, %c0_i32 : i32, i32
  }
  func.func @transform_1(%arg0: i32, %arg1: i32) -> (i32, i32) {
    %c0_i32 = arith.constant 0 : i32
    %c0_i32_0 = arith.constant 0 : i32
    return %arg0, %c0_i32 : i32, i32
  }
  func.func @transform_2(%arg0: i32, %arg1: i32) -> (i32, i32) {
    %c0_i32 = arith.constant 0 : i32
    %c0_i32_0 = arith.constant 0 : i32
    return %arg0, %c0_i32 : i32, i32
  }
  func.func @transform_3(%arg0: i32, %arg1: i32) -> (i32, i32) {
    %c0_i32 = arith.constant 0 : i32
    %c0_i32_0 = arith.constant 0 : i32
    %c0_i32_1 = arith.constant 0 : i32
    return %c0_i32, %c0_i32_0 : i32, i32
  }
  func.func @transform_4(%arg0: i32, %arg1: i32) -> (i32, i32) {
    %c0_i32 = arith.constant 0 : i32
    %c0_i32_0 = arith.constant 0 : i32
    %c0_i32_1 = arith.constant 0 : i32
    return %c0_i32, %c0_i32_0 : i32, i32
  }
  func.func @transform_5(%arg0: i32, %arg1: i32) -> (i32, i32) {
    %c0_i32 = arith.constant 0 : i32
    %c0_i32_0 = arith.constant 0 : i32
    return %c0_i32, %arg1 : i32, i32
  }
  func.func @transform_6(%arg0: i32, %arg1: i32) -> (i32, i32) {
    %c0_i32 = arith.constant 0 : i32
    %c0_i32_0 = arith.constant 0 : i32
    return %c0_i32, %arg1 : i32, i32
  }
  func.func @transform_7(%arg0: i32, %arg1: i32) -> (i32, i32) {
    %c0_i32 = arith.constant 0 : i32
    return %arg0, %arg1 : i32, i32
  }
  func.func @transform_8(%arg0: i32, %arg1: i32) -> (i32, i32) {
    %c0_i32 = arith.constant 0 : i32
    return %arg0, %arg1 : i32, i32
  }
}

module attributes {stable_mosaic.version = 11 : i64} {
  func.func @_linear_kernel(%arg0: i32, %arg1: i32, %arg2: i32, %arg3: memref<32x256xf32, #tpu.memory_space<vmem>>, %arg4: memref<256x128xf32, #tpu.memory_space<vmem>>, %arg5: memref<1x128xf32, #tpu.memory_space<vmem>>, %arg6: memref<32x1xf32, #tpu.memory_space<vmem>>, %arg7: memref<32x1xf32, #tpu.memory_space<vmem>>, %arg8: memref<32x128xf32, #tpu.memory_space<vmem>>, %arg9: memref<32x128xf32, #tpu.memory_space<vmem>>) attributes {dimension_semantics = [#tpu.dimension_semantics<parallel>, #tpu.dimension_semantics<parallel>, #tpu.dimension_semantics<arbitrary>], iteration_bounds = array<i64: 1, 1, 1>, scalar_prefetch = 0 : i64, scratch_operands = 1 : i64, tpu.core_type = #tpu.core_type<tc>, window_params = [{transform_indices = @transform_0, window_bounds = array<i64: 32, 256>}, {transform_indices = @transform_1, window_bounds = array<i64: 256, 128>}, {transform_indices = @transform_2, window_bounds = array<i64: 1, 128>}, {transform_indices = @transform_3, window_bounds = array<i64: 32, 1>}, {transform_indices = @transform_4, window_bounds = array<i64: 32, 1>}, {transform_indices = @transform_5, window_bounds = array<i64: 32, 128>}]} {
    %c0_i32 = arith.constant 0 : i32
    %0 = arith.cmpi eq, %arg2, %c0_i32 : i32
    %1 = arith.extui %0 : i1 to i32
    %c0_i32_0 = arith.constant 0 : i32
    %2 = arith.cmpi ne, %1, %c0_i32_0 : i32
    scf.if %2 {
      %cst_14 = arith.constant 0.000000e+00 : f32
      %20 = vector.broadcast %cst_14 : f32 to vector<32x128xf32>
      %c0_15 = arith.constant 0 : index
      %c0_16 = arith.constant 0 : index
      %21 = vector.load %arg9[%c0_15, %c0_16] : memref<32x128xf32, #tpu.memory_space<vmem>>, vector<32x128xf32>
      tpu.vector_store %arg9[%c0_15, %c0_16], %20 {strides = array<i32>} : memref<32x128xf32, #tpu.memory_space<vmem>>, vector<32x128xf32>,
    } else {
    }
    %c0 = arith.constant 0 : index
    %c0_1 = arith.constant 0 : index
    %3 = vector.load %arg3[%c0, %c0_1] : memref<32x256xf32, #tpu.memory_space<vmem>>, vector<32x256xf32>
    %c0_2 = arith.constant 0 : index
    %c0_3 = arith.constant 0 : index
    %4 = vector.load %arg6[%c0_2, %c0_3] : memref<32x1xf32, #tpu.memory_space<vmem>>, vector<32x1xf32>
    %5 = vector.broadcast %4 : vector<32x1xf32> to vector<32x256xf32>
    %6 = arith.mulf %3, %5 : vector<32x256xf32>
    %c0_4 = arith.constant 0 : index
    %c0_5 = arith.constant 0 : index
    %7 = vector.load %arg7[%c0_4, %c0_5] : memref<32x1xf32, #tpu.memory_space<vmem>>, vector<32x1xf32>
    %8 = vector.broadcast %7 : vector<32x1xf32> to vector<32x256xf32>
    %9 = arith.addf %6, %8 : vector<32x256xf32>
    %c0_6 = arith.constant 0 : index
    %c0_7 = arith.constant 0 : index
    %10 = vector.load %arg9[%c0_6, %c0_7] : memref<32x128xf32, #tpu.memory_space<vmem>>, vector<32x128xf32>
    %11 = arith.truncf %9 : vector<32x256xf32> to vector<32x256xbf16>
    %c0_8 = arith.constant 0 : index
    %c0_9 = arith.constant 0 : index
    %12 = vector.load %arg4[%c0_8, %c0_9] : memref<256x128xf32, #tpu.memory_space<vmem>>, vector<256x128xf32>
    %13 = arith.truncf %12 : vector<256x128xf32> to vector<256x128xbf16>
    %cst = arith.constant dense<0.000000e+00> : vector<32x128xf32>
    %14 = tpu.matmul %11, %13, %cst {dimension_numbers = #tpu.dot_dimension_numbers<[1], [0], [0], [1], [0, 0, 1, 1], [], []>} : vector<32x256xbf16>, vector<256x128xbf16>, vector<32x128xf32> -> vector<32x128xf32>
    %15 = arith.addf %10, %14 : vector<32x128xf32>
    %c0_10 = arith.constant 0 : index
    %c0_11 = arith.constant 0 : index
    %16 = vector.load %arg9[%c0_10, %c0_11] : memref<32x128xf32, #tpu.memory_space<vmem>>, vector<32x128xf32>
    tpu.vector_store %arg9[%c0_10, %c0_11], %15 {strides = array<i32>} : memref<32x128xf32, #tpu.memory_space<vmem>>, vector<32x128xf32>,
    %c0_i32_12 = arith.constant 0 : i32
    %17 = arith.cmpi eq, %arg2, %c0_i32_12 : i32
    %18 = arith.extui %17 : i1 to i32
    %c0_i32_13 = arith.constant 0 : i32
    %19 = arith.cmpi ne, %18, %c0_i32_13 : i32
    scf.if %19 {
      %c0_14 = arith.constant 0 : index
      %c0_15 = arith.constant 0 : index
      %20 = vector.load %arg9[%c0_14, %c0_15] : memref<32x128xf32, #tpu.memory_space<vmem>>, vector<32x128xf32>
      %c0_16 = arith.constant 0 : index
      %c0_17 = arith.constant 0 : index
      %21 = vector.load %arg5[%c0_16, %c0_17] : memref<1x128xf32, #tpu.memory_space<vmem>>, vector<1x128xf32>
      %22 = vector.broadcast %21 : vector<1x128xf32> to vector<32x128xf32>
      %23 = arith.addf %20, %22 : vector<32x128xf32>
      %c0_18 = arith.constant 0 : index
      %c0_19 = arith.constant 0 : index
      %24 = vector.load %arg8[%c0_18, %c0_19] : memref<32x128xf32, #tpu.memory_space<vmem>>, vector<32x128xf32>
      tpu.vector_store %arg8[%c0_18, %c0_19], %23 {strides = array<i32>} : memref<32x128xf32, #tpu.memory_space<vmem>>, vector<32x128xf32>,
    } else {
    }
    return
  }
  func.func @transform_0(%arg0: i32, %arg1: i32, %arg2: i32) -> (i32, i32) {
    %c0_i32 = arith.constant 0 : i32
    return %arg0, %arg2 : i32, i32
  }
  func.func @transform_1(%arg0: i32, %arg1: i32, %arg2: i32) -> (i32, i32) {
    %c0_i32 = arith.constant 0 : i32
    return %arg2, %arg1 : i32, i32
  }
  func.func @transform_2(%arg0: i32, %arg1: i32, %arg2: i32) -> (i32, i32) {
    %c0_i32 = arith.constant 0 : i32
    %c0_i32_0 = arith.constant 0 : i32
    return %c0_i32, %arg1 : i32, i32
  }
  func.func @transform_3(%arg0: i32, %arg1: i32, %arg2: i32) -> (i32, i32) {
    %c0_i32 = arith.constant 0 : i32
    %c0_i32_0 = arith.constant 0 : i32
    return %arg0, %c0_i32 : i32, i32
  }
  func.func @transform_4(%arg0: i32, %arg1: i32, %arg2: i32) -> (i32, i32) {
    %c0_i32 = arith.constant 0 : i32
    %c0_i32_0 = arith.constant 0 : i32
    return %arg0, %c0_i32 : i32, i32
  }
  func.func @transform_5(%arg0: i32, %arg1: i32, %arg2: i32) -> (i32, i32) {
    %c0_i32 = arith.constant 0 : i32
    return %arg0, %arg1 : i32, i32
  }
}

module attributes {stable_mosaic.version = 11 : i64} {
  func.func @_mlp_kernel(%arg0: i32, %arg1: i32, %arg2: memref<32x128xf32, #tpu.memory_space<vmem>>, %arg3: memref<32x1xf32, #tpu.memory_space<vmem>>, %arg4: memref<32x1xf32, #tpu.memory_space<vmem>>, %arg5: memref<128x128xf32, #tpu.memory_space<vmem>>, %arg6: memref<1x128xf32, #tpu.memory_space<vmem>>, %arg7: memref<128x128xf32, #tpu.memory_space<vmem>>, %arg8: memref<1x128xf32, #tpu.memory_space<vmem>>, %arg9: memref<32x128xf32, #tpu.memory_space<vmem>>, %arg10: memref<32x128xf32, #tpu.memory_space<vmem>>, %arg11: memref<32x128xbf16, #tpu.memory_space<vmem>>) attributes {dimension_semantics = [#tpu.dimension_semantics<parallel>, #tpu.dimension_semantics<arbitrary>], iteration_bounds = array<i64: 1, 1>, scalar_prefetch = 0 : i64, scratch_operands = 1 : i64, tpu.core_type = #tpu.core_type<tc>, window_params = [{transform_indices = @transform_0, window_bounds = array<i64: 32, 128>}, {transform_indices = @transform_1, window_bounds = array<i64: 32, 1>}, {transform_indices = @transform_2, window_bounds = array<i64: 32, 1>}, {pipeline_mode = #tpu.pipeline_mode<synchronous>, transform_indices = @transform_3, window_bounds = array<i64: 128, 128>}, {pipeline_mode = #tpu.pipeline_mode<synchronous>, transform_indices = @transform_4, window_bounds = array<i64: 1, 128>}, {transform_indices = @transform_5, window_bounds = array<i64: 128, 128>}, {transform_indices = @transform_6, window_bounds = array<i64: 1, 128>}, {transform_indices = @transform_7, window_bounds = array<i64: 32, 128>}, {transform_indices = @transform_8, window_bounds = array<i64: 32, 128>}]} {
    %c0_i32 = arith.constant 0 : i32
    %0 = arith.cmpi eq, %arg1, %c0_i32 : i32
    %1 = arith.extui %0 : i1 to i32
    %c0_i32_0 = arith.constant 0 : i32
    %2 = arith.cmpi ne, %1, %c0_i32_0 : i32
    scf.if %2 {
      %c0_10 = arith.constant 0 : index
      %c0_11 = arith.constant 0 : index
      %13 = vector.load %arg2[%c0_10, %c0_11] : memref<32x128xf32, #tpu.memory_space<vmem>>, vector<32x128xf32>
      %c0_12 = arith.constant 0 : index
      %c0_13 = arith.constant 0 : index
      %14 = vector.load %arg3[%c0_12, %c0_13] : memref<32x1xf32, #tpu.memory_space<vmem>>, vector<32x1xf32>
      %15 = vector.broadcast %14 : vector<32x1xf32> to vector<32x128xf32>
      %16 = arith.mulf %13, %15 : vector<32x128xf32>
      %c0_14 = arith.constant 0 : index
      %c0_15 = arith.constant 0 : index
      %17 = vector.load %arg4[%c0_14, %c0_15] : memref<32x1xf32, #tpu.memory_space<vmem>>, vector<32x1xf32>
      %18 = vector.broadcast %17 : vector<32x1xf32> to vector<32x128xf32>
      %19 = arith.addf %16, %18 : vector<32x128xf32>
      %20 = arith.truncf %19 : vector<32x128xf32> to vector<32x128xbf16>
      %c0_16 = arith.constant 0 : index
      %c0_17 = arith.constant 0 : index
      %21 = vector.load %arg5[%c0_16, %c0_17] : memref<128x128xf32, #tpu.memory_space<vmem>>, vector<128x128xf32>
      %22 = arith.truncf %21 : vector<128x128xf32> to vector<128x128xbf16>
      %cst_18 = arith.constant dense<0.000000e+00> : vector<32x128xf32>
      %23 = tpu.matmul %20, %22, %cst_18 {dimension_numbers = #tpu.dot_dimension_numbers<[1], [0], [0], [1], [0, 0, 1, 1], [], []>} : vector<32x128xbf16>, vector<128x128xbf16>, vector<32x128xf32> -> vector<32x128xf32>
      %c0_19 = arith.constant 0 : index
      %c0_20 = arith.constant 0 : index
      %24 = vector.load %arg6[%c0_19, %c0_20] : memref<1x128xf32, #tpu.memory_space<vmem>>, vector<1x128xf32>
      %25 = vector.broadcast %24 : vector<1x128xf32> to vector<32x128xf32>
      %26 = arith.addf %23, %25 : vector<32x128xf32>
      %cst_21 = arith.constant 5.000000e-01 : f32
      %27 = vector.broadcast %cst_21 : f32 to vector<32x128xf32>
      %28 = arith.mulf %27, %26 : vector<32x128xf32>
      %cst_22 = arith.constant 0.707106769 : f32
      %29 = vector.broadcast %cst_22 : f32 to vector<32x128xf32>
      %30 = arith.mulf %26, %29 : vector<32x128xf32>
      %31 = math.erf %30 : vector<32x128xf32>
      %cst_23 = arith.constant 1.000000e+00 : f32
      %32 = vector.broadcast %cst_23 : f32 to vector<32x128xf32>
      %33 = arith.addf %32, %31 : vector<32x128xf32>
      %34 = arith.mulf %28, %33 : vector<32x128xf32>
      %35 = arith.truncf %34 : vector<32x128xf32> to vector<32x128xbf16>
      %c0_24 = arith.constant 0 : index
      %c0_25 = arith.constant 0 : index
      %36 = vector.load %arg11[%c0_24, %c0_25] : memref<32x128xbf16, #tpu.memory_space<vmem>>, vector<32x128xbf16>
      tpu.vector_store %arg11[%c0_24, %c0_25], %35 {strides = array<i32>} : memref<32x128xbf16, #tpu.memory_space<vmem>>, vector<32x128xbf16>,
    } else {
    }
    %c0 = arith.constant 0 : index
    %c0_1 = arith.constant 0 : index
    %3 = vector.load %arg11[%c0, %c0_1] : memref<32x128xbf16, #tpu.memory_space<vmem>>, vector<32x128xbf16>
    %c0_2 = arith.constant 0 : index
    %c0_3 = arith.constant 0 : index
    %4 = vector.load %arg7[%c0_2, %c0_3] : memref<128x128xf32, #tpu.memory_space<vmem>>, vector<128x128xf32>
    %5 = arith.truncf %4 : vector<128x128xf32> to vector<128x128xbf16>
    %cst = arith.constant dense<0.000000e+00> : vector<32x128xf32>
    %6 = tpu.matmul %3, %5, %cst {dimension_numbers = #tpu.dot_dimension_numbers<[1], [0], [0], [1], [0, 0, 1, 1], [], []>} : vector<32x128xbf16>, vector<128x128xbf16>, vector<32x128xf32> -> vector<32x128xf32>
    %c0_4 = arith.constant 0 : index
    %c0_5 = arith.constant 0 : index
    %7 = vector.load %arg8[%c0_4, %c0_5] : memref<1x128xf32, #tpu.memory_space<vmem>>, vector<1x128xf32>
    %8 = vector.broadcast %7 : vector<1x128xf32> to vector<32x128xf32>
    %9 = arith.addf %6, %8 : vector<32x128xf32>
    %c0_6 = arith.constant 0 : index
    %c0_7 = arith.constant 0 : index
    %10 = vector.load %arg9[%c0_6, %c0_7] : memref<32x128xf32, #tpu.memory_space<vmem>>, vector<32x128xf32>
    %11 = arith.addf %9, %10 : vector<32x128xf32>
    %c0_8 = arith.constant 0 : index
    %c0_9 = arith.constant 0 : index
    %12 = vector.load %arg10[%c0_8, %c0_9] : memref<32x128xf32, #tpu.memory_space<vmem>>, vector<32x128xf32>
    tpu.vector_store %arg10[%c0_8, %c0_9], %11 {strides = array<i32>} : memref<32x128xf32, #tpu.memory_space<vmem>>, vector<32x128xf32>,
    return
  }
  func.func @transform_0(%arg0: i32, %arg1: i32) -> (i32, i32) {
    %c0_i32 = arith.constant 0 : i32
    %c0_i32_0 = arith.constant 0 : i32
    return %arg0, %c0_i32 : i32, i32
  }
  func.func @transform_1(%arg0: i32, %arg1: i32) -> (i32, i32) {
    %c0_i32 = arith.constant 0 : i32
    %c0_i32_0 = arith.constant 0 : i32
    return %arg0, %c0_i32 : i32, i32
  }
  func.func @transform_2(%arg0: i32, %arg1: i32) -> (i32, i32) {
    %c0_i32 = arith.constant 0 : i32
    %c0_i32_0 = arith.constant 0 : i32
    return %arg0, %c0_i32 : i32, i32
  }
  func.func @transform_3(%arg0: i32, %arg1: i32) -> (i32, i32) {
    %c0_i32 = arith.constant 0 : i32
    %c0_i32_0 = arith.constant 0 : i32
    %c0_i32_1 = arith.constant 0 : i32
    return %c0_i32, %c0_i32_0 : i32, i32
  }
  func.func @transform_4(%arg0: i32, %arg1: i32) -> (i32, i32) {
    %c0_i32 = arith.constant 0 : i32
    %c0_i32_0 = arith.constant 0 : i32
    %c0_i32_1 = arith.constant 0 : i32
    return %c0_i32, %c0_i32_0 : i32, i32
  }
  func.func @transform_5(%arg0: i32, %arg1: i32) -> (i32, i32) {
    %c0_i32 = arith.constant 0 : i32
    %c0_i32_0 = arith.constant 0 : i32
    return %c0_i32, %arg1 : i32, i32
  }
  func.func @transform_6(%arg0: i32, %arg1: i32) -> (i32, i32) {
    %c0_i32 = arith.constant 0 : i32
    %c0_i32_0 = arith.constant 0 : i32
    return %c0_i32, %arg1 : i32, i32
  }
  func.func @transform_7(%arg0: i32, %arg1: i32) -> (i32, i32) {
    %c0_i32 = arith.constant 0 : i32
    return %arg0, %arg1 : i32, i32
  }
  func.func @transform_8(%arg0: i32, %arg1: i32) -> (i32, i32) {
    %c0_i32 = arith.constant 0 : i32
    return %arg0, %arg1 : i32, i32
  }
}

module attributes {stable_mosaic.version = 11 : i64} {
  func.func @_flash_attn_kernel(%arg0: i32, %arg1: i32, %arg2: i32, %arg3: memref<1x16x16xf32, #tpu.memory_space<vmem>>, %arg4: memref<1x16x16xf32, #tpu.memory_space<vmem>>, %arg5: memref<1x16x16xf32, #tpu.memory_space<vmem>>, %arg6: memref<1x16x16xf32, #tpu.memory_space<vmem>>, %arg7: memref<16x1xf32, #tpu.memory_space<vmem>>, %arg8: memref<16x1xf32, #tpu.memory_space<vmem>>, %arg9: memref<16x16xf32, #tpu.memory_space<vmem>>) attributes {dimension_semantics = [#tpu.dimension_semantics<parallel>, #tpu.dimension_semantics<parallel>, #tpu.dimension_semantics<arbitrary>], iteration_bounds = array<i64: 2, 1, 1>, scalar_prefetch = 0 : i64, scratch_operands = 3 : i64, tpu.core_type = #tpu.core_type<tc>, window_params = [{transform_indices = @transform_0, window_bounds = array<i64: 1, 16, 16>}, {transform_indices = @transform_1, window_bounds = array<i64: 1, 16, 16>}, {transform_indices = @transform_2, window_bounds = array<i64: 1, 16, 16>}, {transform_indices = @transform_3, window_bounds = array<i64: 1, 16, 16>}]} {
    %c0_i32 = arith.constant 0 : i32
    %0 = arith.cmpi eq, %arg2, %c0_i32 : i32
    %1 = arith.extui %0 : i1 to i32
    %c0_i32_0 = arith.constant 0 : i32
    %2 = arith.cmpi ne, %1, %c0_i32_0 : i32
    scf.if %2 {
      %cst_27 = arith.constant 0xFF800000 : f32
      %41 = vector.broadcast %cst_27 : f32 to vector<16x1xf32>
      %c0_28 = arith.constant 0 : index
      %c0_29 = arith.constant 0 : index
      %42 = vector.load %arg7[%c0_28, %c0_29] : memref<16x1xf32, #tpu.memory_space<vmem>>, vector<16x1xf32>
      tpu.vector_store %arg7[%c0_28, %c0_29], %41 {strides = array<i32>} : memref<16x1xf32, #tpu.memory_space<vmem>>, vector<16x1xf32>,
      %cst_30 = arith.constant 0.000000e+00 : f32
      %43 = vector.broadcast %cst_30 : f32 to vector<16x1xf32>
      %c0_31 = arith.constant 0 : index
      %c0_32 = arith.constant 0 : index
      %44 = vector.load %arg8[%c0_31, %c0_32] : memref<16x1xf32, #tpu.memory_space<vmem>>, vector<16x1xf32>
      tpu.vector_store %arg8[%c0_31, %c0_32], %43 {strides = array<i32>} : memref<16x1xf32, #tpu.memory_space<vmem>>, vector<16x1xf32>,
      %cst_33 = arith.constant 0.000000e+00 : f32
      %45 = vector.broadcast %cst_33 : f32 to vector<16x16xf32>
      %c0_34 = arith.constant 0 : index
      %c0_35 = arith.constant 0 : index
      %46 = vector.load %arg9[%c0_34, %c0_35] : memref<16x16xf32, #tpu.memory_space<vmem>>, vector<16x16xf32>
      tpu.vector_store %arg9[%c0_34, %c0_35], %45 {strides = array<i32>} : memref<16x16xf32, #tpu.memory_space<vmem>>, vector<16x16xf32>,
    } else {
    }
    %c0 = arith.constant 0 : index
    %c0_1 = arith.constant 0 : index
    %c0_2 = arith.constant 0 : index
    %3 = vector.load %arg3[%c0, %c0_1, %c0_2] : memref<1x16x16xf32, #tpu.memory_space<vmem>>, vector<1x16x16xf32>
    %4 = vector.shape_cast %3 : vector<1x16x16xf32> to vector<16x16xf32>
    %5 = arith.truncf %4 : vector<16x16xf32> to vector<16x16xbf16>
    %c0_3 = arith.constant 0 : index
    %c0_4 = arith.constant 0 : index
    %c0_5 = arith.constant 0 : index
    %6 = vector.load %arg4[%c0_3, %c0_4, %c0_5] : memref<1x16x16xf32, #tpu.memory_space<vmem>>, vector<1x16x16xf32>
    %7 = vector.shape_cast %6 : vector<1x16x16xf32> to vector<16x16xf32>
    %8 = arith.truncf %7 : vector<16x16xf32> to vector<16x16xbf16>
    %c0_6 = arith.constant 0 : index
    %c0_7 = arith.constant 0 : index
    %c0_8 = arith.constant 0 : index
    %9 = vector.load %arg5[%c0_6, %c0_7, %c0_8] : memref<1x16x16xf32, #tpu.memory_space<vmem>>, vector<1x16x16xf32>
    %10 = vector.shape_cast %9 : vector<1x16x16xf32> to vector<16x16xf32>
    %11 = arith.truncf %10 : vector<16x16xf32> to vector<16x16xbf16>
    %cst = arith.constant dense<0.000000e+00> : vector<16x16xf32>
    %12 = tpu.matmul %5, %8, %cst {dimension_numbers = #tpu.dot_dimension_numbers<[1], [1], [0], [0], [0, 0, 1, 0], [], []>} : vector<16x16xbf16>, vector<16x16xbf16>, vector<16x16xf32> -> vector<16x16xf32>
    %cst_9 = arith.constant 0.0833333358 : f32
    %13 = vector.broadcast %cst_9 : f32 to vector<16x16xf32>
    %14 = arith.mulf %12, %13 : vector<16x16xf32>
    %c0_10 = arith.constant 0 : index
    %c0_11 = arith.constant 0 : index
    %15 = vector.load %arg7[%c0_10, %c0_11] : memref<16x1xf32, #tpu.memory_space<vmem>>, vector<16x1xf32>
    %cst_12 = arith.constant dense<0xFF800000> : vector<16xf32>
    %16 = vector.multi_reduction <maximumf>, %14, %cst_12 [1] : vector<16x16xf32> to vector<16xf32>
    %17 = vector.shape_cast %16 : vector<16xf32> to vector<16x1xf32>
    %18 = arith.maximumf %15, %17 : vector<16x1xf32>
    %19 = arith.subf %15, %18 : vector<16x1xf32>
    %20 = math.exp %19 : vector<16x1xf32>
    %21 = vector.broadcast %18 : vector<16x1xf32> to vector<16x16xf32>
    %22 = arith.subf %14, %21 : vector<16x16xf32>
    %23 = math.exp %22 : vector<16x16xf32>
    %c0_13 = arith.constant 0 : index
    %c0_14 = arith.constant 0 : index
    %24 = vector.load %arg8[%c0_13, %c0_14] : memref<16x1xf32, #tpu.memory_space<vmem>>, vector<16x1xf32>
    %25 = arith.mulf %20, %24 : vector<16x1xf32>
    %cst_15 = arith.constant dense<0.000000e+00> : vector<16xf32>
    %26 = vector.multi_reduction <add>, %23, %cst_15 [1] : vector<16x16xf32> to vector<16xf32>
    %27 = vector.shape_cast %26 : vector<16xf32> to vector<16x1xf32>
    %28 = arith.addf %25, %27 : vector<16x1xf32>
    %c0_16 = arith.constant 0 : index
    %c0_17 = arith.constant 0 : index
    %29 = vector.load %arg8[%c0_16, %c0_17] : memref<16x1xf32, #tpu.memory_space<vmem>>, vector<16x1xf32>
    tpu.vector_store %arg8[%c0_16, %c0_17], %28 {strides = array<i32>} : memref<16x1xf32, #tpu.memory_space<vmem>>, vector<16x1xf32>,
    %c0_18 = arith.constant 0 : index
    %c0_19 = arith.constant 0 : index
    %30 = vector.load %arg9[%c0_18, %c0_19] : memref<16x16xf32, #tpu.memory_space<vmem>>, vector<16x16xf32>
    %31 = vector.broadcast %20 : vector<16x1xf32> to vector<16x16xf32>
    %32 = arith.mulf %31, %30 : vector<16x16xf32>
    %33 = arith.truncf %23 : vector<16x16xf32> to vector<16x16xbf16>
    %cst_20 = arith.constant dense<0.000000e+00> : vector<16x16xf32>
    %34 = tpu.matmul %33, %11, %cst_20 {dimension_numbers = #tpu.dot_dimension_numbers<[1], [0], [0], [1], [0, 0, 1, 1], [], []>} : vector<16x16xbf16>, vector<16x16xbf16>, vector<16x16xf32> -> vector<16x16xf32>
    %35 = arith.addf %32, %34 : vector<16x16xf32>
    %c0_21 = arith.constant 0 : index
    %c0_22 = arith.constant 0 : index
    %36 = vector.load %arg9[%c0_21, %c0_22] : memref<16x16xf32, #tpu.memory_space<vmem>>, vector<16x16xf32>
    tpu.vector_store %arg9[%c0_21, %c0_22], %35 {strides = array<i32>} : memref<16x16xf32, #tpu.memory_space<vmem>>, vector<16x16xf32>,
    %c0_23 = arith.constant 0 : index
    %c0_24 = arith.constant 0 : index
    %37 = vector.load %arg7[%c0_23, %c0_24] : memref<16x1xf32, #tpu.memory_space<vmem>>, vector<16x1xf32>
    tpu.vector_store %arg7[%c0_23, %c0_24], %18 {strides = array<i32>} : memref<16x1xf32, #tpu.memory_space<vmem>>, vector<16x1xf32>,
    %c0_i32_25 = arith.constant 0 : i32
    %38 = arith.cmpi eq, %arg2, %c0_i32_25 : i32
    %39 = arith.extui %38 : i1 to i32
    %c0_i32_26 = arith.constant 0 : i32
    %40 = arith.cmpi ne, %39, %c0_i32_26 : i32
    scf.if %40 {
      %c0_27 = arith.constant 0 : index
      %c0_28 = arith.constant 0 : index
      %41 = vector.load %arg9[%c0_27, %c0_28] : memref<16x16xf32, #tpu.memory_space<vmem>>, vector<16x16xf32>
      %c0_29 = arith.constant 0 : index
      %c0_30 = arith.constant 0 : index
      %42 = vector.load %arg8[%c0_29, %c0_30] : memref<16x1xf32, #tpu.memory_space<vmem>>, vector<16x1xf32>
      %43 = tpu.reciprocal %42 {approx = true} : vector<16x1xf32> -> vector<16x1xf32>
      %44 = vector.broadcast %43 : vector<16x1xf32> to vector<16x16xf32>
      %45 = arith.mulf %41, %44 : vector<16x16xf32>
      %c0_31 = arith.constant 0 : index
      %c0_32 = arith.constant 0 : index
      %c0_33 = arith.constant 0 : index
      %46 = vector.load %arg6[%c0_31, %c0_32, %c0_33] : memref<1x16x16xf32, #tpu.memory_space<vmem>>, vector<1x16x16xf32>
      %47 = vector.shape_cast %46 : vector<1x16x16xf32> to vector<16x16xf32>
      %48 = vector.shape_cast %45 : vector<16x16xf32> to vector<1x16x16xf32>
      tpu.vector_store %arg6[%c0_31, %c0_32, %c0_33], %48 {strides = array<i32>} : memref<1x16x16xf32, #tpu.memory_space<vmem>>, vector<1x16x16xf32>,
    } else {
    }
    return
  }
  func.func @transform_0(%arg0: i32, %arg1: i32, %arg2: i32) -> (i32, i32, i32) {
    %c0_i32 = arith.constant 0 : i32
    %c0_i32_0 = arith.constant 0 : i32
    return %arg0, %arg1, %c0_i32 : i32, i32, i32
  }
  func.func @transform_1(%arg0: i32, %arg1: i32, %arg2: i32) -> (i32, i32, i32) {
    %c0_i32 = arith.constant 0 : i32
    %c0_i32_0 = arith.constant 0 : i32
    return %arg0, %arg2, %c0_i32 : i32, i32, i32
  }
  func.func @transform_2(%arg0: i32, %arg1: i32, %arg2: i32) -> (i32, i32, i32) {
    %c0_i32 = arith.constant 0 : i32
    %c0_i32_0 = arith.constant 0 : i32
    return %arg0, %arg2, %c0_i32 : i32, i32, i32
  }
  func.func @transform_3(%arg0: i32, %arg1: i32, %arg2: i32) -> (i32, i32, i32) {
    %c0_i32 = arith.constant 0 : i32
    %c0_i32_0 = arith.constant 0 : i32
    return %arg0, %arg1, %c0_i32 : i32, i32, i32
  }
}

module attributes {stable_mosaic.version = 11 : i64} {
  func.func @_linear_kernel(%arg0: i32, %arg1: i32, %arg2: i32, %arg3: memref<32x128xf32, #tpu.memory_space<vmem>>, %arg4: memref<128x128xf32, #tpu.memory_space<vmem>>, %arg5: memref<1x128xf32, #tpu.memory_space<vmem>>, %arg6: memref<32x128xf32, #tpu.memory_space<vmem>>, %arg7: memref<32x128xf32, #tpu.memory_space<vmem>>, %arg8: memref<32x128xf32, #tpu.memory_space<vmem>>) attributes {dimension_semantics = [#tpu.dimension_semantics<parallel>, #tpu.dimension_semantics<parallel>, #tpu.dimension_semantics<arbitrary>], iteration_bounds = array<i64: 1, 1, 1>, scalar_prefetch = 0 : i64, scratch_operands = 1 : i64, tpu.core_type = #tpu.core_type<tc>, window_params = [{transform_indices = @transform_0, window_bounds = array<i64: 32, 128>}, {transform_indices = @transform_1, window_bounds = array<i64: 128, 128>}, {transform_indices = @transform_2, window_bounds = array<i64: 1, 128>}, {transform_indices = @transform_3, window_bounds = array<i64: 32, 128>}, {transform_indices = @transform_4, window_bounds = array<i64: 32, 128>}]} {
    %c0_i32 = arith.constant 0 : i32
    %0 = arith.cmpi eq, %arg2, %c0_i32 : i32
    %1 = arith.extui %0 : i1 to i32
    %c0_i32_0 = arith.constant 0 : i32
    %2 = arith.cmpi ne, %1, %c0_i32_0 : i32
    scf.if %2 {
      %cst_10 = arith.constant 0.000000e+00 : f32
      %14 = vector.broadcast %cst_10 : f32 to vector<32x128xf32>
      %c0_11 = arith.constant 0 : index
      %c0_12 = arith.constant 0 : index
      %15 = vector.load %arg8[%c0_11, %c0_12] : memref<32x128xf32, #tpu.memory_space<vmem>>, vector<32x128xf32>
      tpu.vector_store %arg8[%c0_11, %c0_12], %14 {strides = array<i32>} : memref<32x128xf32, #tpu.memory_space<vmem>>, vector<32x128xf32>,
    } else {
    }
    %c0 = arith.constant 0 : index
    %c0_1 = arith.constant 0 : index
    %3 = vector.load %arg3[%c0, %c0_1] : memref<32x128xf32, #tpu.memory_space<vmem>>, vector<32x128xf32>
    %c0_2 = arith.constant 0 : index
    %c0_3 = arith.constant 0 : index
    %4 = vector.load %arg8[%c0_2, %c0_3] : memref<32x128xf32, #tpu.memory_space<vmem>>, vector<32x128xf32>
    %5 = arith.truncf %3 : vector<32x128xf32> to vector<32x128xbf16>
    %c0_4 = arith.constant 0 : index
    %c0_5 = arith.constant 0 : index
    %6 = vector.load %arg4[%c0_4, %c0_5] : memref<128x128xf32, #tpu.memory_space<vmem>>, vector<128x128xf32>
    %7 = arith.truncf %6 : vector<128x128xf32> to vector<128x128xbf16>
    %cst = arith.constant dense<0.000000e+00> : vector<32x128xf32>
    %8 = tpu.matmul %5, %7, %cst {dimension_numbers = #tpu.dot_dimension_numbers<[1], [0], [0], [1], [0, 0, 1, 1], [], []>} : vector<32x128xbf16>, vector<128x128xbf16>, vector<32x128xf32> -> vector<32x128xf32>
    %9 = arith.addf %4, %8 : vector<32x128xf32>
    %c0_6 = arith.constant 0 : index
    %c0_7 = arith.constant 0 : index
    %10 = vector.load %arg8[%c0_6, %c0_7] : memref<32x128xf32, #tpu.memory_space<vmem>>, vector<32x128xf32>
    tpu.vector_store %arg8[%c0_6, %c0_7], %9 {strides = array<i32>} : memref<32x128xf32, #tpu.memory_space<vmem>>, vector<32x128xf32>,
    %c0_i32_8 = arith.constant 0 : i32
    %11 = arith.cmpi eq, %arg2, %c0_i32_8 : i32
    %12 = arith.extui %11 : i1 to i32
    %c0_i32_9 = arith.constant 0 : i32
    %13 = arith.cmpi ne, %12, %c0_i32_9 : i32
    scf.if %13 {
      %c0_10 = arith.constant 0 : index
      %c0_11 = arith.constant 0 : index
      %14 = vector.load %arg8[%c0_10, %c0_11] : memref<32x128xf32, #tpu.memory_space<vmem>>, vector<32x128xf32>
      %c0_12 = arith.constant 0 : index
      %c0_13 = arith.constant 0 : index
      %15 = vector.load %arg5[%c0_12, %c0_13] : memref<1x128xf32, #tpu.memory_space<vmem>>, vector<1x128xf32>
      %16 = vector.broadcast %15 : vector<1x128xf32> to vector<32x128xf32>
      %17 = arith.addf %14, %16 : vector<32x128xf32>
      %c0_14 = arith.constant 0 : index
      %c0_15 = arith.constant 0 : index
      %18 = vector.load %arg6[%c0_14, %c0_15] : memref<32x128xf32, #tpu.memory_space<vmem>>, vector<32x128xf32>
      %19 = arith.addf %17, %18 : vector<32x128xf32>
      %c0_16 = arith.constant 0 : index
      %c0_17 = arith.constant 0 : index
      %20 = vector.load %arg7[%c0_16, %c0_17] : memref<32x128xf32, #tpu.memory_space<vmem>>, vector<32x128xf32>
      tpu.vector_store %arg7[%c0_16, %c0_17], %19 {strides = array<i32>} : memref<32x128xf32, #tpu.memory_space<vmem>>, vector<32x128xf32>,
    } else {
    }
    return
  }
  func.func @transform_0(%arg0: i32, %arg1: i32, %arg2: i32) -> (i32, i32) {
    %c0_i32 = arith.constant 0 : i32
    return %arg0, %arg2 : i32, i32
  }
  func.func @transform_1(%arg0: i32, %arg1: i32, %arg2: i32) -> (i32, i32) {
    %c0_i32 = arith.constant 0 : i32
    return %arg2, %arg1 : i32, i32
  }
  func.func @transform_2(%arg0: i32, %arg1: i32, %arg2: i32) -> (i32, i32) {
    %c0_i32 = arith.constant 0 : i32
    %c0_i32_0 = arith.constant 0 : i32
    return %c0_i32, %arg1 : i32, i32
  }
  func.func @transform_3(%arg0: i32, %arg1: i32, %arg2: i32) -> (i32, i32) {
    %c0_i32 = arith.constant 0 : i32
    return %arg0, %arg1 : i32, i32
  }
  func.func @transform_4(%arg0: i32, %arg1: i32, %arg2: i32) -> (i32, i32) {
    %c0_i32 = arith.constant 0 : i32
    return %arg0, %arg1 : i32, i32
  }
}

module attributes {stable_mosaic.version = 11 : i64} {
  func.func @_linear_kernel(%arg0: i32, %arg1: i32, %arg2: i32, %arg3: memref<8x256xf32, #tpu.memory_space<vmem>>, %arg4: memref<256x128xf32, #tpu.memory_space<vmem>>, %arg5: memref<1x128xf32, #tpu.memory_space<vmem>>, %arg6: memref<8x128xf32, #tpu.memory_space<vmem>>, %arg7: memref<8x128xf32, #tpu.memory_space<vmem>>, %arg8: memref<8x128xf32, #tpu.memory_space<vmem>>) attributes {dimension_semantics = [#tpu.dimension_semantics<parallel>, #tpu.dimension_semantics<parallel>, #tpu.dimension_semantics<arbitrary>], iteration_bounds = array<i64: 1, 1, 1>, scalar_prefetch = 0 : i64, scratch_operands = 1 : i64, tpu.core_type = #tpu.core_type<tc>, window_params = [{transform_indices = @transform_0, window_bounds = array<i64: 8, 256>}, {transform_indices = @transform_1, window_bounds = array<i64: 256, 128>}, {transform_indices = @transform_2, window_bounds = array<i64: 1, 128>}, {transform_indices = @transform_3, window_bounds = array<i64: 8, 128>}, {transform_indices = @transform_4, window_bounds = array<i64: 8, 128>}]} {
    %c0_i32 = arith.constant 0 : i32
    %0 = arith.cmpi eq, %arg2, %c0_i32 : i32
    %1 = arith.extui %0 : i1 to i32
    %c0_i32_0 = arith.constant 0 : i32
    %2 = arith.cmpi ne, %1, %c0_i32_0 : i32
    scf.if %2 {
      %cst_10 = arith.constant 0.000000e+00 : f32
      %14 = vector.broadcast %cst_10 : f32 to vector<8x128xf32>
      %c0_11 = arith.constant 0 : index
      %c0_12 = arith.constant 0 : index
      %15 = vector.load %arg8[%c0_11, %c0_12] : memref<8x128xf32, #tpu.memory_space<vmem>>, vector<8x128xf32>
      tpu.vector_store %arg8[%c0_11, %c0_12], %14 {strides = array<i32>} : memref<8x128xf32, #tpu.memory_space<vmem>>, vector<8x128xf32>,
    } else {
    }
    %c0 = arith.constant 0 : index
    %c0_1 = arith.constant 0 : index
    %3 = vector.load %arg3[%c0, %c0_1] : memref<8x256xf32, #tpu.memory_space<vmem>>, vector<8x256xf32>
    %c0_2 = arith.constant 0 : index
    %c0_3 = arith.constant 0 : index
    %4 = vector.load %arg8[%c0_2, %c0_3] : memref<8x128xf32, #tpu.memory_space<vmem>>, vector<8x128xf32>
    %5 = arith.truncf %3 : vector<8x256xf32> to vector<8x256xbf16>
    %c0_4 = arith.constant 0 : index
    %c0_5 = arith.constant 0 : index
    %6 = vector.load %arg4[%c0_4, %c0_5] : memref<256x128xf32, #tpu.memory_space<vmem>>, vector<256x128xf32>
    %7 = arith.truncf %6 : vector<256x128xf32> to vector<256x128xbf16>
    %cst = arith.constant dense<0.000000e+00> : vector<8x128xf32>
    %8 = tpu.matmul %5, %7, %cst {dimension_numbers = #tpu.dot_dimension_numbers<[1], [0], [0], [1], [0, 0, 1, 1], [], []>} : vector<8x256xbf16>, vector<256x128xbf16>, vector<8x128xf32> -> vector<8x128xf32>
    %9 = arith.addf %4, %8 : vector<8x128xf32>
    %c0_6 = arith.constant 0 : index
    %c0_7 = arith.constant 0 : index
    %10 = vector.load %arg8[%c0_6, %c0_7] : memref<8x128xf32, #tpu.memory_space<vmem>>, vector<8x128xf32>
    tpu.vector_store %arg8[%c0_6, %c0_7], %9 {strides = array<i32>} : memref<8x128xf32, #tpu.memory_space<vmem>>, vector<8x128xf32>,
    %c0_i32_8 = arith.constant 0 : i32
    %11 = arith.cmpi eq, %arg2, %c0_i32_8 : i32
    %12 = arith.extui %11 : i1 to i32
    %c0_i32_9 = arith.constant 0 : i32
    %13 = arith.cmpi ne, %12, %c0_i32_9 : i32
    scf.if %13 {
      %c0_10 = arith.constant 0 : index
      %c0_11 = arith.constant 0 : index
      %14 = vector.load %arg8[%c0_10, %c0_11] : memref<8x128xf32, #tpu.memory_space<vmem>>, vector<8x128xf32>
      %c0_12 = arith.constant 0 : index
      %c0_13 = arith.constant 0 : index
      %15 = vector.load %arg5[%c0_12, %c0_13] : memref<1x128xf32, #tpu.memory_space<vmem>>, vector<1x128xf32>
      %16 = vector.broadcast %15 : vector<1x128xf32> to vector<8x128xf32>
      %17 = arith.addf %14, %16 : vector<8x128xf32>
      %c0_14 = arith.constant 0 : index
      %c0_15 = arith.constant 0 : index
      %18 = vector.load %arg6[%c0_14, %c0_15] : memref<8x128xf32, #tpu.memory_space<vmem>>, vector<8x128xf32>
      %19 = arith.addf %17, %18 : vector<8x128xf32>
      %c0_16 = arith.constant 0 : index
      %c0_17 = arith.constant 0 : index
      %20 = vector.load %arg7[%c0_16, %c0_17] : memref<8x128xf32, #tpu.memory_space<vmem>>, vector<8x128xf32>
      tpu.vector_store %arg7[%c0_16, %c0_17], %19 {strides = array<i32>} : memref<8x128xf32, #tpu.memory_space<vmem>>, vector<8x128xf32>,
    } else {
    }
    return
  }
  func.func @transform_0(%arg0: i32, %arg1: i32, %arg2: i32) -> (i32, i32) {
    %c0_i32 = arith.constant 0 : i32
    return %arg0, %arg2 : i32, i32
  }
  func.func @transform_1(%arg0: i32, %arg1: i32, %arg2: i32) -> (i32, i32) {
    %c0_i32 = arith.constant 0 : i32
    return %arg2, %arg1 : i32, i32
  }
  func.func @transform_2(%arg0: i32, %arg1: i32, %arg2: i32) -> (i32, i32) {
    %c0_i32 = arith.constant 0 : i32
    %c0_i32_0 = arith.constant 0 : i32
    return %c0_i32, %arg1 : i32, i32
  }
  func.func @transform_3(%arg0: i32, %arg1: i32, %arg2: i32) -> (i32, i32) {
    %c0_i32 = arith.constant 0 : i32
    return %arg0, %arg1 : i32, i32
  }
  func.func @transform_4(%arg0: i32, %arg1: i32, %arg2: i32) -> (i32, i32) {
    %c0_i32 = arith.constant 0 : i32
    return %arg0, %arg1 : i32, i32
  }
}

module attributes {stable_mosaic.version = 11 : i64} {
  func.func @_linear_kernel(%arg0: i32, %arg1: i32, %arg2: i32, %arg3: memref<8x128xf32, #tpu.memory_space<vmem>>, %arg4: memref<128x128xf32, #tpu.memory_space<vmem>>, %arg5: memref<1x128xf32, #tpu.memory_space<vmem>>, %arg6: memref<8x1xf32, #tpu.memory_space<vmem>>, %arg7: memref<8x1xf32, #tpu.memory_space<vmem>>, %arg8: memref<8x128xf32, #tpu.memory_space<vmem>>, %arg9: memref<8x128xf32, #tpu.memory_space<vmem>>) attributes {dimension_semantics = [#tpu.dimension_semantics<parallel>, #tpu.dimension_semantics<parallel>, #tpu.dimension_semantics<arbitrary>], iteration_bounds = array<i64: 1, 1, 1>, scalar_prefetch = 0 : i64, scratch_operands = 1 : i64, tpu.core_type = #tpu.core_type<tc>, window_params = [{transform_indices = @transform_0, window_bounds = array<i64: 8, 128>}, {transform_indices = @transform_1, window_bounds = array<i64: 128, 128>}, {transform_indices = @transform_2, window_bounds = array<i64: 1, 128>}, {transform_indices = @transform_3, window_bounds = array<i64: 8, 1>}, {transform_indices = @transform_4, window_bounds = array<i64: 8, 1>}, {transform_indices = @transform_5, window_bounds = array<i64: 8, 128>}]} {
    %c0_i32 = arith.constant 0 : i32
    %0 = arith.cmpi eq, %arg2, %c0_i32 : i32
    %1 = arith.extui %0 : i1 to i32
    %c0_i32_0 = arith.constant 0 : i32
    %2 = arith.cmpi ne, %1, %c0_i32_0 : i32
    scf.if %2 {
      %cst_14 = arith.constant 0.000000e+00 : f32
      %20 = vector.broadcast %cst_14 : f32 to vector<8x128xf32>
      %c0_15 = arith.constant 0 : index
      %c0_16 = arith.constant 0 : index
      %21 = vector.load %arg9[%c0_15, %c0_16] : memref<8x128xf32, #tpu.memory_space<vmem>>, vector<8x128xf32>
      tpu.vector_store %arg9[%c0_15, %c0_16], %20 {strides = array<i32>} : memref<8x128xf32, #tpu.memory_space<vmem>>, vector<8x128xf32>,
    } else {
    }
    %c0 = arith.constant 0 : index
    %c0_1 = arith.constant 0 : index
    %3 = vector.load %arg3[%c0, %c0_1] : memref<8x128xf32, #tpu.memory_space<vmem>>, vector<8x128xf32>
    %c0_2 = arith.constant 0 : index
    %c0_3 = arith.constant 0 : index
    %4 = vector.load %arg6[%c0_2, %c0_3] : memref<8x1xf32, #tpu.memory_space<vmem>>, vector<8x1xf32>
    %5 = vector.broadcast %4 : vector<8x1xf32> to vector<8x128xf32>
    %6 = arith.mulf %3, %5 : vector<8x128xf32>
    %c0_4 = arith.constant 0 : index
    %c0_5 = arith.constant 0 : index
    %7 = vector.load %arg7[%c0_4, %c0_5] : memref<8x1xf32, #tpu.memory_space<vmem>>, vector<8x1xf32>
    %8 = vector.broadcast %7 : vector<8x1xf32> to vector<8x128xf32>
    %9 = arith.addf %6, %8 : vector<8x128xf32>
    %c0_6 = arith.constant 0 : index
    %c0_7 = arith.constant 0 : index
    %10 = vector.load %arg9[%c0_6, %c0_7] : memref<8x128xf32, #tpu.memory_space<vmem>>, vector<8x128xf32>
    %11 = arith.truncf %9 : vector<8x128xf32> to vector<8x128xbf16>
    %c0_8 = arith.constant 0 : index
    %c0_9 = arith.constant 0 : index
    %12 = vector.load %arg4[%c0_8, %c0_9] : memref<128x128xf32, #tpu.memory_space<vmem>>, vector<128x128xf32>
    %13 = arith.truncf %12 : vector<128x128xf32> to vector<128x128xbf16>
    %cst = arith.constant dense<0.000000e+00> : vector<8x128xf32>
    %14 = tpu.matmul %11, %13, %cst {dimension_numbers = #tpu.dot_dimension_numbers<[1], [0], [0], [1], [0, 0, 1, 1], [], []>} : vector<8x128xbf16>, vector<128x128xbf16>, vector<8x128xf32> -> vector<8x128xf32>
    %15 = arith.addf %10, %14 : vector<8x128xf32>
    %c0_10 = arith.constant 0 : index
    %c0_11 = arith.constant 0 : index
    %16 = vector.load %arg9[%c0_10, %c0_11] : memref<8x128xf32, #tpu.memory_space<vmem>>, vector<8x128xf32>
    tpu.vector_store %arg9[%c0_10, %c0_11], %15 {strides = array<i32>} : memref<8x128xf32, #tpu.memory_space<vmem>>, vector<8x128xf32>,
    %c0_i32_12 = arith.constant 0 : i32
    %17 = arith.cmpi eq, %arg2, %c0_i32_12 : i32
    %18 = arith.extui %17 : i1 to i32
    %c0_i32_13 = arith.constant 0 : i32
    %19 = arith.cmpi ne, %18, %c0_i32_13 : i32
    scf.if %19 {
      %c0_14 = arith.constant 0 : index
      %c0_15 = arith.constant 0 : index
      %20 = vector.load %arg9[%c0_14, %c0_15] : memref<8x128xf32, #tpu.memory_space<vmem>>, vector<8x128xf32>
      %c0_16 = arith.constant 0 : index
      %c0_17 = arith.constant 0 : index
      %21 = vector.load %arg5[%c0_16, %c0_17] : memref<1x128xf32, #tpu.memory_space<vmem>>, vector<1x128xf32>
      %22 = vector.broadcast %21 : vector<1x128xf32> to vector<8x128xf32>
      %23 = arith.addf %20, %22 : vector<8x128xf32>
      %c0_18 = arith.constant 0 : index
      %c0_19 = arith.constant 0 : index
      %24 = vector.load %arg8[%c0_18, %c0_19] : memref<8x128xf32, #tpu.memory_space<vmem>>, vector<8x128xf32>
      tpu.vector_store %arg8[%c0_18, %c0_19], %23 {strides = array<i32>} : memref<8x128xf32, #tpu.memory_space<vmem>>, vector<8x128xf32>,
    } else {
    }
    return
  }
  func.func @transform_0(%arg0: i32, %arg1: i32, %arg2: i32) -> (i32, i32) {
    %c0_i32 = arith.constant 0 : i32
    return %arg0, %arg2 : i32, i32
  }
  func.func @transform_1(%arg0: i32, %arg1: i32, %arg2: i32) -> (i32, i32) {
    %c0_i32 = arith.constant 0 : i32
    return %arg2, %arg1 : i32, i32
  }
  func.func @transform_2(%arg0: i32, %arg1: i32, %arg2: i32) -> (i32, i32) {
    %c0_i32 = arith.constant 0 : i32
    %c0_i32_0 = arith.constant 0 : i32
    return %c0_i32, %arg1 : i32, i32
  }
  func.func @transform_3(%arg0: i32, %arg1: i32, %arg2: i32) -> (i32, i32) {
    %c0_i32 = arith.constant 0 : i32
    %c0_i32_0 = arith.constant 0 : i32
    return %arg0, %c0_i32 : i32, i32
  }
  func.func @transform_4(%arg0: i32, %arg1: i32, %arg2: i32) -> (i32, i32) {
    %c0_i32 = arith.constant 0 : i32
    %c0_i32_0 = arith.constant 0 : i32
    return %arg0, %c0_i32 : i32, i32
  }
  func.func @transform_5(%arg0: i32, %arg1: i32, %arg2: i32) -> (i32, i32) {
    %c0_i32 = arith.constant 0 : i32
    return %arg0, %arg1 : i32, i32
  }
}

module attributes {stable_mosaic.version = 11 : i64} {
  func.func @_flash_attn_kernel(%arg0: i32, %arg1: i32, %arg2: i32, %arg3: memref<1x4x16xf32, #tpu.memory_space<vmem>>, %arg4: memref<1x4x16xf32, #tpu.memory_space<vmem>>, %arg5: memref<1x4x16xf32, #tpu.memory_space<vmem>>, %arg6: memref<1x4x16xf32, #tpu.memory_space<vmem>>, %arg7: memref<4x1xf32, #tpu.memory_space<vmem>>, %arg8: memref<4x1xf32, #tpu.memory_space<vmem>>, %arg9: memref<4x16xf32, #tpu.memory_space<vmem>>) attributes {dimension_semantics = [#tpu.dimension_semantics<parallel>, #tpu.dimension_semantics<parallel>, #tpu.dimension_semantics<arbitrary>], iteration_bounds = array<i64: 4, 1, 1>, scalar_prefetch = 0 : i64, scratch_operands = 3 : i64, tpu.core_type = #tpu.core_type<tc>, window_params = [{transform_indices = @transform_0, window_bounds = array<i64: 1, 4, 16>}, {transform_indices = @transform_1, window_bounds = array<i64: 1, 4, 16>}, {transform_indices = @transform_2, window_bounds = array<i64: 1, 4, 16>}, {transform_indices = @transform_3, window_bounds = array<i64: 1, 4, 16>}]} {
    %c0_i32 = arith.constant 0 : i32
    %0 = arith.cmpi eq, %arg2, %c0_i32 : i32
    %1 = arith.extui %0 : i1 to i32
    %c0_i32_0 = arith.constant 0 : i32
    %2 = arith.cmpi ne, %1, %c0_i32_0 : i32
    scf.if %2 {
      %cst_27 = arith.constant 0xFF800000 : f32
      %41 = vector.broadcast %cst_27 : f32 to vector<4x1xf32>
      %c0_28 = arith.constant 0 : index
      %c0_29 = arith.constant 0 : index
      %42 = vector.load %arg7[%c0_28, %c0_29] : memref<4x1xf32, #tpu.memory_space<vmem>>, vector<4x1xf32>
      tpu.vector_store %arg7[%c0_28, %c0_29], %41 {strides = array<i32>} : memref<4x1xf32, #tpu.memory_space<vmem>>, vector<4x1xf32>,
      %cst_30 = arith.constant 0.000000e+00 : f32
      %43 = vector.broadcast %cst_30 : f32 to vector<4x1xf32>
      %c0_31 = arith.constant 0 : index
      %c0_32 = arith.constant 0 : index
      %44 = vector.load %arg8[%c0_31, %c0_32] : memref<4x1xf32, #tpu.memory_space<vmem>>, vector<4x1xf32>
      tpu.vector_store %arg8[%c0_31, %c0_32], %43 {strides = array<i32>} : memref<4x1xf32, #tpu.memory_space<vmem>>, vector<4x1xf32>,
      %cst_33 = arith.constant 0.000000e+00 : f32
      %45 = vector.broadcast %cst_33 : f32 to vector<4x16xf32>
      %c0_34 = arith.constant 0 : index
      %c0_35 = arith.constant 0 : index
      %46 = vector.load %arg9[%c0_34, %c0_35] : memref<4x16xf32, #tpu.memory_space<vmem>>, vector<4x16xf32>
      tpu.vector_store %arg9[%c0_34, %c0_35], %45 {strides = array<i32>} : memref<4x16xf32, #tpu.memory_space<vmem>>, vector<4x16xf32>,
    } else {
    }
    %c0 = arith.constant 0 : index
    %c0_1 = arith.constant 0 : index
    %c0_2 = arith.constant 0 : index
    %3 = vector.load %arg3[%c0, %c0_1, %c0_2] : memref<1x4x16xf32, #tpu.memory_space<vmem>>, vector<1x4x16xf32>
    %4 = vector.shape_cast %3 : vector<1x4x16xf32> to vector<4x16xf32>
    %5 = arith.truncf %4 : vector<4x16xf32> to vector<4x16xbf16>
    %c0_3 = arith.constant 0 : index
    %c0_4 = arith.constant 0 : index
    %c0_5 = arith.constant 0 : index
    %6 = vector.load %arg4[%c0_3, %c0_4, %c0_5] : memref<1x4x16xf32, #tpu.memory_space<vmem>>, vector<1x4x16xf32>
    %7 = vector.shape_cast %6 : vector<1x4x16xf32> to vector<4x16xf32>
    %8 = arith.truncf %7 : vector<4x16xf32> to vector<4x16xbf16>
    %c0_6 = arith.constant 0 : index
    %c0_7 = arith.constant 0 : index
    %c0_8 = arith.constant 0 : index
    %9 = vector.load %arg5[%c0_6, %c0_7, %c0_8] : memref<1x4x16xf32, #tpu.memory_space<vmem>>, vector<1x4x16xf32>
    %10 = vector.shape_cast %9 : vector<1x4x16xf32> to vector<4x16xf32>
    %11 = arith.truncf %10 : vector<4x16xf32> to vector<4x16xbf16>
    %cst = arith.constant dense<0.000000e+00> : vector<4x4xf32>
    %12 = tpu.matmul %5, %8, %cst {dimension_numbers = #tpu.dot_dimension_numbers<[1], [1], [0], [0], [0, 0, 1, 0], [], []>} : vector<4x16xbf16>, vector<4x16xbf16>, vector<4x4xf32> -> vector<4x4xf32>
    %cst_9 = arith.constant 2.500000e-01 : f32
    %13 = vector.broadcast %cst_9 : f32 to vector<4x4xf32>
    %14 = arith.mulf %12, %13 : vector<4x4xf32>
    %c0_10 = arith.constant 0 : index
    %c0_11 = arith.constant 0 : index
    %15 = vector.load %arg7[%c0_10, %c0_11] : memref<4x1xf32, #tpu.memory_space<vmem>>, vector<4x1xf32>
    %cst_12 = arith.constant dense<0xFF800000> : vector<4xf32>
    %16 = vector.multi_reduction <maximumf>, %14, %cst_12 [1] : vector<4x4xf32> to vector<4xf32>
    %17 = vector.shape_cast %16 : vector<4xf32> to vector<4x1xf32>
    %18 = arith.maximumf %15, %17 : vector<4x1xf32>
    %19 = arith.subf %15, %18 : vector<4x1xf32>
    %20 = math.exp %19 : vector<4x1xf32>
    %21 = vector.broadcast %18 : vector<4x1xf32> to vector<4x4xf32>
    %22 = arith.subf %14, %21 : vector<4x4xf32>
    %23 = math.exp %22 : vector<4x4xf32>
    %c0_13 = arith.constant 0 : index
    %c0_14 = arith.constant 0 : index
    %24 = vector.load %arg8[%c0_13, %c0_14] : memref<4x1xf32, #tpu.memory_space<vmem>>, vector<4x1xf32>
    %25 = arith.mulf %20, %24 : vector<4x1xf32>
    %cst_15 = arith.constant dense<0.000000e+00> : vector<4xf32>
    %26 = vector.multi_reduction <add>, %23, %cst_15 [1] : vector<4x4xf32> to vector<4xf32>
    %27 = vector.shape_cast %26 : vector<4xf32> to vector<4x1xf32>
    %28 = arith.addf %25, %27 : vector<4x1xf32>
    %c0_16 = arith.constant 0 : index
    %c0_17 = arith.constant 0 : index
    %29 = vector.load %arg8[%c0_16, %c0_17] : memref<4x1xf32, #tpu.memory_space<vmem>>, vector<4x1xf32>
    tpu.vector_store %arg8[%c0_16, %c0_17], %28 {strides = array<i32>} : memref<4x1xf32, #tpu.memory_space<vmem>>, vector<4x1xf32>,
    %c0_18 = arith.constant 0 : index
    %c0_19 = arith.constant 0 : index
    %30 = vector.load %arg9[%c0_18, %c0_19] : memref<4x16xf32, #tpu.memory_space<vmem>>, vector<4x16xf32>
    %31 = vector.broadcast %20 : vector<4x1xf32> to vector<4x16xf32>
    %32 = arith.mulf %31, %30 : vector<4x16xf32>
    %33 = arith.truncf %23 : vector<4x4xf32> to vector<4x4xbf16>
    %cst_20 = arith.constant dense<0.000000e+00> : vector<4x16xf32>
    %34 = tpu.matmul %33, %11, %cst_20 {dimension_numbers = #tpu.dot_dimension_numbers<[1], [0], [0], [1], [0, 0, 1, 1], [], []>} : vector<4x4xbf16>, vector<4x16xbf16>, vector<4x16xf32> -> vector<4x16xf32>
    %35 = arith.addf %32, %34 : vector<4x16xf32>
    %c0_21 = arith.constant 0 : index
    %c0_22 = arith.constant 0 : index
    %36 = vector.load %arg9[%c0_21, %c0_22] : memref<4x16xf32, #tpu.memory_space<vmem>>, vector<4x16xf32>
    tpu.vector_store %arg9[%c0_21, %c0_22], %35 {strides = array<i32>} : memref<4x16xf32, #tpu.memory_space<vmem>>, vector<4x16xf32>,
    %c0_23 = arith.constant 0 : index
    %c0_24 = arith.constant 0 : index
    %37 = vector.load %arg7[%c0_23, %c0_24] : memref<4x1xf32, #tpu.memory_space<vmem>>, vector<4x1xf32>
    tpu.vector_store %arg7[%c0_23, %c0_24], %18 {strides = array<i32>} : memref<4x1xf32, #tpu.memory_space<vmem>>, vector<4x1xf32>,
    %c0_i32_25 = arith.constant 0 : i32
    %38 = arith.cmpi eq, %arg2, %c0_i32_25 : i32
    %39 = arith.extui %38 : i1 to i32
    %c0_i32_26 = arith.constant 0 : i32
    %40 = arith.cmpi ne, %39, %c0_i32_26 : i32
    scf.if %40 {
      %c0_27 = arith.constant 0 : index
      %c0_28 = arith.constant 0 : index
      %41 = vector.load %arg9[%c0_27, %c0_28] : memref<4x16xf32, #tpu.memory_space<vmem>>, vector<4x16xf32>
      %c0_29 = arith.constant 0 : index
      %c0_30 = arith.constant 0 : index
      %42 = vector.load %arg8[%c0_29, %c0_30] : memref<4x1xf32, #tpu.memory_space<vmem>>, vector<4x1xf32>
      %43 = tpu.reciprocal %42 {approx = true} : vector<4x1xf32> -> vector<4x1xf32>
      %44 = vector.broadcast %43 : vector<4x1xf32> to vector<4x16xf32>
      %45 = arith.mulf %41, %44 : vector<4x16xf32>
      %c0_31 = arith.constant 0 : index
      %c0_32 = arith.constant 0 : index
      %c0_33 = arith.constant 0 : index
      %46 = vector.load %arg6[%c0_31, %c0_32, %c0_33] : memref<1x4x16xf32, #tpu.memory_space<vmem>>, vector<1x4x16xf32>
      %47 = vector.shape_cast %46 : vector<1x4x16xf32> to vector<4x16xf32>
      %48 = vector.shape_cast %45 : vector<4x16xf32> to vector<1x4x16xf32>
      tpu.vector_store %arg6[%c0_31, %c0_32, %c0_33], %48 {strides = array<i32>} : memref<1x4x16xf32, #tpu.memory_space<vmem>>, vector<1x4x16xf32>,
    } else {
    }
    return
  }
  func.func @transform_0(%arg0: i32, %arg1: i32, %arg2: i32) -> (i32, i32, i32) {
    %c0_i32 = arith.constant 0 : i32
    %c0_i32_0 = arith.constant 0 : i32
    return %arg0, %arg1, %c0_i32 : i32, i32, i32
  }
  func.func @transform_1(%arg0: i32, %arg1: i32, %arg2: i32) -> (i32, i32, i32) {
    %c0_i32 = arith.constant 0 : i32
    %c0_i32_0 = arith.constant 0 : i32
    return %arg0, %arg2, %c0_i32 : i32, i32, i32
  }
  func.func @transform_2(%arg0: i32, %arg1: i32, %arg2: i32) -> (i32, i32, i32) {
    %c0_i32 = arith.constant 0 : i32
    %c0_i32_0 = arith.constant 0 : i32
    return %arg0, %arg2, %c0_i32 : i32, i32, i32
  }
  func.func @transform_3(%arg0: i32, %arg1: i32, %arg2: i32) -> (i32, i32, i32) {
    %c0_i32 = arith.constant 0 : i32
    %c0_i32_0 = arith.constant 0 : i32
    return %arg0, %arg1, %c0_i32 : i32, i32, i32
  }
}

module attributes {stable_mosaic.version = 11 : i64} {
  func.func @_linear_kernel(%arg0: i32, %arg1: i32, %arg2: i32, %arg3: memref<8x128xf32, #tpu.memory_space<vmem>>, %arg4: memref<128x128xf32, #tpu.memory_space<vmem>>, %arg5: memref<1x128xf32, #tpu.memory_space<vmem>>, %arg6: memref<8x128xf32, #tpu.memory_space<vmem>>, %arg7: memref<8x128xf32, #tpu.memory_space<vmem>>, %arg8: memref<8x128xf32, #tpu.memory_space<vmem>>) attributes {dimension_semantics = [#tpu.dimension_semantics<parallel>, #tpu.dimension_semantics<parallel>, #tpu.dimension_semantics<arbitrary>], iteration_bounds = array<i64: 1, 1, 1>, scalar_prefetch = 0 : i64, scratch_operands = 1 : i64, tpu.core_type = #tpu.core_type<tc>, window_params = [{transform_indices = @transform_0, window_bounds = array<i64: 8, 128>}, {transform_indices = @transform_1, window_bounds = array<i64: 128, 128>}, {transform_indices = @transform_2, window_bounds = array<i64: 1, 128>}, {transform_indices = @transform_3, window_bounds = array<i64: 8, 128>}, {transform_indices = @transform_4, window_bounds = array<i64: 8, 128>}]} {
    %c0_i32 = arith.constant 0 : i32
    %0 = arith.cmpi eq, %arg2, %c0_i32 : i32
    %1 = arith.extui %0 : i1 to i32
    %c0_i32_0 = arith.constant 0 : i32
    %2 = arith.cmpi ne, %1, %c0_i32_0 : i32
    scf.if %2 {
      %cst_10 = arith.constant 0.000000e+00 : f32
      %14 = vector.broadcast %cst_10 : f32 to vector<8x128xf32>
      %c0_11 = arith.constant 0 : index
      %c0_12 = arith.constant 0 : index
      %15 = vector.load %arg8[%c0_11, %c0_12] : memref<8x128xf32, #tpu.memory_space<vmem>>, vector<8x128xf32>
      tpu.vector_store %arg8[%c0_11, %c0_12], %14 {strides = array<i32>} : memref<8x128xf32, #tpu.memory_space<vmem>>, vector<8x128xf32>,
    } else {
    }
    %c0 = arith.constant 0 : index
    %c0_1 = arith.constant 0 : index
    %3 = vector.load %arg3[%c0, %c0_1] : memref<8x128xf32, #tpu.memory_space<vmem>>, vector<8x128xf32>
    %c0_2 = arith.constant 0 : index
    %c0_3 = arith.constant 0 : index
    %4 = vector.load %arg8[%c0_2, %c0_3] : memref<8x128xf32, #tpu.memory_space<vmem>>, vector<8x128xf32>
    %5 = arith.truncf %3 : vector<8x128xf32> to vector<8x128xbf16>
    %c0_4 = arith.constant 0 : index
    %c0_5 = arith.constant 0 : index
    %6 = vector.load %arg4[%c0_4, %c0_5] : memref<128x128xf32, #tpu.memory_space<vmem>>, vector<128x128xf32>
    %7 = arith.truncf %6 : vector<128x128xf32> to vector<128x128xbf16>
    %cst = arith.constant dense<0.000000e+00> : vector<8x128xf32>
    %8 = tpu.matmul %5, %7, %cst {dimension_numbers = #tpu.dot_dimension_numbers<[1], [0], [0], [1], [0, 0, 1, 1], [], []>} : vector<8x128xbf16>, vector<128x128xbf16>, vector<8x128xf32> -> vector<8x128xf32>
    %9 = arith.addf %4, %8 : vector<8x128xf32>
    %c0_6 = arith.constant 0 : index
    %c0_7 = arith.constant 0 : index
    %10 = vector.load %arg8[%c0_6, %c0_7] : memref<8x128xf32, #tpu.memory_space<vmem>>, vector<8x128xf32>
    tpu.vector_store %arg8[%c0_6, %c0_7], %9 {strides = array<i32>} : memref<8x128xf32, #tpu.memory_space<vmem>>, vector<8x128xf32>,
    %c0_i32_8 = arith.constant 0 : i32
    %11 = arith.cmpi eq, %arg2, %c0_i32_8 : i32
    %12 = arith.extui %11 : i1 to i32
    %c0_i32_9 = arith.constant 0 : i32
    %13 = arith.cmpi ne, %12, %c0_i32_9 : i32
    scf.if %13 {
      %c0_10 = arith.constant 0 : index
      %c0_11 = arith.constant 0 : index
      %14 = vector.load %arg8[%c0_10, %c0_11] : memref<8x128xf32, #tpu.memory_space<vmem>>, vector<8x128xf32>
      %c0_12 = arith.constant 0 : index
      %c0_13 = arith.constant 0 : index
      %15 = vector.load %arg5[%c0_12, %c0_13] : memref<1x128xf32, #tpu.memory_space<vmem>>, vector<1x128xf32>
      %16 = vector.broadcast %15 : vector<1x128xf32> to vector<8x128xf32>
      %17 = arith.addf %14, %16 : vector<8x128xf32>
      %c0_14 = arith.constant 0 : index
      %c0_15 = arith.constant 0 : index
      %18 = vector.load %arg6[%c0_14, %c0_15] : memref<8x128xf32, #tpu.memory_space<vmem>>, vector<8x128xf32>
      %19 = arith.addf %17, %18 : vector<8x128xf32>
      %c0_16 = arith.constant 0 : index
      %c0_17 = arith.constant 0 : index
      %20 = vector.load %arg7[%c0_16, %c0_17] : memref<8x128xf32, #tpu.memory_space<vmem>>, vector<8x128xf32>
      tpu.vector_store %arg7[%c0_16, %c0_17], %19 {strides = array<i32>} : memref<8x128xf32, #tpu.memory_space<vmem>>, vector<8x128xf32>,
    } else {
    }
    return
  }
  func.func @transform_0(%arg0: i32, %arg1: i32, %arg2: i32) -> (i32, i32) {
    %c0_i32 = arith.constant 0 : i32
    return %arg0, %arg2 : i32, i32
  }
  func.func @transform_1(%arg0: i32, %arg1: i32, %arg2: i32) -> (i32, i32) {
    %c0_i32 = arith.constant 0 : i32
    return %arg2, %arg1 : i32, i32
  }
  func.func @transform_2(%arg0: i32, %arg1: i32, %arg2: i32) -> (i32, i32) {
    %c0_i32 = arith.constant 0 : i32
    %c0_i32_0 = arith.constant 0 : i32
    return %c0_i32, %arg1 : i32, i32
  }
  func.func @transform_3(%arg0: i32, %arg1: i32, %arg2: i32) -> (i32, i32) {
    %c0_i32 = arith.constant 0 : i32
    return %arg0, %arg1 : i32, i32
  }
  func.func @transform_4(%arg0: i32, %arg1: i32, %arg2: i32) -> (i32, i32) {
    %c0_i32 = arith.constant 0 : i32
    return %arg0, %arg1 : i32, i32
  }
}

module attributes {stable_mosaic.version = 11 : i64} {
  func.func @_mlp_kernel(%arg0: i32, %arg1: i32, %arg2: memref<8x128xf32, #tpu.memory_space<vmem>>, %arg3: memref<8x1xf32, #tpu.memory_space<vmem>>, %arg4: memref<8x1xf32, #tpu.memory_space<vmem>>, %arg5: memref<128x128xf32, #tpu.memory_space<vmem>>, %arg6: memref<1x128xf32, #tpu.memory_space<vmem>>, %arg7: memref<128x128xf32, #tpu.memory_space<vmem>>, %arg8: memref<1x128xf32, #tpu.memory_space<vmem>>, %arg9: memref<8x128xf32, #tpu.memory_space<vmem>>, %arg10: memref<8x128xf32, #tpu.memory_space<vmem>>, %arg11: memref<8x128xbf16, #tpu.memory_space<vmem>>) attributes {dimension_semantics = [#tpu.dimension_semantics<parallel>, #tpu.dimension_semantics<arbitrary>], iteration_bounds = array<i64: 1, 1>, scalar_prefetch = 0 : i64, scratch_operands = 1 : i64, tpu.core_type = #tpu.core_type<tc>, window_params = [{transform_indices = @transform_0, window_bounds = array<i64: 8, 128>}, {transform_indices = @transform_1, window_bounds = array<i64: 8, 1>}, {transform_indices = @transform_2, window_bounds = array<i64: 8, 1>}, {pipeline_mode = #tpu.pipeline_mode<synchronous>, transform_indices = @transform_3, window_bounds = array<i64: 128, 128>}, {pipeline_mode = #tpu.pipeline_mode<synchronous>, transform_indices = @transform_4, window_bounds = array<i64: 1, 128>}, {transform_indices = @transform_5, window_bounds = array<i64: 128, 128>}, {transform_indices = @transform_6, window_bounds = array<i64: 1, 128>}, {transform_indices = @transform_7, window_bounds = array<i64: 8, 128>}, {transform_indices = @transform_8, window_bounds = array<i64: 8, 128>}]} {
    %c0_i32 = arith.constant 0 : i32
    %0 = arith.cmpi eq, %arg1, %c0_i32 : i32
    %1 = arith.extui %0 : i1 to i32
    %c0_i32_0 = arith.constant 0 : i32
    %2 = arith.cmpi ne, %1, %c0_i32_0 : i32
    scf.if %2 {
      %c0_10 = arith.constant 0 : index
      %c0_11 = arith.constant 0 : index
      %13 = vector.load %arg2[%c0_10, %c0_11] : memref<8x128xf32, #tpu.memory_space<vmem>>, vector<8x128xf32>
      %c0_12 = arith.constant 0 : index
      %c0_13 = arith.constant 0 : index
      %14 = vector.load %arg3[%c0_12, %c0_13] : memref<8x1xf32, #tpu.memory_space<vmem>>, vector<8x1xf32>
      %15 = vector.broadcast %14 : vector<8x1xf32> to vector<8x128xf32>
      %16 = arith.mulf %13, %15 : vector<8x128xf32>
      %c0_14 = arith.constant 0 : index
      %c0_15 = arith.constant 0 : index
      %17 = vector.load %arg4[%c0_14, %c0_15] : memref<8x1xf32, #tpu.memory_space<vmem>>, vector<8x1xf32>
      %18 = vector.broadcast %17 : vector<8x1xf32> to vector<8x128xf32>
      %19 = arith.addf %16, %18 : vector<8x128xf32>
      %20 = arith.truncf %19 : vector<8x128xf32> to vector<8x128xbf16>
      %c0_16 = arith.constant 0 : index
      %c0_17 = arith.constant 0 : index
      %21 = vector.load %arg5[%c0_16, %c0_17] : memref<128x128xf32, #tpu.memory_space<vmem>>, vector<128x128xf32>
      %22 = arith.truncf %21 : vector<128x128xf32> to vector<128x128xbf16>
      %cst_18 = arith.constant dense<0.000000e+00> : vector<8x128xf32>
      %23 = tpu.matmul %20, %22, %cst_18 {dimension_numbers = #tpu.dot_dimension_numbers<[1], [0], [0], [1], [0, 0, 1, 1], [], []>} : vector<8x128xbf16>, vector<128x128xbf16>, vector<8x128xf32> -> vector<8x128xf32>
      %c0_19 = arith.constant 0 : index
      %c0_20 = arith.constant 0 : index
      %24 = vector.load %arg6[%c0_19, %c0_20] : memref<1x128xf32, #tpu.memory_space<vmem>>, vector<1x128xf32>
      %25 = vector.broadcast %24 : vector<1x128xf32> to vector<8x128xf32>
      %26 = arith.addf %23, %25 : vector<8x128xf32>
      %cst_21 = arith.constant 5.000000e-01 : f32
      %27 = vector.broadcast %cst_21 : f32 to vector<8x128xf32>
      %28 = arith.mulf %27, %26 : vector<8x128xf32>
      %cst_22 = arith.constant 0.707106769 : f32
      %29 = vector.broadcast %cst_22 : f32 to vector<8x128xf32>
      %30 = arith.mulf %26, %29 : vector<8x128xf32>
      %31 = math.erf %30 : vector<8x128xf32>
      %cst_23 = arith.constant 1.000000e+00 : f32
      %32 = vector.broadcast %cst_23 : f32 to vector<8x128xf32>
      %33 = arith.addf %32, %31 : vector<8x128xf32>
      %34 = arith.mulf %28, %33 : vector<8x128xf32>
      %35 = arith.truncf %34 : vector<8x128xf32> to vector<8x128xbf16>
      %c0_24 = arith.constant 0 : index
      %c0_25 = arith.constant 0 : index
      %36 = vector.load %arg11[%c0_24, %c0_25] : memref<8x128xbf16, #tpu.memory_space<vmem>>, vector<8x128xbf16>
      tpu.vector_store %arg11[%c0_24, %c0_25], %35 {strides = array<i32>} : memref<8x128xbf16, #tpu.memory_space<vmem>>, vector<8x128xbf16>,
    } else {
    }
    %c0 = arith.constant 0 : index
    %c0_1 = arith.constant 0 : index
    %3 = vector.load %arg11[%c0, %c0_1] : memref<8x128xbf16, #tpu.memory_space<vmem>>, vector<8x128xbf16>
    %c0_2 = arith.constant 0 : index
    %c0_3 = arith.constant 0 : index
    %4 = vector.load %arg7[%c0_2, %c0_3] : memref<128x128xf32, #tpu.memory_space<vmem>>, vector<128x128xf32>
    %5 = arith.truncf %4 : vector<128x128xf32> to vector<128x128xbf16>
    %cst = arith.constant dense<0.000000e+00> : vector<8x128xf32>
    %6 = tpu.matmul %3, %5, %cst {dimension_numbers = #tpu.dot_dimension_numbers<[1], [0], [0], [1], [0, 0, 1, 1], [], []>} : vector<8x128xbf16>, vector<128x128xbf16>, vector<8x128xf32> -> vector<8x128xf32>
    %c0_4 = arith.constant 0 : index
    %c0_5 = arith.constant 0 : index
    %7 = vector.load %arg8[%c0_4, %c0_5] : memref<1x128xf32, #tpu.memory_space<vmem>>, vector<1x128xf32>
    %8 = vector.broadcast %7 : vector<1x128xf32> to vector<8x128xf32>
    %9 = arith.addf %6, %8 : vector<8x128xf32>
    %c0_6 = arith.constant 0 : index
    %c0_7 = arith.constant 0 : index
    %10 = vector.load %arg9[%c0_6, %c0_7] : memref<8x128xf32, #tpu.memory_space<vmem>>, vector<8x128xf32>
    %11 = arith.addf %9, %10 : vector<8x128xf32>
    %c0_8 = arith.constant 0 : index
    %c0_9 = arith.constant 0 : index
    %12 = vector.load %arg10[%c0_8, %c0_9] : memref<8x128xf32, #tpu.memory_space<vmem>>, vector<8x128xf32>
    tpu.vector_store %arg10[%c0_8, %c0_9], %11 {strides = array<i32>} : memref<8x128xf32, #tpu.memory_space<vmem>>, vector<8x128xf32>,
    return
  }
  func.func @transform_0(%arg0: i32, %arg1: i32) -> (i32, i32) {
    %c0_i32 = arith.constant 0 : i32
    %c0_i32_0 = arith.constant 0 : i32
    return %arg0, %c0_i32 : i32, i32
  }
  func.func @transform_1(%arg0: i32, %arg1: i32) -> (i32, i32) {
    %c0_i32 = arith.constant 0 : i32
    %c0_i32_0 = arith.constant 0 : i32
    return %arg0, %c0_i32 : i32, i32
  }
  func.func @transform_2(%arg0: i32, %arg1: i32) -> (i32, i32) {
    %c0_i32 = arith.constant 0 : i32
    %c0_i32_0 = arith.constant 0 : i32
    return %arg0, %c0_i32 : i32, i32
  }
  func.func @transform_3(%arg0: i32, %arg1: i32) -> (i32, i32) {
    %c0_i32 = arith.constant 0 : i32
    %c0_i32_0 = arith.constant 0 : i32
    %c0_i32_1 = arith.constant 0 : i32
    return %c0_i32, %c0_i32_0 : i32, i32
  }
  func.func @transform_4(%arg0: i32, %arg1: i32) -> (i32, i32) {
    %c0_i32 = arith.constant 0 : i32
    %c0_i32_0 = arith.constant 0 : i32
    %c0_i32_1 = arith.constant 0 : i32
    return %c0_i32, %c0_i32_0 : i32, i32
  }
  func.func @transform_5(%arg0: i32, %arg1: i32) -> (i32, i32) {
    %c0_i32 = arith.constant 0 : i32
    %c0_i32_0 = arith.constant 0 : i32
    return %c0_i32, %arg1 : i32, i32
  }
  func.func @transform_6(%arg0: i32, %arg1: i32) -> (i32, i32) {
    %c0_i32 = arith.constant 0 : i32
    %c0_i32_0 = arith.constant 0 : i32
    return %c0_i32, %arg1 : i32, i32
  }
  func.func @transform_7(%arg0: i32, %arg1: i32) -> (i32, i32) {
    %c0_i32 = arith.constant 0 : i32
    return %arg0, %arg1 : i32, i32
  }
  func.func @transform_8(%arg0: i32, %arg1: i32) -> (i32, i32) {
    %c0_i32 = arith.constant 0 : i32
    return %arg0, %arg1 : i32, i32
  }
}

module attributes {stable_mosaic.version = 11 : i64} {
  func.func @_linear_kernel(%arg0: i32, %arg1: i32, %arg2: i32, %arg3: memref<8x128xf32, #tpu.memory_space<vmem>>, %arg4: memref<128x128xf32, #tpu.memory_space<vmem>>, %arg5: memref<1x128xf32, #tpu.memory_space<vmem>>, %arg6: memref<1x128xf32, #tpu.memory_space<vmem>>, %arg7: memref<1x128xf32, #tpu.memory_space<vmem>>, %arg8: memref<8x128xf32, #tpu.memory_space<vmem>>, %arg9: memref<8x128xf32, #tpu.memory_space<vmem>>) attributes {dimension_semantics = [#tpu.dimension_semantics<parallel>, #tpu.dimension_semantics<parallel>, #tpu.dimension_semantics<arbitrary>], iteration_bounds = array<i64: 1, 1, 1>, scalar_prefetch = 0 : i64, scratch_operands = 1 : i64, tpu.core_type = #tpu.core_type<tc>, window_params = [{transform_indices = @transform_0, window_bounds = array<i64: 8, 128>}, {transform_indices = @transform_1, window_bounds = array<i64: 128, 128>}, {transform_indices = @transform_2, window_bounds = array<i64: 1, 128>}, {transform_indices = @transform_3, window_bounds = array<i64: 1, 128>}, {transform_indices = @transform_4, window_bounds = array<i64: 1, 128>}, {transform_indices = @transform_5, window_bounds = array<i64: 8, 128>}]} {
    %c0_i32 = arith.constant 0 : i32
    %0 = arith.cmpi eq, %arg2, %c0_i32 : i32
    %1 = arith.extui %0 : i1 to i32
    %c0_i32_0 = arith.constant 0 : i32
    %2 = arith.cmpi ne, %1, %c0_i32_0 : i32
    scf.if %2 {
      %cst_14 = arith.constant 0.000000e+00 : f32
      %20 = vector.broadcast %cst_14 : f32 to vector<8x128xf32>
      %c0_15 = arith.constant 0 : index
      %c0_16 = arith.constant 0 : index
      %21 = vector.load %arg9[%c0_15, %c0_16] : memref<8x128xf32, #tpu.memory_space<vmem>>, vector<8x128xf32>
      tpu.vector_store %arg9[%c0_15, %c0_16], %20 {strides = array<i32>} : memref<8x128xf32, #tpu.memory_space<vmem>>, vector<8x128xf32>,
    } else {
    }
    %c0 = arith.constant 0 : index
    %c0_1 = arith.constant 0 : index
    %3 = vector.load %arg3[%c0, %c0_1] : memref<8x128xf32, #tpu.memory_space<vmem>>, vector<8x128xf32>
    %c0_2 = arith.constant 0 : index
    %c0_3 = arith.constant 0 : index
    %4 = vector.load %arg6[%c0_2, %c0_3] : memref<1x128xf32, #tpu.memory_space<vmem>>, vector<1x128xf32>
    %5 = vector.broadcast %4 : vector<1x128xf32> to vector<8x128xf32>
    %6 = arith.mulf %3, %5 : vector<8x128xf32>
    %c0_4 = arith.constant 0 : index
    %c0_5 = arith.constant 0 : index
    %7 = vector.load %arg7[%c0_4, %c0_5] : memref<1x128xf32, #tpu.memory_space<vmem>>, vector<1x128xf32>
    %8 = vector.broadcast %7 : vector<1x128xf32> to vector<8x128xf32>
    %9 = arith.addf %6, %8 : vector<8x128xf32>
    %c0_6 = arith.constant 0 : index
    %c0_7 = arith.constant 0 : index
    %10 = vector.load %arg9[%c0_6, %c0_7] : memref<8x128xf32, #tpu.memory_space<vmem>>, vector<8x128xf32>
    %11 = arith.truncf %9 : vector<8x128xf32> to vector<8x128xbf16>
    %c0_8 = arith.constant 0 : index
    %c0_9 = arith.constant 0 : index
    %12 = vector.load %arg4[%c0_8, %c0_9] : memref<128x128xf32, #tpu.memory_space<vmem>>, vector<128x128xf32>
    %13 = arith.truncf %12 : vector<128x128xf32> to vector<128x128xbf16>
    %cst = arith.constant dense<0.000000e+00> : vector<8x128xf32>
    %14 = tpu.matmul %11, %13, %cst {dimension_numbers = #tpu.dot_dimension_numbers<[1], [0], [0], [1], [0, 0, 1, 1], [], []>} : vector<8x128xbf16>, vector<128x128xbf16>, vector<8x128xf32> -> vector<8x128xf32>
    %15 = arith.addf %10, %14 : vector<8x128xf32>
    %c0_10 = arith.constant 0 : index
    %c0_11 = arith.constant 0 : index
    %16 = vector.load %arg9[%c0_10, %c0_11] : memref<8x128xf32, #tpu.memory_space<vmem>>, vector<8x128xf32>
    tpu.vector_store %arg9[%c0_10, %c0_11], %15 {strides = array<i32>} : memref<8x128xf32, #tpu.memory_space<vmem>>, vector<8x128xf32>,
    %c0_i32_12 = arith.constant 0 : i32
    %17 = arith.cmpi eq, %arg2, %c0_i32_12 : i32
    %18 = arith.extui %17 : i1 to i32
    %c0_i32_13 = arith.constant 0 : i32
    %19 = arith.cmpi ne, %18, %c0_i32_13 : i32
    scf.if %19 {
      %c0_14 = arith.constant 0 : index
      %c0_15 = arith.constant 0 : index
      %20 = vector.load %arg9[%c0_14, %c0_15] : memref<8x128xf32, #tpu.memory_space<vmem>>, vector<8x128xf32>
      %c0_16 = arith.constant 0 : index
      %c0_17 = arith.constant 0 : index
      %21 = vector.load %arg5[%c0_16, %c0_17] : memref<1x128xf32, #tpu.memory_space<vmem>>, vector<1x128xf32>
      %22 = vector.broadcast %21 : vector<1x128xf32> to vector<8x128xf32>
      %23 = arith.addf %20, %22 : vector<8x128xf32>
      %c0_18 = arith.constant 0 : index
      %c0_19 = arith.constant 0 : index
      %24 = vector.load %arg8[%c0_18, %c0_19] : memref<8x128xf32, #tpu.memory_space<vmem>>, vector<8x128xf32>
      tpu.vector_store %arg8[%c0_18, %c0_19], %23 {strides = array<i32>} : memref<8x128xf32, #tpu.memory_space<vmem>>, vector<8x128xf32>,
    } else {
    }
    return
  }
  func.func @transform_0(%arg0: i32, %arg1: i32, %arg2: i32) -> (i32, i32) {
    %c0_i32 = arith.constant 0 : i32
    return %arg0, %arg2 : i32, i32
  }
  func.func @transform_1(%arg0: i32, %arg1: i32, %arg2: i32) -> (i32, i32) {
    %c0_i32 = arith.constant 0 : i32
    return %arg2, %arg1 : i32, i32
  }
  func.func @transform_2(%arg0: i32, %arg1: i32, %arg2: i32) -> (i32, i32) {
    %c0_i32 = arith.constant 0 : i32
    %c0_i32_0 = arith.constant 0 : i32
    return %c0_i32, %arg1 : i32, i32
  }
  func.func @transform_3(%arg0: i32, %arg1: i32, %arg2: i32) -> (i32, i32) {
    %c0_i32 = arith.constant 0 : i32
    %c0_i32_0 = arith.constant 0 : i32
    return %c0_i32, %arg2 : i32, i32
  }
  func.func @transform_4(%arg0: i32, %arg1: i32, %arg2: i32) -> (i32, i32) {
    %c0_i32 = arith.constant 0 : i32
    %c0_i32_0 = arith.constant 0 : i32
    return %c0_i32, %arg2 : i32, i32
  }
  func.func @transform_5(%arg0: i32, %arg1: i32, %arg2: i32) -> (i32, i32) {
    %c0_i32 = arith.constant 0 : i32
    return %arg0, %arg1 : i32, i32
  }
}

module attributes {stable_mosaic.version = 11 : i64} {
  func.func @_affine_kernel(%arg0: i32, %arg1: memref<2x10xf32, #tpu.memory_space<vmem>>, %arg2: memref<1x10xf32, #tpu.memory_space<vmem>>, %arg3: memref<1x10xf32, #tpu.memory_space<vmem>>, %arg4: memref<2x10xf32, #tpu.memory_space<vmem>>) attributes {dimension_semantics = [#tpu.dimension_semantics<arbitrary>], iteration_bounds = array<i64: 1>, scalar_prefetch = 0 : i64, scratch_operands = 0 : i64, tpu.core_type = #tpu.core_type<tc>, window_params = [{pipeline_mode = #tpu.pipeline_mode<synchronous>, transform_indices = @transform_0, window_bounds = array<i64: 2, 10>}, {pipeline_mode = #tpu.pipeline_mode<synchronous>, transform_indices = @transform_1, window_bounds = array<i64: 1, 10>}, {pipeline_mode = #tpu.pipeline_mode<synchronous>, transform_indices = @transform_2, window_bounds = array<i64: 1, 10>}, {pipeline_mode = #tpu.pipeline_mode<synchronous>, transform_indices = @transform_3, window_bounds = array<i64: 2, 10>}]} {
    %c0 = arith.constant 0 : index
    %c0_0 = arith.constant 0 : index
    %0 = vector.load %arg1[%c0, %c0_0] : memref<2x10xf32, #tpu.memory_space<vmem>>, vector<2x10xf32>
    %c0_1 = arith.constant 0 : index
    %c0_2 = arith.constant 0 : index
    %1 = vector.load %arg2[%c0_1, %c0_2] : memref<1x10xf32, #tpu.memory_space<vmem>>, vector<1x10xf32>
    %2 = vector.broadcast %1 : vector<1x10xf32> to vector<2x10xf32>
    %3 = arith.mulf %0, %2 : vector<2x10xf32>
    %c0_3 = arith.constant 0 : index
    %c0_4 = arith.constant 0 : index
    %4 = vector.load %arg3[%c0_3, %c0_4] : memref<1x10xf32, #tpu.memory_space<vmem>>, vector<1x10xf32>
    %5 = vector.broadcast %4 : vector<1x10xf32> to vector<2x10xf32>
    %6 = arith.addf %3, %5 : vector<2x10xf32>
    %c0_5 = arith.constant 0 : index
    %c0_6 = arith.constant 0 : index
    %7 = vector.load %arg4[%c0_5, %c0_6] : memref<2x10xf32, #tpu.memory_space<vmem>>, vector<2x10xf32>
    tpu.vector_store %arg4[%c0_5, %c0_6], %6 {strides = array<i32>} : memref<2x10xf32, #tpu.memory_space<vmem>>, vector<2x10xf32>,
    return
  }
  func.func @transform_0(%arg0: i32) -> (i32, i32) {
    %c0_i32 = arith.constant 0 : i32
    %c0_i32_0 = arith.constant 0 : i32
    %c0_i32_1 = arith.constant 0 : i32
    return %c0_i32, %c0_i32_0 : i32, i32
  }
  func.func @transform_1(%arg0: i32) -> (i32, i32) {
    %c0_i32 = arith.constant 0 : i32
    %c0_i32_0 = arith.constant 0 : i32
    %c0_i32_1 = arith.constant 0 : i32
    return %c0_i32, %c0_i32_0 : i32, i32
  }
  func.func @transform_2(%arg0: i32) -> (i32, i32) {
    %c0_i32 = arith.constant 0 : i32
    %c0_i32_0 = arith.constant 0 : i32
    %c0_i32_1 = arith.constant 0 : i32
    return %c0_i32, %c0_i32_0 : i32, i32
  }
  func.func @transform_3(%arg0: i32) -> (i32, i32) {
    %c0_i32 = arith.constant 0 : i32
    %c0_i32_0 = arith.constant 0 : i32
    %c0_i32_1 = arith.constant 0 : i32
    return %c0_i32, %c0_i32_0 : i32, i32
  }
}

</mosaic_0001>

<llo_original>
// kernel: t2t_vit_forward.20
$region0: #{t2t_vit_forward.20}
  #allocation0 [shape = 'u32[]', space=smem, size = 0x4, offset = 0x4, fixed_abs, tag = 'smem constant byte address 0x4 - core index']
  #allocation1 [shape = 'u32[144,128]{1,0:T(1,128)}', space=vmem, size = 0x12000, scoped, tag = 'internal scratch']
  #allocation2 [shape = 'f32[128,128]{1,0:T(8,128)}', space=vmem, size = 0x10000, scoped, tag = 'scratch operand']
  %s0 = inlined_call_operand.vmem [shape: f32[128,128], index: 0, kind: input, shape index: {}]
  %s1 = inlined_call_operand.vmem [shape: f32[128,128], index: 1, kind: input, shape index: {}]
  %s2 = inlined_call_operand.vmem [shape: f32[1,128], index: 2, kind: input, shape index: {}]
  %s3 = inlined_call_operand.vmem [shape: f32[128,1], index: 3, kind: input, shape index: {}]
  %s4 = inlined_call_operand.vmem [shape: f32[128,1], index: 4, kind: input, shape index: {}]
  %s5 = inlined_call_operand.vmem [shape: f32[128,128], index: 5, kind: output, shape index: {}]
  %s6 = sld [smem:[#allocation0]]
  $region38: #{t2t_vit_forward.20} parent=0
    _
  %s8 = ssub.s32 1, %s6
  %s9 = scalar_select 0, %s8, %s6
  // Predicated region
  $region2: #{t2t_vit_forward.20} parent=0 // pred_check
    _
  $region3: #{t2t_vit_forward.20} parent=0 // pred_check_branch
    %11 = sbr.rel (0) target = $region5
  $region4: #{t2t_vit_forward.20} parent=0 // pred_region
    _
  $region5: #{t2t_vit_forward.20} parent=0 // pred_fallthru
    _
  // Predicated region
  $region6: #{t2t_vit_forward.20} parent=0 // pred_check
    _
  $region7: #{t2t_vit_forward.20} parent=0 // pred_check_branch
    %13 = sbr.rel (0) target = $region9
  $region8: #{t2t_vit_forward.20} parent=0 // pred_region
    _
  $region9: #{t2t_vit_forward.20} parent=0 // pred_fallthru
    _
  // Predicated region
  $region10: #{t2t_vit_forward.20} parent=0 // pred_check
    _
  $region11: #{t2t_vit_forward.20} parent=0 // pred_check_branch
    %15 = sbr.rel (0) target = $region13
  $region12: #{t2t_vit_forward.20} parent=0 // pred_region
    _
  $region13: #{t2t_vit_forward.20} parent=0 // pred_fallthru
    _
  // Predicated region
  $region14: #{t2t_vit_forward.20} parent=0 // pred_check
    _
  $region15: #{t2t_vit_forward.20} parent=0 // pred_check_branch
    %17 = sbr.rel (0) target = $region17
  $region16: #{t2t_vit_forward.20} parent=0 // pred_region
    _
  $region17: #{t2t_vit_forward.20} parent=0 // pred_fallthru
    _
  // Predicated region
  $region18: #{t2t_vit_forward.20} parent=0 // pred_check
    _
  $region19: #{t2t_vit_forward.20} parent=0 // pred_check_branch
    %19 = sbr.rel (0) target = $region21
  $region20: #{t2t_vit_forward.20} parent=0 // pred_region
    _
  $region21: #{t2t_vit_forward.20} parent=0 // pred_fallthru
    _
  %p21 = scmp.eq.s32.totalorder 0, 0
  // Predicated region
  $region22: #{t2t_vit_forward.20} parent=0 // pred_check
    %p22 = pneg %p21
  $region23: #{t2t_vit_forward.20} parent=0 // pred_check_branch
    %24 = sbr.rel (%p22) target = $region25
  $region24: #{t2t_vit_forward.20} parent=0 // pred_region
    %25 = vst [vmem:[#allocation2] sm:$0xff] 0.0
    %26 = vst [vmem:[#allocation2 + $0x8] sm:$0xff] 0.0
    %27 = vst [vmem:[#allocation2 + $0x10] sm:$0xff] 0.0
    %28 = vst [vmem:[#allocation2 + $0x18] sm:$0xff] 0.0
    %29 = vst [vmem:[#allocation2 + $0x20] sm:$0xff] 0.0
    %30 = vst [vmem:[#allocation2 + $0x28] sm:$0xff] 0.0
    %31 = vst [vmem:[#allocation2 + $0x30] sm:$0xff] 0.0
    %32 = vst [vmem:[#allocation2 + $0x38] sm:$0xff] 0.0
    %33 = vst [vmem:[#allocation2 + $0x40] sm:$0xff] 0.0
    %34 = vst [vmem:[#allocation2 + $0x48] sm:$0xff] 0.0
    %35 = vst [vmem:[#allocation2 + $0x50] sm:$0xff] 0.0
    %36 = vst [vmem:[#allocation2 + $0x58] sm:$0xff] 0.0
    %37 = vst [vmem:[#allocation2 + $0x60] sm:$0xff] 0.0
    %38 = vst [vmem:[#allocation2 + $0x68] sm:$0xff] 0.0
    %39 = vst [vmem:[#allocation2 + $0x70] sm:$0xff] 0.0
    %40 = vst [vmem:[#allocation2 + $0x78] sm:$0xff] 0.0
  $region25: #{t2t_vit_forward.20} parent=0 // pred_fallthru
    _
  %v41 = vld [vmem:[%s0] sm:$0xff]
  %v42 = vld [vmem:[%s0 + $0x8] sm:$0xff]
  %v43 = vld [vmem:[%s0 + $0x10] sm:$0xff]
  %v44 = vld [vmem:[%s0 + $0x18] sm:$0xff]
  %v45 = vld [vmem:[%s0 + $0x20] sm:$0xff]
  %v46 = vld [vmem:[%s0 + $0x28] sm:$0xff]
  %v47 = vld [vmem:[%s0 + $0x30] sm:$0xff]
  %v48 = vld [vmem:[%s0 + $0x38] sm:$0xff]
  %v49 = vld [vmem:[%s0 + $0x40] sm:$0xff]
  %v50 = vld [vmem:[%s0 + $0x48] sm:$0xff]
  %v51 = vld [vmem:[%s0 + $0x50] sm:$0xff]
  %v52 = vld [vmem:[%s0 + $0x58] sm:$0xff]
  %v53 = vld [vmem:[%s0 + $0x60] sm:$0xff]
  %v54 = vld [vmem:[%s0 + $0x68] sm:$0xff]
  %v55 = vld [vmem:[%s0 + $0x70] sm:$0xff]
  %v56 = vld [vmem:[%s0 + $0x78] sm:$0xff]
  %v57 = vld [vmem:[%s3] sm:$0xff]
  %v58 = vld [vmem:[%s3 + $0x8] sm:$0xff]
  %v59 = vld [vmem:[%s3 + $0x10] sm:$0xff]
  %v60 = vld [vmem:[%s3 + $0x18] sm:$0xff]
  %v61 = vld [vmem:[%s3 + $0x20] sm:$0xff]
  %v62 = vld [vmem:[%s3 + $0x28] sm:$0xff]
  %v63 = vld [vmem:[%s3 + $0x30] sm:$0xff]
  %v64 = vld [vmem:[%s3 + $0x38] sm:$0xff]
  %v65 = vld [vmem:[%s3 + $0x40] sm:$0xff]
  %v66 = vld [vmem:[%s3 + $0x48] sm:$0xff]
  %v67 = vld [vmem:[%s3 + $0x50] sm:$0xff]
  %v68 = vld [vmem:[%s3 + $0x58] sm:$0xff]
  %v69 = vld [vmem:[%s3 + $0x60] sm:$0xff]
  %v70 = vld [vmem:[%s3 + $0x68] sm:$0xff]
  %v71 = vld [vmem:[%s3 + $0x70] sm:$0xff]
  %v72 = vld [vmem:[%s3 + $0x78] sm:$0xff]
  %74 = vset.pattern.permute.xlu0 0
  %75 = vperm.xlu0 %74, %v57
  %v76 = vpop.permute.xlu0 %75
  %79 = vset.pattern.permute.xlu0 0
  %80 = vperm.xlu0 %79, %v58
  %v81 = vpop.permute.xlu0 %80
  %84 = vset.pattern.permute.xlu0 0
  %85 = vperm.xlu0 %84, %v59
  %v86 = vpop.permute.xlu0 %85
  %89 = vset.pattern.permute.xlu0 0
  %90 = vperm.xlu0 %89, %v60
  %v91 = vpop.permute.xlu0 %90
  %94 = vset.pattern.permute.xlu0 0
  %95 = vperm.xlu0 %94, %v61
  %v96 = vpop.permute.xlu0 %95
  %99 = vset.pattern.permute.xlu0 0
  %100 = vperm.xlu0 %99, %v62
  %v101 = vpop.permute.xlu0 %100
  %104 = vset.pattern.permute.xlu0 0
  %105 = vperm.xlu0 %104, %v63
  %v106 = vpop.permute.xlu0 %105
  %109 = vset.pattern.permute.xlu0 0
  %110 = vperm.xlu0 %109, %v64
  %v111 = vpop.permute.xlu0 %110
  %114 = vset.pattern.permute.xlu0 0
  %115 = vperm.xlu0 %114, %v65
  %v116 = vpop.permute.xlu0 %115
  %119 = vset.pattern.permute.xlu0 0
  %120 = vperm.xlu0 %119, %v66
  %v121 = vpop.permute.xlu0 %120
  %124 = vset.pattern.permute.xlu0 0
  %125 = vperm.xlu0 %124, %v67
  %v126 = vpop.permute.xlu0 %125
  %129 = vset.pattern.permute.xlu0 0
  %130 = vperm.xlu0 %129, %v68
  %v131 = vpop.permute.xlu0 %130
  %134 = vset.pattern.permute.xlu0 0
  %135 = vperm.xlu0 %134, %v69
  %v136 = vpop.permute.xlu0 %135
  %139 = vset.pattern.permute.xlu0 0
  %140 = vperm.xlu0 %139, %v70
  %v141 = vpop.permute.xlu0 %140
  %144 = vset.pattern.permute.xlu0 0
  %145 = vperm.xlu0 %144, %v71
  %v146 = vpop.permute.xlu0 %145
  %149 = vset.pattern.permute.xlu0 0
  %150 = vperm.xlu0 %149, %v72
  %v151 = vpop.permute.xlu0 %150
  %v153 = vmul.f32 %v41, %v76
  %v154 = vmul.f32 %v42, %v81
  %v155 = vmul.f32 %v43, %v86
  %v156 = vmul.f32 %v44, %v91
  %v157 = vmul.f32 %v45, %v96
  %v158 = vmul.f32 %v46, %v101
  %v159 = vmul.f32 %v47, %v106
  %v160 = vmul.f32 %v48, %v111
  %v161 = vmul.f32 %v49, %v116
  %v162 = vmul.f32 %v50, %v121
  %v163 = vmul.f32 %v51, %v126
  %v164 = vmul.f32 %v52, %v131
  %v165 = vmul.f32 %v53, %v136
  %v166 = vmul.f32 %v54, %v141
  %v167 = vmul.f32 %v55, %v146
  %v168 = vmul.f32 %v56, %v151
  %v169 = vld [vmem:[%s4] sm:$0xff]
  %v170 = vld [vmem:[%s4 + $0x8] sm:$0xff]
  %v171 = vld [vmem:[%s4 + $0x10] sm:$0xff]
  %v172 = vld [vmem:[%s4 + $0x18] sm:$0xff]
  %v173 = vld [vmem:[%s4 + $0x20] sm:$0xff]
  %v174 = vld [vmem:[%s4 + $0x28] sm:$0xff]
  %v175 = vld [vmem:[%s4 + $0x30] sm:$0xff]
  %v176 = vld [vmem:[%s4 + $0x38] sm:$0xff]
  %v177 = vld [vmem:[%s4 + $0x40] sm:$0xff]
  %v178 = vld [vmem:[%s4 + $0x48] sm:$0xff]
  %v179 = vld [vmem:[%s4 + $0x50] sm:$0xff]
  %v180 = vld [vmem:[%s4 + $0x58] sm:$0xff]
  %v181 = vld [vmem:[%s4 + $0x60] sm:$0xff]
  %v182 = vld [vmem:[%s4 + $0x68] sm:$0xff]
  %v183 = vld [vmem:[%s4 + $0x70] sm:$0xff]
  %v184 = vld [vmem:[%s4 + $0x78] sm:$0xff]
  %186 = vset.pattern.permute.xlu0 0
  %187 = vperm.xlu0 %186, %v169
  %v188 = vpop.permute.xlu0 %187
  %191 = vset.pattern.permute.xlu0 0
  %192 = vperm.xlu0 %191, %v170
  %v193 = vpop.permute.xlu0 %192
  %196 = vset.pattern.permute.xlu0 0
  %197 = vperm.xlu0 %196, %v171
  %v198 = vpop.permute.xlu0 %197
  %201 = vset.pattern.permute.xlu0 0
  %202 = vperm.xlu0 %201, %v172
  %v203 = vpop.permute.xlu0 %202
  %206 = vset.pattern.permute.xlu0 0
  %207 = vperm.xlu0 %206, %v173
  %v208 = vpop.permute.xlu0 %207
  %211 = vset.pattern.permute.xlu0 0
  %212 = vperm.xlu0 %211, %v174
  %v213 = vpop.permute.xlu0 %212
  %216 = vset.pattern.permute.xlu0 0
  %217 = vperm.xlu0 %216, %v175
  %v218 = vpop.permute.xlu0 %217
  %221 = vset.pattern.permute.xlu0 0
  %222 = vperm.xlu0 %221, %v176
  %v223 = vpop.permute.xlu0 %222
  %226 = vset.pattern.permute.xlu0 0
  %227 = vperm.xlu0 %226, %v177
  %v228 = vpop.permute.xlu0 %227
  %231 = vset.pattern.permute.xlu0 0
  %232 = vperm.xlu0 %231, %v178
  %v233 = vpop.permute.xlu0 %232
  %236 = vset.pattern.permute.xlu0 0
  %237 = vperm.xlu0 %236, %v179
  %v238 = vpop.permute.xlu0 %237
  %241 = vset.pattern.permute.xlu0 0
  %242 = vperm.xlu0 %241, %v180
  %v243 = vpop.permute.xlu0 %242
  %246 = vset.pattern.permute.xlu0 0
  %247 = vperm.xlu0 %246, %v181
  %v248 = vpop.permute.xlu0 %247
  %251 = vset.pattern.permute.xlu0 0
  %252 = vperm.xlu0 %251, %v182
  %v253 = vpop.permute.xlu0 %252
  %256 = vset.pattern.permute.xlu0 0
  %257 = vperm.xlu0 %256, %v183
  %v258 = vpop.permute.xlu0 %257
  %261 = vset.pattern.permute.xlu0 0
  %262 = vperm.xlu0 %261, %v184
  %v263 = vpop.permute.xlu0 %262
  %v265 = vadd.f32 %v153, %v188
  %v266 = vadd.f32 %v154, %v193
  %v267 = vadd.f32 %v155, %v198
  %v268 = vadd.f32 %v156, %v203
  %v269 = vadd.f32 %v157, %v208
  %v270 = vadd.f32 %v158, %v213
  %v271 = vadd.f32 %v159, %v218
  %v272 = vadd.f32 %v160, %v223
  %v273 = vadd.f32 %v161, %v228
  %v274 = vadd.f32 %v162, %v233
  %v275 = vadd.f32 %v163, %v238
  %v276 = vadd.f32 %v164, %v243
  %v277 = vadd.f32 %v165, %v248
  %v278 = vadd.f32 %v166, %v253
  %v279 = vadd.f32 %v167, %v258
  %v280 = vadd.f32 %v168, %v263
  %v281 = vld [vmem:[#allocation2] sm:$0xff]
  %v282 = vld [vmem:[#allocation2 + $0x8] sm:$0xff]
  %v283 = vld [vmem:[#allocation2 + $0x10] sm:$0xff]
  %v284 = vld [vmem:[#allocation2 + $0x18] sm:$0xff]
  %v285 = vld [vmem:[#allocation2 + $0x20] sm:$0xff]
  %v286 = vld [vmem:[#allocation2 + $0x28] sm:$0xff]
  %v287 = vld [vmem:[#allocation2 + $0x30] sm:$0xff]
  %v288 = vld [vmem:[#allocation2 + $0x38] sm:$0xff]
  %v289 = vld [vmem:[#allocation2 + $0x40] sm:$0xff]
  %v290 = vld [vmem:[#allocation2 + $0x48] sm:$0xff]
  %v291 = vld [vmem:[#allocation2 + $0x50] sm:$0xff]
  %v292 = vld [vmem:[#allocation2 + $0x58] sm:$0xff]
  %v293 = vld [vmem:[#allocation2 + $0x60] sm:$0xff]
  %v294 = vld [vmem:[#allocation2 + $0x68] sm:$0xff]
  %v295 = vld [vmem:[#allocation2 + $0x70] sm:$0xff]
  %v296 = vld [vmem:[#allocation2 + $0x78] sm:$0xff]
  %v297 = vpack.c.bf16 %v266, %v265
  %v298 = vpack.c.bf16 %v268, %v267
  %v299 = vpack.c.bf16 %v270, %v269
  %v300 = vpack.c.bf16 %v272, %v271
  %v301 = vpack.c.bf16 %v274, %v273
  %v302 = vpack.c.bf16 %v276, %v275
  %v303 = vpack.c.bf16 %v278, %v277
  %v304 = vpack.c.bf16 %v280, %v279
  %v305 = vld [vmem:[%s1] sm:$0xff]
  %v306 = vld [vmem:[%s1 + $0x8] sm:$0xff]
  %v307 = vld [vmem:[%s1 + $0x10] sm:$0xff]
  %v308 = vld [vmem:[%s1 + $0x18] sm:$0xff]
  %v309 = vld [vmem:[%s1 + $0x20] sm:$0xff]
  %v310 = vld [vmem:[%s1 + $0x28] sm:$0xff]
  %v311 = vld [vmem:[%s1 + $0x30] sm:$0xff]
  %v312 = vld [vmem:[%s1 + $0x38] sm:$0xff]
  %v313 = vld [vmem:[%s1 + $0x40] sm:$0xff]
  %v314 = vld [vmem:[%s1 + $0x48] sm:$0xff]
  %v315 = vld [vmem:[%s1 + $0x50] sm:$0xff]
  %v316 = vld [vmem:[%s1 + $0x58] sm:$0xff]
  %v317 = vld [vmem:[%s1 + $0x60] sm:$0xff]
  %v318 = vld [vmem:[%s1 + $0x68] sm:$0xff]
  %v319 = vld [vmem:[%s1 + $0x70] sm:$0xff]
  %v320 = vld [vmem:[%s1 + $0x78] sm:$0xff]
  %v321 = vpack.c.bf16 %v306, %v305
  %v322 = vpack.c.bf16 %v308, %v307
  %v323 = vpack.c.bf16 %v310, %v309
  %v324 = vpack.c.bf16 %v312, %v311
  %v325 = vpack.c.bf16 %v314, %v313
  %v326 = vpack.c.bf16 %v316, %v315
  %v327 = vpack.c.bf16 %v318, %v317
  %v328 = vpack.c.bf16 %v320, %v319
  %329 = vmatprep.subr.bf16.mxu0 0
  %330 = vmatpush1.bf16.msra.mxu0 %v321
  %331 = vmatprep.subr.bf16.mxu0 0
  %332 = vmatpush1.bf16.msra.mxu0 %v322
  %333 = vmatprep.subr.bf16.mxu0 0
  %334 = vmatpush1.bf16.msra.mxu0 %v323
  %335 = vmatprep.subr.bf16.mxu0 0
  %336 = vmatpush1.bf16.msra.mxu0 %v324
  %337 = vmatprep.subr.bf16.mxu0 0
  %338 = vmatpush1.bf16.msra.mxu0 %v325
  %339 = vmatprep.subr.bf16.mxu0 0
  %340 = vmatpush1.bf16.msra.mxu0 %v326
  %341 = vmatprep.subr.bf16.mxu0 0
  %342 = vmatpush1.bf16.msra.mxu0 %v327
  %343 = vmatprep.subr.bf16.mxu0 0
  %344 = vmatpush1.bf16.msra.mxu0 %v328
  %345 = vmatprep.subr.bf16.mxu0 0
  %346 = vmatpush1.bf16.msra.mxu0 0
  %347 = vmatprep.subr.bf16.mxu0 0
  %348 = vmatpush1.bf16.msra.mxu0 0
  %349 = vmatprep.subr.bf16.mxu0 0
  %350 = vmatpush1.bf16.msra.mxu0 0
  %351 = vmatprep.subr.bf16.mxu0 0
  %352 = vmatpush1.bf16.msra.mxu0 0
  %353 = vmatprep.subr.bf16.mxu0 0
  %354 = vmatpush1.bf16.msra.mxu0 0
  %355 = vmatprep.subr.bf16.mxu0 0
  %356 = vmatpush1.bf16.msra.mxu0 0
  %357 = vmatprep.subr.bf16.mxu0 0
  %358 = vmatpush1.bf16.msra.mxu0 0
  %359 = vmatprep.subr.bf16.mxu0 0
  %360 = vmatpush1.bf16.msra.mxu0 0
  %361 = vmatprep.mubr.bf16.mxu0 0
  %362 = vmatmul.mubr.bf16.gmra.mrb[0].mxu0 %v297
  %v363 = vpop.f32.mrb[0].mxu0
  %v364 = vadd.f32 0.0, %v363
  %v365 = vpop.f32.mrb[0].mxu0
  %v366 = vpop.f32.mrb[0].mxu0
  %v367 = vadd.f32 0.0, %v366
  %v368 = vpop.f32.mrb[0].mxu0
  %369 = vmatprep.mubr.bf16.mxu0 0
  %370 = vmatmul.mubr.bf16.gmra.mrb[0].mxu0 %v298
  %v371 = vpop.f32.mrb[0].mxu0
  %v372 = vadd.f32 0.0, %v371
  %v373 = vpop.f32.mrb[0].mxu0
  %v374 = vpop.f32.mrb[0].mxu0
  %v375 = vadd.f32 0.0, %v374
  %v376 = vpop.f32.mrb[0].mxu0
  %377 = vmatprep.mubr.bf16.mxu0 0
  %378 = vmatmul.mubr.bf16.gmra.mrb[0].mxu0 %v299
  %v379 = vpop.f32.mrb[0].mxu0
  %v380 = vadd.f32 0.0, %v379
  %v381 = vpop.f32.mrb[0].mxu0
  %v382 = vpop.f32.mrb[0].mxu0
  %v383 = vadd.f32 0.0, %v382
  %v384 = vpop.f32.mrb[0].mxu0
  %385 = vmatprep.mubr.bf16.mxu0 0
  %386 = vmatmul.mubr.bf16.gmra.mrb[0].mxu0 %v300
  %v387 = vpop.f32.mrb[0].mxu0
  %v388 = vadd.f32 0.0, %v387
  %v389 = vpop.f32.mrb[0].mxu0
  %v390 = vpop.f32.mrb[0].mxu0
  %v391 = vadd.f32 0.0, %v390
  %v392 = vpop.f32.mrb[0].mxu0
  %393 = vmatprep.mubr.bf16.mxu0 0
  %394 = vmatmul.mubr.bf16.gmra.mrb[0].mxu0 %v301
  %v395 = vpop.f32.mrb[0].mxu0
  %v396 = vadd.f32 0.0, %v395
  %v397 = vpop.f32.mrb[0].mxu0
  %v398 = vpop.f32.mrb[0].mxu0
  %v399 = vadd.f32 0.0, %v398
  %v400 = vpop.f32.mrb[0].mxu0
  %401 = vmatprep.mubr.bf16.mxu0 0
  %402 = vmatmul.mubr.bf16.gmra.mrb[0].mxu0 %v302
  %v403 = vpop.f32.mrb[0].mxu0
  %v404 = vadd.f32 0.0, %v403
  %v405 = vpop.f32.mrb[0].mxu0
  %v406 = vpop.f32.mrb[0].mxu0
  %v407 = vadd.f32 0.0, %v406
  %v408 = vpop.f32.mrb[0].mxu0
  %409 = vmatprep.mubr.bf16.mxu0 0
  %410 = vmatmul.mubr.bf16.gmra.mrb[0].mxu0 %v303
  %v411 = vpop.f32.mrb[0].mxu0
  %v412 = vadd.f32 0.0, %v411
  %v413 = vpop.f32.mrb[0].mxu0
  %v414 = vpop.f32.mrb[0].mxu0
  %v415 = vadd.f32 0.0, %v414
  %v416 = vpop.f32.mrb[0].mxu0
  %417 = vmatprep.mubr.bf16.mxu0 0
  %418 = vmatmul.mubr.bf16.gmra.mrb[0].mxu0 %v304
  %v419 = vpop.f32.mrb[0].mxu0
  %v420 = vadd.f32 0.0, %v419
  %v421 = vpop.f32.mrb[0].mxu0
  %v422 = vpop.f32.mrb[0].mxu0
  %v423 = vadd.f32 0.0, %v422
  %v424 = vpop.f32.mrb[0].mxu0
  %425 = vdwg.mxu0
  %v426 = vadd.f32 %v281, %v364
  %v427 = vadd.f32 %v282, %v367
  %v428 = vadd.f32 %v283, %v372
  %v429 = vadd.f32 %v284, %v375
  %v430 = vadd.f32 %v285, %v380
  %v431 = vadd.f32 %v286, %v383
  %v432 = vadd.f32 %v287, %v388
  %v433 = vadd.f32 %v288, %v391
  %v434 = vadd.f32 %v289, %v396
  %v435 = vadd.f32 %v290, %v399
  %v436 = vadd.f32 %v291, %v404
  %v437 = vadd.f32 %v292, %v407
  %v438 = vadd.f32 %v293, %v412
  %v439 = vadd.f32 %v294, %v415
  %v440 = vadd.f32 %v295, %v420
  %v441 = vadd.f32 %v296, %v423
  %442 = vst [vmem:[#allocation2] sm:$0xff] %v426
  %443 = vst [vmem:[#allocation2 + $0x8] sm:$0xff] %v427
  %444 = vst [vmem:[#allocation2 + $0x10] sm:$0xff] %v428
  %445 = vst [vmem:[#allocation2 + $0x18] sm:$0xff] %v429
  %446 = vst [vmem:[#allocation2 + $0x20] sm:$0xff] %v430
  %447 = vst [vmem:[#allocation2 + $0x28] sm:$0xff] %v431
  %448 = vst [vmem:[#allocation2 + $0x30] sm:$0xff] %v432
  %449 = vst [vmem:[#allocation2 + $0x38] sm:$0xff] %v433
  %450 = vst [vmem:[#allocation2 + $0x40] sm:$0xff] %v434
  %451 = vst [vmem:[#allocation2 + $0x48] sm:$0xff] %v435
  %452 = vst [vmem:[#allocation2 + $0x50] sm:$0xff] %v436
  %453 = vst [vmem:[#allocation2 + $0x58] sm:$0xff] %v437
  %454 = vst [vmem:[#allocation2 + $0x60] sm:$0xff] %v438
  %455 = vst [vmem:[#allocation2 + $0x68] sm:$0xff] %v439
  %456 = vst [vmem:[#allocation2 + $0x70] sm:$0xff] %v440
  %457 = vst [vmem:[#allocation2 + $0x78] sm:$0xff] %v441
  // Predicated region
  $region26: #{t2t_vit_forward.20} parent=0 // pred_check
    %p458 = pneg %p21
  $region27: #{t2t_vit_forward.20} parent=0 // pred_check_branch
    %460 = sbr.rel (%p458) target = $region29
  $region28: #{t2t_vit_forward.20} parent=0 // pred_region
    %v461 = vld [vmem:[#allocation2] sm:$0xff]
    %v462 = vld [vmem:[#allocation2 + $0x8] sm:$0xff]
    %v463 = vld [vmem:[#allocation2 + $0x10] sm:$0xff]
    %v464 = vld [vmem:[#allocation2 + $0x18] sm:$0xff]
    %v465 = vld [vmem:[#allocation2 + $0x20] sm:$0xff]
    %v466 = vld [vmem:[#allocation2 + $0x28] sm:$0xff]
    %v467 = vld [vmem:[#allocation2 + $0x30] sm:$0xff]
    %v468 = vld [vmem:[#allocation2 + $0x38] sm:$0xff]
    %v469 = vld [vmem:[#allocation2 + $0x40] sm:$0xff]
    %v470 = vld [vmem:[#allocation2 + $0x48] sm:$0xff]
    %v471 = vld [vmem:[#allocation2 + $0x50] sm:$0xff]
    %v472 = vld [vmem:[#allocation2 + $0x58] sm:$0xff]
    %v473 = vld [vmem:[#allocation2 + $0x60] sm:$0xff]
    %v474 = vld [vmem:[#allocation2 + $0x68] sm:$0xff]
    %v475 = vld [vmem:[#allocation2 + $0x70] sm:$0xff]
    %v476 = vld [vmem:[#allocation2 + $0x78] sm:$0xff]
    %v477 = vld [vmem:[%s2] sm:$0x1]
    %v479 = vlaneseq
    %v480 = vshrl.u32 %v479, 7
    %v481 = vsub.s32 0, %v480
    %v482 = vrot.slane %v477, %v481
    %v484 = vadd.f32 %v461, %v482
    %v485 = vadd.f32 %v462, %v482
    %v486 = vadd.f32 %v463, %v482
    %v487 = vadd.f32 %v464, %v482
    %v488 = vadd.f32 %v465, %v482
    %v489 = vadd.f32 %v466, %v482
    %v490 = vadd.f32 %v467, %v482
    %v491 = vadd.f32 %v468, %v482
    %v492 = vadd.f32 %v469, %v482
    %v493 = vadd.f32 %v470, %v482
    %v494 = vadd.f32 %v471, %v482
    %v495 = vadd.f32 %v472, %v482
    %v496 = vadd.f32 %v473, %v482
    %v497 = vadd.f32 %v474, %v482
    %v498 = vadd.f32 %v475, %v482
    %v499 = vadd.f32 %v476, %v482
    %500 = vst [vmem:[%s5] sm:$0xff] %v484
    %501 = vst [vmem:[%s5 + $0x8] sm:$0xff] %v485
    %502 = vst [vmem:[%s5 + $0x10] sm:$0xff] %v486
    %503 = vst [vmem:[%s5 + $0x18] sm:$0xff] %v487
    %504 = vst [vmem:[%s5 + $0x20] sm:$0xff] %v488
    %505 = vst [vmem:[%s5 + $0x28] sm:$0xff] %v489
    %506 = vst [vmem:[%s5 + $0x30] sm:$0xff] %v490
    %507 = vst [vmem:[%s5 + $0x38] sm:$0xff] %v491
    %508 = vst [vmem:[%s5 + $0x40] sm:$0xff] %v492
    %509 = vst [vmem:[%s5 + $0x48] sm:$0xff] %v493
    %510 = vst [vmem:[%s5 + $0x50] sm:$0xff] %v494
    %511 = vst [vmem:[%s5 + $0x58] sm:$0xff] %v495
    %512 = vst [vmem:[%s5 + $0x60] sm:$0xff] %v496
    %513 = vst [vmem:[%s5 + $0x68] sm:$0xff] %v497
    %514 = vst [vmem:[%s5 + $0x70] sm:$0xff] %v498
    %515 = vst [vmem:[%s5 + $0x78] sm:$0xff] %v499
  $region29: #{t2t_vit_forward.20} parent=0 // pred_fallthru
    _
  // Predicated region
  $region30: #{t2t_vit_forward.20} parent=0 // pred_check
    _
  $region31: #{t2t_vit_forward.20} parent=0 // pred_check_branch
    %517 = sbr.rel (0) target = $region33
  $region32: #{t2t_vit_forward.20} parent=0 // pred_region
    _
  $region33: #{t2t_vit_forward.20} parent=0 // pred_fallthru
    _
  // Predicated region
  $region34: #{t2t_vit_forward.20} parent=0 // pred_check
    _
  $region35: #{t2t_vit_forward.20} parent=0 // pred_check_branch
    %519 = sbr.rel (0) target = $region37
  $region36: #{t2t_vit_forward.20} parent=0 // pred_region
    _
  $region37: #{t2t_vit_forward.20} parent=0 // pred_fallthru
    _

// kernel: t2t_vit_forward.22
$region0: #{t2t_vit_forward.22}
  #allocation0 [shape = 'u32[]', space=smem, size = 0x4, offset = 0x4, fixed_abs, tag = 'smem constant byte address 0x4 - core index']
  #allocation1 [shape = 'u32[144,128]{1,0:T(1,128)}', space=vmem, size = 0x12000, scoped, tag = 'internal scratch']
  #allocation2 [shape = 'f32[128,128]{1,0:T(8,128)}', space=vmem, size = 0x10000, scoped, tag = 'scratch operand']
  %s0 = inlined_call_operand.vmem [shape: f32[128,128], index: 0, kind: input, shape index: {}]
  %s1 = inlined_call_operand.vmem [shape: f32[128,128], index: 1, kind: input, shape index: {}]
  %s2 = inlined_call_operand.vmem [shape: f32[1,128], index: 2, kind: input, shape index: {}]
  %s3 = inlined_call_operand.vmem [shape: f32[128,128], index: 3, kind: input, shape index: {}]
  %s4 = inlined_call_operand.vmem [shape: f32[128,128], index: 4, kind: output, shape index: {}]
  %s5 = sld [smem:[#allocation0]]
  $region34: #{t2t_vit_forward.22} parent=0
    _
  %s7 = ssub.s32 1, %s5
  %s8 = scalar_select 0, %s7, %s5
  // Predicated region
  $region2: #{t2t_vit_forward.22} parent=0 // pred_check
    _
  $region3: #{t2t_vit_forward.22} parent=0 // pred_check_branch
    %10 = sbr.rel (0) target = $region5
  $region4: #{t2t_vit_forward.22} parent=0 // pred_region
    _
  $region5: #{t2t_vit_forward.22} parent=0 // pred_fallthru
    _
  // Predicated region
  $region6: #{t2t_vit_forward.22} parent=0 // pred_check
    _
  $region7: #{t2t_vit_forward.22} parent=0 // pred_check_branch
    %12 = sbr.rel (0) target = $region9
  $region8: #{t2t_vit_forward.22} parent=0 // pred_region
    _
  $region9: #{t2t_vit_forward.22} parent=0 // pred_fallthru
    _
  // Predicated region
  $region10: #{t2t_vit_forward.22} parent=0 // pred_check
    _
  $region11: #{t2t_vit_forward.22} parent=0 // pred_check_branch
    %14 = sbr.rel (0) target = $region13
  $region12: #{t2t_vit_forward.22} parent=0 // pred_region
    _
  $region13: #{t2t_vit_forward.22} parent=0 // pred_fallthru
    _
  // Predicated region
  $region14: #{t2t_vit_forward.22} parent=0 // pred_check
    _
  $region15: #{t2t_vit_forward.22} parent=0 // pred_check_branch
    %16 = sbr.rel (0) target = $region17
  $region16: #{t2t_vit_forward.22} parent=0 // pred_region
    _
  $region17: #{t2t_vit_forward.22} parent=0 // pred_fallthru
    _
  %p18 = scmp.eq.s32.totalorder 0, 0
  // Predicated region
  $region18: #{t2t_vit_forward.22} parent=0 // pred_check
    %p19 = pneg %p18
  $region19: #{t2t_vit_forward.22} parent=0 // pred_check_branch
    %21 = sbr.rel (%p19) target = $region21
  $region20: #{t2t_vit_forward.22} parent=0 // pred_region
    %22 = vst [vmem:[#allocation2] sm:$0xff] 0.0
    %23 = vst [vmem:[#allocation2 + $0x8] sm:$0xff] 0.0
    %24 = vst [vmem:[#allocation2 + $0x10] sm:$0xff] 0.0
    %25 = vst [vmem:[#allocation2 + $0x18] sm:$0xff] 0.0
    %26 = vst [vmem:[#allocation2 + $0x20] sm:$0xff] 0.0
    %27 = vst [vmem:[#allocation2 + $0x28] sm:$0xff] 0.0
    %28 = vst [vmem:[#allocation2 + $0x30] sm:$0xff] 0.0
    %29 = vst [vmem:[#allocation2 + $0x38] sm:$0xff] 0.0
    %30 = vst [vmem:[#allocation2 + $0x40] sm:$0xff] 0.0
    %31 = vst [vmem:[#allocation2 + $0x48] sm:$0xff] 0.0
    %32 = vst [vmem:[#allocation2 + $0x50] sm:$0xff] 0.0
    %33 = vst [vmem:[#allocation2 + $0x58] sm:$0xff] 0.0
    %34 = vst [vmem:[#allocation2 + $0x60] sm:$0xff] 0.0
    %35 = vst [vmem:[#allocation2 + $0x68] sm:$0xff] 0.0
    %36 = vst [vmem:[#allocation2 + $0x70] sm:$0xff] 0.0
    %37 = vst [vmem:[#allocation2 + $0x78] sm:$0xff] 0.0
  $region21: #{t2t_vit_forward.22} parent=0 // pred_fallthru
    _
  %v38 = vld [vmem:[%s0] sm:$0xff]
  %v39 = vld [vmem:[%s0 + $0x8] sm:$0xff]
  %v40 = vld [vmem:[%s0 + $0x10] sm:$0xff]
  %v41 = vld [vmem:[%s0 + $0x18] sm:$0xff]
  %v42 = vld [vmem:[%s0 + $0x20] sm:$0xff]
  %v43 = vld [vmem:[%s0 + $0x28] sm:$0xff]
  %v44 = vld [vmem:[%s0 + $0x30] sm:$0xff]
  %v45 = vld [vmem:[%s0 + $0x38] sm:$0xff]
  %v46 = vld [vmem:[%s0 + $0x40] sm:$0xff]
  %v47 = vld [vmem:[%s0 + $0x48] sm:$0xff]
  %v48 = vld [vmem:[%s0 + $0x50] sm:$0xff]
  %v49 = vld [vmem:[%s0 + $0x58] sm:$0xff]
  %v50 = vld [vmem:[%s0 + $0x60] sm:$0xff]
  %v51 = vld [vmem:[%s0 + $0x68] sm:$0xff]
  %v52 = vld [vmem:[%s0 + $0x70] sm:$0xff]
  %v53 = vld [vmem:[%s0 + $0x78] sm:$0xff]
  %v54 = vld [vmem:[#allocation2] sm:$0xff]
  %v55 = vld [vmem:[#allocation2 + $0x8] sm:$0xff]
  %v56 = vld [vmem:[#allocation2 + $0x10] sm:$0xff]
  %v57 = vld [vmem:[#allocation2 + $0x18] sm:$0xff]
  %v58 = vld [vmem:[#allocation2 + $0x20] sm:$0xff]
  %v59 = vld [vmem:[#allocation2 + $0x28] sm:$0xff]
  %v60 = vld [vmem:[#allocation2 + $0x30] sm:$0xff]
  %v61 = vld [vmem:[#allocation2 + $0x38] sm:$0xff]
  %v62 = vld [vmem:[#allocation2 + $0x40] sm:$0xff]
  %v63 = vld [vmem:[#allocation2 + $0x48] sm:$0xff]
  %v64 = vld [vmem:[#allocation2 + $0x50] sm:$0xff]
  %v65 = vld [vmem:[#allocation2 + $0x58] sm:$0xff]
  %v66 = vld [vmem:[#allocation2 + $0x60] sm:$0xff]
  %v67 = vld [vmem:[#allocation2 + $0x68] sm:$0xff]
  %v68 = vld [vmem:[#allocation2 + $0x70] sm:$0xff]
  %v69 = vld [vmem:[#allocation2 + $0x78] sm:$0xff]
  %v70 = vpack.c.bf16 %v39, %v38
  %v71 = vpack.c.bf16 %v41, %v40
  %v72 = vpack.c.bf16 %v43, %v42
  %v73 = vpack.c.bf16 %v45, %v44
  %v74 = vpack.c.bf16 %v47, %v46
  %v75 = vpack.c.bf16 %v49, %v48
  %v76 = vpack.c.bf16 %v51, %v50
  %v77 = vpack.c.bf16 %v53, %v52
  %v78 = vld [vmem:[%s1] sm:$0xff]
  %v79 = vld [vmem:[%s1 + $0x8] sm:$0xff]
  %v80 = vld [vmem:[%s1 + $0x10] sm:$0xff]
  %v81 = vld [vmem:[%s1 + $0x18] sm:$0xff]
  %v82 = vld [vmem:[%s1 + $0x20] sm:$0xff]
  %v83 = vld [vmem:[%s1 + $0x28] sm:$0xff]
  %v84 = vld [vmem:[%s1 + $0x30] sm:$0xff]
  %v85 = vld [vmem:[%s1 + $0x38] sm:$0xff]
  %v86 = vld [vmem:[%s1 + $0x40] sm:$0xff]
  %v87 = vld [vmem:[%s1 + $0x48] sm:$0xff]
  %v88 = vld [vmem:[%s1 + $0x50] sm:$0xff]
  %v89 = vld [vmem:[%s1 + $0x58] sm:$0xff]
  %v90 = vld [vmem:[%s1 + $0x60] sm:$0xff]
  %v91 = vld [vmem:[%s1 + $0x68] sm:$0xff]
  %v92 = vld [vmem:[%s1 + $0x70] sm:$0xff]
  %v93 = vld [vmem:[%s1 + $0x78] sm:$0xff]
  %v94 = vpack.c.bf16 %v79, %v78
  %v95 = vpack.c.bf16 %v81, %v80
  %v96 = vpack.c.bf16 %v83, %v82
  %v97 = vpack.c.bf16 %v85, %v84
  %v98 = vpack.c.bf16 %v87, %v86
  %v99 = vpack.c.bf16 %v89, %v88
  %v100 = vpack.c.bf16 %v91, %v90
  %v101 = vpack.c.bf16 %v93, %v92
  %102 = vmatprep.subr.bf16.mxu0 0
  %103 = vmatpush1.bf16.msra.mxu0 %v94
  %104 = vmatprep.subr.bf16.mxu0 0
  %105 = vmatpush1.bf16.msra.mxu0 %v95
  %106 = vmatprep.subr.bf16.mxu0 0
  %107 = vmatpush1.bf16.msra.mxu0 %v96
  %108 = vmatprep.subr.bf16.mxu0 0
  %109 = vmatpush1.bf16.msra.mxu0 %v97
  %110 = vmatprep.subr.bf16.mxu0 0
  %111 = vmatpush1.bf16.msra.mxu0 %v98
  %112 = vmatprep.subr.bf16.mxu0 0
  %113 = vmatpush1.bf16.msra.mxu0 %v99
  %114 = vmatprep.subr.bf16.mxu0 0
  %115 = vmatpush1.bf16.msra.mxu0 %v100
  %116 = vmatprep.subr.bf16.mxu0 0
  %117 = vmatpush1.bf16.msra.mxu0 %v101
  %118 = vmatprep.subr.bf16.mxu0 0
  %119 = vmatpush1.bf16.msra.mxu0 0
  %120 = vmatprep.subr.bf16.mxu0 0
  %121 = vmatpush1.bf16.msra.mxu0 0
  %122 = vmatprep.subr.bf16.mxu0 0
  %123 = vmatpush1.bf16.msra.mxu0 0
  %124 = vmatprep.subr.bf16.mxu0 0
  %125 = vmatpush1.bf16.msra.mxu0 0
  %126 = vmatprep.subr.bf16.mxu0 0
  %127 = vmatpush1.bf16.msra.mxu0 0
  %128 = vmatprep.subr.bf16.mxu0 0
  %129 = vmatpush1.bf16.msra.mxu0 0
  %130 = vmatprep.subr.bf16.mxu0 0
  %131 = vmatpush1.bf16.msra.mxu0 0
  %132 = vmatprep.subr.bf16.mxu0 0
  %133 = vmatpush1.bf16.msra.mxu0 0
  %134 = vmatprep.mubr.bf16.mxu0 0
  %135 = vmatmul.mubr.bf16.gmra.mrb[0].mxu0 %v70
  %v136 = vpop.f32.mrb[0].mxu0
  %v137 = vadd.f32 0.0, %v136
  %v138 = vpop.f32.mrb[0].mxu0
  %v139 = vpop.f32.mrb[0].mxu0
  %v140 = vadd.f32 0.0, %v139
  %v141 = vpop.f32.mrb[0].mxu0
  %142 = vmatprep.mubr.bf16.mxu0 0
  %143 = vmatmul.mubr.bf16.gmra.mrb[0].mxu0 %v71
  %v144 = vpop.f32.mrb[0].mxu0
  %v145 = vadd.f32 0.0, %v144
  %v146 = vpop.f32.mrb[0].mxu0
  %v147 = vpop.f32.mrb[0].mxu0
  %v148 = vadd.f32 0.0, %v147
  %v149 = vpop.f32.mrb[0].mxu0
  %150 = vmatprep.mubr.bf16.mxu0 0
  %151 = vmatmul.mubr.bf16.gmra.mrb[0].mxu0 %v72
  %v152 = vpop.f32.mrb[0].mxu0
  %v153 = vadd.f32 0.0, %v152
  %v154 = vpop.f32.mrb[0].mxu0
  %v155 = vpop.f32.mrb[0].mxu0
  %v156 = vadd.f32 0.0, %v155
  %v157 = vpop.f32.mrb[0].mxu0
  %158 = vmatprep.mubr.bf16.mxu0 0
  %159 = vmatmul.mubr.bf16.gmra.mrb[0].mxu0 %v73
  %v160 = vpop.f32.mrb[0].mxu0
  %v161 = vadd.f32 0.0, %v160
  %v162 = vpop.f32.mrb[0].mxu0
  %v163 = vpop.f32.mrb[0].mxu0
  %v164 = vadd.f32 0.0, %v163
  %v165 = vpop.f32.mrb[0].mxu0
  %166 = vmatprep.mubr.bf16.mxu0 0
  %167 = vmatmul.mubr.bf16.gmra.mrb[0].mxu0 %v74
  %v168 = vpop.f32.mrb[0].mxu0
  %v169 = vadd.f32 0.0, %v168
  %v170 = vpop.f32.mrb[0].mxu0
  %v171 = vpop.f32.mrb[0].mxu0
  %v172 = vadd.f32 0.0, %v171
  %v173 = vpop.f32.mrb[0].mxu0
  %174 = vmatprep.mubr.bf16.mxu0 0
  %175 = vmatmul.mubr.bf16.gmra.mrb[0].mxu0 %v75
  %v176 = vpop.f32.mrb[0].mxu0
  %v177 = vadd.f32 0.0, %v176
  %v178 = vpop.f32.mrb[0].mxu0
  %v179 = vpop.f32.mrb[0].mxu0
  %v180 = vadd.f32 0.0, %v179
  %v181 = vpop.f32.mrb[0].mxu0
  %182 = vmatprep.mubr.bf16.mxu0 0
  %183 = vmatmul.mubr.bf16.gmra.mrb[0].mxu0 %v76
  %v184 = vpop.f32.mrb[0].mxu0
  %v185 = vadd.f32 0.0, %v184
  %v186 = vpop.f32.mrb[0].mxu0
  %v187 = vpop.f32.mrb[0].mxu0
  %v188 = vadd.f32 0.0, %v187
  %v189 = vpop.f32.mrb[0].mxu0
  %190 = vmatprep.mubr.bf16.mxu0 0
  %191 = vmatmul.mubr.bf16.gmra.mrb[0].mxu0 %v77
  %v192 = vpop.f32.mrb[0].mxu0
  %v193 = vadd.f32 0.0, %v192
  %v194 = vpop.f32.mrb[0].mxu0
  %v195 = vpop.f32.mrb[0].mxu0
  %v196 = vadd.f32 0.0, %v195
  %v197 = vpop.f32.mrb[0].mxu0
  %198 = vdwg.mxu0
  %v199 = vadd.f32 %v54, %v137
  %v200 = vadd.f32 %v55, %v140
  %v201 = vadd.f32 %v56, %v145
  %v202 = vadd.f32 %v57, %v148
  %v203 = vadd.f32 %v58, %v153
  %v204 = vadd.f32 %v59, %v156
  %v205 = vadd.f32 %v60, %v161
  %v206 = vadd.f32 %v61, %v164
  %v207 = vadd.f32 %v62, %v169
  %v208 = vadd.f32 %v63, %v172
  %v209 = vadd.f32 %v64, %v177
  %v210 = vadd.f32 %v65, %v180
  %v211 = vadd.f32 %v66, %v185
  %v212 = vadd.f32 %v67, %v188
  %v213 = vadd.f32 %v68, %v193
  %v214 = vadd.f32 %v69, %v196
  %215 = vst [vmem:[#allocation2] sm:$0xff] %v199
  %216 = vst [vmem:[#allocation2 + $0x8] sm:$0xff] %v200
  %217 = vst [vmem:[#allocation2 + $0x10] sm:$0xff] %v201
  %218 = vst [vmem:[#allocation2 + $0x18] sm:$0xff] %v202
  %219 = vst [vmem:[#allocation2 + $0x20] sm:$0xff] %v203
  %220 = vst [vmem:[#allocation2 + $0x28] sm:$0xff] %v204
  %221 = vst [vmem:[#allocation2 + $0x30] sm:$0xff] %v205
  %222 = vst [vmem:[#allocation2 + $0x38] sm:$0xff] %v206
  %223 = vst [vmem:[#allocation2 + $0x40] sm:$0xff] %v207
  %224 = vst [vmem:[#allocation2 + $0x48] sm:$0xff] %v208
  %225 = vst [vmem:[#allocation2 + $0x50] sm:$0xff] %v209
  %226 = vst [vmem:[#allocation2 + $0x58] sm:$0xff] %v210
  %227 = vst [vmem:[#allocation2 + $0x60] sm:$0xff] %v211
  %228 = vst [vmem:[#allocation2 + $0x68] sm:$0xff] %v212
  %229 = vst [vmem:[#allocation2 + $0x70] sm:$0xff] %v213
  %230 = vst [vmem:[#allocation2 + $0x78] sm:$0xff] %v214
  // Predicated region
  $region22: #{t2t_vit_forward.22} parent=0 // pred_check
    %p231 = pneg %p18
  $region23: #{t2t_vit_forward.22} parent=0 // pred_check_branch
    %233 = sbr.rel (%p231) target = $region25
  $region24: #{t2t_vit_forward.22} parent=0 // pred_region
    %v234 = vld [vmem:[#allocation2] sm:$0xff]
    %v235 = vld [vmem:[#allocation2 + $0x8] sm:$0xff]
    %v236 = vld [vmem:[#allocation2 + $0x10] sm:$0xff]
    %v237 = vld [vmem:[#allocation2 + $0x18] sm:$0xff]
    %v238 = vld [vmem:[#allocation2 + $0x20] sm:$0xff]
    %v239 = vld [vmem:[#allocation2 + $0x28] sm:$0xff]
    %v240 = vld [vmem:[#allocation2 + $0x30] sm:$0xff]
    %v241 = vld [vmem:[#allocation2 + $0x38] sm:$0xff]
    %v242 = vld [vmem:[#allocation2 + $0x40] sm:$0xff]
    %v243 = vld [vmem:[#allocation2 + $0x48] sm:$0xff]
    %v244 = vld [vmem:[#allocation2 + $0x50] sm:$0xff]
    %v245 = vld [vmem:[#allocation2 + $0x58] sm:$0xff]
    %v246 = vld [vmem:[#allocation2 + $0x60] sm:$0xff]
    %v247 = vld [vmem:[#allocation2 + $0x68] sm:$0xff]
    %v248 = vld [vmem:[#allocation2 + $0x70] sm:$0xff]
    %v249 = vld [vmem:[#allocation2 + $0x78] sm:$0xff]
    %v250 = vld [vmem:[%s2] sm:$0x1]
    %v252 = vlaneseq
    %v253 = vshrl.u32 %v252, 7
    %v254 = vsub.s32 0, %v253
    %v255 = vrot.slane %v250, %v254
    %v257 = vadd.f32 %v234, %v255
    %v258 = vadd.f32 %v235, %v255
    %v259 = vadd.f32 %v236, %v255
    %v260 = vadd.f32 %v237, %v255
    %v261 = vadd.f32 %v238, %v255
    %v262 = vadd.f32 %v239, %v255
    %v263 = vadd.f32 %v240, %v255
    %v264 = vadd.f32 %v241, %v255
    %v265 = vadd.f32 %v242, %v255
    %v266 = vadd.f32 %v243, %v255
    %v267 = vadd.f32 %v244, %v255
    %v268 = vadd.f32 %v245, %v255
    %v269 = vadd.f32 %v246, %v255
    %v270 = vadd.f32 %v247, %v255
    %v271 = vadd.f32 %v248, %v255
    %v272 = vadd.f32 %v249, %v255
    %v273 = vld [vmem:[%s3] sm:$0xff]
    %v274 = vld [vmem:[%s3 + $0x8] sm:$0xff]
    %v275 = vld [vmem:[%s3 + $0x10] sm:$0xff]
    %v276 = vld [vmem:[%s3 + $0x18] sm:$0xff]
    %v277 = vld [vmem:[%s3 + $0x20] sm:$0xff]
    %v278 = vld [vmem:[%s3 + $0x28] sm:$0xff]
    %v279 = vld [vmem:[%s3 + $0x30] sm:$0xff]
    %v280 = vld [vmem:[%s3 + $0x38] sm:$0xff]
    %v281 = vld [vmem:[%s3 + $0x40] sm:$0xff]
    %v282 = vld [vmem:[%s3 + $0x48] sm:$0xff]
    %v283 = vld [vmem:[%s3 + $0x50] sm:$0xff]
    %v284 = vld [vmem:[%s3 + $0x58] sm:$0xff]
    %v285 = vld [vmem:[%s3 + $0x60] sm:$0xff]
    %v286 = vld [vmem:[%s3 + $0x68] sm:$0xff]
    %v287 = vld [vmem:[%s3 + $0x70] sm:$0xff]
    %v288 = vld [vmem:[%s3 + $0x78] sm:$0xff]
    %v289 = vadd.f32 %v257, %v273
    %v290 = vadd.f32 %v258, %v274
    %v291 = vadd.f32 %v259, %v275
    %v292 = vadd.f32 %v260, %v276
    %v293 = vadd.f32 %v261, %v277
    %v294 = vadd.f32 %v262, %v278
    %v295 = vadd.f32 %v263, %v279
    %v296 = vadd.f32 %v264, %v280
    %v297 = vadd.f32 %v265, %v281
    %v298 = vadd.f32 %v266, %v282
    %v299 = vadd.f32 %v267, %v283
    %v300 = vadd.f32 %v268, %v284
    %v301 = vadd.f32 %v269, %v285
    %v302 = vadd.f32 %v270, %v286
    %v303 = vadd.f32 %v271, %v287
    %v304 = vadd.f32 %v272, %v288
    %305 = vst [vmem:[%s4] sm:$0xff] %v289
    %306 = vst [vmem:[%s4 + $0x8] sm:$0xff] %v290
    %307 = vst [vmem:[%s4 + $0x10] sm:$0xff] %v291
    %308 = vst [vmem:[%s4 + $0x18] sm:$0xff] %v292
    %309 = vst [vmem:[%s4 + $0x20] sm:$0xff] %v293
    %310 = vst [vmem:[%s4 + $0x28] sm:$0xff] %v294
    %311 = vst [vmem:[%s4 + $0x30] sm:$0xff] %v295
    %312 = vst [vmem:[%s4 + $0x38] sm:$0xff] %v296
    %313 = vst [vmem:[%s4 + $0x40] sm:$0xff] %v297
    %314 = vst [vmem:[%s4 + $0x48] sm:$0xff] %v298
    %315 = vst [vmem:[%s4 + $0x50] sm:$0xff] %v299
    %316 = vst [vmem:[%s4 + $0x58] sm:$0xff] %v300
    %317 = vst [vmem:[%s4 + $0x60] sm:$0xff] %v301
    %318 = vst [vmem:[%s4 + $0x68] sm:$0xff] %v302
    %319 = vst [vmem:[%s4 + $0x70] sm:$0xff] %v303
    %320 = vst [vmem:[%s4 + $0x78] sm:$0xff] %v304
  $region25: #{t2t_vit_forward.22} parent=0 // pred_fallthru
    _
  // Predicated region
  $region26: #{t2t_vit_forward.22} parent=0 // pred_check
    _
  $region27: #{t2t_vit_forward.22} parent=0 // pred_check_branch
    %322 = sbr.rel (0) target = $region29
  $region28: #{t2t_vit_forward.22} parent=0 // pred_region
    _
  $region29: #{t2t_vit_forward.22} parent=0 // pred_fallthru
    _
  // Predicated region
  $region30: #{t2t_vit_forward.22} parent=0 // pred_check
    _
  $region31: #{t2t_vit_forward.22} parent=0 // pred_check_branch
    %324 = sbr.rel (0) target = $region33
  $region32: #{t2t_vit_forward.22} parent=0 // pred_region
    _
  $region33: #{t2t_vit_forward.22} parent=0 // pred_fallthru
    _

// kernel: t2t_vit_forward.21
$region0: #{t2t_vit_forward.21}
  #allocation0 [shape = 'u32[]', space=smem, size = 0x4, offset = 0x4, fixed_abs, tag = 'smem constant byte address 0x4 - core index']
  #allocation1 [shape = 'u32[144,128]{1,0:T(1,128)}', space=vmem, size = 0x12000, scoped, tag = 'internal scratch']
  #allocation2 [shape = 'f32[64,1]{1,0:T(8,128)}', space=vmem, size = 0x8000, scoped, tag = 'scratch operand']
  #allocation3 [shape = 'f32[64,1]{1,0:T(8,128)}', space=vmem, size = 0x8000, scoped, tag = 'scratch operand']
  #allocation4 [shape = 'f32[64,16]{1,0:T(8,128)}', space=vmem, size = 0x8000, scoped, tag = 'scratch operand']
  %s0 = inlined_call_operand.vmem [shape: f32[2,64,16], index: 0, kind: input, shape index: {}]
  %s1 = inlined_call_operand.vmem [shape: f32[2,64,16], index: 1, kind: input, shape index: {}]
  %s2 = inlined_call_operand.vmem [shape: f32[2,64,16], index: 2, kind: input, shape index: {}]
  %s3 = inlined_call_operand.vmem [shape: f32[2,64,16], index: 3, kind: output, shape index: {}]
  %s4 = sld [smem:[#allocation0]]
  $region53: #{t2t_vit_forward.21} parent=0
    _
  %s6 = ssub.s32 1, %s4
  %s7 = scalar_select 0, %s6, %s4
  loop: start=0, step=1, limit=4
  $region2: #{t2t_vit_forward.21} parent=0 // loop_pre_header
    _
  $region3: #{t2t_vit_forward.21} parent=0 // loop_header
    %s9 = sphi 0, %s13
    %p10 = scmp.ge.s32.totalorder %s9, 4
    %s16 = sphi 0, %s35
    %s17 = sphi 0, %s31
    %s18 = sphi 0, %s27
    %s19 = sphi 0, %s16
    %s20 = sphi 0, %s17
    %s21 = sphi 0, %s18
    %s22 = sphi 0, %s19
    %s23 = sphi 0, %s20
    %s24 = sphi 0, %s21
    %s40 = sphi 0, %s42
    %s43 = sphi 0, %s40
    %s44 = sphi 0, %s43
    %s60 = sphi 0, %s44
    %s68 = sphi 0, %s70
    %s71 = sphi 0, %s68
    %s72 = sphi 0, %s71
    %s88 = sphi 0, %s72
    %s96 = sphi 0, %s98
    %s99 = sphi 0, %s96
    %s100 = sphi 0, %s99
    %s116 = sphi 0, %s100
    %s124 = sphi 0, %s126
    %s127 = sphi 0, %s124
    %s128 = sphi 0, %s127
    %s144 = sphi 0, %s128
  $region4: #{t2t_vit_forward.21} parent=0 // loop_header_branch
    %12 = sbr.rel (%p10) target = $region8
  $region5: #{t2t_vit_forward.21} parent=0 // loop_body
    %s14 = ssub.s32 %s9, 1
    %s15 = ssub.s32 %s9, 2
    %s25 = sadd.s32 1, %s18
    %p26 = scmp.ge.s32.totalorder %s25, 1
    %s27 = scalar_select %p26, 0, %s25
    %s28 = sadd.s32 1, %s17
    %s29 = scalar_select %p26, %s28, %s17
    %p30 = scmp.ge.s32.totalorder %s29, 1
    %s31 = scalar_select %p30, 0, %s29
    %s32 = sadd.s32 1, %s16
    %s33 = scalar_select %p30, %s32, %s16
    %p34 = scmp.ge.s32.totalorder %s33, 2
    %s35 = scalar_select %p34, 0, %s33
    %s36 = ssub.s32 %s16, %s35
    %s37 = ssub.s32 %s17, %s31
    %s38 = sor.u32 %s36, %s37
    %p39 = scmp.eq.s32.totalorder %s38, 0
    %s41 = sadd.s32 %s40, 1
    %s42 = scalar_select %p39, %s40, %s41
    %p45 = pneg %p39
    %p46 = scmp.eq.s32.totalorder %s9, 1
    %p47 = por %p45, %p46
    %p48 = scmp.ne.s32.totalorder %s40, %s43
    %p49 = scmp.eq.s32.totalorder %s9, 0
    %p50 = por %p48, %p49
    %p51 = scmp.ne.s32.totalorder %s40, %s43
    %p52 = scmp.eq.s32.totalorder %s14, 1
    %p53 = por %p51, %p52
    %p54 = scmp.ne.s32.totalorder %s43, %s44
    %p55 = scmp.eq.s32.totalorder %s14, 0
    %p56 = por %p54, %p55
    %p57 = scmp.ne.s32.totalorder %s43, %s44
    %p58 = scmp.eq.s32.totalorder %s15, 1
    %p59 = por %p57, %p58
    %p61 = scmp.ne.s32.totalorder %s44, %s60
    %p62 = scmp.eq.s32.totalorder %s15, 0
    %p63 = por %p61, %p62
    %s64 = ssub.s32 %s16, %s35
    %s65 = ssub.s32 %s18, %s27
    %s66 = sor.u32 %s64, %s65
    %p67 = scmp.eq.s32.totalorder %s66, 0
    %s69 = sadd.s32 %s68, 1
    %s70 = scalar_select %p67, %s68, %s69
    %p73 = pneg %p67
    %p74 = scmp.eq.s32.totalorder %s9, 1
    %p75 = por %p73, %p74
    %p76 = scmp.ne.s32.totalorder %s68, %s71
    %p77 = scmp.eq.s32.totalorder %s9, 0
    %p78 = por %p76, %p77
    %p79 = scmp.ne.s32.totalorder %s68, %s71
    %p80 = scmp.eq.s32.totalorder %s14, 1
    %p81 = por %p79, %p80
    %p82 = scmp.ne.s32.totalorder %s71, %s72
    %p83 = scmp.eq.s32.totalorder %s14, 0
    %p84 = por %p82, %p83
    %p85 = scmp.ne.s32.totalorder %s71, %s72
    %p86 = scmp.eq.s32.totalorder %s15, 1
    %p87 = por %p85, %p86
    %p89 = scmp.ne.s32.totalorder %s72, %s88
    %p90 = scmp.eq.s32.totalorder %s15, 0
    %p91 = por %p89, %p90
    %s92 = ssub.s32 %s16, %s35
    %s93 = ssub.s32 %s18, %s27
    %s94 = sor.u32 %s92, %s93
    %p95 = scmp.eq.s32.totalorder %s94, 0
    %s97 = sadd.s32 %s96, 1
    %s98 = scalar_select %p95, %s96, %s97
    %p101 = pneg %p95
    %p102 = scmp.eq.s32.totalorder %s9, 1
    %p103 = por %p101, %p102
    %p104 = scmp.ne.s32.totalorder %s96, %s99
    %p105 = scmp.eq.s32.totalorder %s9, 0
    %p106 = por %p104, %p105
    %p107 = scmp.ne.s32.totalorder %s96, %s99
    %p108 = scmp.eq.s32.totalorder %s14, 1
    %p109 = por %p107, %p108
    %p110 = scmp.ne.s32.totalorder %s99, %s100
    %p111 = scmp.eq.s32.totalorder %s14, 0
    %p112 = por %p110, %p111
    %p113 = scmp.ne.s32.totalorder %s99, %s100
    %p114 = scmp.eq.s32.totalorder %s15, 1
    %p115 = por %p113, %p114
    %p117 = scmp.ne.s32.totalorder %s100, %s116
    %p118 = scmp.eq.s32.totalorder %s15, 0
    %p119 = por %p117, %p118
    %s120 = ssub.s32 %s16, %s35
    %s121 = ssub.s32 %s17, %s31
    %s122 = sor.u32 %s120, %s121
    %p123 = scmp.eq.s32.totalorder %s122, 0
    %s125 = sadd.s32 %s124, 1
    %s126 = scalar_select %p123, %s124, %s125
    %p129 = pneg %p123
    %p130 = scmp.eq.s32.totalorder %s9, 1
    %p131 = por %p129, %p130
    %p132 = scmp.ne.s32.totalorder %s124, %s127
    %p133 = scmp.eq.s32.totalorder %s9, 0
    %p134 = por %p132, %p133
    %p135 = scmp.ne.s32.totalorder %s124, %s127
    %p136 = scmp.eq.s32.totalorder %s14, 1
    %p137 = por %p135, %p136
    %p138 = scmp.ne.s32.totalorder %s127, %s128
    %p139 = scmp.eq.s32.totalorder %s14, 0
    %p140 = por %p138, %p139
    %p141 = scmp.ne.s32.totalorder %s127, %s128
    %p142 = scmp.eq.s32.totalorder %s15, 1
    %p143 = por %p141, %p142
    %p145 = scmp.ne.s32.totalorder %s128, %s144
    %p146 = scmp.eq.s32.totalorder %s15, 0
    %p147 = por %p145, %p146
    %p148 = scmp.le.s32.totalorder 1, %s9
    %p149 = scmp.lt.s32.totalorder %s9, 3
    %p150 = pnand %p148, %p149
    %p151 = pneg %p150
    // Predicated region
    $region9: #{t2t_vit_forward.21} parent=5 // pred_check
      _
    $region10: #{t2t_vit_forward.21} parent=5 // pred_check_branch
      %153 = sbr.rel (%p150) target = $region12
    $region11: #{t2t_vit_forward.21} parent=5 // pred_region
      %s154 = ssub.s32 %s9, 1
    $region12: #{t2t_vit_forward.21} parent=5 // pred_fallthru
      _
    %p155 = scmp.lt.s32.totalorder %s9, 2
    // Predicated region
    $region13: #{t2t_vit_forward.21} parent=5 // pred_check
      %p156 = pneg %p155
    $region14: #{t2t_vit_forward.21} parent=5 // pred_check_branch
      %158 = sbr.rel (%p156) target = $region16
    $region15: #{t2t_vit_forward.21} parent=5 // pred_region
      // Predicated region
      $region17: #{t2t_vit_forward.21} parent=15 // pred_check
        %p159 = pneg %p50
      $region18: #{t2t_vit_forward.21} parent=15 // pred_check_branch
        %161 = sbr.rel (%p159) target = $region20
      $region19: #{t2t_vit_forward.21} parent=15 // pred_region
        %s162 = smul.u32 8, %s17
        %p163 = scmp.lt.s32.totalorder %s16, 1
        %s164 = scalar_select %p163, %s16, 1
        %p165 = scmp.lt.s32.totalorder %s162, 7
        %s166 = scalar_select %p165, %s162, 7
        %s167 = smul.addr %s164, 8
        %s168 = sadd.s32 %s166, %s167
        %s169 = smul.addr %s168, 8
        %s170 = scalar_lea.vmem %s0, %s169
        %s171 = smul.u32 8, %s17
      $region20: #{t2t_vit_forward.21} parent=15 // pred_fallthru
        _
      // Predicated region
      $region21: #{t2t_vit_forward.21} parent=15 // pred_check
        %p172 = pneg %p78
      $region22: #{t2t_vit_forward.21} parent=15 // pred_check_branch
        %174 = sbr.rel (%p172) target = $region24
      $region23: #{t2t_vit_forward.21} parent=15 // pred_region
        %s175 = smul.u32 8, %s18
        %p176 = scmp.lt.s32.totalorder %s16, 1
        %s177 = scalar_select %p176, %s16, 1
        %p178 = scmp.lt.s32.totalorder %s175, 7
        %s179 = scalar_select %p178, %s175, 7
        %s180 = smul.addr %s177, 8
        %s181 = sadd.s32 %s179, %s180
        %s182 = smul.addr %s181, 8
        %s183 = scalar_lea.vmem %s1, %s182
        %s184 = smul.u32 8, %s18
      $region24: #{t2t_vit_forward.21} parent=15 // pred_fallthru
        _
      // Predicated region
      $region25: #{t2t_vit_forward.21} parent=15 // pred_check
        %p185 = pneg %p106
      $region26: #{t2t_vit_forward.21} parent=15 // pred_check_branch
        %187 = sbr.rel (%p185) target = $region28
      $region27: #{t2t_vit_forward.21} parent=15 // pred_region
        %s188 = smul.u32 8, %s18
        %p189 = scmp.lt.s32.totalorder %s16, 1
        %s190 = scalar_select %p189, %s16, 1
        %p191 = scmp.lt.s32.totalorder %s188, 7
        %s192 = scalar_select %p191, %s188, 7
        %s193 = smul.addr %s190, 8
        %s194 = sadd.s32 %s192, %s193
        %s195 = smul.addr %s194, 8
        %s196 = scalar_lea.vmem %s2, %s195
        %s197 = smul.u32 8, %s18
      $region28: #{t2t_vit_forward.21} parent=15 // pred_fallthru
        _
    $region16: #{t2t_vit_forward.21} parent=5 // pred_fallthru
      _
    %p198 = scmp.le.s32.totalorder 1, %s9
    %p199 = scmp.lt.s32.totalorder %s9, 3
    %p200 = pnand %p198, %p199
    %p201 = pneg %p200
    // Predicated region
    $region29: #{t2t_vit_forward.21} parent=5 // pred_check
      _
    $region30: #{t2t_vit_forward.21} parent=5 // pred_check_branch
      %203 = sbr.rel (%p200) target = $region32
    $region31: #{t2t_vit_forward.21} parent=5 // pred_region
      %s204 = ssub.s32 %s9, 1
      %s205 = smul.u32 8, %s20
      %p206 = scmp.lt.s32.totalorder %s19, 1
      %s207 = scalar_select %p206, %s19, 1
      %p208 = scmp.lt.s32.totalorder %s205, 7
      %s209 = scalar_select %p208, %s205, 7
      %s210 = smul.addr %s207, 8
      %s211 = sadd.s32 %s209, %s210
      %s212 = smul.addr %s211, 8
      %s213 = scalar_lea.vmem %s0, %s212
      %p214 = pneg %p56
      %p215 = pneg %p53
      %s216 = smul.u32 8, %s21
      %p217 = scmp.lt.s32.totalorder %s19, 1
      %s218 = scalar_select %p217, %s19, 1
      %p219 = scmp.lt.s32.totalorder %s216, 7
      %s220 = scalar_select %p219, %s216, 7
      %s221 = smul.addr %s218, 8
      %s222 = sadd.s32 %s220, %s221
      %s223 = smul.addr %s222, 8
      %s224 = scalar_lea.vmem %s1, %s223
      %p225 = pneg %p84
      %p226 = pneg %p81
      %s227 = smul.u32 8, %s21
      %p228 = scmp.lt.s32.totalorder %s19, 1
      %s229 = scalar_select %p228, %s19, 1
      %p230 = scmp.lt.s32.totalorder %s227, 7
      %s231 = scalar_select %p230, %s227, 7
      %s232 = smul.addr %s229, 8
      %s233 = sadd.s32 %s231, %s232
      %s234 = smul.addr %s233, 8
      %s235 = scalar_lea.vmem %s2, %s234
      %p236 = pneg %p112
      %p237 = pneg %p109
      %p238 = pneg %p140
      %p239 = pneg %p137
      %s240 = smul.u32 8, %s20
      %p241 = scmp.lt.s32.totalorder %s19, 1
      %s242 = scalar_select %p241, %s19, 1
      %p243 = scmp.lt.s32.totalorder %s240, 7
      %s244 = scalar_select %p243, %s240, 7
      %s245 = smul.addr %s242, 8
      %s246 = sadd.s32 %s244, %s245
      %s247 = smul.addr %s246, 8
      %s248 = scalar_lea.vmem %s3, %s247
      %s249 = smul.u32 8, %s20
      %p250 = scmp.lt.s32.totalorder %s19, 1
      %s251 = scalar_select %p250, %s19, 1
      %p252 = scmp.lt.s32.totalorder %s249, 7
      %s253 = scalar_select %p252, %s249, 7
      %s254 = smul.addr %s251, 8
      %s255 = sadd.s32 %s253, %s254
      %s256 = smul.addr %s255, 8
      %s257 = scalar_lea.vmem %s0, %s256
      %s258 = smul.u32 8, %s20
      %s259 = smul.u32 8, %s21
      %p260 = scmp.lt.s32.totalorder %s19, 1
      %s261 = scalar_select %p260, %s19, 1
      %p262 = scmp.lt.s32.totalorder %s259, 7
      %s263 = scalar_select %p262, %s259, 7
      %s264 = smul.addr %s261, 8
      %s265 = sadd.s32 %s263, %s264
      %s266 = smul.addr %s265, 8
      %s267 = scalar_lea.vmem %s1, %s266
      %s268 = smul.u32 8, %s21
      %s269 = smul.u32 8, %s21
      %p270 = scmp.lt.s32.totalorder %s19, 1
      %s271 = scalar_select %p270, %s19, 1
      %p272 = scmp.lt.s32.totalorder %s269, 7
      %s273 = scalar_select %p272, %s269, 7
      %s274 = smul.addr %s271, 8
      %s275 = sadd.s32 %s273, %s274
      %s276 = smul.addr %s275, 8
      %s277 = scalar_lea.vmem %s2, %s276
      %s278 = smul.u32 8, %s21
      %s279 = smul.u32 8, %s20
      %p280 = scmp.lt.s32.totalorder %s19, 1
      %s281 = scalar_select %p280, %s19, 1
      %p282 = scmp.lt.s32.totalorder %s279, 7
      %s283 = scalar_select %p282, %s279, 7
      %s284 = smul.addr %s281, 8
      %s285 = sadd.s32 %s283, %s284
      %s286 = smul.addr %s285, 8
      %s287 = scalar_lea.vmem %s3, %s286
      %s288 = smul.u32 8, %s20
      %p290 = scmp.eq.s32.totalorder %s21, 0
      // Predicated region
      $region33: #{t2t_vit_forward.21} parent=31 // pred_check
        %p291 = pneg %p290
      $region34: #{t2t_vit_forward.21} parent=31 // pred_check_branch
        %293 = sbr.rel (%p291) target = $region36
      $region35: #{t2t_vit_forward.21} parent=31 // pred_region
        %vm294 = vcmask 7168
        %295 = vst.msk [vmem:[#allocation2] sm:$0xff] %vm294, -inf
        %296 = vst.msk [vmem:[#allocation2 + $0x8] sm:$0xff] %vm294, -inf
        %297 = vst.msk [vmem:[#allocation2 + $0x10] sm:$0xff] %vm294, -inf
        %298 = vst.msk [vmem:[#allocation2 + $0x18] sm:$0xff] %vm294, -inf
        %299 = vst.msk [vmem:[#allocation2 + $0x20] sm:$0xff] %vm294, -inf
        %300 = vst.msk [vmem:[#allocation2 + $0x28] sm:$0xff] %vm294, -inf
        %301 = vst.msk [vmem:[#allocation2 + $0x30] sm:$0xff] %vm294, -inf
        %302 = vst.msk [vmem:[#allocation2 + $0x38] sm:$0xff] %vm294, -inf
        %303 = vst.msk [vmem:[#allocation3] sm:$0xff] %vm294, 0.0
        %304 = vst.msk [vmem:[#allocation3 + $0x8] sm:$0xff] %vm294, 0.0
        %305 = vst.msk [vmem:[#allocation3 + $0x10] sm:$0xff] %vm294, 0.0
        %306 = vst.msk [vmem:[#allocation3 + $0x18] sm:$0xff] %vm294, 0.0
        %307 = vst.msk [vmem:[#allocation3 + $0x20] sm:$0xff] %vm294, 0.0
        %308 = vst.msk [vmem:[#allocation3 + $0x28] sm:$0xff] %vm294, 0.0
        %309 = vst.msk [vmem:[#allocation3 + $0x30] sm:$0xff] %vm294, 0.0
        %310 = vst.msk [vmem:[#allocation3 + $0x38] sm:$0xff] %vm294, 0.0
        %vm311 = vcmask 130048
        %312 = vst.msk [vmem:[#allocation4] sm:$0xff] %vm311, 0.0
        %313 = vst.msk [vmem:[#allocation4 + $0x8] sm:$0xff] %vm311, 0.0
        %314 = vst.msk [vmem:[#allocation4 + $0x10] sm:$0xff] %vm311, 0.0
        %315 = vst.msk [vmem:[#allocation4 + $0x18] sm:$0xff] %vm311, 0.0
        %316 = vst.msk [vmem:[#allocation4 + $0x20] sm:$0xff] %vm311, 0.0
        %317 = vst.msk [vmem:[#allocation4 + $0x28] sm:$0xff] %vm311, 0.0
        %318 = vst.msk [vmem:[#allocation4 + $0x30] sm:$0xff] %vm311, 0.0
        %319 = vst.msk [vmem:[#allocation4 + $0x38] sm:$0xff] %vm311, 0.0
      $region36: #{t2t_vit_forward.21} parent=31 // pred_fallthru
        _
      %v320 = vld [vmem:[%s257] sm:$0xff]
      %v321 = vld [vmem:[%s257 + $0x8] sm:$0xff]
      %v322 = vld [vmem:[%s257 + $0x10] sm:$0xff]
      %v323 = vld [vmem:[%s257 + $0x18] sm:$0xff]
      %v324 = vld [vmem:[%s257 + $0x20] sm:$0xff]
      %v325 = vld [vmem:[%s257 + $0x28] sm:$0xff]
      %v326 = vld [vmem:[%s257 + $0x30] sm:$0xff]
      %v327 = vld [vmem:[%s257 + $0x38] sm:$0xff]
      %v328 = vpack.c.bf16 %v321, %v320
      %v329 = vpack.c.bf16 %v323, %v322
      %v330 = vpack.c.bf16 %v325, %v324
      %v331 = vpack.c.bf16 %v327, %v326
      %v332 = vld [vmem:[%s267] sm:$0xff]
      %v333 = vld [vmem:[%s267 + $0x8] sm:$0xff]
      %v334 = vld [vmem:[%s267 + $0x10] sm:$0xff]
      %v335 = vld [vmem:[%s267 + $0x18] sm:$0xff]
      %v336 = vld [vmem:[%s267 + $0x20] sm:$0xff]
      %v337 = vld [vmem:[%s267 + $0x28] sm:$0xff]
      %v338 = vld [vmem:[%s267 + $0x30] sm:$0xff]
      %v339 = vld [vmem:[%s267 + $0x38] sm:$0xff]
      %v340 = vpack.c.bf16 %v333, %v332
      %v341 = vpack.c.bf16 %v335, %v334
      %v342 = vpack.c.bf16 %v337, %v336
      %v343 = vpack.c.bf16 %v339, %v338
      %v344 = vld [vmem:[%s277] sm:$0xff]
      %v345 = vld [vmem:[%s277 + $0x8] sm:$0xff]
      %v346 = vld [vmem:[%s277 + $0x10] sm:$0xff]
      %v347 = vld [vmem:[%s277 + $0x18] sm:$0xff]
      %v348 = vld [vmem:[%s277 + $0x20] sm:$0xff]
      %v349 = vld [vmem:[%s277 + $0x28] sm:$0xff]
      %v350 = vld [vmem:[%s277 + $0x30] sm:$0xff]
      %v351 = vld [vmem:[%s277 + $0x38] sm:$0xff]
      %v352 = vpack.c.bf16 %v345, %v344
      %v353 = vpack.c.bf16 %v347, %v346
      %v354 = vpack.c.bf16 %v349, %v348
      %v355 = vpack.c.bf16 %v351, %v350
      %vm356 = vcmask 130048
      %v358 = vsel %vm356, %v328, 0
      %v361 = vsel %vm356, %v329, 0
      %v364 = vsel %vm356, %v330, 0
      %v367 = vsel %vm356, %v331, 0
      %v370 = vsel %vm356, %v340, 0
      %v373 = vsel %vm356, %v341, 0
      %v376 = vsel %vm356, %v342, 0
      %v379 = vsel %vm356, %v343, 0
      %381 = vmatprep.subr.bf16.mxu0 0
      %382 = vmatpush1.bf16.xpose.msra.mxu0 %v370
      %383 = vmatprep.subr.bf16.mxu0 0
      %384 = vmatpush1.bf16.xpose.msra.mxu0 %v373
      %385 = vmatprep.subr.bf16.mxu0 0
      %386 = vmatpush1.bf16.xpose.msra.mxu0 %v376
      %387 = vmatprep.subr.bf16.mxu0 0
      %388 = vmatpush1.bf16.xpose.msra.mxu0 %v379
      %389 = vmatprep.subr.bf16.mxu0 0
      %390 = vmatpush1.bf16.xpose.msra.mxu0 0
      %391 = vmatprep.subr.bf16.mxu0 0
      %392 = vmatpush1.bf16.xpose.msra.mxu0 0
      %393 = vmatprep.subr.bf16.mxu0 0
      %394 = vmatpush1.bf16.xpose.msra.mxu0 0
      %395 = vmatprep.subr.bf16.mxu0 0
      %396 = vmatpush1.bf16.xpose.msra.mxu0 0
      %397 = vmatprep.subr.bf16.mxu0 0
      %398 = vmatpush1.bf16.xpose.msra.mxu0 0
      %399 = vmatprep.subr.bf16.mxu0 0
      %400 = vmatpush1.bf16.xpose.msra.mxu0 0
      %401 = vmatprep.subr.bf16.mxu0 0
      %402 = vmatpush1.bf16.xpose.msra.mxu0 0
      %403 = vmatprep.subr.bf16.mxu0 0
      %404 = vmatpush1.bf16.xpose.msra.mxu0 0
      %405 = vmatprep.subr.bf16.mxu0 0
      %406 = vmatpush1.bf16.xpose.msra.mxu0 0
      %407 = vmatprep.subr.bf16.mxu0 0
      %408 = vmatpush1.bf16.xpose.msra.mxu0 0
      %409 = vmatprep.subr.bf16.mxu0 0
      %410 = vmatpush1.bf16.xpose.msra.mxu0 0
      %411 = vmatprep.subr.bf16.mxu0 0
      %412 = vmatpush1.bf16.xpose.msra.mxu0 0
      %413 = vmatprep.mubr.bf16.mxu0 0
      %414 = vmatmul.mubr.bf16.gmra.mrb[0].mxu0 %v358
      %v415 = vpop.f32.mrb[0].mxu0
      %v416 = vadd.f32 0.0, %v415
      %v417 = vpop.f32.mrb[0].mxu0
      %v418 = vpop.f32.mrb[0].mxu0
      %v419 = vadd.f32 0.0, %v418
      %v420 = vpop.f32.mrb[0].mxu0
      %421 = vmatprep.mubr.bf16.mxu0 0
      %422 = vmatmul.mubr.bf16.gmra.mrb[0].mxu0 %v361
      %v423 = vpop.f32.mrb[0].mxu0
      %v424 = vadd.f32 0.0, %v423
      %v425 = vpop.f32.mrb[0].mxu0
      %v426 = vpop.f32.mrb[0].mxu0
      %v427 = vadd.f32 0.0, %v426
      %v428 = vpop.f32.mrb[0].mxu0
      %429 = vmatprep.mubr.bf16.mxu0 0
      %430 = vmatmul.mubr.bf16.gmra.mrb[0].mxu0 %v364
      %v431 = vpop.f32.mrb[0].mxu0
      %v432 = vadd.f32 0.0, %v431
      %v433 = vpop.f32.mrb[0].mxu0
      %v434 = vpop.f32.mrb[0].mxu0
      %v435 = vadd.f32 0.0, %v434
      %v436 = vpop.f32.mrb[0].mxu0
      %437 = vmatprep.mubr.bf16.mxu0 0
      %438 = vmatmul.mubr.bf16.gmra.mrb[0].mxu0 %v367
      %v439 = vpop.f32.mrb[0].mxu0
      %v440 = vadd.f32 0.0, %v439
      %v441 = vpop.f32.mrb[0].mxu0
      %v442 = vpop.f32.mrb[0].mxu0
      %v443 = vadd.f32 0.0, %v442
      %v444 = vpop.f32.mrb[0].mxu0
      %445 = vdwg.mxu0
      %v446 = vmul.f32 %v416, 0.11547005
      %v447 = vmul.f32 %v419, 0.11547005
      %v448 = vmul.f32 %v424, 0.11547005
      %v449 = vmul.f32 %v427, 0.11547005
      %v450 = vmul.f32 %v432, 0.11547005
      %v451 = vmul.f32 %v435, 0.11547005
      %v452 = vmul.f32 %v440, 0.11547005
      %v453 = vmul.f32 %v443, 0.11547005
      %v454 = vld [vmem:[#allocation2] sm:$0xff]
      %v455 = vld [vmem:[#allocation2 + $0x8] sm:$0xff]
      %v456 = vld [vmem:[#allocation2 + $0x10] sm:$0xff]
      %v457 = vld [vmem:[#allocation2 + $0x18] sm:$0xff]
      %v458 = vld [vmem:[#allocation2 + $0x20] sm:$0xff]
      %v459 = vld [vmem:[#allocation2 + $0x28] sm:$0xff]
      %v460 = vld [vmem:[#allocation2 + $0x30] sm:$0xff]
      %v461 = vld [vmem:[#allocation2 + $0x38] sm:$0xff]
      %vm462 = vcmask 523264
      %v463 = vsel %vm462, %v446, -inf
      %464 = vmax.xlane.f32.xlu0 %v463
      %v465 = vpop.xlane.xlu0 %464
      %v466 = vsel %vm462, %v447, -inf
      %467 = vmax.xlane.f32.xlu0 %v466
      %v468 = vpop.xlane.xlu0 %467
      %v469 = vsel %vm462, %v448, -inf
      %470 = vmax.xlane.f32.xlu0 %v469
      %v471 = vpop.xlane.xlu0 %470
      %v472 = vsel %vm462, %v449, -inf
      %473 = vmax.xlane.f32.xlu0 %v472
      %v474 = vpop.xlane.xlu0 %473
      %v475 = vsel %vm462, %v450, -inf
      %476 = vmax.xlane.f32.xlu0 %v475
      %v477 = vpop.xlane.xlu0 %476
      %v478 = vsel %vm462, %v451, -inf
      %479 = vmax.xlane.f32.xlu0 %v478
      %v480 = vpop.xlane.xlu0 %479
      %v481 = vsel %vm462, %v452, -inf
      %482 = vmax.xlane.f32.xlu0 %v481
      %v483 = vpop.xlane.xlu0 %482
      %v484 = vsel %vm462, %v453, -inf
      %485 = vmax.xlane.f32.xlu0 %v484
      %v486 = vpop.xlane.xlu0 %485
      %v487 = vmax.f32 %v454, %v465
      %v488 = vmax.f32 %v455, %v468
      %v489 = vmax.f32 %v456, %v471
      %v490 = vmax.f32 %v457, %v474
      %v491 = vmax.f32 %v458, %v477
      %v492 = vmax.f32 %v459, %v480
      %v493 = vmax.f32 %v460, %v483
      %v494 = vmax.f32 %v461, %v486
      %v495 = vsub.f32 %v454, %v487
      %v496 = vsub.f32 %v455, %v488
      %v497 = vsub.f32 %v456, %v489
      %v498 = vsub.f32 %v457, %v490
      %v499 = vsub.f32 %v458, %v491
      %v500 = vsub.f32 %v459, %v492
      %v501 = vsub.f32 %v460, %v493
      %v502 = vsub.f32 %v461, %v494
      %v503 = vmul.f32 %v495, 1.442695
      %v504 = vpow.pop %v503
      %v505 = vmul.f32 %v496, 1.442695
      %v506 = vpow.pop %v505
      %v507 = vmul.f32 %v497, 1.442695
      %v508 = vpow.pop %v507
      %v509 = vmul.f32 %v498, 1.442695
      %v510 = vpow.pop %v509
      %v511 = vmul.f32 %v499, 1.442695
      %v512 = vpow.pop %v511
      %v513 = vmul.f32 %v500, 1.442695
      %v514 = vpow.pop %v513
      %v515 = vmul.f32 %v501, 1.442695
      %v516 = vpow.pop %v515
      %v517 = vmul.f32 %v502, 1.442695
      %v518 = vpow.pop %v517
      %520 = vset.pattern.permute.xlu0 0
      %521 = vperm.xlu0 %520, %v487
      %v522 = vpop.permute.xlu0 %521
      %525 = vset.pattern.permute.xlu0 0
      %526 = vperm.xlu0 %525, %v488
      %v527 = vpop.permute.xlu0 %526
      %530 = vset.pattern.permute.xlu0 0
      %531 = vperm.xlu0 %530, %v489
      %v532 = vpop.permute.xlu0 %531
      %535 = vset.pattern.permute.xlu0 0
      %536 = vperm.xlu0 %535, %v490
      %v537 = vpop.permute.xlu0 %536
      %540 = vset.pattern.permute.xlu0 0
      %541 = vperm.xlu0 %540, %v491
      %v542 = vpop.permute.xlu0 %541
      %545 = vset.pattern.permute.xlu0 0
      %546 = vperm.xlu0 %545, %v492
      %v547 = vpop.permute.xlu0 %546
      %550 = vset.pattern.permute.xlu0 0
      %551 = vperm.xlu0 %550, %v493
      %v552 = vpop.permute.xlu0 %551
      %555 = vset.pattern.permute.xlu0 0
      %556 = vperm.xlu0 %555, %v494
      %v557 = vpop.permute.xlu0 %556
      %v559 = vsub.f32 %v446, %v522
      %v560 = vsub.f32 %v447, %v527
      %v561 = vsub.f32 %v448, %v532
      %v562 = vsub.f32 %v449, %v537
      %v563 = vsub.f32 %v450, %v542
      %v564 = vsub.f32 %v451, %v547
      %v565 = vsub.f32 %v452, %v552
      %v566 = vsub.f32 %v453, %v557
      %v567 = vmul.f32 %v559, 1.442695
      %v568 = vpow.pop %v567
      %v569 = vmul.f32 %v560, 1.442695
      %v570 = vpow.pop %v569
      %v571 = vmul.f32 %v561, 1.442695
      %v572 = vpow.pop %v571
      %v573 = vmul.f32 %v562, 1.442695
      %v574 = vpow.pop %v573
      %v575 = vmul.f32 %v563, 1.442695
      %v576 = vpow.pop %v575
      %v577 = vmul.f32 %v564, 1.442695
      %v578 = vpow.pop %v577
      %v579 = vmul.f32 %v565, 1.442695
      %v580 = vpow.pop %v579
      %v581 = vmul.f32 %v566, 1.442695
      %v582 = vpow.pop %v581
      %v583 = vld [vmem:[#allocation3] sm:$0xff]
      %v584 = vld [vmem:[#allocation3 + $0x8] sm:$0xff]
      %v585 = vld [vmem:[#allocation3 + $0x10] sm:$0xff]
      %v586 = vld [vmem:[#allocation3 + $0x18] sm:$0xff]
      %v587 = vld [vmem:[#allocation3 + $0x20] sm:$0xff]
      %v588 = vld [vmem:[#allocation3 + $0x28] sm:$0xff]
      %v589 = vld [vmem:[#allocation3 + $0x30] sm:$0xff]
      %v590 = vld [vmem:[#allocation3 + $0x38] sm:$0xff]
      %v591 = vmul.f32 %v504, %v583
      %v592 = vmul.f32 %v506, %v584
      %v593 = vmul.f32 %v508, %v585
      %v594 = vmul.f32 %v510, %v586
      %v595 = vmul.f32 %v512, %v587
      %v596 = vmul.f32 %v514, %v588
      %v597 = vmul.f32 %v516, %v589
      %v598 = vmul.f32 %v518, %v590
      %v599 = vsel %vm462, %v568, 0.0
      %600 = vadd.xlane.f32.xlu0 %v599
      %v601 = vpop.xlane.xlu0 %600
      %v602 = vsel %vm462, %v570, 0.0
      %603 = vadd.xlane.f32.xlu0 %v602
      %v604 = vpop.xlane.xlu0 %603
      %v605 = vsel %vm462, %v572, 0.0
      %606 = vadd.xlane.f32.xlu0 %v605
      %v607 = vpop.xlane.xlu0 %606
      %v608 = vsel %vm462, %v574, 0.0
      %609 = vadd.xlane.f32.xlu0 %v608
      %v610 = vpop.xlane.xlu0 %609
      %v611 = vsel %vm462, %v576, 0.0
      %612 = vadd.xlane.f32.xlu0 %v611
      %v613 = vpop.xlane.xlu0 %612
      %v614 = vsel %vm462, %v578, 0.0
      %615 = vadd.xlane.f32.xlu0 %v614
      %v616 = vpop.xlane.xlu0 %615
      %v617 = vsel %vm462, %v580, 0.0
      %618 = vadd.xlane.f32.xlu0 %v617
      %v619 = vpop.xlane.xlu0 %618
      %v620 = vsel %vm462, %v582, 0.0
      %621 = vadd.xlane.f32.xlu0 %v620
      %v622 = vpop.xlane.xlu0 %621
      %v623 = vadd.f32 %v591, %v601
      %v624 = vadd.f32 %v592, %v604
      %v625 = vadd.f32 %v593, %v607
      %v626 = vadd.f32 %v594, %v610
      %v627 = vadd.f32 %v595, %v613
      %v628 = vadd.f32 %v596, %v616
      %v629 = vadd.f32 %v597, %v619
      %v630 = vadd.f32 %v598, %v622
      %vm631 = vcmask 7168
      %632 = vst.msk [vmem:[#allocation3] sm:$0xff] %vm631, %v623
      %633 = vst.msk [vmem:[#allocation3 + $0x8] sm:$0xff] %vm631, %v624
      %634 = vst.msk [vmem:[#allocation3 + $0x10] sm:$0xff] %vm631, %v625
      %635 = vst.msk [vmem:[#allocation3 + $0x18] sm:$0xff] %vm631, %v626
      %636 = vst.msk [vmem:[#allocation3 + $0x20] sm:$0xff] %vm631, %v627
      %637 = vst.msk [vmem:[#allocation3 + $0x28] sm:$0xff] %vm631, %v628
      %638 = vst.msk [vmem:[#allocation3 + $0x30] sm:$0xff] %vm631, %v629
      %639 = vst.msk [vmem:[#allocation3 + $0x38] sm:$0xff] %vm631, %v630
      %v640 = vld [vmem:[#allocation4] sm:$0xff]
      %v641 = vld [vmem:[#allocation4 + $0x8] sm:$0xff]
      %v642 = vld [vmem:[#allocation4 + $0x10] sm:$0xff]
      %v643 = vld [vmem:[#allocation4 + $0x18] sm:$0xff]
      %v644 = vld [vmem:[#allocation4 + $0x20] sm:$0xff]
      %v645 = vld [vmem:[#allocation4 + $0x28] sm:$0xff]
      %v646 = vld [vmem:[#allocation4 + $0x30] sm:$0xff]
      %v647 = vld [vmem:[#allocation4 + $0x38] sm:$0xff]
      %649 = vset.pattern.permute.xlu0 0
      %650 = vperm.xlu0 %649, %v504
      %v651 = vpop.permute.xlu0 %650
      %654 = vset.pattern.permute.xlu0 0
      %655 = vperm.xlu0 %654, %v506
      %v656 = vpop.permute.xlu0 %655
      %659 = vset.pattern.permute.xlu0 0
      %660 = vperm.xlu0 %659, %v508
      %v661 = vpop.permute.xlu0 %660
      %664 = vset.pattern.permute.xlu0 0
      %665 = vperm.xlu0 %664, %v510
      %v666 = vpop.permute.xlu0 %665
      %669 = vset.pattern.permute.xlu0 0
      %670 = vperm.xlu0 %669, %v512
      %v671 = vpop.permute.xlu0 %670
      %674 = vset.pattern.permute.xlu0 0
      %675 = vperm.xlu0 %674, %v514
      %v676 = vpop.permute.xlu0 %675
      %679 = vset.pattern.permute.xlu0 0
      %680 = vperm.xlu0 %679, %v516
      %v681 = vpop.permute.xlu0 %680
      %684 = vset.pattern.permute.xlu0 0
      %685 = vperm.xlu0 %684, %v518
      %v686 = vpop.permute.xlu0 %685
      %v688 = vmul.f32 %v651, %v640
      %v689 = vmul.f32 %v656, %v641
      %v690 = vmul.f32 %v661, %v642
      %v691 = vmul.f32 %v666, %v643
      %v692 = vmul.f32 %v671, %v644
      %v693 = vmul.f32 %v676, %v645
      %v694 = vmul.f32 %v681, %v646
      %v695 = vmul.f32 %v686, %v647
      %v696 = vpack.c.bf16 %v570, %v568
      %v697 = vpack.c.bf16 %v574, %v572
      %v698 = vpack.c.bf16 %v578, %v576
      %v699 = vpack.c.bf16 %v582, %v580
      %v701 = vsel %vm462, %v696, 0
      %v704 = vsel %vm462, %v697, 0
      %v707 = vsel %vm462, %v698, 0
      %v710 = vsel %vm462, %v699, 0
      %712 = vmatprep.subr.bf16.mxu0 0
      %713 = vmatpush1.bf16.msra.mxu0 %v352
      %714 = vmatprep.subr.bf16.mxu0 0
      %715 = vmatpush1.bf16.msra.mxu0 %v353
      %716 = vmatprep.subr.bf16.mxu0 0
      %717 = vmatpush1.bf16.msra.mxu0 %v354
      %718 = vmatprep.subr.bf16.mxu0 0
      %719 = vmatpush1.bf16.msra.mxu0 %v355
      %720 = vmatprep.subr.bf16.mxu0 0
      %721 = vmatpush1.bf16.msra.mxu0 0
      %722 = vmatprep.subr.bf16.mxu0 0
      %723 = vmatpush1.bf16.msra.mxu0 0
      %724 = vmatprep.subr.bf16.mxu0 0
      %725 = vmatpush1.bf16.msra.mxu0 0
      %726 = vmatprep.subr.bf16.mxu0 0
      %727 = vmatpush1.bf16.msra.mxu0 0
      %728 = vmatprep.subr.bf16.mxu0 0
      %729 = vmatpush1.bf16.msra.mxu0 0
      %730 = vmatprep.subr.bf16.mxu0 0
      %731 = vmatpush1.bf16.msra.mxu0 0
      %732 = vmatprep.subr.bf16.mxu0 0
      %733 = vmatpush1.bf16.msra.mxu0 0
      %734 = vmatprep.subr.bf16.mxu0 0
      %735 = vmatpush1.bf16.msra.mxu0 0
      %736 = vmatprep.subr.bf16.mxu0 0
      %737 = vmatpush1.bf16.msra.mxu0 0
      %738 = vmatprep.subr.bf16.mxu0 0
      %739 = vmatpush1.bf16.msra.mxu0 0
      %740 = vmatprep.subr.bf16.mxu0 0
      %741 = vmatpush1.bf16.msra.mxu0 0
      %742 = vmatprep.subr.bf16.mxu0 0
      %743 = vmatpush1.bf16.msra.mxu0 0
      %744 = vmatprep.mubr.bf16.mxu0 0
      %745 = vmatmul.mubr.bf16.gmra.mrb[0].mxu0 %v701
      %v746 = vpop.f32.mrb[0].mxu0
      %v747 = vadd.f32 0.0, %v746
      %v748 = vpop.f32.mrb[0].mxu0
      %v749 = vpop.f32.mrb[0].mxu0
      %v750 = vadd.f32 0.0, %v749
      %v751 = vpop.f32.mrb[0].mxu0
      %752 = vmatprep.mubr.bf16.mxu0 0
      %753 = vmatmul.mubr.bf16.gmra.mrb[0].mxu0 %v704
      %v754 = vpop.f32.mrb[0].mxu0
      %v755 = vadd.f32 0.0, %v754
      %v756 = vpop.f32.mrb[0].mxu0
      %v757 = vpop.f32.mrb[0].mxu0
      %v758 = vadd.f32 0.0, %v757
      %v759 = vpop.f32.mrb[0].mxu0
      %760 = vmatprep.mubr.bf16.mxu0 0
      %761 = vmatmul.mubr.bf16.gmra.mrb[0].mxu0 %v707
      %v762 = vpop.f32.mrb[0].mxu0
      %v763 = vadd.f32 0.0, %v762
      %v764 = vpop.f32.mrb[0].mxu0
      %v765 = vpop.f32.mrb[0].mxu0
      %v766 = vadd.f32 0.0, %v765
      %v767 = vpop.f32.mrb[0].mxu0
      %768 = vmatprep.mubr.bf16.mxu0 0
      %769 = vmatmul.mubr.bf16.gmra.mrb[0].mxu0 %v710
      %v770 = vpop.f32.mrb[0].mxu0
      %v771 = vadd.f32 0.0, %v770
      %v772 = vpop.f32.mrb[0].mxu0
      %v773 = vpop.f32.mrb[0].mxu0
      %v774 = vadd.f32 0.0, %v773
      %v775 = vpop.f32.mrb[0].mxu0
      %776 = vdwg.mxu0
      %v777 = vadd.f32 %v688, %v747
      %v778 = vadd.f32 %v689, %v750
      %v779 = vadd.f32 %v690, %v755
      %v780 = vadd.f32 %v691, %v758
      %v781 = vadd.f32 %v692, %v763
      %v782 = vadd.f32 %v693, %v766
      %v783 = vadd.f32 %v694, %v771
      %v784 = vadd.f32 %v695, %v774
      %785 = vst.msk [vmem:[#allocation4] sm:$0xff] %vm356, %v777
      %786 = vst.msk [vmem:[#allocation4 + $0x8] sm:$0xff] %vm356, %v778
      %787 = vst.msk [vmem:[#allocation4 + $0x10] sm:$0xff] %vm356, %v779
      %788 = vst.msk [vmem:[#allocation4 + $0x18] sm:$0xff] %vm356, %v780
      %789 = vst.msk [vmem:[#allocation4 + $0x20] sm:$0xff] %vm356, %v781
      %790 = vst.msk [vmem:[#allocation4 + $0x28] sm:$0xff] %vm356, %v782
      %791 = vst.msk [vmem:[#allocation4 + $0x30] sm:$0xff] %vm356, %v783
      %792 = vst.msk [vmem:[#allocation4 + $0x38] sm:$0xff] %vm356, %v784
      %793 = vst.msk [vmem:[#allocation2] sm:$0xff] %vm631, %v487
      %794 = vst.msk [vmem:[#allocation2 + $0x8] sm:$0xff] %vm631, %v488
      %795 = vst.msk [vmem:[#allocation2 + $0x10] sm:$0xff] %vm631, %v489
      %796 = vst.msk [vmem:[#allocation2 + $0x18] sm:$0xff] %vm631, %v490
      %797 = vst.msk [vmem:[#allocation2 + $0x20] sm:$0xff] %vm631, %v491
      %798 = vst.msk [vmem:[#allocation2 + $0x28] sm:$0xff] %vm631, %v492
      %799 = vst.msk [vmem:[#allocation2 + $0x30] sm:$0xff] %vm631, %v493
      %800 = vst.msk [vmem:[#allocation2 + $0x38] sm:$0xff] %vm631, %v494
      // Predicated region
      $region37: #{t2t_vit_forward.21} parent=31 // pred_check
        %p801 = pneg %p290
      $region38: #{t2t_vit_forward.21} parent=31 // pred_check_branch
        %803 = sbr.rel (%p801) target = $region40
      $region39: #{t2t_vit_forward.21} parent=31 // pred_region
        %v804 = vld [vmem:[#allocation4] sm:$0xff]
        %v805 = vld [vmem:[#allocation4 + $0x8] sm:$0xff]
        %v806 = vld [vmem:[#allocation4 + $0x10] sm:$0xff]
        %v807 = vld [vmem:[#allocation4 + $0x18] sm:$0xff]
        %v808 = vld [vmem:[#allocation4 + $0x20] sm:$0xff]
        %v809 = vld [vmem:[#allocation4 + $0x28] sm:$0xff]
        %v810 = vld [vmem:[#allocation4 + $0x30] sm:$0xff]
        %v811 = vld [vmem:[#allocation4 + $0x38] sm:$0xff]
        %v812 = vld [vmem:[#allocation3] sm:$0xff]
        %v813 = vld [vmem:[#allocation3 + $0x8] sm:$0xff]
        %v814 = vld [vmem:[#allocation3 + $0x10] sm:$0xff]
        %v815 = vld [vmem:[#allocation3 + $0x18] sm:$0xff]
        %v816 = vld [vmem:[#allocation3 + $0x20] sm:$0xff]
        %v817 = vld [vmem:[#allocation3 + $0x28] sm:$0xff]
        %v818 = vld [vmem:[#allocation3 + $0x30] sm:$0xff]
        %v819 = vld [vmem:[#allocation3 + $0x38] sm:$0xff]
        %v820 = vrcp.pop %v812
        %v821 = vrcp.pop %v813
        %v822 = vrcp.pop %v814
        %v823 = vrcp.pop %v815
        %v824 = vrcp.pop %v816
        %v825 = vrcp.pop %v817
        %v826 = vrcp.pop %v818
        %v827 = vrcp.pop %v819
        %829 = vset.pattern.permute.xlu0 0
        %830 = vperm.xlu0 %829, %v820
        %v831 = vpop.permute.xlu0 %830
        %834 = vset.pattern.permute.xlu0 0
        %835 = vperm.xlu0 %834, %v821
        %v836 = vpop.permute.xlu0 %835
        %839 = vset.pattern.permute.xlu0 0
        %840 = vperm.xlu0 %839, %v822
        %v841 = vpop.permute.xlu0 %840
        %844 = vset.pattern.permute.xlu0 0
        %845 = vperm.xlu0 %844, %v823
        %v846 = vpop.permute.xlu0 %845
        %849 = vset.pattern.permute.xlu0 0
        %850 = vperm.xlu0 %849, %v824
        %v851 = vpop.permute.xlu0 %850
        %854 = vset.pattern.permute.xlu0 0
        %855 = vperm.xlu0 %854, %v825
        %v856 = vpop.permute.xlu0 %855
        %859 = vset.pattern.permute.xlu0 0
        %860 = vperm.xlu0 %859, %v826
        %v861 = vpop.permute.xlu0 %860
        %864 = vset.pattern.permute.xlu0 0
        %865 = vperm.xlu0 %864, %v827
        %v866 = vpop.permute.xlu0 %865
        %v868 = vmul.f32 %v804, %v831
        %v869 = vmul.f32 %v805, %v836
        %v870 = vmul.f32 %v806, %v841
        %v871 = vmul.f32 %v807, %v846
        %v872 = vmul.f32 %v808, %v851
        %v873 = vmul.f32 %v809, %v856
        %v874 = vmul.f32 %v810, %v861
        %v875 = vmul.f32 %v811, %v866
        %876 = vst.msk [vmem:[%s287] sm:$0xff] %vm356, %v868
        %877 = vst.msk [vmem:[%s287 + $0x8] sm:$0xff] %vm356, %v869
        %878 = vst.msk [vmem:[%s287 + $0x10] sm:$0xff] %vm356, %v870
        %879 = vst.msk [vmem:[%s287 + $0x18] sm:$0xff] %vm356, %v871
        %880 = vst.msk [vmem:[%s287 + $0x20] sm:$0xff] %vm356, %v872
        %881 = vst.msk [vmem:[%s287 + $0x28] sm:$0xff] %vm356, %v873
        %882 = vst.msk [vmem:[%s287 + $0x30] sm:$0xff] %vm356, %v874
        %883 = vst.msk [vmem:[%s287 + $0x38] sm:$0xff] %vm356, %v875
      $region40: #{t2t_vit_forward.21} parent=31 // pred_fallthru
        _
      %s884 = smul.u32 8, %s20
      %p885 = scmp.lt.s32.totalorder %s19, 1
      %s886 = scalar_select %p885, %s19, 1
      %p887 = scmp.lt.s32.totalorder %s884, 7
      %s888 = scalar_select %p887, %s884, 7
      %s889 = smul.addr %s886, 8
      %s890 = sadd.s32 %s888, %s889
      %s891 = smul.addr %s890, 8
      %s892 = scalar_lea.vmem %s3, %s891
      // Predicated region
      $region41: #{t2t_vit_forward.21} parent=31 // pred_check
        %p893 = pneg %p137
      $region42: #{t2t_vit_forward.21} parent=31 // pred_check_branch
        %895 = sbr.rel (%p893) target = $region44
      $region43: #{t2t_vit_forward.21} parent=31 // pred_region
        %s896 = smul.u32 8, %s20
      $region44: #{t2t_vit_forward.21} parent=31 // pred_fallthru
        _
    $region32: #{t2t_vit_forward.21} parent=5 // pred_fallthru
      _
    %p897 = scmp.le.s32.totalorder 2, %s9
    // Predicated region
    $region45: #{t2t_vit_forward.21} parent=5 // pred_check
      %p898 = pneg %p897
    $region46: #{t2t_vit_forward.21} parent=5 // pred_check_branch
      %900 = sbr.rel (%p898) target = $region48
    $region47: #{t2t_vit_forward.21} parent=5 // pred_region
      %s901 = ssub.s32 %s9, 2
      // Predicated region
      $region49: #{t2t_vit_forward.21} parent=47 // pred_check
        %p902 = pneg %p143
      $region50: #{t2t_vit_forward.21} parent=47 // pred_check_branch
        %904 = sbr.rel (%p902) target = $region52
      $region51: #{t2t_vit_forward.21} parent=47 // pred_region
        %s905 = smul.u32 8, %s23
        %p906 = scmp.lt.s32.totalorder %s22, 1
        %s907 = scalar_select %p906, %s22, 1
        %p908 = scmp.lt.s32.totalorder %s905, 7
        %s909 = scalar_select %p908, %s905, 7
        %s910 = smul.addr %s907, 8
        %s911 = sadd.s32 %s909, %s910
        %s912 = smul.addr %s911, 8
        %s913 = scalar_lea.vmem %s3, %s912
      $region52: #{t2t_vit_forward.21} parent=47 // pred_fallthru
        _
    $region48: #{t2t_vit_forward.21} parent=5 // pred_fallthru
      _
  $region6: #{t2t_vit_forward.21} parent=0 // loop_footer
    %s13 = sadd.s32 1, %s9
  $region7: #{t2t_vit_forward.21} parent=0 // loop_footer_branch
    %8 = sbr.rel target = $region3
  $region8: #{t2t_vit_forward.21} parent=0 // loop_exit
    _

// kernel: t2t_vit_forward.23
$region0: #{t2t_vit_forward.23}
  #allocation0 [shape = 'u32[]', space=smem, size = 0x4, offset = 0x4, fixed_abs, tag = 'smem constant byte address 0x4 - core index']
  #allocation1 [shape = 'u32[144,128]{1,0:T(1,128)}', space=vmem, size = 0x12000, scoped, tag = 'internal scratch']
  #allocation2 [shape = 'bf16[128,128]{1,0:T(16,128)(2,1)}', space=vmem, size = 0x8000, scoped, tag = 'scratch operand']
  %s0 = inlined_call_operand.vmem [shape: f32[128,128], index: 0, kind: input, shape index: {}, may-alias: {0,7}]
  %s1 = inlined_call_operand.vmem [shape: f32[128,1], index: 1, kind: input, shape index: {}]
  %s2 = inlined_call_operand.vmem [shape: f32[128,1], index: 2, kind: input, shape index: {}]
  %s3 = inlined_call_operand.vmem [shape: f32[128,128], index: 3, kind: input, shape index: {}]
  %s4 = inlined_call_operand.vmem [shape: f32[1,128], index: 4, kind: input, shape index: {}]
  %s5 = inlined_call_operand.vmem [shape: f32[128,128], index: 5, kind: input, shape index: {}]
  %s6 = inlined_call_operand.vmem [shape: f32[1,128], index: 6, kind: input, shape index: {}]
  %s7 = inlined_call_operand.vmem [shape: f32[128,128], index: 7, kind: input, shape index: {}, may-alias: {0,7}]
  %s8 = inlined_call_operand.vmem [shape: f32[128,128], index: 8, kind: output, shape index: {}]
  %s9 = sld [smem:[#allocation0]]
  $region46: #{t2t_vit_forward.23} parent=0
    _
  %s11 = ssub.s32 1, %s9
  %s12 = scalar_select 0, %s11, %s9
  // Predicated region
  $region2: #{t2t_vit_forward.23} parent=0 // pred_check
    _
  $region3: #{t2t_vit_forward.23} parent=0 // pred_check_branch
    %14 = sbr.rel (0) target = $region5
  $region4: #{t2t_vit_forward.23} parent=0 // pred_region
    _
  $region5: #{t2t_vit_forward.23} parent=0 // pred_fallthru
    _
  // Predicated region
  $region6: #{t2t_vit_forward.23} parent=0 // pred_check
    _
  $region7: #{t2t_vit_forward.23} parent=0 // pred_check_branch
    %16 = sbr.rel (0) target = $region9
  $region8: #{t2t_vit_forward.23} parent=0 // pred_region
    _
  $region9: #{t2t_vit_forward.23} parent=0 // pred_fallthru
    _
  // Predicated region
  $region10: #{t2t_vit_forward.23} parent=0 // pred_check
    _
  $region11: #{t2t_vit_forward.23} parent=0 // pred_check_branch
    %18 = sbr.rel (0) target = $region13
  $region12: #{t2t_vit_forward.23} parent=0 // pred_region
    _
  $region13: #{t2t_vit_forward.23} parent=0 // pred_fallthru
    _
  // Predicated region
  $region14: #{t2t_vit_forward.23} parent=0 // pred_check
    _
  $region15: #{t2t_vit_forward.23} parent=0 // pred_check_branch
    %20 = sbr.rel (0) target = $region17
  $region16: #{t2t_vit_forward.23} parent=0 // pred_region
    _
  $region17: #{t2t_vit_forward.23} parent=0 // pred_fallthru
    _
  // Predicated region
  $region18: #{t2t_vit_forward.23} parent=0 // pred_check
    _
  $region19: #{t2t_vit_forward.23} parent=0 // pred_check_branch
    %22 = sbr.rel (0) target = $region21
  $region20: #{t2t_vit_forward.23} parent=0 // pred_region
    _
  $region21: #{t2t_vit_forward.23} parent=0 // pred_fallthru
    _
  // Predicated region
  $region22: #{t2t_vit_forward.23} parent=0 // pred_check
    _
  $region23: #{t2t_vit_forward.23} parent=0 // pred_check_branch
    %24 = sbr.rel (0) target = $region25
  $region24: #{t2t_vit_forward.23} parent=0 // pred_region
    _
  $region25: #{t2t_vit_forward.23} parent=0 // pred_fallthru
    _
  // Predicated region
  $region26: #{t2t_vit_forward.23} parent=0 // pred_check
    _
  $region27: #{t2t_vit_forward.23} parent=0 // pred_check_branch
    %26 = sbr.rel (0) target = $region29
  $region28: #{t2t_vit_forward.23} parent=0 // pred_region
    _
  $region29: #{t2t_vit_forward.23} parent=0 // pred_fallthru
    _
  // Predicated region
  $region30: #{t2t_vit_forward.23} parent=0 // pred_check
    _
  $region31: #{t2t_vit_forward.23} parent=0 // pred_check_branch
    %28 = sbr.rel (0) target = $region33
  $region32: #{t2t_vit_forward.23} parent=0 // pred_region
    _
  $region33: #{t2t_vit_forward.23} parent=0 // pred_fallthru
    _
  %p30 = scmp.eq.s32.totalorder 0, 0
  // Predicated region
  $region34: #{t2t_vit_forward.23} parent=0 // pred_check
    %p31 = pneg %p30
  $region35: #{t2t_vit_forward.23} parent=0 // pred_check_branch
    %33 = sbr.rel (%p31) target = $region37
  $region36: #{t2t_vit_forward.23} parent=0 // pred_region
    %v34 = vld [vmem:[%s0] sm:$0xff]
    %v35 = vld [vmem:[%s0 + $0x8] sm:$0xff]
    %v36 = vld [vmem:[%s0 + $0x10] sm:$0xff]
    %v37 = vld [vmem:[%s0 + $0x18] sm:$0xff]
    %v38 = vld [vmem:[%s0 + $0x20] sm:$0xff]
    %v39 = vld [vmem:[%s0 + $0x28] sm:$0xff]
    %v40 = vld [vmem:[%s0 + $0x30] sm:$0xff]
    %v41 = vld [vmem:[%s0 + $0x38] sm:$0xff]
    %v42 = vld [vmem:[%s0 + $0x40] sm:$0xff]
    %v43 = vld [vmem:[%s0 + $0x48] sm:$0xff]
    %v44 = vld [vmem:[%s0 + $0x50] sm:$0xff]
    %v45 = vld [vmem:[%s0 + $0x58] sm:$0xff]
    %v46 = vld [vmem:[%s0 + $0x60] sm:$0xff]
    %v47 = vld [vmem:[%s0 + $0x68] sm:$0xff]
    %v48 = vld [vmem:[%s0 + $0x70] sm:$0xff]
    %v49 = vld [vmem:[%s0 + $0x78] sm:$0xff]
    %v50 = vld [vmem:[%s1] sm:$0xff]
    %v51 = vld [vmem:[%s1 + $0x8] sm:$0xff]
    %v52 = vld [vmem:[%s1 + $0x10] sm:$0xff]
    %v53 = vld [vmem:[%s1 + $0x18] sm:$0xff]
    %v54 = vld [vmem:[%s1 + $0x20] sm:$0xff]
    %v55 = vld [vmem:[%s1 + $0x28] sm:$0xff]
    %v56 = vld [vmem:[%s1 + $0x30] sm:$0xff]
    %v57 = vld [vmem:[%s1 + $0x38] sm:$0xff]
    %v58 = vld [vmem:[%s1 + $0x40] sm:$0xff]
    %v59 = vld [vmem:[%s1 + $0x48] sm:$0xff]
    %v60 = vld [vmem:[%s1 + $0x50] sm:$0xff]
    %v61 = vld [vmem:[%s1 + $0x58] sm:$0xff]
    %v62 = vld [vmem:[%s1 + $0x60] sm:$0xff]
    %v63 = vld [vmem:[%s1 + $0x68] sm:$0xff]
    %v64 = vld [vmem:[%s1 + $0x70] sm:$0xff]
    %v65 = vld [vmem:[%s1 + $0x78] sm:$0xff]
    %67 = vset.pattern.permute.xlu0 0
    %68 = vperm.xlu0 %67, %v50
    %v69 = vpop.permute.xlu0 %68
    %72 = vset.pattern.permute.xlu0 0
    %73 = vperm.xlu0 %72, %v51
    %v74 = vpop.permute.xlu0 %73
    %77 = vset.pattern.permute.xlu0 0
    %78 = vperm.xlu0 %77, %v52
    %v79 = vpop.permute.xlu0 %78
    %82 = vset.pattern.permute.xlu0 0
    %83 = vperm.xlu0 %82, %v53
    %v84 = vpop.permute.xlu0 %83
    %87 = vset.pattern.permute.xlu0 0
    %88 = vperm.xlu0 %87, %v54
    %v89 = vpop.permute.xlu0 %88
    %92 = vset.pattern.permute.xlu0 0
    %93 = vperm.xlu0 %92, %v55
    %v94 = vpop.permute.xlu0 %93
    %97 = vset.pattern.permute.xlu0 0
    %98 = vperm.xlu0 %97, %v56
    %v99 = vpop.permute.xlu0 %98
    %102 = vset.pattern.permute.xlu0 0
    %103 = vperm.xlu0 %102, %v57
    %v104 = vpop.permute.xlu0 %103
    %107 = vset.pattern.permute.xlu0 0
    %108 = vperm.xlu0 %107, %v58
    %v109 = vpop.permute.xlu0 %108
    %112 = vset.pattern.permute.xlu0 0
    %113 = vperm.xlu0 %112, %v59
    %v114 = vpop.permute.xlu0 %113
    %117 = vset.pattern.permute.xlu0 0
    %118 = vperm.xlu0 %117, %v60
    %v119 = vpop.permute.xlu0 %118
    %122 = vset.pattern.permute.xlu0 0
    %123 = vperm.xlu0 %122, %v61
    %v124 = vpop.permute.xlu0 %123
    %127 = vset.pattern.permute.xlu0 0
    %128 = vperm.xlu0 %127, %v62
    %v129 = vpop.permute.xlu0 %128
    %132 = vset.pattern.permute.xlu0 0
    %133 = vperm.xlu0 %132, %v63
    %v134 = vpop.permute.xlu0 %133
    %137 = vset.pattern.permute.xlu0 0
    %138 = vperm.xlu0 %137, %v64
    %v139 = vpop.permute.xlu0 %138
    %142 = vset.pattern.permute.xlu0 0
    %143 = vperm.xlu0 %142, %v65
    %v144 = vpop.permute.xlu0 %143
    %v146 = vmul.f32 %v34, %v69
    %v147 = vmul.f32 %v35, %v74
    %v148 = vmul.f32 %v36, %v79
    %v149 = vmul.f32 %v37, %v84
    %v150 = vmul.f32 %v38, %v89
    %v151 = vmul.f32 %v39, %v94
    %v152 = vmul.f32 %v40, %v99
    %v153 = vmul.f32 %v41, %v104
    %v154 = vmul.f32 %v42, %v109
    %v155 = vmul.f32 %v43, %v114
    %v156 = vmul.f32 %v44, %v119
    %v157 = vmul.f32 %v45, %v124
    %v158 = vmul.f32 %v46, %v129
    %v159 = vmul.f32 %v47, %v134
    %v160 = vmul.f32 %v48, %v139
    %v161 = vmul.f32 %v49, %v144
    %v162 = vld [vmem:[%s2] sm:$0xff]
    %v163 = vld [vmem:[%s2 + $0x8] sm:$0xff]
    %v164 = vld [vmem:[%s2 + $0x10] sm:$0xff]
    %v165 = vld [vmem:[%s2 + $0x18] sm:$0xff]
    %v166 = vld [vmem:[%s2 + $0x20] sm:$0xff]
    %v167 = vld [vmem:[%s2 + $0x28] sm:$0xff]
    %v168 = vld [vmem:[%s2 + $0x30] sm:$0xff]
    %v169 = vld [vmem:[%s2 + $0x38] sm:$0xff]
    %v170 = vld [vmem:[%s2 + $0x40] sm:$0xff]
    %v171 = vld [vmem:[%s2 + $0x48] sm:$0xff]
    %v172 = vld [vmem:[%s2 + $0x50] sm:$0xff]
    %v173 = vld [vmem:[%s2 + $0x58] sm:$0xff]
    %v174 = vld [vmem:[%s2 + $0x60] sm:$0xff]
    %v175 = vld [vmem:[%s2 + $0x68] sm:$0xff]
    %v176 = vld [vmem:[%s2 + $0x70] sm:$0xff]
    %v177 = vld [vmem:[%s2 + $0x78] sm:$0xff]
    %179 = vset.pattern.permute.xlu0 0
    %180 = vperm.xlu0 %179, %v162
    %v181 = vpop.permute.xlu0 %180
    %184 = vset.pattern.permute.xlu0 0
    %185 = vperm.xlu0 %184, %v163
    %v186 = vpop.permute.xlu0 %185
    %189 = vset.pattern.permute.xlu0 0
    %190 = vperm.xlu0 %189, %v164
    %v191 = vpop.permute.xlu0 %190
    %194 = vset.pattern.permute.xlu0 0
    %195 = vperm.xlu0 %194, %v165
    %v196 = vpop.permute.xlu0 %195
    %199 = vset.pattern.permute.xlu0 0
    %200 = vperm.xlu0 %199, %v166
    %v201 = vpop.permute.xlu0 %200
    %204 = vset.pattern.permute.xlu0 0
    %205 = vperm.xlu0 %204, %v167
    %v206 = vpop.permute.xlu0 %205
    %209 = vset.pattern.permute.xlu0 0
    %210 = vperm.xlu0 %209, %v168
    %v211 = vpop.permute.xlu0 %210
    %214 = vset.pattern.permute.xlu0 0
    %215 = vperm.xlu0 %214, %v169
    %v216 = vpop.permute.xlu0 %215
    %219 = vset.pattern.permute.xlu0 0
    %220 = vperm.xlu0 %219, %v170
    %v221 = vpop.permute.xlu0 %220
    %224 = vset.pattern.permute.xlu0 0
    %225 = vperm.xlu0 %224, %v171
    %v226 = vpop.permute.xlu0 %225
    %229 = vset.pattern.permute.xlu0 0
    %230 = vperm.xlu0 %229, %v172
    %v231 = vpop.permute.xlu0 %230
    %234 = vset.pattern.permute.xlu0 0
    %235 = vperm.xlu0 %234, %v173
    %v236 = vpop.permute.xlu0 %235
    %239 = vset.pattern.permute.xlu0 0
    %240 = vperm.xlu0 %239, %v174
    %v241 = vpop.permute.xlu0 %240
    %244 = vset.pattern.permute.xlu0 0
    %245 = vperm.xlu0 %244, %v175
    %v246 = vpop.permute.xlu0 %245
    %249 = vset.pattern.permute.xlu0 0
    %250 = vperm.xlu0 %249, %v176
    %v251 = vpop.permute.xlu0 %250
    %254 = vset.pattern.permute.xlu0 0
    %255 = vperm.xlu0 %254, %v177
    %v256 = vpop.permute.xlu0 %255
    %v258 = vadd.f32 %v146, %v181
    %v259 = vadd.f32 %v147, %v186
    %v260 = vadd.f32 %v148, %v191
    %v261 = vadd.f32 %v149, %v196
    %v262 = vadd.f32 %v150, %v201
    %v263 = vadd.f32 %v151, %v206
    %v264 = vadd.f32 %v152, %v211
    %v265 = vadd.f32 %v153, %v216
    %v266 = vadd.f32 %v154, %v221
    %v267 = vadd.f32 %v155, %v226
    %v268 = vadd.f32 %v156, %v231
    %v269 = vadd.f32 %v157, %v236
    %v270 = vadd.f32 %v158, %v241
    %v271 = vadd.f32 %v159, %v246
    %v272 = vadd.f32 %v160, %v251
    %v273 = vadd.f32 %v161, %v256
    %v274 = vpack.c.bf16 %v259, %v258
    %v275 = vpack.c.bf16 %v261, %v260
    %v276 = vpack.c.bf16 %v263, %v262
    %v277 = vpack.c.bf16 %v265, %v264
    %v278 = vpack.c.bf16 %v267, %v266
    %v279 = vpack.c.bf16 %v269, %v268
    %v280 = vpack.c.bf16 %v271, %v270
    %v281 = vpack.c.bf16 %v273, %v272
    %v282 = vld [vmem:[%s3] sm:$0xff]
    %v283 = vld [vmem:[%s3 + $0x8] sm:$0xff]
    %v284 = vld [vmem:[%s3 + $0x10] sm:$0xff]
    %v285 = vld [vmem:[%s3 + $0x18] sm:$0xff]
    %v286 = vld [vmem:[%s3 + $0x20] sm:$0xff]
    %v287 = vld [vmem:[%s3 + $0x28] sm:$0xff]
    %v288 = vld [vmem:[%s3 + $0x30] sm:$0xff]
    %v289 = vld [vmem:[%s3 + $0x38] sm:$0xff]
    %v290 = vld [vmem:[%s3 + $0x40] sm:$0xff]
    %v291 = vld [vmem:[%s3 + $0x48] sm:$0xff]
    %v292 = vld [vmem:[%s3 + $0x50] sm:$0xff]
    %v293 = vld [vmem:[%s3 + $0x58] sm:$0xff]
    %v294 = vld [vmem:[%s3 + $0x60] sm:$0xff]
    %v295 = vld [vmem:[%s3 + $0x68] sm:$0xff]
    %v296 = vld [vmem:[%s3 + $0x70] sm:$0xff]
    %v297 = vld [vmem:[%s3 + $0x78] sm:$0xff]
    %v298 = vpack.c.bf16 %v283, %v282
    %v299 = vpack.c.bf16 %v285, %v284
    %v300 = vpack.c.bf16 %v287, %v286
    %v301 = vpack.c.bf16 %v289, %v288
    %v302 = vpack.c.bf16 %v291, %v290
    %v303 = vpack.c.bf16 %v293, %v292
    %v304 = vpack.c.bf16 %v295, %v294
    %v305 = vpack.c.bf16 %v297, %v296
    %v306 = vld [vmem:[%s4] sm:$0x1]
    %v308 = vlaneseq
    %v309 = vshrl.u32 %v308, 7
    %v310 = vsub.s32 0, %v309
    %v311 = vrot.slane %v306, %v310
    %313 = vmatprep.subr.bf16.mxu0 0
    %314 = vmatpush1.bf16.msra.mxu0 %v298
    %315 = vmatprep.subr.bf16.mxu0 0
    %316 = vmatpush1.bf16.msra.mxu0 %v299
    %317 = vmatprep.subr.bf16.mxu0 0
    %318 = vmatpush1.bf16.msra.mxu0 %v300
    %319 = vmatprep.subr.bf16.mxu0 0
    %320 = vmatpush1.bf16.msra.mxu0 %v301
    %321 = vmatprep.subr.bf16.mxu0 0
    %322 = vmatpush1.bf16.msra.mxu0 %v302
    %323 = vmatprep.subr.bf16.mxu0 0
    %324 = vmatpush1.bf16.msra.mxu0 %v303
    %325 = vmatprep.subr.bf16.mxu0 0
    %326 = vmatpush1.bf16.msra.mxu0 %v304
    %327 = vmatprep.subr.bf16.mxu0 0
    %328 = vmatpush1.bf16.msra.mxu0 %v305
    %329 = vmatprep.subr.bf16.mxu0 0
    %330 = vmatpush1.bf16.msra.mxu0 0
    %331 = vmatprep.subr.bf16.mxu0 0
    %332 = vmatpush1.bf16.msra.mxu0 0
    %333 = vmatprep.subr.bf16.mxu0 0
    %334 = vmatpush1.bf16.msra.mxu0 0
    %335 = vmatprep.subr.bf16.mxu0 0
    %336 = vmatpush1.bf16.msra.mxu0 0
    %337 = vmatprep.subr.bf16.mxu0 0
    %338 = vmatpush1.bf16.msra.mxu0 0
    %339 = vmatprep.subr.bf16.mxu0 0
    %340 = vmatpush1.bf16.msra.mxu0 0
    %341 = vmatprep.subr.bf16.mxu0 0
    %342 = vmatpush1.bf16.msra.mxu0 0
    %343 = vmatprep.subr.bf16.mxu0 0
    %344 = vmatpush1.bf16.msra.mxu0 0
    %345 = vmatprep.mubr.bf16.mxu0 0
    %346 = vmatmul.mubr.bf16.gmra.mrb[0].mxu0 %v274
    %v347 = vpop.f32.mrb[0].mxu0
    %v348 = vadd.f32 %v311, %v347
    %v349 = vpop.f32.mrb[0].mxu0
    %v350 = vpop.f32.mrb[0].mxu0
    %v351 = vadd.f32 %v311, %v350
    %v352 = vpop.f32.mrb[0].mxu0
    %353 = vmatprep.mubr.bf16.mxu0 0
    %354 = vmatmul.mubr.bf16.gmra.mrb[0].mxu0 %v275
    %v355 = vpop.f32.mrb[0].mxu0
    %v356 = vadd.f32 %v311, %v355
    %v357 = vpop.f32.mrb[0].mxu0
    %v358 = vpop.f32.mrb[0].mxu0
    %v359 = vadd.f32 %v311, %v358
    %v360 = vpop.f32.mrb[0].mxu0
    %361 = vmatprep.mubr.bf16.mxu0 0
    %362 = vmatmul.mubr.bf16.gmra.mrb[0].mxu0 %v276
    %v363 = vpop.f32.mrb[0].mxu0
    %v364 = vadd.f32 %v311, %v363
    %v365 = vpop.f32.mrb[0].mxu0
    %v366 = vpop.f32.mrb[0].mxu0
    %v367 = vadd.f32 %v311, %v366
    %v368 = vpop.f32.mrb[0].mxu0
    %369 = vmatprep.mubr.bf16.mxu0 0
    %370 = vmatmul.mubr.bf16.gmra.mrb[0].mxu0 %v277
    %v371 = vpop.f32.mrb[0].mxu0
    %v372 = vadd.f32 %v311, %v371
    %v373 = vpop.f32.mrb[0].mxu0
    %v374 = vpop.f32.mrb[0].mxu0
    %v375 = vadd.f32 %v311, %v374
    %v376 = vpop.f32.mrb[0].mxu0
    %377 = vmatprep.mubr.bf16.mxu0 0
    %378 = vmatmul.mubr.bf16.gmra.mrb[0].mxu0 %v278
    %v379 = vpop.f32.mrb[0].mxu0
    %v380 = vadd.f32 %v311, %v379
    %v381 = vpop.f32.mrb[0].mxu0
    %v382 = vpop.f32.mrb[0].mxu0
    %v383 = vadd.f32 %v311, %v382
    %v384 = vpop.f32.mrb[0].mxu0
    %385 = vmatprep.mubr.bf16.mxu0 0
    %386 = vmatmul.mubr.bf16.gmra.mrb[0].mxu0 %v279
    %v387 = vpop.f32.mrb[0].mxu0
    %v388 = vadd.f32 %v311, %v387
    %v389 = vpop.f32.mrb[0].mxu0
    %v390 = vpop.f32.mrb[0].mxu0
    %v391 = vadd.f32 %v311, %v390
    %v392 = vpop.f32.mrb[0].mxu0
    %393 = vmatprep.mubr.bf16.mxu0 0
    %394 = vmatmul.mubr.bf16.gmra.mrb[0].mxu0 %v280
    %v395 = vpop.f32.mrb[0].mxu0
    %v396 = vadd.f32 %v311, %v395
    %v397 = vpop.f32.mrb[0].mxu0
    %v398 = vpop.f32.mrb[0].mxu0
    %v399 = vadd.f32 %v311, %v398
    %v400 = vpop.f32.mrb[0].mxu0
    %401 = vmatprep.mubr.bf16.mxu0 0
    %402 = vmatmul.mubr.bf16.gmra.mrb[0].mxu0 %v281
    %v403 = vpop.f32.mrb[0].mxu0
    %v404 = vadd.f32 %v311, %v403
    %v405 = vpop.f32.mrb[0].mxu0
    %v406 = vpop.f32.mrb[0].mxu0
    %v407 = vadd.f32 %v311, %v406
    %v408 = vpop.f32.mrb[0].mxu0
    %409 = vdwg.mxu0
    %v410 = vmul.f32 %v348, 0.5
    %v411 = vmul.f32 %v351, 0.5
    %v412 = vmul.f32 %v356, 0.5
    %v413 = vmul.f32 %v359, 0.5
    %v414 = vmul.f32 %v364, 0.5
    %v415 = vmul.f32 %v367, 0.5
    %v416 = vmul.f32 %v372, 0.5
    %v417 = vmul.f32 %v375, 0.5
    %v418 = vmul.f32 %v380, 0.5
    %v419 = vmul.f32 %v383, 0.5
    %v420 = vmul.f32 %v388, 0.5
    %v421 = vmul.f32 %v391, 0.5
    %v422 = vmul.f32 %v396, 0.5
    %v423 = vmul.f32 %v399, 0.5
    %v424 = vmul.f32 %v404, 0.5
    %v425 = vmul.f32 %v407, 0.5
    %v426 = vmul.f32 %v348, 0.70710677
    %v427 = vmul.f32 %v351, 0.70710677
    %v428 = vmul.f32 %v356, 0.70710677
    %v429 = vmul.f32 %v359, 0.70710677
    %v430 = vmul.f32 %v364, 0.70710677
    %v431 = vmul.f32 %v367, 0.70710677
    %v432 = vmul.f32 %v372, 0.70710677
    %v433 = vmul.f32 %v375, 0.70710677
    %v434 = vmul.f32 %v380, 0.70710677
    %v435 = vmul.f32 %v383, 0.70710677
    %v436 = vmul.f32 %v388, 0.70710677
    %v437 = vmul.f32 %v391, 0.70710677
    %v438 = vmul.f32 %v396, 0.70710677
    %v439 = vmul.f32 %v399, 0.70710677
    %v440 = vmul.f32 %v404, 0.70710677
    %v441 = vmul.f32 %v407, 0.70710677
    %v442 = verf.f32.pop %v426
    %v443 = verf.f32.pop %v427
    %v444 = verf.f32.pop %v428
    %v445 = verf.f32.pop %v429
    %v446 = verf.f32.pop %v430
    %v447 = verf.f32.pop %v431
    %v448 = verf.f32.pop %v432
    %v449 = verf.f32.pop %v433
    %v450 = verf.f32.pop %v434
    %v451 = verf.f32.pop %v435
    %v452 = verf.f32.pop %v436
    %v453 = verf.f32.pop %v437
    %v454 = verf.f32.pop %v438
    %v455 = verf.f32.pop %v439
    %v456 = verf.f32.pop %v440
    %v457 = verf.f32.pop %v441
    %v458 = vadd.f32 %v442, 1.0
    %v459 = vadd.f32 %v443, 1.0
    %v460 = vadd.f32 %v444, 1.0
    %v461 = vadd.f32 %v445, 1.0
    %v462 = vadd.f32 %v446, 1.0
    %v463 = vadd.f32 %v447, 1.0
    %v464 = vadd.f32 %v448, 1.0
    %v465 = vadd.f32 %v449, 1.0
    %v466 = vadd.f32 %v450, 1.0
    %v467 = vadd.f32 %v451, 1.0
    %v468 = vadd.f32 %v452, 1.0
    %v469 = vadd.f32 %v453, 1.0
    %v470 = vadd.f32 %v454, 1.0
    %v471 = vadd.f32 %v455, 1.0
    %v472 = vadd.f32 %v456, 1.0
    %v473 = vadd.f32 %v457, 1.0
    %v474 = vmul.f32 %v410, %v458
    %v475 = vmul.f32 %v411, %v459
    %v476 = vmul.f32 %v412, %v460
    %v477 = vmul.f32 %v413, %v461
    %v478 = vmul.f32 %v414, %v462
    %v479 = vmul.f32 %v415, %v463
    %v480 = vmul.f32 %v416, %v464
    %v481 = vmul.f32 %v417, %v465
    %v482 = vmul.f32 %v418, %v466
    %v483 = vmul.f32 %v419, %v467
    %v484 = vmul.f32 %v420, %v468
    %v485 = vmul.f32 %v421, %v469
    %v486 = vmul.f32 %v422, %v470
    %v487 = vmul.f32 %v423, %v471
    %v488 = vmul.f32 %v424, %v472
    %v489 = vmul.f32 %v425, %v473
    %v490 = vpack.c.bf16 %v475, %v474
    %v491 = vpack.c.bf16 %v477, %v476
    %v492 = vpack.c.bf16 %v479, %v478
    %v493 = vpack.c.bf16 %v481, %v480
    %v494 = vpack.c.bf16 %v483, %v482
    %v495 = vpack.c.bf16 %v485, %v484
    %v496 = vpack.c.bf16 %v487, %v486
    %v497 = vpack.c.bf16 %v489, %v488
    %498 = vst [vmem:[#allocation2] sm:$0xff] %v490
    %499 = vst [vmem:[#allocation2 + $0x8] sm:$0xff] %v491
    %500 = vst [vmem:[#allocation2 + $0x10] sm:$0xff] %v492
    %501 = vst [vmem:[#allocation2 + $0x18] sm:$0xff] %v493
    %502 = vst [vmem:[#allocation2 + $0x20] sm:$0xff] %v494
    %503 = vst [vmem:[#allocation2 + $0x28] sm:$0xff] %v495
    %504 = vst [vmem:[#allocation2 + $0x30] sm:$0xff] %v496
    %505 = vst [vmem:[#allocation2 + $0x38] sm:$0xff] %v497
  $region37: #{t2t_vit_forward.23} parent=0 // pred_fallthru
    _
  %v506 = vld [vmem:[#allocation2] sm:$0xff]
  %v507 = vld [vmem:[#allocation2 + $0x8] sm:$0xff]
  %v508 = vld [vmem:[#allocation2 + $0x10] sm:$0xff]
  %v509 = vld [vmem:[#allocation2 + $0x18] sm:$0xff]
  %v510 = vld [vmem:[#allocation2 + $0x20] sm:$0xff]
  %v511 = vld [vmem:[#allocation2 + $0x28] sm:$0xff]
  %v512 = vld [vmem:[#allocation2 + $0x30] sm:$0xff]
  %v513 = vld [vmem:[#allocation2 + $0x38] sm:$0xff]
  %v514 = vld [vmem:[%s5] sm:$0xff]
  %v515 = vld [vmem:[%s5 + $0x8] sm:$0xff]
  %v516 = vld [vmem:[%s5 + $0x10] sm:$0xff]
  %v517 = vld [vmem:[%s5 + $0x18] sm:$0xff]
  %v518 = vld [vmem:[%s5 + $0x20] sm:$0xff]
  %v519 = vld [vmem:[%s5 + $0x28] sm:$0xff]
  %v520 = vld [vmem:[%s5 + $0x30] sm:$0xff]
  %v521 = vld [vmem:[%s5 + $0x38] sm:$0xff]
  %v522 = vld [vmem:[%s5 + $0x40] sm:$0xff]
  %v523 = vld [vmem:[%s5 + $0x48] sm:$0xff]
  %v524 = vld [vmem:[%s5 + $0x50] sm:$0xff]
  %v525 = vld [vmem:[%s5 + $0x58] sm:$0xff]
  %v526 = vld [vmem:[%s5 + $0x60] sm:$0xff]
  %v527 = vld [vmem:[%s5 + $0x68] sm:$0xff]
  %v528 = vld [vmem:[%s5 + $0x70] sm:$0xff]
  %v529 = vld [vmem:[%s5 + $0x78] sm:$0xff]
  %v530 = vpack.c.bf16 %v515, %v514
  %v531 = vpack.c.bf16 %v517, %v516
  %v532 = vpack.c.bf16 %v519, %v518
  %v533 = vpack.c.bf16 %v521, %v520
  %v534 = vpack.c.bf16 %v523, %v522
  %v535 = vpack.c.bf16 %v525, %v524
  %v536 = vpack.c.bf16 %v527, %v526
  %v537 = vpack.c.bf16 %v529, %v528
  %v538 = vld [vmem:[%s6] sm:$0x1]
  %v540 = vlaneseq
  %v541 = vshrl.u32 %v540, 7
  %v542 = vsub.s32 0, %v541
  %v543 = vrot.slane %v538, %v542
  %545 = vmatprep.subr.bf16.mxu0 0
  %546 = vmatpush1.bf16.msra.mxu0 %v530
  %547 = vmatprep.subr.bf16.mxu0 0
  %548 = vmatpush1.bf16.msra.mxu0 %v531
  %549 = vmatprep.subr.bf16.mxu0 0
  %550 = vmatpush1.bf16.msra.mxu0 %v532
  %551 = vmatprep.subr.bf16.mxu0 0
  %552 = vmatpush1.bf16.msra.mxu0 %v533
  %553 = vmatprep.subr.bf16.mxu0 0
  %554 = vmatpush1.bf16.msra.mxu0 %v534
  %555 = vmatprep.subr.bf16.mxu0 0
  %556 = vmatpush1.bf16.msra.mxu0 %v535
  %557 = vmatprep.subr.bf16.mxu0 0
  %558 = vmatpush1.bf16.msra.mxu0 %v536
  %559 = vmatprep.subr.bf16.mxu0 0
  %560 = vmatpush1.bf16.msra.mxu0 %v537
  %561 = vmatprep.subr.bf16.mxu0 0
  %562 = vmatpush1.bf16.msra.mxu0 0
  %563 = vmatprep.subr.bf16.mxu0 0
  %564 = vmatpush1.bf16.msra.mxu0 0
  %565 = vmatprep.subr.bf16.mxu0 0
  %566 = vmatpush1.bf16.msra.mxu0 0
  %567 = vmatprep.subr.bf16.mxu0 0
  %568 = vmatpush1.bf16.msra.mxu0 0
  %569 = vmatprep.subr.bf16.mxu0 0
  %570 = vmatpush1.bf16.msra.mxu0 0
  %571 = vmatprep.subr.bf16.mxu0 0
  %572 = vmatpush1.bf16.msra.mxu0 0
  %573 = vmatprep.subr.bf16.mxu0 0
  %574 = vmatpush1.bf16.msra.mxu0 0
  %575 = vmatprep.subr.bf16.mxu0 0
  %576 = vmatpush1.bf16.msra.mxu0 0
  %577 = vmatprep.mubr.bf16.mxu0 0
  %578 = vmatmul.mubr.bf16.gmra.mrb[0].mxu0 %v506
  %v579 = vpop.f32.mrb[0].mxu0
  %v580 = vadd.f32 %v543, %v579
  %v581 = vpop.f32.mrb[0].mxu0
  %v582 = vpop.f32.mrb[0].mxu0
  %v583 = vadd.f32 %v543, %v582
  %v584 = vpop.f32.mrb[0].mxu0
  %585 = vmatprep.mubr.bf16.mxu0 0
  %586 = vmatmul.mubr.bf16.gmra.mrb[0].mxu0 %v507
  %v587 = vpop.f32.mrb[0].mxu0
  %v588 = vadd.f32 %v543, %v587
  %v589 = vpop.f32.mrb[0].mxu0
  %v590 = vpop.f32.mrb[0].mxu0
  %v591 = vadd.f32 %v543, %v590
  %v592 = vpop.f32.mrb[0].mxu0
  %593 = vmatprep.mubr.bf16.mxu0 0
  %594 = vmatmul.mubr.bf16.gmra.mrb[0].mxu0 %v508
  %v595 = vpop.f32.mrb[0].mxu0
  %v596 = vadd.f32 %v543, %v595
  %v597 = vpop.f32.mrb[0].mxu0
  %v598 = vpop.f32.mrb[0].mxu0
  %v599 = vadd.f32 %v543, %v598
  %v600 = vpop.f32.mrb[0].mxu0
  %601 = vmatprep.mubr.bf16.mxu0 0
  %602 = vmatmul.mubr.bf16.gmra.mrb[0].mxu0 %v509
  %v603 = vpop.f32.mrb[0].mxu0
  %v604 = vadd.f32 %v543, %v603
  %v605 = vpop.f32.mrb[0].mxu0
  %v606 = vpop.f32.mrb[0].mxu0
  %v607 = vadd.f32 %v543, %v606
  %v608 = vpop.f32.mrb[0].mxu0
  %609 = vmatprep.mubr.bf16.mxu0 0
  %610 = vmatmul.mubr.bf16.gmra.mrb[0].mxu0 %v510
  %v611 = vpop.f32.mrb[0].mxu0
  %v612 = vadd.f32 %v543, %v611
  %v613 = vpop.f32.mrb[0].mxu0
  %v614 = vpop.f32.mrb[0].mxu0
  %v615 = vadd.f32 %v543, %v614
  %v616 = vpop.f32.mrb[0].mxu0
  %617 = vmatprep.mubr.bf16.mxu0 0
  %618 = vmatmul.mubr.bf16.gmra.mrb[0].mxu0 %v511
  %v619 = vpop.f32.mrb[0].mxu0
  %v620 = vadd.f32 %v543, %v619
  %v621 = vpop.f32.mrb[0].mxu0
  %v622 = vpop.f32.mrb[0].mxu0
  %v623 = vadd.f32 %v543, %v622
  %v624 = vpop.f32.mrb[0].mxu0
  %625 = vmatprep.mubr.bf16.mxu0 0
  %626 = vmatmul.mubr.bf16.gmra.mrb[0].mxu0 %v512
  %v627 = vpop.f32.mrb[0].mxu0
  %v628 = vadd.f32 %v543, %v627
  %v629 = vpop.f32.mrb[0].mxu0
  %v630 = vpop.f32.mrb[0].mxu0
  %v631 = vadd.f32 %v543, %v630
  %v632 = vpop.f32.mrb[0].mxu0
  %633 = vmatprep.mubr.bf16.mxu0 0
  %634 = vmatmul.mubr.bf16.gmra.mrb[0].mxu0 %v513
  %v635 = vpop.f32.mrb[0].mxu0
  %v636 = vadd.f32 %v543, %v635
  %v637 = vpop.f32.mrb[0].mxu0
  %v638 = vpop.f32.mrb[0].mxu0
  %v639 = vadd.f32 %v543, %v638
  %v640 = vpop.f32.mrb[0].mxu0
  %641 = vdwg.mxu0
  %v642 = vld [vmem:[%s7] sm:$0xff]
  %v643 = vld [vmem:[%s7 + $0x8] sm:$0xff]
  %v644 = vld [vmem:[%s7 + $0x10] sm:$0xff]
  %v645 = vld [vmem:[%s7 + $0x18] sm:$0xff]
  %v646 = vld [vmem:[%s7 + $0x20] sm:$0xff]
  %v647 = vld [vmem:[%s7 + $0x28] sm:$0xff]
  %v648 = vld [vmem:[%s7 + $0x30] sm:$0xff]
  %v649 = vld [vmem:[%s7 + $0x38] sm:$0xff]
  %v650 = vld [vmem:[%s7 + $0x40] sm:$0xff]
  %v651 = vld [vmem:[%s7 + $0x48] sm:$0xff]
  %v652 = vld [vmem:[%s7 + $0x50] sm:$0xff]
  %v653 = vld [vmem:[%s7 + $0x58] sm:$0xff]
  %v654 = vld [vmem:[%s7 + $0x60] sm:$0xff]
  %v655 = vld [vmem:[%s7 + $0x68] sm:$0xff]
  %v656 = vld [vmem:[%s7 + $0x70] sm:$0xff]
  %v657 = vld [vmem:[%s7 + $0x78] sm:$0xff]
  %v658 = vadd.f32 %v580, %v642
  %v659 = vadd.f32 %v583, %v643
  %v660 = vadd.f32 %v588, %v644
  %v661 = vadd.f32 %v591, %v645
  %v662 = vadd.f32 %v596, %v646
  %v663 = vadd.f32 %v599, %v647
  %v664 = vadd.f32 %v604, %v648
  %v665 = vadd.f32 %v607, %v649
  %v666 = vadd.f32 %v612, %v650
  %v667 = vadd.f32 %v615, %v651
  %v668 = vadd.f32 %v620, %v652
  %v669 = vadd.f32 %v623, %v653
  %v670 = vadd.f32 %v628, %v654
  %v671 = vadd.f32 %v631, %v655
  %v672 = vadd.f32 %v636, %v656
  %v673 = vadd.f32 %v639, %v657
  %674 = vst [vmem:[%s8] sm:$0xff] %v658
  %675 = vst [vmem:[%s8 + $0x8] sm:$0xff] %v659
  %676 = vst [vmem:[%s8 + $0x10] sm:$0xff] %v660
  %677 = vst [vmem:[%s8 + $0x18] sm:$0xff] %v661
  %678 = vst [vmem:[%s8 + $0x20] sm:$0xff] %v662
  %679 = vst [vmem:[%s8 + $0x28] sm:$0xff] %v663
  %680 = vst [vmem:[%s8 + $0x30] sm:$0xff] %v664
  %681 = vst [vmem:[%s8 + $0x38] sm:$0xff] %v665
  %682 = vst [vmem:[%s8 + $0x40] sm:$0xff] %v666
  %683 = vst [vmem:[%s8 + $0x48] sm:$0xff] %v667
  %684 = vst [vmem:[%s8 + $0x50] sm:$0xff] %v668
  %685 = vst [vmem:[%s8 + $0x58] sm:$0xff] %v669
  %686 = vst [vmem:[%s8 + $0x60] sm:$0xff] %v670
  %687 = vst [vmem:[%s8 + $0x68] sm:$0xff] %v671
  %688 = vst [vmem:[%s8 + $0x70] sm:$0xff] %v672
  %689 = vst [vmem:[%s8 + $0x78] sm:$0xff] %v673
  // Predicated region
  $region38: #{t2t_vit_forward.23} parent=0 // pred_check
    _
  $region39: #{t2t_vit_forward.23} parent=0 // pred_check_branch
    %691 = sbr.rel (0) target = $region41
  $region40: #{t2t_vit_forward.23} parent=0 // pred_region
    _
  $region41: #{t2t_vit_forward.23} parent=0 // pred_fallthru
    _
  // Predicated region
  $region42: #{t2t_vit_forward.23} parent=0 // pred_check
    _
  $region43: #{t2t_vit_forward.23} parent=0 // pred_check_branch
    %693 = sbr.rel (0) target = $region45
  $region44: #{t2t_vit_forward.23} parent=0 // pred_region
    _
  $region45: #{t2t_vit_forward.23} parent=0 // pred_fallthru
    _

// kernel: t2t_vit_forward.24
$region0: #{t2t_vit_forward.24}
  #allocation0 [shape = 'u32[]', space=smem, size = 0x4, offset = 0x4, fixed_abs, tag = 'smem constant byte address 0x4 - core index']
  #allocation1 [shape = 'u32[144,128]{1,0:T(1,128)}', space=vmem, size = 0x12000, scoped, tag = 'internal scratch']
  #allocation2 [shape = 'f32[32,128]{1,0:T(8,128)}', space=vmem, size = 0x4000, scoped, tag = 'scratch operand']
  %s0 = inlined_call_operand.vmem [shape: f32[32,256], index: 0, kind: input, shape index: {}]
  %s1 = inlined_call_operand.vmem [shape: f32[256,128], index: 1, kind: input, shape index: {}]
  %s2 = inlined_call_operand.vmem [shape: f32[1,128], index: 2, kind: input, shape index: {}]
  %s3 = inlined_call_operand.vmem [shape: f32[32,1], index: 3, kind: input, shape index: {}]
  %s4 = inlined_call_operand.vmem [shape: f32[32,1], index: 4, kind: input, shape index: {}]
  %s5 = inlined_call_operand.vmem [shape: f32[32,128], index: 5, kind: output, shape index: {}]
  %s6 = sld [smem:[#allocation0]]
  $region38: #{t2t_vit_forward.24} parent=0
    _
  %s8 = ssub.s32 1, %s6
  %s9 = scalar_select 0, %s8, %s6
  // Predicated region
  $region2: #{t2t_vit_forward.24} parent=0 // pred_check
    _
  $region3: #{t2t_vit_forward.24} parent=0 // pred_check_branch
    %11 = sbr.rel (0) target = $region5
  $region4: #{t2t_vit_forward.24} parent=0 // pred_region
    _
  $region5: #{t2t_vit_forward.24} parent=0 // pred_fallthru
    _
  // Predicated region
  $region6: #{t2t_vit_forward.24} parent=0 // pred_check
    _
  $region7: #{t2t_vit_forward.24} parent=0 // pred_check_branch
    %13 = sbr.rel (0) target = $region9
  $region8: #{t2t_vit_forward.24} parent=0 // pred_region
    _
  $region9: #{t2t_vit_forward.24} parent=0 // pred_fallthru
    _
  // Predicated region
  $region10: #{t2t_vit_forward.24} parent=0 // pred_check
    _
  $region11: #{t2t_vit_forward.24} parent=0 // pred_check_branch
    %15 = sbr.rel (0) target = $region13
  $region12: #{t2t_vit_forward.24} parent=0 // pred_region
    _
  $region13: #{t2t_vit_forward.24} parent=0 // pred_fallthru
    _
  // Predicated region
  $region14: #{t2t_vit_forward.24} parent=0 // pred_check
    _
  $region15: #{t2t_vit_forward.24} parent=0 // pred_check_branch
    %17 = sbr.rel (0) target = $region17
  $region16: #{t2t_vit_forward.24} parent=0 // pred_region
    _
  $region17: #{t2t_vit_forward.24} parent=0 // pred_fallthru
    _
  // Predicated region
  $region18: #{t2t_vit_forward.24} parent=0 // pred_check
    _
  $region19: #{t2t_vit_forward.24} parent=0 // pred_check_branch
    %19 = sbr.rel (0) target = $region21
  $region20: #{t2t_vit_forward.24} parent=0 // pred_region
    _
  $region21: #{t2t_vit_forward.24} parent=0 // pred_fallthru
    _
  %p21 = scmp.eq.s32.totalorder 0, 0
  // Predicated region
  $region22: #{t2t_vit_forward.24} parent=0 // pred_check
    %p22 = pneg %p21
  $region23: #{t2t_vit_forward.24} parent=0 // pred_check_branch
    %24 = sbr.rel (%p22) target = $region25
  $region24: #{t2t_vit_forward.24} parent=0 // pred_region
    %25 = vst [vmem:[#allocation2] sm:$0xff] 0.0
    %26 = vst [vmem:[#allocation2 + $0x8] sm:$0xff] 0.0
    %27 = vst [vmem:[#allocation2 + $0x10] sm:$0xff] 0.0
    %28 = vst [vmem:[#allocation2 + $0x18] sm:$0xff] 0.0
  $region25: #{t2t_vit_forward.24} parent=0 // pred_fallthru
    _
  %v29 = vld [vmem:[%s0] sm:$0xff]
  %v30 = vld [vmem:[%s0 + $0x8] sm:$0xff]
  %v31 = vld [vmem:[%s0 + $0x10] sm:$0xff]
  %v32 = vld [vmem:[%s0 + $0x18] sm:$0xff]
  %v33 = vld [vmem:[%s0 + $0x20] sm:$0xff]
  %v34 = vld [vmem:[%s0 + $0x28] sm:$0xff]
  %v35 = vld [vmem:[%s0 + $0x30] sm:$0xff]
  %v36 = vld [vmem:[%s0 + $0x38] sm:$0xff]
  %v37 = vld [vmem:[%s3] sm:$0xff]
  %v38 = vld [vmem:[%s3 + $0x8] sm:$0xff]
  %v39 = vld [vmem:[%s3 + $0x10] sm:$0xff]
  %v40 = vld [vmem:[%s3 + $0x18] sm:$0xff]
  %42 = vset.pattern.permute.xlu0 0
  %43 = vperm.xlu0 %42, %v37
  %v44 = vpop.permute.xlu0 %43
  %47 = vset.pattern.permute.xlu0 0
  %48 = vperm.xlu0 %47, %v38
  %v49 = vpop.permute.xlu0 %48
  %52 = vset.pattern.permute.xlu0 0
  %53 = vperm.xlu0 %52, %v39
  %v54 = vpop.permute.xlu0 %53
  %57 = vset.pattern.permute.xlu0 0
  %58 = vperm.xlu0 %57, %v40
  %v59 = vpop.permute.xlu0 %58
  %v61 = vmul.f32 %v29, %v44
  %v62 = vmul.f32 %v30, %v44
  %v63 = vmul.f32 %v31, %v49
  %v64 = vmul.f32 %v32, %v49
  %v65 = vmul.f32 %v33, %v54
  %v66 = vmul.f32 %v34, %v54
  %v67 = vmul.f32 %v35, %v59
  %v68 = vmul.f32 %v36, %v59
  %v69 = vld [vmem:[%s4] sm:$0xff]
  %v70 = vld [vmem:[%s4 + $0x8] sm:$0xff]
  %v71 = vld [vmem:[%s4 + $0x10] sm:$0xff]
  %v72 = vld [vmem:[%s4 + $0x18] sm:$0xff]
  %74 = vset.pattern.permute.xlu0 0
  %75 = vperm.xlu0 %74, %v69
  %v76 = vpop.permute.xlu0 %75
  %79 = vset.pattern.permute.xlu0 0
  %80 = vperm.xlu0 %79, %v70
  %v81 = vpop.permute.xlu0 %80
  %84 = vset.pattern.permute.xlu0 0
  %85 = vperm.xlu0 %84, %v71
  %v86 = vpop.permute.xlu0 %85
  %89 = vset.pattern.permute.xlu0 0
  %90 = vperm.xlu0 %89, %v72
  %v91 = vpop.permute.xlu0 %90
  %v93 = vadd.f32 %v61, %v76
  %v94 = vadd.f32 %v62, %v76
  %v95 = vadd.f32 %v63, %v81
  %v96 = vadd.f32 %v64, %v81
  %v97 = vadd.f32 %v65, %v86
  %v98 = vadd.f32 %v66, %v86
  %v99 = vadd.f32 %v67, %v91
  %v100 = vadd.f32 %v68, %v91
  %v101 = vld [vmem:[#allocation2] sm:$0xff]
  %v102 = vld [vmem:[#allocation2 + $0x8] sm:$0xff]
  %v103 = vld [vmem:[#allocation2 + $0x10] sm:$0xff]
  %v104 = vld [vmem:[#allocation2 + $0x18] sm:$0xff]
  %v105 = vpack.c.bf16 %v95, %v93
  %v106 = vpack.c.bf16 %v96, %v94
  %v107 = vpack.c.bf16 %v99, %v97
  %v108 = vpack.c.bf16 %v100, %v98
  %v109 = vld [vmem:[%s1] sm:$0xff]
  %v110 = vld [vmem:[%s1 + $0x8] sm:$0xff]
  %v111 = vld [vmem:[%s1 + $0x10] sm:$0xff]
  %v112 = vld [vmem:[%s1 + $0x18] sm:$0xff]
  %v113 = vld [vmem:[%s1 + $0x20] sm:$0xff]
  %v114 = vld [vmem:[%s1 + $0x28] sm:$0xff]
  %v115 = vld [vmem:[%s1 + $0x30] sm:$0xff]
  %v116 = vld [vmem:[%s1 + $0x38] sm:$0xff]
  %v117 = vld [vmem:[%s1 + $0x40] sm:$0xff]
  %v118 = vld [vmem:[%s1 + $0x48] sm:$0xff]
  %v119 = vld [vmem:[%s1 + $0x50] sm:$0xff]
  %v120 = vld [vmem:[%s1 + $0x58] sm:$0xff]
  %v121 = vld [vmem:[%s1 + $0x60] sm:$0xff]
  %v122 = vld [vmem:[%s1 + $0x68] sm:$0xff]
  %v123 = vld [vmem:[%s1 + $0x70] sm:$0xff]
  %v124 = vld [vmem:[%s1 + $0x78] sm:$0xff]
  %v125 = vld [vmem:[%s1 + $0x80] sm:$0xff]
  %v126 = vld [vmem:[%s1 + $0x88] sm:$0xff]
  %v127 = vld [vmem:[%s1 + $0x90] sm:$0xff]
  %v128 = vld [vmem:[%s1 + $0x98] sm:$0xff]
  %v129 = vld [vmem:[%s1 + $0xa0] sm:$0xff]
  %v130 = vld [vmem:[%s1 + $0xa8] sm:$0xff]
  %v131 = vld [vmem:[%s1 + $0xb0] sm:$0xff]
  %v132 = vld [vmem:[%s1 + $0xb8] sm:$0xff]
  %v133 = vld [vmem:[%s1 + $0xc0] sm:$0xff]
  %v134 = vld [vmem:[%s1 + $0xc8] sm:$0xff]
  %v135 = vld [vmem:[%s1 + $0xd0] sm:$0xff]
  %v136 = vld [vmem:[%s1 + $0xd8] sm:$0xff]
  %v137 = vld [vmem:[%s1 + $0xe0] sm:$0xff]
  %v138 = vld [vmem:[%s1 + $0xe8] sm:$0xff]
  %v139 = vld [vmem:[%s1 + $0xf0] sm:$0xff]
  %v140 = vld [vmem:[%s1 + $0xf8] sm:$0xff]
  %v141 = vpack.c.bf16 %v110, %v109
  %v142 = vpack.c.bf16 %v112, %v111
  %v143 = vpack.c.bf16 %v114, %v113
  %v144 = vpack.c.bf16 %v116, %v115
  %v145 = vpack.c.bf16 %v118, %v117
  %v146 = vpack.c.bf16 %v120, %v119
  %v147 = vpack.c.bf16 %v122, %v121
  %v148 = vpack.c.bf16 %v124, %v123
  %v149 = vpack.c.bf16 %v126, %v125
  %v150 = vpack.c.bf16 %v128, %v127
  %v151 = vpack.c.bf16 %v130, %v129
  %v152 = vpack.c.bf16 %v132, %v131
  %v153 = vpack.c.bf16 %v134, %v133
  %v154 = vpack.c.bf16 %v136, %v135
  %v155 = vpack.c.bf16 %v138, %v137
  %v156 = vpack.c.bf16 %v140, %v139
  %157 = vmatprep.subr.bf16.mxu0 0
  %158 = vmatpush1.bf16.msra.mxu0 %v141
  %159 = vmatprep.subr.bf16.mxu0 0
  %160 = vmatpush1.bf16.msra.mxu0 %v142
  %161 = vmatprep.subr.bf16.mxu0 0
  %162 = vmatpush1.bf16.msra.mxu0 %v143
  %163 = vmatprep.subr.bf16.mxu0 0
  %164 = vmatpush1.bf16.msra.mxu0 %v144
  %165 = vmatprep.subr.bf16.mxu0 0
  %166 = vmatpush1.bf16.msra.mxu0 %v145
  %167 = vmatprep.subr.bf16.mxu0 0
  %168 = vmatpush1.bf16.msra.mxu0 %v146
  %169 = vmatprep.subr.bf16.mxu0 0
  %170 = vmatpush1.bf16.msra.mxu0 %v147
  %171 = vmatprep.subr.bf16.mxu0 0
  %172 = vmatpush1.bf16.msra.mxu0 %v148
  %173 = vmatprep.subr.bf16.mxu0 0
  %174 = vmatpush1.bf16.msra.mxu0 %v149
  %175 = vmatprep.subr.bf16.mxu0 0
  %176 = vmatpush1.bf16.msra.mxu0 %v150
  %177 = vmatprep.subr.bf16.mxu0 0
  %178 = vmatpush1.bf16.msra.mxu0 %v151
  %179 = vmatprep.subr.bf16.mxu0 0
  %180 = vmatpush1.bf16.msra.mxu0 %v152
  %181 = vmatprep.subr.bf16.mxu0 0
  %182 = vmatpush1.bf16.msra.mxu0 %v153
  %183 = vmatprep.subr.bf16.mxu0 0
  %184 = vmatpush1.bf16.msra.mxu0 %v154
  %185 = vmatprep.subr.bf16.mxu0 0
  %186 = vmatpush1.bf16.msra.mxu0 %v155
  %187 = vmatprep.subr.bf16.mxu0 0
  %188 = vmatpush1.bf16.msra.mxu0 %v156
  %189 = vmatprep.mubr.bf16.mxu0 %v106
  %190 = vmatmul.mubr.bf16.gmra.mrb[0].mxu0 %v105
  %v191 = vpop.f32.mrb[0].mxu0
  %v192 = vadd.f32 0.0, %v191
  %v193 = vpop.f32.mrb[0].mxu0
  %v194 = vpop.f32.mrb[0].mxu0
  %v195 = vadd.f32 0.0, %v194
  %v196 = vpop.f32.mrb[0].mxu0
  %197 = vmatprep.mubr.bf16.mxu0 %v108
  %198 = vmatmul.mubr.bf16.gmra.mrb[0].mxu0 %v107
  %v199 = vpop.f32.mrb[0].mxu0
  %v200 = vadd.f32 0.0, %v199
  %v201 = vpop.f32.mrb[0].mxu0
  %v202 = vpop.f32.mrb[0].mxu0
  %v203 = vadd.f32 0.0, %v202
  %v204 = vpop.f32.mrb[0].mxu0
  %205 = vdwg.mxu0
  %v206 = vadd.f32 %v101, %v192
  %v207 = vadd.f32 %v102, %v195
  %v208 = vadd.f32 %v103, %v200
  %v209 = vadd.f32 %v104, %v203
  %210 = vst [vmem:[#allocation2] sm:$0xff] %v206
  %211 = vst [vmem:[#allocation2 + $0x8] sm:$0xff] %v207
  %212 = vst [vmem:[#allocation2 + $0x10] sm:$0xff] %v208
  %213 = vst [vmem:[#allocation2 + $0x18] sm:$0xff] %v209
  // Predicated region
  $region26: #{t2t_vit_forward.24} parent=0 // pred_check
    %p214 = pneg %p21
  $region27: #{t2t_vit_forward.24} parent=0 // pred_check_branch
    %216 = sbr.rel (%p214) target = $region29
  $region28: #{t2t_vit_forward.24} parent=0 // pred_region
    %v217 = vld [vmem:[#allocation2] sm:$0xff]
    %v218 = vld [vmem:[#allocation2 + $0x8] sm:$0xff]
    %v219 = vld [vmem:[#allocation2 + $0x10] sm:$0xff]
    %v220 = vld [vmem:[#allocation2 + $0x18] sm:$0xff]
    %v221 = vld [vmem:[%s2] sm:$0x1]
    %v223 = vlaneseq
    %v224 = vshrl.u32 %v223, 7
    %v225 = vsub.s32 0, %v224
    %v226 = vrot.slane %v221, %v225
    %v228 = vadd.f32 %v217, %v226
    %v229 = vadd.f32 %v218, %v226
    %v230 = vadd.f32 %v219, %v226
    %v231 = vadd.f32 %v220, %v226
    %232 = vst [vmem:[%s5] sm:$0xff] %v228
    %233 = vst [vmem:[%s5 + $0x8] sm:$0xff] %v229
    %234 = vst [vmem:[%s5 + $0x10] sm:$0xff] %v230
    %235 = vst [vmem:[%s5 + $0x18] sm:$0xff] %v231
  $region29: #{t2t_vit_forward.24} parent=0 // pred_fallthru
    _
  // Predicated region
  $region30: #{t2t_vit_forward.24} parent=0 // pred_check
    _
  $region31: #{t2t_vit_forward.24} parent=0 // pred_check_branch
    %237 = sbr.rel (0) target = $region33
  $region32: #{t2t_vit_forward.24} parent=0 // pred_region
    _
  $region33: #{t2t_vit_forward.24} parent=0 // pred_fallthru
    _
  // Predicated region
  $region34: #{t2t_vit_forward.24} parent=0 // pred_check
    _
  $region35: #{t2t_vit_forward.24} parent=0 // pred_check_branch
    %239 = sbr.rel (0) target = $region37
  $region36: #{t2t_vit_forward.24} parent=0 // pred_region
    _
  $region37: #{t2t_vit_forward.24} parent=0 // pred_fallthru
    _

// kernel: t2t_vit_forward.26
$region0: #{t2t_vit_forward.26}
  #allocation0 [shape = 'u32[]', space=smem, size = 0x4, offset = 0x4, fixed_abs, tag = 'smem constant byte address 0x4 - core index']
  #allocation1 [shape = 'u32[144,128]{1,0:T(1,128)}', space=vmem, size = 0x12000, scoped, tag = 'internal scratch']
  #allocation2 [shape = 'f32[32,128]{1,0:T(8,128)}', space=vmem, size = 0x4000, scoped, tag = 'scratch operand']
  %s0 = inlined_call_operand.vmem [shape: f32[32,128], index: 0, kind: input, shape index: {}]
  %s1 = inlined_call_operand.vmem [shape: f32[128,128], index: 1, kind: input, shape index: {}]
  %s2 = inlined_call_operand.vmem [shape: f32[1,128], index: 2, kind: input, shape index: {}]
  %s3 = inlined_call_operand.vmem [shape: f32[32,128], index: 3, kind: input, shape index: {}]
  %s4 = inlined_call_operand.vmem [shape: f32[32,128], index: 4, kind: output, shape index: {}]
  %s5 = sld [smem:[#allocation0]]
  $region34: #{t2t_vit_forward.26} parent=0
    _
  %s7 = ssub.s32 1, %s5
  %s8 = scalar_select 0, %s7, %s5
  // Predicated region
  $region2: #{t2t_vit_forward.26} parent=0 // pred_check
    _
  $region3: #{t2t_vit_forward.26} parent=0 // pred_check_branch
    %10 = sbr.rel (0) target = $region5
  $region4: #{t2t_vit_forward.26} parent=0 // pred_region
    _
  $region5: #{t2t_vit_forward.26} parent=0 // pred_fallthru
    _
  // Predicated region
  $region6: #{t2t_vit_forward.26} parent=0 // pred_check
    _
  $region7: #{t2t_vit_forward.26} parent=0 // pred_check_branch
    %12 = sbr.rel (0) target = $region9
  $region8: #{t2t_vit_forward.26} parent=0 // pred_region
    _
  $region9: #{t2t_vit_forward.26} parent=0 // pred_fallthru
    _
  // Predicated region
  $region10: #{t2t_vit_forward.26} parent=0 // pred_check
    _
  $region11: #{t2t_vit_forward.26} parent=0 // pred_check_branch
    %14 = sbr.rel (0) target = $region13
  $region12: #{t2t_vit_forward.26} parent=0 // pred_region
    _
  $region13: #{t2t_vit_forward.26} parent=0 // pred_fallthru
    _
  // Predicated region
  $region14: #{t2t_vit_forward.26} parent=0 // pred_check
    _
  $region15: #{t2t_vit_forward.26} parent=0 // pred_check_branch
    %16 = sbr.rel (0) target = $region17
  $region16: #{t2t_vit_forward.26} parent=0 // pred_region
    _
  $region17: #{t2t_vit_forward.26} parent=0 // pred_fallthru
    _
  %p18 = scmp.eq.s32.totalorder 0, 0
  // Predicated region
  $region18: #{t2t_vit_forward.26} parent=0 // pred_check
    %p19 = pneg %p18
  $region19: #{t2t_vit_forward.26} parent=0 // pred_check_branch
    %21 = sbr.rel (%p19) target = $region21
  $region20: #{t2t_vit_forward.26} parent=0 // pred_region
    %22 = vst [vmem:[#allocation2] sm:$0xff] 0.0
    %23 = vst [vmem:[#allocation2 + $0x8] sm:$0xff] 0.0
    %24 = vst [vmem:[#allocation2 + $0x10] sm:$0xff] 0.0
    %25 = vst [vmem:[#allocation2 + $0x18] sm:$0xff] 0.0
  $region21: #{t2t_vit_forward.26} parent=0 // pred_fallthru
    _
  %v26 = vld [vmem:[%s0] sm:$0xff]
  %v27 = vld [vmem:[%s0 + $0x8] sm:$0xff]
  %v28 = vld [vmem:[%s0 + $0x10] sm:$0xff]
  %v29 = vld [vmem:[%s0 + $0x18] sm:$0xff]
  %v30 = vld [vmem:[#allocation2] sm:$0xff]
  %v31 = vld [vmem:[#allocation2 + $0x8] sm:$0xff]
  %v32 = vld [vmem:[#allocation2 + $0x10] sm:$0xff]
  %v33 = vld [vmem:[#allocation2 + $0x18] sm:$0xff]
  %v34 = vpack.c.bf16 %v27, %v26
  %v35 = vpack.c.bf16 %v29, %v28
  %v36 = vld [vmem:[%s1] sm:$0xff]
  %v37 = vld [vmem:[%s1 + $0x8] sm:$0xff]
  %v38 = vld [vmem:[%s1 + $0x10] sm:$0xff]
  %v39 = vld [vmem:[%s1 + $0x18] sm:$0xff]
  %v40 = vld [vmem:[%s1 + $0x20] sm:$0xff]
  %v41 = vld [vmem:[%s1 + $0x28] sm:$0xff]
  %v42 = vld [vmem:[%s1 + $0x30] sm:$0xff]
  %v43 = vld [vmem:[%s1 + $0x38] sm:$0xff]
  %v44 = vld [vmem:[%s1 + $0x40] sm:$0xff]
  %v45 = vld [vmem:[%s1 + $0x48] sm:$0xff]
  %v46 = vld [vmem:[%s1 + $0x50] sm:$0xff]
  %v47 = vld [vmem:[%s1 + $0x58] sm:$0xff]
  %v48 = vld [vmem:[%s1 + $0x60] sm:$0xff]
  %v49 = vld [vmem:[%s1 + $0x68] sm:$0xff]
  %v50 = vld [vmem:[%s1 + $0x70] sm:$0xff]
  %v51 = vld [vmem:[%s1 + $0x78] sm:$0xff]
  %v52 = vpack.c.bf16 %v37, %v36
  %v53 = vpack.c.bf16 %v39, %v38
  %v54 = vpack.c.bf16 %v41, %v40
  %v55 = vpack.c.bf16 %v43, %v42
  %v56 = vpack.c.bf16 %v45, %v44
  %v57 = vpack.c.bf16 %v47, %v46
  %v58 = vpack.c.bf16 %v49, %v48
  %v59 = vpack.c.bf16 %v51, %v50
  %60 = vmatprep.subr.bf16.mxu0 0
  %61 = vmatpush1.bf16.msra.mxu0 %v52
  %62 = vmatprep.subr.bf16.mxu0 0
  %63 = vmatpush1.bf16.msra.mxu0 %v53
  %64 = vmatprep.subr.bf16.mxu0 0
  %65 = vmatpush1.bf16.msra.mxu0 %v54
  %66 = vmatprep.subr.bf16.mxu0 0
  %67 = vmatpush1.bf16.msra.mxu0 %v55
  %68 = vmatprep.subr.bf16.mxu0 0
  %69 = vmatpush1.bf16.msra.mxu0 %v56
  %70 = vmatprep.subr.bf16.mxu0 0
  %71 = vmatpush1.bf16.msra.mxu0 %v57
  %72 = vmatprep.subr.bf16.mxu0 0
  %73 = vmatpush1.bf16.msra.mxu0 %v58
  %74 = vmatprep.subr.bf16.mxu0 0
  %75 = vmatpush1.bf16.msra.mxu0 %v59
  %76 = vmatprep.subr.bf16.mxu0 0
  %77 = vmatpush1.bf16.msra.mxu0 0
  %78 = vmatprep.subr.bf16.mxu0 0
  %79 = vmatpush1.bf16.msra.mxu0 0
  %80 = vmatprep.subr.bf16.mxu0 0
  %81 = vmatpush1.bf16.msra.mxu0 0
  %82 = vmatprep.subr.bf16.mxu0 0
  %83 = vmatpush1.bf16.msra.mxu0 0
  %84 = vmatprep.subr.bf16.mxu0 0
  %85 = vmatpush1.bf16.msra.mxu0 0
  %86 = vmatprep.subr.bf16.mxu0 0
  %87 = vmatpush1.bf16.msra.mxu0 0
  %88 = vmatprep.subr.bf16.mxu0 0
  %89 = vmatpush1.bf16.msra.mxu0 0
  %90 = vmatprep.subr.bf16.mxu0 0
  %91 = vmatpush1.bf16.msra.mxu0 0
  %92 = vmatprep.mubr.bf16.mxu0 0
  %93 = vmatmul.mubr.bf16.gmra.mrb[0].mxu0 %v34
  %v94 = vpop.f32.mrb[0].mxu0
  %v95 = vadd.f32 0.0, %v94
  %v96 = vpop.f32.mrb[0].mxu0
  %v97 = vpop.f32.mrb[0].mxu0
  %v98 = vadd.f32 0.0, %v97
  %v99 = vpop.f32.mrb[0].mxu0
  %100 = vmatprep.mubr.bf16.mxu0 0
  %101 = vmatmul.mubr.bf16.gmra.mrb[0].mxu0 %v35
  %v102 = vpop.f32.mrb[0].mxu0
  %v103 = vadd.f32 0.0, %v102
  %v104 = vpop.f32.mrb[0].mxu0
  %v105 = vpop.f32.mrb[0].mxu0
  %v106 = vadd.f32 0.0, %v105
  %v107 = vpop.f32.mrb[0].mxu0
  %108 = vdwg.mxu0
  %v109 = vadd.f32 %v30, %v95
  %v110 = vadd.f32 %v31, %v98
  %v111 = vadd.f32 %v32, %v103
  %v112 = vadd.f32 %v33, %v106
  %113 = vst [vmem:[#allocation2] sm:$0xff] %v109
  %114 = vst [vmem:[#allocation2 + $0x8] sm:$0xff] %v110
  %115 = vst [vmem:[#allocation2 + $0x10] sm:$0xff] %v111
  %116 = vst [vmem:[#allocation2 + $0x18] sm:$0xff] %v112
  // Predicated region
  $region22: #{t2t_vit_forward.26} parent=0 // pred_check
    %p117 = pneg %p18
  $region23: #{t2t_vit_forward.26} parent=0 // pred_check_branch
    %119 = sbr.rel (%p117) target = $region25
  $region24: #{t2t_vit_forward.26} parent=0 // pred_region
    %v120 = vld [vmem:[#allocation2] sm:$0xff]
    %v121 = vld [vmem:[#allocation2 + $0x8] sm:$0xff]
    %v122 = vld [vmem:[#allocation2 + $0x10] sm:$0xff]
    %v123 = vld [vmem:[#allocation2 + $0x18] sm:$0xff]
    %v124 = vld [vmem:[%s2] sm:$0x1]
    %v126 = vlaneseq
    %v127 = vshrl.u32 %v126, 7
    %v128 = vsub.s32 0, %v127
    %v129 = vrot.slane %v124, %v128
    %v131 = vadd.f32 %v120, %v129
    %v132 = vadd.f32 %v121, %v129
    %v133 = vadd.f32 %v122, %v129
    %v134 = vadd.f32 %v123, %v129
    %v135 = vld [vmem:[%s3] sm:$0xff]
    %v136 = vld [vmem:[%s3 + $0x8] sm:$0xff]
    %v137 = vld [vmem:[%s3 + $0x10] sm:$0xff]
    %v138 = vld [vmem:[%s3 + $0x18] sm:$0xff]
    %v139 = vadd.f32 %v131, %v135
    %v140 = vadd.f32 %v132, %v136
    %v141 = vadd.f32 %v133, %v137
    %v142 = vadd.f32 %v134, %v138
    %143 = vst [vmem:[%s4] sm:$0xff] %v139
    %144 = vst [vmem:[%s4 + $0x8] sm:$0xff] %v140
    %145 = vst [vmem:[%s4 + $0x10] sm:$0xff] %v141
    %146 = vst [vmem:[%s4 + $0x18] sm:$0xff] %v142
  $region25: #{t2t_vit_forward.26} parent=0 // pred_fallthru
    _
  // Predicated region
  $region26: #{t2t_vit_forward.26} parent=0 // pred_check
    _
  $region27: #{t2t_vit_forward.26} parent=0 // pred_check_branch
    %148 = sbr.rel (0) target = $region29
  $region28: #{t2t_vit_forward.26} parent=0 // pred_region
    _
  $region29: #{t2t_vit_forward.26} parent=0 // pred_fallthru
    _
  // Predicated region
  $region30: #{t2t_vit_forward.26} parent=0 // pred_check
    _
  $region31: #{t2t_vit_forward.26} parent=0 // pred_check_branch
    %150 = sbr.rel (0) target = $region33
  $region32: #{t2t_vit_forward.26} parent=0 // pred_region
    _
  $region33: #{t2t_vit_forward.26} parent=0 // pred_fallthru
    _

// kernel: t2t_vit_forward.27
$region0: #{t2t_vit_forward.27}
  #allocation0 [shape = 'u32[]', space=smem, size = 0x4, offset = 0x4, fixed_abs, tag = 'smem constant byte address 0x4 - core index']
  #allocation1 [shape = 'u32[144,128]{1,0:T(1,128)}', space=vmem, size = 0x12000, scoped, tag = 'internal scratch']
  #allocation2 [shape = 'bf16[32,128]{1,0:T(16,128)(2,1)}', space=vmem, size = 0x2000, scoped, tag = 'scratch operand']
  %s0 = inlined_call_operand.vmem [shape: f32[32,128], index: 0, kind: input, shape index: {}, may-alias: {0,7}]
  %s1 = inlined_call_operand.vmem [shape: f32[32,1], index: 1, kind: input, shape index: {}]
  %s2 = inlined_call_operand.vmem [shape: f32[32,1], index: 2, kind: input, shape index: {}]
  %s3 = inlined_call_operand.vmem [shape: f32[128,128], index: 3, kind: input, shape index: {}]
  %s4 = inlined_call_operand.vmem [shape: f32[1,128], index: 4, kind: input, shape index: {}]
  %s5 = inlined_call_operand.vmem [shape: f32[128,128], index: 5, kind: input, shape index: {}]
  %s6 = inlined_call_operand.vmem [shape: f32[1,128], index: 6, kind: input, shape index: {}]
  %s7 = inlined_call_operand.vmem [shape: f32[32,128], index: 7, kind: input, shape index: {}, may-alias: {0,7}]
  %s8 = inlined_call_operand.vmem [shape: f32[32,128], index: 8, kind: output, shape index: {}]
  %s9 = sld [smem:[#allocation0]]
  $region46: #{t2t_vit_forward.27} parent=0
    _
  %s11 = ssub.s32 1, %s9
  %s12 = scalar_select 0, %s11, %s9
  // Predicated region
  $region2: #{t2t_vit_forward.27} parent=0 // pred_check
    _
  $region3: #{t2t_vit_forward.27} parent=0 // pred_check_branch
    %14 = sbr.rel (0) target = $region5
  $region4: #{t2t_vit_forward.27} parent=0 // pred_region
    _
  $region5: #{t2t_vit_forward.27} parent=0 // pred_fallthru
    _
  // Predicated region
  $region6: #{t2t_vit_forward.27} parent=0 // pred_check
    _
  $region7: #{t2t_vit_forward.27} parent=0 // pred_check_branch
    %16 = sbr.rel (0) target = $region9
  $region8: #{t2t_vit_forward.27} parent=0 // pred_region
    _
  $region9: #{t2t_vit_forward.27} parent=0 // pred_fallthru
    _
  // Predicated region
  $region10: #{t2t_vit_forward.27} parent=0 // pred_check
    _
  $region11: #{t2t_vit_forward.27} parent=0 // pred_check_branch
    %18 = sbr.rel (0) target = $region13
  $region12: #{t2t_vit_forward.27} parent=0 // pred_region
    _
  $region13: #{t2t_vit_forward.27} parent=0 // pred_fallthru
    _
  // Predicated region
  $region14: #{t2t_vit_forward.27} parent=0 // pred_check
    _
  $region15: #{t2t_vit_forward.27} parent=0 // pred_check_branch
    %20 = sbr.rel (0) target = $region17
  $region16: #{t2t_vit_forward.27} parent=0 // pred_region
    _
  $region17: #{t2t_vit_forward.27} parent=0 // pred_fallthru
    _
  // Predicated region
  $region18: #{t2t_vit_forward.27} parent=0 // pred_check
    _
  $region19: #{t2t_vit_forward.27} parent=0 // pred_check_branch
    %22 = sbr.rel (0) target = $region21
  $region20: #{t2t_vit_forward.27} parent=0 // pred_region
    _
  $region21: #{t2t_vit_forward.27} parent=0 // pred_fallthru
    _
  // Predicated region
  $region22: #{t2t_vit_forward.27} parent=0 // pred_check
    _
  $region23: #{t2t_vit_forward.27} parent=0 // pred_check_branch
    %24 = sbr.rel (0) target = $region25
  $region24: #{t2t_vit_forward.27} parent=0 // pred_region
    _
  $region25: #{t2t_vit_forward.27} parent=0 // pred_fallthru
    _
  // Predicated region
  $region26: #{t2t_vit_forward.27} parent=0 // pred_check
    _
  $region27: #{t2t_vit_forward.27} parent=0 // pred_check_branch
    %26 = sbr.rel (0) target = $region29
  $region28: #{t2t_vit_forward.27} parent=0 // pred_region
    _
  $region29: #{t2t_vit_forward.27} parent=0 // pred_fallthru
    _
  // Predicated region
  $region30: #{t2t_vit_forward.27} parent=0 // pred_check
    _
  $region31: #{t2t_vit_forward.27} parent=0 // pred_check_branch
    %28 = sbr.rel (0) target = $region33
  $region32: #{t2t_vit_forward.27} parent=0 // pred_region
    _
  $region33: #{t2t_vit_forward.27} parent=0 // pred_fallthru
    _
  %p30 = scmp.eq.s32.totalorder 0, 0
  // Predicated region
  $region34: #{t2t_vit_forward.27} parent=0 // pred_check
    %p31 = pneg %p30
  $region35: #{t2t_vit_forward.27} parent=0 // pred_check_branch
    %33 = sbr.rel (%p31) target = $region37
  $region36: #{t2t_vit_forward.27} parent=0 // pred_region
    %v34 = vld [vmem:[%s0] sm:$0xff]
    %v35 = vld [vmem:[%s0 + $0x8] sm:$0xff]
    %v36 = vld [vmem:[%s0 + $0x10] sm:$0xff]
    %v37 = vld [vmem:[%s0 + $0x18] sm:$0xff]
    %v38 = vld [vmem:[%s1] sm:$0xff]
    %v39 = vld [vmem:[%s1 + $0x8] sm:$0xff]
    %v40 = vld [vmem:[%s1 + $0x10] sm:$0xff]
    %v41 = vld [vmem:[%s1 + $0x18] sm:$0xff]
    %43 = vset.pattern.permute.xlu0 0
    %44 = vperm.xlu0 %43, %v38
    %v45 = vpop.permute.xlu0 %44
    %48 = vset.pattern.permute.xlu0 0
    %49 = vperm.xlu0 %48, %v39
    %v50 = vpop.permute.xlu0 %49
    %53 = vset.pattern.permute.xlu0 0
    %54 = vperm.xlu0 %53, %v40
    %v55 = vpop.permute.xlu0 %54
    %58 = vset.pattern.permute.xlu0 0
    %59 = vperm.xlu0 %58, %v41
    %v60 = vpop.permute.xlu0 %59
    %v62 = vmul.f32 %v34, %v45
    %v63 = vmul.f32 %v35, %v50
    %v64 = vmul.f32 %v36, %v55
    %v65 = vmul.f32 %v37, %v60
    %v66 = vld [vmem:[%s2] sm:$0xff]
    %v67 = vld [vmem:[%s2 + $0x8] sm:$0xff]
    %v68 = vld [vmem:[%s2 + $0x10] sm:$0xff]
    %v69 = vld [vmem:[%s2 + $0x18] sm:$0xff]
    %71 = vset.pattern.permute.xlu0 0
    %72 = vperm.xlu0 %71, %v66
    %v73 = vpop.permute.xlu0 %72
    %76 = vset.pattern.permute.xlu0 0
    %77 = vperm.xlu0 %76, %v67
    %v78 = vpop.permute.xlu0 %77
    %81 = vset.pattern.permute.xlu0 0
    %82 = vperm.xlu0 %81, %v68
    %v83 = vpop.permute.xlu0 %82
    %86 = vset.pattern.permute.xlu0 0
    %87 = vperm.xlu0 %86, %v69
    %v88 = vpop.permute.xlu0 %87
    %v90 = vadd.f32 %v62, %v73
    %v91 = vadd.f32 %v63, %v78
    %v92 = vadd.f32 %v64, %v83
    %v93 = vadd.f32 %v65, %v88
    %v94 = vpack.c.bf16 %v91, %v90
    %v95 = vpack.c.bf16 %v93, %v92
    %v96 = vld [vmem:[%s3] sm:$0xff]
    %v97 = vld [vmem:[%s3 + $0x8] sm:$0xff]
    %v98 = vld [vmem:[%s3 + $0x10] sm:$0xff]
    %v99 = vld [vmem:[%s3 + $0x18] sm:$0xff]
    %v100 = vld [vmem:[%s3 + $0x20] sm:$0xff]
    %v101 = vld [vmem:[%s3 + $0x28] sm:$0xff]
    %v102 = vld [vmem:[%s3 + $0x30] sm:$0xff]
    %v103 = vld [vmem:[%s3 + $0x38] sm:$0xff]
    %v104 = vld [vmem:[%s3 + $0x40] sm:$0xff]
    %v105 = vld [vmem:[%s3 + $0x48] sm:$0xff]
    %v106 = vld [vmem:[%s3 + $0x50] sm:$0xff]
    %v107 = vld [vmem:[%s3 + $0x58] sm:$0xff]
    %v108 = vld [vmem:[%s3 + $0x60] sm:$0xff]
    %v109 = vld [vmem:[%s3 + $0x68] sm:$0xff]
    %v110 = vld [vmem:[%s3 + $0x70] sm:$0xff]
    %v111 = vld [vmem:[%s3 + $0x78] sm:$0xff]
    %v112 = vpack.c.bf16 %v97, %v96
    %v113 = vpack.c.bf16 %v99, %v98
    %v114 = vpack.c.bf16 %v101, %v100
    %v115 = vpack.c.bf16 %v103, %v102
    %v116 = vpack.c.bf16 %v105, %v104
    %v117 = vpack.c.bf16 %v107, %v106
    %v118 = vpack.c.bf16 %v109, %v108
    %v119 = vpack.c.bf16 %v111, %v110
    %v120 = vld [vmem:[%s4] sm:$0x1]
    %v122 = vlaneseq
    %v123 = vshrl.u32 %v122, 7
    %v124 = vsub.s32 0, %v123
    %v125 = vrot.slane %v120, %v124
    %127 = vmatprep.subr.bf16.mxu0 0
    %128 = vmatpush1.bf16.msra.mxu0 %v112
    %129 = vmatprep.subr.bf16.mxu0 0
    %130 = vmatpush1.bf16.msra.mxu0 %v113
    %131 = vmatprep.subr.bf16.mxu0 0
    %132 = vmatpush1.bf16.msra.mxu0 %v114
    %133 = vmatprep.subr.bf16.mxu0 0
    %134 = vmatpush1.bf16.msra.mxu0 %v115
    %135 = vmatprep.subr.bf16.mxu0 0
    %136 = vmatpush1.bf16.msra.mxu0 %v116
    %137 = vmatprep.subr.bf16.mxu0 0
    %138 = vmatpush1.bf16.msra.mxu0 %v117
    %139 = vmatprep.subr.bf16.mxu0 0
    %140 = vmatpush1.bf16.msra.mxu0 %v118
    %141 = vmatprep.subr.bf16.mxu0 0
    %142 = vmatpush1.bf16.msra.mxu0 %v119
    %143 = vmatprep.subr.bf16.mxu0 0
    %144 = vmatpush1.bf16.msra.mxu0 0
    %145 = vmatprep.subr.bf16.mxu0 0
    %146 = vmatpush1.bf16.msra.mxu0 0
    %147 = vmatprep.subr.bf16.mxu0 0
    %148 = vmatpush1.bf16.msra.mxu0 0
    %149 = vmatprep.subr.bf16.mxu0 0
    %150 = vmatpush1.bf16.msra.mxu0 0
    %151 = vmatprep.subr.bf16.mxu0 0
    %152 = vmatpush1.bf16.msra.mxu0 0
    %153 = vmatprep.subr.bf16.mxu0 0
    %154 = vmatpush1.bf16.msra.mxu0 0
    %155 = vmatprep.subr.bf16.mxu0 0
    %156 = vmatpush1.bf16.msra.mxu0 0
    %157 = vmatprep.subr.bf16.mxu0 0
    %158 = vmatpush1.bf16.msra.mxu0 0
    %159 = vmatprep.mubr.bf16.mxu0 0
    %160 = vmatmul.mubr.bf16.gmra.mrb[0].mxu0 %v94
    %v161 = vpop.f32.mrb[0].mxu0
    %v162 = vadd.f32 %v125, %v161
    %v163 = vpop.f32.mrb[0].mxu0
    %v164 = vpop.f32.mrb[0].mxu0
    %v165 = vadd.f32 %v125, %v164
    %v166 = vpop.f32.mrb[0].mxu0
    %167 = vmatprep.mubr.bf16.mxu0 0
    %168 = vmatmul.mubr.bf16.gmra.mrb[0].mxu0 %v95
    %v169 = vpop.f32.mrb[0].mxu0
    %v170 = vadd.f32 %v125, %v169
    %v171 = vpop.f32.mrb[0].mxu0
    %v172 = vpop.f32.mrb[0].mxu0
    %v173 = vadd.f32 %v125, %v172
    %v174 = vpop.f32.mrb[0].mxu0
    %175 = vdwg.mxu0
    %v176 = vmul.f32 %v162, 0.5
    %v177 = vmul.f32 %v165, 0.5
    %v178 = vmul.f32 %v170, 0.5
    %v179 = vmul.f32 %v173, 0.5
    %v180 = vmul.f32 %v162, 0.70710677
    %v181 = vmul.f32 %v165, 0.70710677
    %v182 = vmul.f32 %v170, 0.70710677
    %v183 = vmul.f32 %v173, 0.70710677
    %v184 = verf.f32.pop %v180
    %v185 = verf.f32.pop %v181
    %v186 = verf.f32.pop %v182
    %v187 = verf.f32.pop %v183
    %v188 = vadd.f32 %v184, 1.0
    %v189 = vadd.f32 %v185, 1.0
    %v190 = vadd.f32 %v186, 1.0
    %v191 = vadd.f32 %v187, 1.0
    %v192 = vmul.f32 %v176, %v188
    %v193 = vmul.f32 %v177, %v189
    %v194 = vmul.f32 %v178, %v190
    %v195 = vmul.f32 %v179, %v191
    %v196 = vpack.c.bf16 %v193, %v192
    %v197 = vpack.c.bf16 %v195, %v194
    %198 = vst [vmem:[#allocation2] sm:$0xff] %v196
    %199 = vst [vmem:[#allocation2 + $0x8] sm:$0xff] %v197
  $region37: #{t2t_vit_forward.27} parent=0 // pred_fallthru
    _
  %v200 = vld [vmem:[#allocation2] sm:$0xff]
  %v201 = vld [vmem:[#allocation2 + $0x8] sm:$0xff]
  %v202 = vld [vmem:[%s5] sm:$0xff]
  %v203 = vld [vmem:[%s5 + $0x8] sm:$0xff]
  %v204 = vld [vmem:[%s5 + $0x10] sm:$0xff]
  %v205 = vld [vmem:[%s5 + $0x18] sm:$0xff]
  %v206 = vld [vmem:[%s5 + $0x20] sm:$0xff]
  %v207 = vld [vmem:[%s5 + $0x28] sm:$0xff]
  %v208 = vld [vmem:[%s5 + $0x30] sm:$0xff]
  %v209 = vld [vmem:[%s5 + $0x38] sm:$0xff]
  %v210 = vld [vmem:[%s5 + $0x40] sm:$0xff]
  %v211 = vld [vmem:[%s5 + $0x48] sm:$0xff]
  %v212 = vld [vmem:[%s5 + $0x50] sm:$0xff]
  %v213 = vld [vmem:[%s5 + $0x58] sm:$0xff]
  %v214 = vld [vmem:[%s5 + $0x60] sm:$0xff]
  %v215 = vld [vmem:[%s5 + $0x68] sm:$0xff]
  %v216 = vld [vmem:[%s5 + $0x70] sm:$0xff]
  %v217 = vld [vmem:[%s5 + $0x78] sm:$0xff]
  %v218 = vpack.c.bf16 %v203, %v202
  %v219 = vpack.c.bf16 %v205, %v204
  %v220 = vpack.c.bf16 %v207, %v206
  %v221 = vpack.c.bf16 %v209, %v208
  %v222 = vpack.c.bf16 %v211, %v210
  %v223 = vpack.c.bf16 %v213, %v212
  %v224 = vpack.c.bf16 %v215, %v214
  %v225 = vpack.c.bf16 %v217, %v216
  %v226 = vld [vmem:[%s6] sm:$0x1]
  %v228 = vlaneseq
  %v229 = vshrl.u32 %v228, 7
  %v230 = vsub.s32 0, %v229
  %v231 = vrot.slane %v226, %v230
  %233 = vmatprep.subr.bf16.mxu0 0
  %234 = vmatpush1.bf16.msra.mxu0 %v218
  %235 = vmatprep.subr.bf16.mxu0 0
  %236 = vmatpush1.bf16.msra.mxu0 %v219
  %237 = vmatprep.subr.bf16.mxu0 0
  %238 = vmatpush1.bf16.msra.mxu0 %v220
  %239 = vmatprep.subr.bf16.mxu0 0
  %240 = vmatpush1.bf16.msra.mxu0 %v221
  %241 = vmatprep.subr.bf16.mxu0 0
  %242 = vmatpush1.bf16.msra.mxu0 %v222
  %243 = vmatprep.subr.bf16.mxu0 0
  %244 = vmatpush1.bf16.msra.mxu0 %v223
  %245 = vmatprep.subr.bf16.mxu0 0
  %246 = vmatpush1.bf16.msra.mxu0 %v224
  %247 = vmatprep.subr.bf16.mxu0 0
  %248 = vmatpush1.bf16.msra.mxu0 %v225
  %249 = vmatprep.subr.bf16.mxu0 0
  %250 = vmatpush1.bf16.msra.mxu0 0
  %251 = vmatprep.subr.bf16.mxu0 0
  %252 = vmatpush1.bf16.msra.mxu0 0
  %253 = vmatprep.subr.bf16.mxu0 0
  %254 = vmatpush1.bf16.msra.mxu0 0
  %255 = vmatprep.subr.bf16.mxu0 0
  %256 = vmatpush1.bf16.msra.mxu0 0
  %257 = vmatprep.subr.bf16.mxu0 0
  %258 = vmatpush1.bf16.msra.mxu0 0
  %259 = vmatprep.subr.bf16.mxu0 0
  %260 = vmatpush1.bf16.msra.mxu0 0
  %261 = vmatprep.subr.bf16.mxu0 0
  %262 = vmatpush1.bf16.msra.mxu0 0
  %263 = vmatprep.subr.bf16.mxu0 0
  %264 = vmatpush1.bf16.msra.mxu0 0
  %265 = vmatprep.mubr.bf16.mxu0 0
  %266 = vmatmul.mubr.bf16.gmra.mrb[0].mxu0 %v200
  %v267 = vpop.f32.mrb[0].mxu0
  %v268 = vadd.f32 %v231, %v267
  %v269 = vpop.f32.mrb[0].mxu0
  %v270 = vpop.f32.mrb[0].mxu0
  %v271 = vadd.f32 %v231, %v270
  %v272 = vpop.f32.mrb[0].mxu0
  %273 = vmatprep.mubr.bf16.mxu0 0
  %274 = vmatmul.mubr.bf16.gmra.mrb[0].mxu0 %v201
  %v275 = vpop.f32.mrb[0].mxu0
  %v276 = vadd.f32 %v231, %v275
  %v277 = vpop.f32.mrb[0].mxu0
  %v278 = vpop.f32.mrb[0].mxu0
  %v279 = vadd.f32 %v231, %v278
  %v280 = vpop.f32.mrb[0].mxu0
  %281 = vdwg.mxu0
  %v282 = vld [vmem:[%s7] sm:$0xff]
  %v283 = vld [vmem:[%s7 + $0x8] sm:$0xff]
  %v284 = vld [vmem:[%s7 + $0x10] sm:$0xff]
  %v285 = vld [vmem:[%s7 + $0x18] sm:$0xff]
  %v286 = vadd.f32 %v268, %v282
  %v287 = vadd.f32 %v271, %v283
  %v288 = vadd.f32 %v276, %v284
  %v289 = vadd.f32 %v279, %v285
  %290 = vst [vmem:[%s8] sm:$0xff] %v286
  %291 = vst [vmem:[%s8 + $0x8] sm:$0xff] %v287
  %292 = vst [vmem:[%s8 + $0x10] sm:$0xff] %v288
  %293 = vst [vmem:[%s8 + $0x18] sm:$0xff] %v289
  // Predicated region
  $region38: #{t2t_vit_forward.27} parent=0 // pred_check
    _
  $region39: #{t2t_vit_forward.27} parent=0 // pred_check_branch
    %295 = sbr.rel (0) target = $region41
  $region40: #{t2t_vit_forward.27} parent=0 // pred_region
    _
  $region41: #{t2t_vit_forward.27} parent=0 // pred_fallthru
    _
  // Predicated region
  $region42: #{t2t_vit_forward.27} parent=0 // pred_check
    _
  $region43: #{t2t_vit_forward.27} parent=0 // pred_check_branch
    %297 = sbr.rel (0) target = $region45
  $region44: #{t2t_vit_forward.27} parent=0 // pred_region
    _
  $region45: #{t2t_vit_forward.27} parent=0 // pred_fallthru
    _

// kernel: t2t_vit_forward.25
$region0: #{t2t_vit_forward.25}
  #allocation0 [shape = 'u32[]', space=smem, size = 0x4, offset = 0x4, fixed_abs, tag = 'smem constant byte address 0x4 - core index']
  #allocation1 [shape = 'u32[144,128]{1,0:T(1,128)}', space=vmem, size = 0x12000, scoped, tag = 'internal scratch']
  #allocation2 [shape = 'f32[16,1]{1,0:T(8,128)}', space=vmem, size = 0x2000, scoped, tag = 'scratch operand']
  #allocation3 [shape = 'f32[16,1]{1,0:T(8,128)}', space=vmem, size = 0x2000, scoped, tag = 'scratch operand']
  #allocation4 [shape = 'f32[16,16]{1,0:T(8,128)}', space=vmem, size = 0x2000, scoped, tag = 'scratch operand']
  %s0 = inlined_call_operand.vmem [shape: f32[2,16,16], index: 0, kind: input, shape index: {}]
  %s1 = inlined_call_operand.vmem [shape: f32[2,16,16], index: 1, kind: input, shape index: {}]
  %s2 = inlined_call_operand.vmem [shape: f32[2,16,16], index: 2, kind: input, shape index: {}]
  %s3 = inlined_call_operand.vmem [shape: f32[2,16,16], index: 3, kind: output, shape index: {}]
  %s4 = sld [smem:[#allocation0]]
  $region53: #{t2t_vit_forward.25} parent=0
    _
  %s6 = ssub.s32 1, %s4
  %s7 = scalar_select 0, %s6, %s4
  loop: start=0, step=1, limit=4
  $region2: #{t2t_vit_forward.25} parent=0 // loop_pre_header
    _
  $region3: #{t2t_vit_forward.25} parent=0 // loop_header
    %s9 = sphi 0, %s13
    %p10 = scmp.ge.s32.totalorder %s9, 4
    %s16 = sphi 0, %s35
    %s17 = sphi 0, %s31
    %s18 = sphi 0, %s27
    %s19 = sphi 0, %s16
    %s20 = sphi 0, %s17
    %s21 = sphi 0, %s18
    %s22 = sphi 0, %s19
    %s23 = sphi 0, %s20
    %s24 = sphi 0, %s21
    %s40 = sphi 0, %s42
    %s43 = sphi 0, %s40
    %s44 = sphi 0, %s43
    %s60 = sphi 0, %s44
    %s68 = sphi 0, %s70
    %s71 = sphi 0, %s68
    %s72 = sphi 0, %s71
    %s88 = sphi 0, %s72
    %s96 = sphi 0, %s98
    %s99 = sphi 0, %s96
    %s100 = sphi 0, %s99
    %s116 = sphi 0, %s100
    %s124 = sphi 0, %s126
    %s127 = sphi 0, %s124
    %s128 = sphi 0, %s127
    %s144 = sphi 0, %s128
  $region4: #{t2t_vit_forward.25} parent=0 // loop_header_branch
    %12 = sbr.rel (%p10) target = $region8
  $region5: #{t2t_vit_forward.25} parent=0 // loop_body
    %s14 = ssub.s32 %s9, 1
    %s15 = ssub.s32 %s9, 2
    %s25 = sadd.s32 1, %s18
    %p26 = scmp.ge.s32.totalorder %s25, 1
    %s27 = scalar_select %p26, 0, %s25
    %s28 = sadd.s32 1, %s17
    %s29 = scalar_select %p26, %s28, %s17
    %p30 = scmp.ge.s32.totalorder %s29, 1
    %s31 = scalar_select %p30, 0, %s29
    %s32 = sadd.s32 1, %s16
    %s33 = scalar_select %p30, %s32, %s16
    %p34 = scmp.ge.s32.totalorder %s33, 2
    %s35 = scalar_select %p34, 0, %s33
    %s36 = ssub.s32 %s16, %s35
    %s37 = ssub.s32 %s17, %s31
    %s38 = sor.u32 %s36, %s37
    %p39 = scmp.eq.s32.totalorder %s38, 0
    %s41 = sadd.s32 %s40, 1
    %s42 = scalar_select %p39, %s40, %s41
    %p45 = pneg %p39
    %p46 = scmp.eq.s32.totalorder %s9, 1
    %p47 = por %p45, %p46
    %p48 = scmp.ne.s32.totalorder %s40, %s43
    %p49 = scmp.eq.s32.totalorder %s9, 0
    %p50 = por %p48, %p49
    %p51 = scmp.ne.s32.totalorder %s40, %s43
    %p52 = scmp.eq.s32.totalorder %s14, 1
    %p53 = por %p51, %p52
    %p54 = scmp.ne.s32.totalorder %s43, %s44
    %p55 = scmp.eq.s32.totalorder %s14, 0
    %p56 = por %p54, %p55
    %p57 = scmp.ne.s32.totalorder %s43, %s44
    %p58 = scmp.eq.s32.totalorder %s15, 1
    %p59 = por %p57, %p58
    %p61 = scmp.ne.s32.totalorder %s44, %s60
    %p62 = scmp.eq.s32.totalorder %s15, 0
    %p63 = por %p61, %p62
    %s64 = ssub.s32 %s16, %s35
    %s65 = ssub.s32 %s18, %s27
    %s66 = sor.u32 %s64, %s65
    %p67 = scmp.eq.s32.totalorder %s66, 0
    %s69 = sadd.s32 %s68, 1
    %s70 = scalar_select %p67, %s68, %s69
    %p73 = pneg %p67
    %p74 = scmp.eq.s32.totalorder %s9, 1
    %p75 = por %p73, %p74
    %p76 = scmp.ne.s32.totalorder %s68, %s71
    %p77 = scmp.eq.s32.totalorder %s9, 0
    %p78 = por %p76, %p77
    %p79 = scmp.ne.s32.totalorder %s68, %s71
    %p80 = scmp.eq.s32.totalorder %s14, 1
    %p81 = por %p79, %p80
    %p82 = scmp.ne.s32.totalorder %s71, %s72
    %p83 = scmp.eq.s32.totalorder %s14, 0
    %p84 = por %p82, %p83
    %p85 = scmp.ne.s32.totalorder %s71, %s72
    %p86 = scmp.eq.s32.totalorder %s15, 1
    %p87 = por %p85, %p86
    %p89 = scmp.ne.s32.totalorder %s72, %s88
    %p90 = scmp.eq.s32.totalorder %s15, 0
    %p91 = por %p89, %p90
    %s92 = ssub.s32 %s16, %s35
    %s93 = ssub.s32 %s18, %s27
    %s94 = sor.u32 %s92, %s93
    %p95 = scmp.eq.s32.totalorder %s94, 0
    %s97 = sadd.s32 %s96, 1
    %s98 = scalar_select %p95, %s96, %s97
    %p101 = pneg %p95
    %p102 = scmp.eq.s32.totalorder %s9, 1
    %p103 = por %p101, %p102
    %p104 = scmp.ne.s32.totalorder %s96, %s99
    %p105 = scmp.eq.s32.totalorder %s9, 0
    %p106 = por %p104, %p105
    %p107 = scmp.ne.s32.totalorder %s96, %s99
    %p108 = scmp.eq.s32.totalorder %s14, 1
    %p109 = por %p107, %p108
    %p110 = scmp.ne.s32.totalorder %s99, %s100
    %p111 = scmp.eq.s32.totalorder %s14, 0
    %p112 = por %p110, %p111
    %p113 = scmp.ne.s32.totalorder %s99, %s100
    %p114 = scmp.eq.s32.totalorder %s15, 1
    %p115 = por %p113, %p114
    %p117 = scmp.ne.s32.totalorder %s100, %s116
    %p118 = scmp.eq.s32.totalorder %s15, 0
    %p119 = por %p117, %p118
    %s120 = ssub.s32 %s16, %s35
    %s121 = ssub.s32 %s17, %s31
    %s122 = sor.u32 %s120, %s121
    %p123 = scmp.eq.s32.totalorder %s122, 0
    %s125 = sadd.s32 %s124, 1
    %s126 = scalar_select %p123, %s124, %s125
    %p129 = pneg %p123
    %p130 = scmp.eq.s32.totalorder %s9, 1
    %p131 = por %p129, %p130
    %p132 = scmp.ne.s32.totalorder %s124, %s127
    %p133 = scmp.eq.s32.totalorder %s9, 0
    %p134 = por %p132, %p133
    %p135 = scmp.ne.s32.totalorder %s124, %s127
    %p136 = scmp.eq.s32.totalorder %s14, 1
    %p137 = por %p135, %p136
    %p138 = scmp.ne.s32.totalorder %s127, %s128
    %p139 = scmp.eq.s32.totalorder %s14, 0
    %p140 = por %p138, %p139
    %p141 = scmp.ne.s32.totalorder %s127, %s128
    %p142 = scmp.eq.s32.totalorder %s15, 1
    %p143 = por %p141, %p142
    %p145 = scmp.ne.s32.totalorder %s128, %s144
    %p146 = scmp.eq.s32.totalorder %s15, 0
    %p147 = por %p145, %p146
    %p148 = scmp.le.s32.totalorder 1, %s9
    %p149 = scmp.lt.s32.totalorder %s9, 3
    %p150 = pnand %p148, %p149
    %p151 = pneg %p150
    // Predicated region
    $region9: #{t2t_vit_forward.25} parent=5 // pred_check
      _
    $region10: #{t2t_vit_forward.25} parent=5 // pred_check_branch
      %153 = sbr.rel (%p150) target = $region12
    $region11: #{t2t_vit_forward.25} parent=5 // pred_region
      %s154 = ssub.s32 %s9, 1
    $region12: #{t2t_vit_forward.25} parent=5 // pred_fallthru
      _
    %p155 = scmp.lt.s32.totalorder %s9, 2
    // Predicated region
    $region13: #{t2t_vit_forward.25} parent=5 // pred_check
      %p156 = pneg %p155
    $region14: #{t2t_vit_forward.25} parent=5 // pred_check_branch
      %158 = sbr.rel (%p156) target = $region16
    $region15: #{t2t_vit_forward.25} parent=5 // pred_region
      // Predicated region
      $region17: #{t2t_vit_forward.25} parent=15 // pred_check
        %p159 = pneg %p50
      $region18: #{t2t_vit_forward.25} parent=15 // pred_check_branch
        %161 = sbr.rel (%p159) target = $region20
      $region19: #{t2t_vit_forward.25} parent=15 // pred_region
        %s162 = smul.u32 2, %s17
        %p163 = scmp.lt.s32.totalorder %s16, 1
        %s164 = scalar_select %p163, %s16, 1
        %p165 = scmp.lt.s32.totalorder %s162, 1
        %s166 = scalar_select %p165, %s162, 1
        %s167 = smul.addr %s164, 2
        %s168 = sadd.s32 %s166, %s167
        %s169 = smul.addr %s168, 8
        %s170 = scalar_lea.vmem %s0, %s169
        %s171 = smul.u32 2, %s17
      $region20: #{t2t_vit_forward.25} parent=15 // pred_fallthru
        _
      // Predicated region
      $region21: #{t2t_vit_forward.25} parent=15 // pred_check
        %p172 = pneg %p78
      $region22: #{t2t_vit_forward.25} parent=15 // pred_check_branch
        %174 = sbr.rel (%p172) target = $region24
      $region23: #{t2t_vit_forward.25} parent=15 // pred_region
        %s175 = smul.u32 2, %s18
        %p176 = scmp.lt.s32.totalorder %s16, 1
        %s177 = scalar_select %p176, %s16, 1
        %p178 = scmp.lt.s32.totalorder %s175, 1
        %s179 = scalar_select %p178, %s175, 1
        %s180 = smul.addr %s177, 2
        %s181 = sadd.s32 %s179, %s180
        %s182 = smul.addr %s181, 8
        %s183 = scalar_lea.vmem %s1, %s182
        %s184 = smul.u32 2, %s18
      $region24: #{t2t_vit_forward.25} parent=15 // pred_fallthru
        _
      // Predicated region
      $region25: #{t2t_vit_forward.25} parent=15 // pred_check
        %p185 = pneg %p106
      $region26: #{t2t_vit_forward.25} parent=15 // pred_check_branch
        %187 = sbr.rel (%p185) target = $region28
      $region27: #{t2t_vit_forward.25} parent=15 // pred_region
        %s188 = smul.u32 2, %s18
        %p189 = scmp.lt.s32.totalorder %s16, 1
        %s190 = scalar_select %p189, %s16, 1
        %p191 = scmp.lt.s32.totalorder %s188, 1
        %s192 = scalar_select %p191, %s188, 1
        %s193 = smul.addr %s190, 2
        %s194 = sadd.s32 %s192, %s193
        %s195 = smul.addr %s194, 8
        %s196 = scalar_lea.vmem %s2, %s195
        %s197 = smul.u32 2, %s18
      $region28: #{t2t_vit_forward.25} parent=15 // pred_fallthru
        _
    $region16: #{t2t_vit_forward.25} parent=5 // pred_fallthru
      _
    %p198 = scmp.le.s32.totalorder 1, %s9
    %p199 = scmp.lt.s32.totalorder %s9, 3
    %p200 = pnand %p198, %p199
    %p201 = pneg %p200
    // Predicated region
    $region29: #{t2t_vit_forward.25} parent=5 // pred_check
      _
    $region30: #{t2t_vit_forward.25} parent=5 // pred_check_branch
      %203 = sbr.rel (%p200) target = $region32
    $region31: #{t2t_vit_forward.25} parent=5 // pred_region
      %s204 = ssub.s32 %s9, 1
      %s205 = smul.u32 2, %s20
      %p206 = scmp.lt.s32.totalorder %s19, 1
      %s207 = scalar_select %p206, %s19, 1
      %p208 = scmp.lt.s32.totalorder %s205, 1
      %s209 = scalar_select %p208, %s205, 1
      %s210 = smul.addr %s207, 2
      %s211 = sadd.s32 %s209, %s210
      %s212 = smul.addr %s211, 8
      %s213 = scalar_lea.vmem %s0, %s212
      %p214 = pneg %p56
      %p215 = pneg %p53
      %s216 = smul.u32 2, %s21
      %p217 = scmp.lt.s32.totalorder %s19, 1
      %s218 = scalar_select %p217, %s19, 1
      %p219 = scmp.lt.s32.totalorder %s216, 1
      %s220 = scalar_select %p219, %s216, 1
      %s221 = smul.addr %s218, 2
      %s222 = sadd.s32 %s220, %s221
      %s223 = smul.addr %s222, 8
      %s224 = scalar_lea.vmem %s1, %s223
      %p225 = pneg %p84
      %p226 = pneg %p81
      %s227 = smul.u32 2, %s21
      %p228 = scmp.lt.s32.totalorder %s19, 1
      %s229 = scalar_select %p228, %s19, 1
      %p230 = scmp.lt.s32.totalorder %s227, 1
      %s231 = scalar_select %p230, %s227, 1
      %s232 = smul.addr %s229, 2
      %s233 = sadd.s32 %s231, %s232
      %s234 = smul.addr %s233, 8
      %s235 = scalar_lea.vmem %s2, %s234
      %p236 = pneg %p112
      %p237 = pneg %p109
      %p238 = pneg %p140
      %p239 = pneg %p137
      %s240 = smul.u32 2, %s20
      %p241 = scmp.lt.s32.totalorder %s19, 1
      %s242 = scalar_select %p241, %s19, 1
      %p243 = scmp.lt.s32.totalorder %s240, 1
      %s244 = scalar_select %p243, %s240, 1
      %s245 = smul.addr %s242, 2
      %s246 = sadd.s32 %s244, %s245
      %s247 = smul.addr %s246, 8
      %s248 = scalar_lea.vmem %s3, %s247
      %s249 = smul.u32 2, %s20
      %p250 = scmp.lt.s32.totalorder %s19, 1
      %s251 = scalar_select %p250, %s19, 1
      %p252 = scmp.lt.s32.totalorder %s249, 1
      %s253 = scalar_select %p252, %s249, 1
      %s254 = smul.addr %s251, 2
      %s255 = sadd.s32 %s253, %s254
      %s256 = smul.addr %s255, 8
      %s257 = scalar_lea.vmem %s0, %s256
      %s258 = smul.u32 2, %s20
      %s259 = smul.u32 2, %s21
      %p260 = scmp.lt.s32.totalorder %s19, 1
      %s261 = scalar_select %p260, %s19, 1
      %p262 = scmp.lt.s32.totalorder %s259, 1
      %s263 = scalar_select %p262, %s259, 1
      %s264 = smul.addr %s261, 2
      %s265 = sadd.s32 %s263, %s264
      %s266 = smul.addr %s265, 8
      %s267 = scalar_lea.vmem %s1, %s266
      %s268 = smul.u32 2, %s21
      %s269 = smul.u32 2, %s21
      %p270 = scmp.lt.s32.totalorder %s19, 1
      %s271 = scalar_select %p270, %s19, 1
      %p272 = scmp.lt.s32.totalorder %s269, 1
      %s273 = scalar_select %p272, %s269, 1
      %s274 = smul.addr %s271, 2
      %s275 = sadd.s32 %s273, %s274
      %s276 = smul.addr %s275, 8
      %s277 = scalar_lea.vmem %s2, %s276
      %s278 = smul.u32 2, %s21
      %s279 = smul.u32 2, %s20
      %p280 = scmp.lt.s32.totalorder %s19, 1
      %s281 = scalar_select %p280, %s19, 1
      %p282 = scmp.lt.s32.totalorder %s279, 1
      %s283 = scalar_select %p282, %s279, 1
      %s284 = smul.addr %s281, 2
      %s285 = sadd.s32 %s283, %s284
      %s286 = smul.addr %s285, 8
      %s287 = scalar_lea.vmem %s3, %s286
      %s288 = smul.u32 2, %s20
      %p290 = scmp.eq.s32.totalorder %s21, 0
      // Predicated region
      $region33: #{t2t_vit_forward.25} parent=31 // pred_check
        %p291 = pneg %p290
      $region34: #{t2t_vit_forward.25} parent=31 // pred_check_branch
        %293 = sbr.rel (%p291) target = $region36
      $region35: #{t2t_vit_forward.25} parent=31 // pred_region
        %vm294 = vcmask 7168
        %295 = vst.msk [vmem:[#allocation2] sm:$0xff] %vm294, -inf
        %296 = vst.msk [vmem:[#allocation2 + $0x8] sm:$0xff] %vm294, -inf
        %297 = vst.msk [vmem:[#allocation3] sm:$0xff] %vm294, 0.0
        %298 = vst.msk [vmem:[#allocation3 + $0x8] sm:$0xff] %vm294, 0.0
        %vm299 = vcmask 130048
        %300 = vst.msk [vmem:[#allocation4] sm:$0xff] %vm299, 0.0
        %301 = vst.msk [vmem:[#allocation4 + $0x8] sm:$0xff] %vm299, 0.0
      $region36: #{t2t_vit_forward.25} parent=31 // pred_fallthru
        _
      %v302 = vld [vmem:[%s257] sm:$0xff]
      %v303 = vld [vmem:[%s257 + $0x8] sm:$0xff]
      %v304 = vpack.c.bf16 %v303, %v302
      %v305 = vld [vmem:[%s267] sm:$0xff]
      %v306 = vld [vmem:[%s267 + $0x8] sm:$0xff]
      %v307 = vpack.c.bf16 %v306, %v305
      %v308 = vld [vmem:[%s277] sm:$0xff]
      %v309 = vld [vmem:[%s277 + $0x8] sm:$0xff]
      %v310 = vpack.c.bf16 %v309, %v308
      %vm311 = vcmask 130048
      %v313 = vsel %vm311, %v304, 0
      %v316 = vsel %vm311, %v307, 0
      %318 = vmatprep.subr.bf16.mxu0 0
      %319 = vmatpush1.bf16.xpose.msra.mxu0 %v316
      %320 = vmatprep.subr.bf16.mxu0 0
      %321 = vmatpush1.bf16.xpose.msra.mxu0 0
      %322 = vmatprep.subr.bf16.mxu0 0
      %323 = vmatpush1.bf16.xpose.msra.mxu0 0
      %324 = vmatprep.subr.bf16.mxu0 0
      %325 = vmatpush1.bf16.xpose.msra.mxu0 0
      %326 = vmatprep.subr.bf16.mxu0 0
      %327 = vmatpush1.bf16.xpose.msra.mxu0 0
      %328 = vmatprep.subr.bf16.mxu0 0
      %329 = vmatpush1.bf16.xpose.msra.mxu0 0
      %330 = vmatprep.subr.bf16.mxu0 0
      %331 = vmatpush1.bf16.xpose.msra.mxu0 0
      %332 = vmatprep.subr.bf16.mxu0 0
      %333 = vmatpush1.bf16.xpose.msra.mxu0 0
      %334 = vmatprep.subr.bf16.mxu0 0
      %335 = vmatpush1.bf16.xpose.msra.mxu0 0
      %336 = vmatprep.subr.bf16.mxu0 0
      %337 = vmatpush1.bf16.xpose.msra.mxu0 0
      %338 = vmatprep.subr.bf16.mxu0 0
      %339 = vmatpush1.bf16.xpose.msra.mxu0 0
      %340 = vmatprep.subr.bf16.mxu0 0
      %341 = vmatpush1.bf16.xpose.msra.mxu0 0
      %342 = vmatprep.subr.bf16.mxu0 0
      %343 = vmatpush1.bf16.xpose.msra.mxu0 0
      %344 = vmatprep.subr.bf16.mxu0 0
      %345 = vmatpush1.bf16.xpose.msra.mxu0 0
      %346 = vmatprep.subr.bf16.mxu0 0
      %347 = vmatpush1.bf16.xpose.msra.mxu0 0
      %348 = vmatprep.subr.bf16.mxu0 0
      %349 = vmatpush1.bf16.xpose.msra.mxu0 0
      %350 = vmatprep.mubr.bf16.mxu0 0
      %351 = vmatmul.mubr.bf16.gmra.mrb[0].mxu0 %v313
      %v352 = vpop.f32.mrb[0].mxu0
      %v353 = vadd.f32 0.0, %v352
      %v354 = vpop.f32.mrb[0].mxu0
      %v355 = vpop.f32.mrb[0].mxu0
      %v356 = vadd.f32 0.0, %v355
      %v357 = vpop.f32.mrb[0].mxu0
      %358 = vdwg.mxu0
      %v359 = vmul.f32 %v353, 0.083333336
      %v360 = vmul.f32 %v356, 0.083333336
      %v361 = vld [vmem:[#allocation2] sm:$0xff]
      %v362 = vld [vmem:[#allocation2 + $0x8] sm:$0xff]
      %v363 = vsel %vm311, %v359, -inf
      %364 = vmax.xlane.f32.xlu0 %v363
      %v365 = vpop.xlane.xlu0 %364
      %v366 = vsel %vm311, %v360, -inf
      %367 = vmax.xlane.f32.xlu0 %v366
      %v368 = vpop.xlane.xlu0 %367
      %v369 = vmax.f32 %v361, %v365
      %v370 = vmax.f32 %v362, %v368
      %v371 = vsub.f32 %v361, %v369
      %v372 = vsub.f32 %v362, %v370
      %v373 = vmul.f32 %v371, 1.442695
      %v374 = vpow.pop %v373
      %v375 = vmul.f32 %v372, 1.442695
      %v376 = vpow.pop %v375
      %378 = vset.pattern.permute.xlu0 0
      %379 = vperm.xlu0 %378, %v369
      %v380 = vpop.permute.xlu0 %379
      %383 = vset.pattern.permute.xlu0 0
      %384 = vperm.xlu0 %383, %v370
      %v385 = vpop.permute.xlu0 %384
      %v387 = vsub.f32 %v359, %v380
      %v388 = vsub.f32 %v360, %v385
      %v389 = vmul.f32 %v387, 1.442695
      %v390 = vpow.pop %v389
      %v391 = vmul.f32 %v388, 1.442695
      %v392 = vpow.pop %v391
      %v393 = vld [vmem:[#allocation3] sm:$0xff]
      %v394 = vld [vmem:[#allocation3 + $0x8] sm:$0xff]
      %v395 = vmul.f32 %v374, %v393
      %v396 = vmul.f32 %v376, %v394
      %v397 = vsel %vm311, %v390, 0.0
      %398 = vadd.xlane.f32.xlu0 %v397
      %v399 = vpop.xlane.xlu0 %398
      %v400 = vsel %vm311, %v392, 0.0
      %401 = vadd.xlane.f32.xlu0 %v400
      %v402 = vpop.xlane.xlu0 %401
      %v403 = vadd.f32 %v395, %v399
      %v404 = vadd.f32 %v396, %v402
      %vm405 = vcmask 7168
      %406 = vst.msk [vmem:[#allocation3] sm:$0xff] %vm405, %v403
      %407 = vst.msk [vmem:[#allocation3 + $0x8] sm:$0xff] %vm405, %v404
      %v408 = vld [vmem:[#allocation4] sm:$0xff]
      %v409 = vld [vmem:[#allocation4 + $0x8] sm:$0xff]
      %411 = vset.pattern.permute.xlu0 0
      %412 = vperm.xlu0 %411, %v374
      %v413 = vpop.permute.xlu0 %412
      %416 = vset.pattern.permute.xlu0 0
      %417 = vperm.xlu0 %416, %v376
      %v418 = vpop.permute.xlu0 %417
      %v420 = vmul.f32 %v413, %v408
      %v421 = vmul.f32 %v418, %v409
      %v422 = vpack.c.bf16 %v392, %v390
      %v424 = vsel %vm311, %v422, 0
      %426 = vmatprep.subr.bf16.mxu0 0
      %427 = vmatpush1.bf16.msra.mxu0 %v310
      %428 = vmatprep.subr.bf16.mxu0 0
      %429 = vmatpush1.bf16.msra.mxu0 0
      %430 = vmatprep.subr.bf16.mxu0 0
      %431 = vmatpush1.bf16.msra.mxu0 0
      %432 = vmatprep.subr.bf16.mxu0 0
      %433 = vmatpush1.bf16.msra.mxu0 0
      %434 = vmatprep.subr.bf16.mxu0 0
      %435 = vmatpush1.bf16.msra.mxu0 0
      %436 = vmatprep.subr.bf16.mxu0 0
      %437 = vmatpush1.bf16.msra.mxu0 0
      %438 = vmatprep.subr.bf16.mxu0 0
      %439 = vmatpush1.bf16.msra.mxu0 0
      %440 = vmatprep.subr.bf16.mxu0 0
      %441 = vmatpush1.bf16.msra.mxu0 0
      %442 = vmatprep.subr.bf16.mxu0 0
      %443 = vmatpush1.bf16.msra.mxu0 0
      %444 = vmatprep.subr.bf16.mxu0 0
      %445 = vmatpush1.bf16.msra.mxu0 0
      %446 = vmatprep.subr.bf16.mxu0 0
      %447 = vmatpush1.bf16.msra.mxu0 0
      %448 = vmatprep.subr.bf16.mxu0 0
      %449 = vmatpush1.bf16.msra.mxu0 0
      %450 = vmatprep.subr.bf16.mxu0 0
      %451 = vmatpush1.bf16.msra.mxu0 0
      %452 = vmatprep.subr.bf16.mxu0 0
      %453 = vmatpush1.bf16.msra.mxu0 0
      %454 = vmatprep.subr.bf16.mxu0 0
      %455 = vmatpush1.bf16.msra.mxu0 0
      %456 = vmatprep.subr.bf16.mxu0 0
      %457 = vmatpush1.bf16.msra.mxu0 0
      %458 = vmatprep.mubr.bf16.mxu0 0
      %459 = vmatmul.mubr.bf16.gmra.mrb[0].mxu0 %v424
      %v460 = vpop.f32.mrb[0].mxu0
      %v461 = vadd.f32 0.0, %v460
      %v462 = vpop.f32.mrb[0].mxu0
      %v463 = vpop.f32.mrb[0].mxu0
      %v464 = vadd.f32 0.0, %v463
      %v465 = vpop.f32.mrb[0].mxu0
      %466 = vdwg.mxu0
      %v467 = vadd.f32 %v420, %v461
      %v468 = vadd.f32 %v421, %v464
      %469 = vst.msk [vmem:[#allocation4] sm:$0xff] %vm311, %v467
      %470 = vst.msk [vmem:[#allocation4 + $0x8] sm:$0xff] %vm311, %v468
      %471 = vst.msk [vmem:[#allocation2] sm:$0xff] %vm405, %v369
      %472 = vst.msk [vmem:[#allocation2 + $0x8] sm:$0xff] %vm405, %v370
      // Predicated region
      $region37: #{t2t_vit_forward.25} parent=31 // pred_check
        %p473 = pneg %p290
      $region38: #{t2t_vit_forward.25} parent=31 // pred_check_branch
        %475 = sbr.rel (%p473) target = $region40
      $region39: #{t2t_vit_forward.25} parent=31 // pred_region
        %v476 = vld [vmem:[#allocation4] sm:$0xff]
        %v477 = vld [vmem:[#allocation4 + $0x8] sm:$0xff]
        %v478 = vld [vmem:[#allocation3] sm:$0xff]
        %v479 = vld [vmem:[#allocation3 + $0x8] sm:$0xff]
        %v480 = vrcp.pop %v478
        %v481 = vrcp.pop %v479
        %483 = vset.pattern.permute.xlu0 0
        %484 = vperm.xlu0 %483, %v480
        %v485 = vpop.permute.xlu0 %484
        %488 = vset.pattern.permute.xlu0 0
        %489 = vperm.xlu0 %488, %v481
        %v490 = vpop.permute.xlu0 %489
        %v492 = vmul.f32 %v476, %v485
        %v493 = vmul.f32 %v477, %v490
        %494 = vst.msk [vmem:[%s287] sm:$0xff] %vm311, %v492
        %495 = vst.msk [vmem:[%s287 + $0x8] sm:$0xff] %vm311, %v493
      $region40: #{t2t_vit_forward.25} parent=31 // pred_fallthru
        _
      %s496 = smul.u32 2, %s20
      %p497 = scmp.lt.s32.totalorder %s19, 1
      %s498 = scalar_select %p497, %s19, 1
      %p499 = scmp.lt.s32.totalorder %s496, 1
      %s500 = scalar_select %p499, %s496, 1
      %s501 = smul.addr %s498, 2
      %s502 = sadd.s32 %s500, %s501
      %s503 = smul.addr %s502, 8
      %s504 = scalar_lea.vmem %s3, %s503
      // Predicated region
      $region41: #{t2t_vit_forward.25} parent=31 // pred_check
        %p505 = pneg %p137
      $region42: #{t2t_vit_forward.25} parent=31 // pred_check_branch
        %507 = sbr.rel (%p505) target = $region44
      $region43: #{t2t_vit_forward.25} parent=31 // pred_region
        %s508 = smul.u32 2, %s20
      $region44: #{t2t_vit_forward.25} parent=31 // pred_fallthru
        _
    $region32: #{t2t_vit_forward.25} parent=5 // pred_fallthru
      _
    %p509 = scmp.le.s32.totalorder 2, %s9
    // Predicated region
    $region45: #{t2t_vit_forward.25} parent=5 // pred_check
      %p510 = pneg %p509
    $region46: #{t2t_vit_forward.25} parent=5 // pred_check_branch
      %512 = sbr.rel (%p510) target = $region48
    $region47: #{t2t_vit_forward.25} parent=5 // pred_region
      %s513 = ssub.s32 %s9, 2
      // Predicated region
      $region49: #{t2t_vit_forward.25} parent=47 // pred_check
        %p514 = pneg %p143
      $region50: #{t2t_vit_forward.25} parent=47 // pred_check_branch
        %516 = sbr.rel (%p514) target = $region52
      $region51: #{t2t_vit_forward.25} parent=47 // pred_region
        %s517 = smul.u32 2, %s23
        %p518 = scmp.lt.s32.totalorder %s22, 1
        %s519 = scalar_select %p518, %s22, 1
        %p520 = scmp.lt.s32.totalorder %s517, 1
        %s521 = scalar_select %p520, %s517, 1
        %s522 = smul.addr %s519, 2
        %s523 = sadd.s32 %s521, %s522
        %s524 = smul.addr %s523, 8
        %s525 = scalar_lea.vmem %s3, %s524
      $region52: #{t2t_vit_forward.25} parent=47 // pred_fallthru
        _
    $region48: #{t2t_vit_forward.25} parent=5 // pred_fallthru
      _
  $region6: #{t2t_vit_forward.25} parent=0 // loop_footer
    %s13 = sadd.s32 1, %s9
  $region7: #{t2t_vit_forward.25} parent=0 // loop_footer_branch
    %8 = sbr.rel target = $region3
  $region8: #{t2t_vit_forward.25} parent=0 // loop_exit
    _

// kernel: t2t_vit_forward.28
$region0: #{t2t_vit_forward.28}
  #allocation0 [shape = 'u32[]', space=smem, size = 0x4, offset = 0x4, fixed_abs, tag = 'smem constant byte address 0x4 - core index']
  #allocation1 [shape = 'u32[144,128]{1,0:T(1,128)}', space=vmem, size = 0x12000, scoped, tag = 'internal scratch']
  #allocation2 [shape = 'f32[8,128]{1,0:T(8,128)}', space=vmem, size = 0x1000, scoped, tag = 'scratch operand']
  %s0 = inlined_call_operand.vmem [shape: f32[8,256], index: 0, kind: input, shape index: {}]
  %s1 = inlined_call_operand.vmem [shape: f32[256,128], index: 1, kind: input, shape index: {}]
  %s2 = inlined_call_operand.vmem [shape: f32[1,128], index: 2, kind: input, shape index: {}]
  %s3 = inlined_call_operand.vmem [shape: f32[8,128], index: 3, kind: input, shape index: {}]
  %s4 = inlined_call_operand.vmem [shape: f32[8,128], index: 4, kind: output, shape index: {}]
  %s5 = sld [smem:[#allocation0]]
  $region34: #{t2t_vit_forward.28} parent=0
    _
  %s7 = ssub.s32 1, %s5
  %s8 = scalar_select 0, %s7, %s5
  // Predicated region
  $region2: #{t2t_vit_forward.28} parent=0 // pred_check
    _
  $region3: #{t2t_vit_forward.28} parent=0 // pred_check_branch
    %10 = sbr.rel (0) target = $region5
  $region4: #{t2t_vit_forward.28} parent=0 // pred_region
    _
  $region5: #{t2t_vit_forward.28} parent=0 // pred_fallthru
    _
  // Predicated region
  $region6: #{t2t_vit_forward.28} parent=0 // pred_check
    _
  $region7: #{t2t_vit_forward.28} parent=0 // pred_check_branch
    %12 = sbr.rel (0) target = $region9
  $region8: #{t2t_vit_forward.28} parent=0 // pred_region
    _
  $region9: #{t2t_vit_forward.28} parent=0 // pred_fallthru
    _
  // Predicated region
  $region10: #{t2t_vit_forward.28} parent=0 // pred_check
    _
  $region11: #{t2t_vit_forward.28} parent=0 // pred_check_branch
    %14 = sbr.rel (0) target = $region13
  $region12: #{t2t_vit_forward.28} parent=0 // pred_region
    _
  $region13: #{t2t_vit_forward.28} parent=0 // pred_fallthru
    _
  // Predicated region
  $region14: #{t2t_vit_forward.28} parent=0 // pred_check
    _
  $region15: #{t2t_vit_forward.28} parent=0 // pred_check_branch
    %16 = sbr.rel (0) target = $region17
  $region16: #{t2t_vit_forward.28} parent=0 // pred_region
    _
  $region17: #{t2t_vit_forward.28} parent=0 // pred_fallthru
    _
  %p18 = scmp.eq.s32.totalorder 0, 0
  // Predicated region
  $region18: #{t2t_vit_forward.28} parent=0 // pred_check
    %p19 = pneg %p18
  $region19: #{t2t_vit_forward.28} parent=0 // pred_check_branch
    %21 = sbr.rel (%p19) target = $region21
  $region20: #{t2t_vit_forward.28} parent=0 // pred_region
    %22 = vst [vmem:[#allocation2] sm:$0xff] 0.0
  $region21: #{t2t_vit_forward.28} parent=0 // pred_fallthru
    _
  %v23 = vld [vmem:[%s0] sm:$0xff]
  %v24 = vld [vmem:[%s0 + $0x8] sm:$0xff]
  %v25 = vld [vmem:[#allocation2] sm:$0xff]
  %v26 = vpack.c.bf16 %v23, %v23
  %v27 = vpack.c.bf16 %v24, %v24
  %v28 = vld [vmem:[%s1] sm:$0xff]
  %v29 = vld [vmem:[%s1 + $0x8] sm:$0xff]
  %v30 = vld [vmem:[%s1 + $0x10] sm:$0xff]
  %v31 = vld [vmem:[%s1 + $0x18] sm:$0xff]
  %v32 = vld [vmem:[%s1 + $0x20] sm:$0xff]
  %v33 = vld [vmem:[%s1 + $0x28] sm:$0xff]
  %v34 = vld [vmem:[%s1 + $0x30] sm:$0xff]
  %v35 = vld [vmem:[%s1 + $0x38] sm:$0xff]
  %v36 = vld [vmem:[%s1 + $0x40] sm:$0xff]
  %v37 = vld [vmem:[%s1 + $0x48] sm:$0xff]
  %v38 = vld [vmem:[%s1 + $0x50] sm:$0xff]
  %v39 = vld [vmem:[%s1 + $0x58] sm:$0xff]
  %v40 = vld [vmem:[%s1 + $0x60] sm:$0xff]
  %v41 = vld [vmem:[%s1 + $0x68] sm:$0xff]
  %v42 = vld [vmem:[%s1 + $0x70] sm:$0xff]
  %v43 = vld [vmem:[%s1 + $0x78] sm:$0xff]
  %v44 = vld [vmem:[%s1 + $0x80] sm:$0xff]
  %v45 = vld [vmem:[%s1 + $0x88] sm:$0xff]
  %v46 = vld [vmem:[%s1 + $0x90] sm:$0xff]
  %v47 = vld [vmem:[%s1 + $0x98] sm:$0xff]
  %v48 = vld [vmem:[%s1 + $0xa0] sm:$0xff]
  %v49 = vld [vmem:[%s1 + $0xa8] sm:$0xff]
  %v50 = vld [vmem:[%s1 + $0xb0] sm:$0xff]
  %v51 = vld [vmem:[%s1 + $0xb8] sm:$0xff]
  %v52 = vld [vmem:[%s1 + $0xc0] sm:$0xff]
  %v53 = vld [vmem:[%s1 + $0xc8] sm:$0xff]
  %v54 = vld [vmem:[%s1 + $0xd0] sm:$0xff]
  %v55 = vld [vmem:[%s1 + $0xd8] sm:$0xff]
  %v56 = vld [vmem:[%s1 + $0xe0] sm:$0xff]
  %v57 = vld [vmem:[%s1 + $0xe8] sm:$0xff]
  %v58 = vld [vmem:[%s1 + $0xf0] sm:$0xff]
  %v59 = vld [vmem:[%s1 + $0xf8] sm:$0xff]
  %v60 = vpack.c.bf16 %v29, %v28
  %v61 = vpack.c.bf16 %v31, %v30
  %v62 = vpack.c.bf16 %v33, %v32
  %v63 = vpack.c.bf16 %v35, %v34
  %v64 = vpack.c.bf16 %v37, %v36
  %v65 = vpack.c.bf16 %v39, %v38
  %v66 = vpack.c.bf16 %v41, %v40
  %v67 = vpack.c.bf16 %v43, %v42
  %v68 = vpack.c.bf16 %v45, %v44
  %v69 = vpack.c.bf16 %v47, %v46
  %v70 = vpack.c.bf16 %v49, %v48
  %v71 = vpack.c.bf16 %v51, %v50
  %v72 = vpack.c.bf16 %v53, %v52
  %v73 = vpack.c.bf16 %v55, %v54
  %v74 = vpack.c.bf16 %v57, %v56
  %v75 = vpack.c.bf16 %v59, %v58
  %76 = vmatprep.subr.bf16.mxu0 0
  %77 = vmatpush1.bf16.msra.mxu0 %v60
  %78 = vmatprep.subr.bf16.mxu0 0
  %79 = vmatpush1.bf16.msra.mxu0 %v61
  %80 = vmatprep.subr.bf16.mxu0 0
  %81 = vmatpush1.bf16.msra.mxu0 %v62
  %82 = vmatprep.subr.bf16.mxu0 0
  %83 = vmatpush1.bf16.msra.mxu0 %v63
  %84 = vmatprep.subr.bf16.mxu0 0
  %85 = vmatpush1.bf16.msra.mxu0 %v64
  %86 = vmatprep.subr.bf16.mxu0 0
  %87 = vmatpush1.bf16.msra.mxu0 %v65
  %88 = vmatprep.subr.bf16.mxu0 0
  %89 = vmatpush1.bf16.msra.mxu0 %v66
  %90 = vmatprep.subr.bf16.mxu0 0
  %91 = vmatpush1.bf16.msra.mxu0 %v67
  %92 = vmatprep.subr.bf16.mxu0 0
  %93 = vmatpush1.bf16.msra.mxu0 %v68
  %94 = vmatprep.subr.bf16.mxu0 0
  %95 = vmatpush1.bf16.msra.mxu0 %v69
  %96 = vmatprep.subr.bf16.mxu0 0
  %97 = vmatpush1.bf16.msra.mxu0 %v70
  %98 = vmatprep.subr.bf16.mxu0 0
  %99 = vmatpush1.bf16.msra.mxu0 %v71
  %100 = vmatprep.subr.bf16.mxu0 0
  %101 = vmatpush1.bf16.msra.mxu0 %v72
  %102 = vmatprep.subr.bf16.mxu0 0
  %103 = vmatpush1.bf16.msra.mxu0 %v73
  %104 = vmatprep.subr.bf16.mxu0 0
  %105 = vmatpush1.bf16.msra.mxu0 %v74
  %106 = vmatprep.subr.bf16.mxu0 0
  %107 = vmatpush1.bf16.msra.mxu0 %v75
  %108 = vmatprep.mubr.bf16.mxu0 %v27
  %109 = vmatmul.mubr.bf16.gmra.mrb[0].mxu0 %v26
  %v110 = vpop.f32.mrb[0].mxu0
  %v111 = vadd.f32 0.0, %v110
  %v112 = vpop.f32.mrb[0].mxu0
  %v113 = vpop.f32.mrb[0].mxu0
  %v114 = vpop.f32.mrb[0].mxu0
  %115 = vdwg.mxu0
  %v116 = vadd.f32 %v25, %v111
  %117 = vst [vmem:[#allocation2] sm:$0xff] %v116
  // Predicated region
  $region22: #{t2t_vit_forward.28} parent=0 // pred_check
    %p118 = pneg %p18
  $region23: #{t2t_vit_forward.28} parent=0 // pred_check_branch
    %120 = sbr.rel (%p118) target = $region25
  $region24: #{t2t_vit_forward.28} parent=0 // pred_region
    %v121 = vld [vmem:[#allocation2] sm:$0xff]
    %v122 = vld [vmem:[%s2] sm:$0x1]
    %v124 = vlaneseq
    %v125 = vshrl.u32 %v124, 7
    %v126 = vsub.s32 0, %v125
    %v127 = vrot.slane %v122, %v126
    %v129 = vadd.f32 %v121, %v127
    %v130 = vld [vmem:[%s3] sm:$0xff]
    %v131 = vadd.f32 %v129, %v130
    %132 = vst [vmem:[%s4] sm:$0xff] %v131
  $region25: #{t2t_vit_forward.28} parent=0 // pred_fallthru
    _
  // Predicated region
  $region26: #{t2t_vit_forward.28} parent=0 // pred_check
    _
  $region27: #{t2t_vit_forward.28} parent=0 // pred_check_branch
    %134 = sbr.rel (0) target = $region29
  $region28: #{t2t_vit_forward.28} parent=0 // pred_region
    _
  $region29: #{t2t_vit_forward.28} parent=0 // pred_fallthru
    _
  // Predicated region
  $region30: #{t2t_vit_forward.28} parent=0 // pred_check
    _
  $region31: #{t2t_vit_forward.28} parent=0 // pred_check_branch
    %136 = sbr.rel (0) target = $region33
  $region32: #{t2t_vit_forward.28} parent=0 // pred_region
    _
  $region33: #{t2t_vit_forward.28} parent=0 // pred_fallthru
    _

// kernel: t2t_vit_forward.29
$region0: #{t2t_vit_forward.29}
  #allocation0 [shape = 'u32[]', space=smem, size = 0x4, offset = 0x4, fixed_abs, tag = 'smem constant byte address 0x4 - core index']
  #allocation1 [shape = 'u32[144,128]{1,0:T(1,128)}', space=vmem, size = 0x12000, scoped, tag = 'internal scratch']
  #allocation2 [shape = 'f32[8,128]{1,0:T(8,128)}', space=vmem, size = 0x1000, scoped, tag = 'scratch operand']
  %s0 = inlined_call_operand.vmem [shape: f32[8,128], index: 0, kind: input, shape index: {}]
  %s1 = inlined_call_operand.vmem [shape: f32[128,128], index: 1, kind: input, shape index: {}]
  %s2 = inlined_call_operand.vmem [shape: f32[1,128], index: 2, kind: input, shape index: {}]
  %s3 = inlined_call_operand.vmem [shape: f32[8,1], index: 3, kind: input, shape index: {}]
  %s4 = inlined_call_operand.vmem [shape: f32[8,1], index: 4, kind: input, shape index: {}]
  %s5 = inlined_call_operand.vmem [shape: f32[8,128], index: 5, kind: output, shape index: {}]
  %s6 = sld [smem:[#allocation0]]
  $region38: #{t2t_vit_forward.29} parent=0
    _
  %s8 = ssub.s32 1, %s6
  %s9 = scalar_select 0, %s8, %s6
  // Predicated region
  $region2: #{t2t_vit_forward.29} parent=0 // pred_check
    _
  $region3: #{t2t_vit_forward.29} parent=0 // pred_check_branch
    %11 = sbr.rel (0) target = $region5
  $region4: #{t2t_vit_forward.29} parent=0 // pred_region
    _
  $region5: #{t2t_vit_forward.29} parent=0 // pred_fallthru
    _
  // Predicated region
  $region6: #{t2t_vit_forward.29} parent=0 // pred_check
    _
  $region7: #{t2t_vit_forward.29} parent=0 // pred_check_branch
    %13 = sbr.rel (0) target = $region9
  $region8: #{t2t_vit_forward.29} parent=0 // pred_region
    _
  $region9: #{t2t_vit_forward.29} parent=0 // pred_fallthru
    _
  // Predicated region
  $region10: #{t2t_vit_forward.29} parent=0 // pred_check
    _
  $region11: #{t2t_vit_forward.29} parent=0 // pred_check_branch
    %15 = sbr.rel (0) target = $region13
  $region12: #{t2t_vit_forward.29} parent=0 // pred_region
    _
  $region13: #{t2t_vit_forward.29} parent=0 // pred_fallthru
    _
  // Predicated region
  $region14: #{t2t_vit_forward.29} parent=0 // pred_check
    _
  $region15: #{t2t_vit_forward.29} parent=0 // pred_check_branch
    %17 = sbr.rel (0) target = $region17
  $region16: #{t2t_vit_forward.29} parent=0 // pred_region
    _
  $region17: #{t2t_vit_forward.29} parent=0 // pred_fallthru
    _
  // Predicated region
  $region18: #{t2t_vit_forward.29} parent=0 // pred_check
    _
  $region19: #{t2t_vit_forward.29} parent=0 // pred_check_branch
    %19 = sbr.rel (0) target = $region21
  $region20: #{t2t_vit_forward.29} parent=0 // pred_region
    _
  $region21: #{t2t_vit_forward.29} parent=0 // pred_fallthru
    _
  %p21 = scmp.eq.s32.totalorder 0, 0
  // Predicated region
  $region22: #{t2t_vit_forward.29} parent=0 // pred_check
    %p22 = pneg %p21
  $region23: #{t2t_vit_forward.29} parent=0 // pred_check_branch
    %24 = sbr.rel (%p22) target = $region25
  $region24: #{t2t_vit_forward.29} parent=0 // pred_region
    %25 = vst [vmem:[#allocation2] sm:$0xff] 0.0
  $region25: #{t2t_vit_forward.29} parent=0 // pred_fallthru
    _
  %v26 = vld [vmem:[%s0] sm:$0xff]
  %v27 = vld [vmem:[%s3] sm:$0xff]
  %29 = vset.pattern.permute.xlu0 0
  %30 = vperm.xlu0 %29, %v27
  %v31 = vpop.permute.xlu0 %30
  %v33 = vmul.f32 %v26, %v31
  %v34 = vld [vmem:[%s4] sm:$0xff]
  %36 = vset.pattern.permute.xlu0 0
  %37 = vperm.xlu0 %36, %v34
  %v38 = vpop.permute.xlu0 %37
  %v40 = vadd.f32 %v33, %v38
  %v41 = vld [vmem:[#allocation2] sm:$0xff]
  %v42 = vpack.c.bf16 %v40, %v40
  %v43 = vld [vmem:[%s1] sm:$0xff]
  %v44 = vld [vmem:[%s1 + $0x8] sm:$0xff]
  %v45 = vld [vmem:[%s1 + $0x10] sm:$0xff]
  %v46 = vld [vmem:[%s1 + $0x18] sm:$0xff]
  %v47 = vld [vmem:[%s1 + $0x20] sm:$0xff]
  %v48 = vld [vmem:[%s1 + $0x28] sm:$0xff]
  %v49 = vld [vmem:[%s1 + $0x30] sm:$0xff]
  %v50 = vld [vmem:[%s1 + $0x38] sm:$0xff]
  %v51 = vld [vmem:[%s1 + $0x40] sm:$0xff]
  %v52 = vld [vmem:[%s1 + $0x48] sm:$0xff]
  %v53 = vld [vmem:[%s1 + $0x50] sm:$0xff]
  %v54 = vld [vmem:[%s1 + $0x58] sm:$0xff]
  %v55 = vld [vmem:[%s1 + $0x60] sm:$0xff]
  %v56 = vld [vmem:[%s1 + $0x68] sm:$0xff]
  %v57 = vld [vmem:[%s1 + $0x70] sm:$0xff]
  %v58 = vld [vmem:[%s1 + $0x78] sm:$0xff]
  %v59 = vpack.c.bf16 %v44, %v43
  %v60 = vpack.c.bf16 %v46, %v45
  %v61 = vpack.c.bf16 %v48, %v47
  %v62 = vpack.c.bf16 %v50, %v49
  %v63 = vpack.c.bf16 %v52, %v51
  %v64 = vpack.c.bf16 %v54, %v53
  %v65 = vpack.c.bf16 %v56, %v55
  %v66 = vpack.c.bf16 %v58, %v57
  %67 = vmatprep.subr.bf16.mxu0 0
  %68 = vmatpush1.bf16.msra.mxu0 %v59
  %69 = vmatprep.subr.bf16.mxu0 0
  %70 = vmatpush1.bf16.msra.mxu0 %v60
  %71 = vmatprep.subr.bf16.mxu0 0
  %72 = vmatpush1.bf16.msra.mxu0 %v61
  %73 = vmatprep.subr.bf16.mxu0 0
  %74 = vmatpush1.bf16.msra.mxu0 %v62
  %75 = vmatprep.subr.bf16.mxu0 0
  %76 = vmatpush1.bf16.msra.mxu0 %v63
  %77 = vmatprep.subr.bf16.mxu0 0
  %78 = vmatpush1.bf16.msra.mxu0 %v64
  %79 = vmatprep.subr.bf16.mxu0 0
  %80 = vmatpush1.bf16.msra.mxu0 %v65
  %81 = vmatprep.subr.bf16.mxu0 0
  %82 = vmatpush1.bf16.msra.mxu0 %v66
  %83 = vmatprep.subr.bf16.mxu0 0
  %84 = vmatpush1.bf16.msra.mxu0 0
  %85 = vmatprep.subr.bf16.mxu0 0
  %86 = vmatpush1.bf16.msra.mxu0 0
  %87 = vmatprep.subr.bf16.mxu0 0
  %88 = vmatpush1.bf16.msra.mxu0 0
  %89 = vmatprep.subr.bf16.mxu0 0
  %90 = vmatpush1.bf16.msra.mxu0 0
  %91 = vmatprep.subr.bf16.mxu0 0
  %92 = vmatpush1.bf16.msra.mxu0 0
  %93 = vmatprep.subr.bf16.mxu0 0
  %94 = vmatpush1.bf16.msra.mxu0 0
  %95 = vmatprep.subr.bf16.mxu0 0
  %96 = vmatpush1.bf16.msra.mxu0 0
  %97 = vmatprep.subr.bf16.mxu0 0
  %98 = vmatpush1.bf16.msra.mxu0 0
  %99 = vmatprep.mubr.bf16.mxu0 0
  %100 = vmatmul.mubr.bf16.gmra.mrb[0].mxu0 %v42
  %v101 = vpop.f32.mrb[0].mxu0
  %v102 = vadd.f32 0.0, %v101
  %v103 = vpop.f32.mrb[0].mxu0
  %v104 = vpop.f32.mrb[0].mxu0
  %v105 = vpop.f32.mrb[0].mxu0
  %106 = vdwg.mxu0
  %v107 = vadd.f32 %v41, %v102
  %108 = vst [vmem:[#allocation2] sm:$0xff] %v107
  // Predicated region
  $region26: #{t2t_vit_forward.29} parent=0 // pred_check
    %p109 = pneg %p21
  $region27: #{t2t_vit_forward.29} parent=0 // pred_check_branch
    %111 = sbr.rel (%p109) target = $region29
  $region28: #{t2t_vit_forward.29} parent=0 // pred_region
    %v112 = vld [vmem:[#allocation2] sm:$0xff]
    %v113 = vld [vmem:[%s2] sm:$0x1]
    %v115 = vlaneseq
    %v116 = vshrl.u32 %v115, 7
    %v117 = vsub.s32 0, %v116
    %v118 = vrot.slane %v113, %v117
    %v120 = vadd.f32 %v112, %v118
    %121 = vst [vmem:[%s5] sm:$0xff] %v120
  $region29: #{t2t_vit_forward.29} parent=0 // pred_fallthru
    _
  // Predicated region
  $region30: #{t2t_vit_forward.29} parent=0 // pred_check
    _
  $region31: #{t2t_vit_forward.29} parent=0 // pred_check_branch
    %123 = sbr.rel (0) target = $region33
  $region32: #{t2t_vit_forward.29} parent=0 // pred_region
    _
  $region33: #{t2t_vit_forward.29} parent=0 // pred_fallthru
    _
  // Predicated region
  $region34: #{t2t_vit_forward.29} parent=0 // pred_check
    _
  $region35: #{t2t_vit_forward.29} parent=0 // pred_check_branch
    %125 = sbr.rel (0) target = $region37
  $region36: #{t2t_vit_forward.29} parent=0 // pred_region
    _
  $region37: #{t2t_vit_forward.29} parent=0 // pred_fallthru
    _

// kernel: t2t_vit_forward.31
$region0: #{t2t_vit_forward.31}
  #allocation0 [shape = 'u32[]', space=smem, size = 0x4, offset = 0x4, fixed_abs, tag = 'smem constant byte address 0x4 - core index']
  #allocation1 [shape = 'u32[144,128]{1,0:T(1,128)}', space=vmem, size = 0x12000, scoped, tag = 'internal scratch']
  #allocation2 [shape = 'f32[8,128]{1,0:T(8,128)}', space=vmem, size = 0x1000, scoped, tag = 'scratch operand']
  %s0 = inlined_call_operand.vmem [shape: f32[8,128], index: 0, kind: input, shape index: {}]
  %s1 = inlined_call_operand.vmem [shape: f32[128,128], index: 1, kind: input, shape index: {}]
  %s2 = inlined_call_operand.vmem [shape: f32[1,128], index: 2, kind: input, shape index: {}]
  %s3 = inlined_call_operand.vmem [shape: f32[8,128], index: 3, kind: input, shape index: {}]
  %s4 = inlined_call_operand.vmem [shape: f32[8,128], index: 4, kind: output, shape index: {}]
  %s5 = sld [smem:[#allocation0]]
  $region34: #{t2t_vit_forward.31} parent=0
    _
  %s7 = ssub.s32 1, %s5
  %s8 = scalar_select 0, %s7, %s5
  // Predicated region
  $region2: #{t2t_vit_forward.31} parent=0 // pred_check
    _
  $region3: #{t2t_vit_forward.31} parent=0 // pred_check_branch
    %10 = sbr.rel (0) target = $region5
  $region4: #{t2t_vit_forward.31} parent=0 // pred_region
    _
  $region5: #{t2t_vit_forward.31} parent=0 // pred_fallthru
    _
  // Predicated region
  $region6: #{t2t_vit_forward.31} parent=0 // pred_check
    _
  $region7: #{t2t_vit_forward.31} parent=0 // pred_check_branch
    %12 = sbr.rel (0) target = $region9
  $region8: #{t2t_vit_forward.31} parent=0 // pred_region
    _
  $region9: #{t2t_vit_forward.31} parent=0 // pred_fallthru
    _
  // Predicated region
  $region10: #{t2t_vit_forward.31} parent=0 // pred_check
    _
  $region11: #{t2t_vit_forward.31} parent=0 // pred_check_branch
    %14 = sbr.rel (0) target = $region13
  $region12: #{t2t_vit_forward.31} parent=0 // pred_region
    _
  $region13: #{t2t_vit_forward.31} parent=0 // pred_fallthru
    _
  // Predicated region
  $region14: #{t2t_vit_forward.31} parent=0 // pred_check
    _
  $region15: #{t2t_vit_forward.31} parent=0 // pred_check_branch
    %16 = sbr.rel (0) target = $region17
  $region16: #{t2t_vit_forward.31} parent=0 // pred_region
    _
  $region17: #{t2t_vit_forward.31} parent=0 // pred_fallthru
    _
  %p18 = scmp.eq.s32.totalorder 0, 0
  // Predicated region
  $region18: #{t2t_vit_forward.31} parent=0 // pred_check
    %p19 = pneg %p18
  $region19: #{t2t_vit_forward.31} parent=0 // pred_check_branch
    %21 = sbr.rel (%p19) target = $region21
  $region20: #{t2t_vit_forward.31} parent=0 // pred_region
    %22 = vst [vmem:[#allocation2] sm:$0xff] 0.0
  $region21: #{t2t_vit_forward.31} parent=0 // pred_fallthru
    _
  %v23 = vld [vmem:[%s0] sm:$0xff]
  %v24 = vld [vmem:[#allocation2] sm:$0xff]
  %v25 = vpack.c.bf16 %v23, %v23
  %v26 = vld [vmem:[%s1] sm:$0xff]
  %v27 = vld [vmem:[%s1 + $0x8] sm:$0xff]
  %v28 = vld [vmem:[%s1 + $0x10] sm:$0xff]
  %v29 = vld [vmem:[%s1 + $0x18] sm:$0xff]
  %v30 = vld [vmem:[%s1 + $0x20] sm:$0xff]
  %v31 = vld [vmem:[%s1 + $0x28] sm:$0xff]
  %v32 = vld [vmem:[%s1 + $0x30] sm:$0xff]
  %v33 = vld [vmem:[%s1 + $0x38] sm:$0xff]
  %v34 = vld [vmem:[%s1 + $0x40] sm:$0xff]
  %v35 = vld [vmem:[%s1 + $0x48] sm:$0xff]
  %v36 = vld [vmem:[%s1 + $0x50] sm:$0xff]
  %v37 = vld [vmem:[%s1 + $0x58] sm:$0xff]
  %v38 = vld [vmem:[%s1 + $0x60] sm:$0xff]
  %v39 = vld [vmem:[%s1 + $0x68] sm:$0xff]
  %v40 = vld [vmem:[%s1 + $0x70] sm:$0xff]
  %v41 = vld [vmem:[%s1 + $0x78] sm:$0xff]
  %v42 = vpack.c.bf16 %v27, %v26
  %v43 = vpack.c.bf16 %v29, %v28
  %v44 = vpack.c.bf16 %v31, %v30
  %v45 = vpack.c.bf16 %v33, %v32
  %v46 = vpack.c.bf16 %v35, %v34
  %v47 = vpack.c.bf16 %v37, %v36
  %v48 = vpack.c.bf16 %v39, %v38
  %v49 = vpack.c.bf16 %v41, %v40
  %50 = vmatprep.subr.bf16.mxu0 0
  %51 = vmatpush1.bf16.msra.mxu0 %v42
  %52 = vmatprep.subr.bf16.mxu0 0
  %53 = vmatpush1.bf16.msra.mxu0 %v43
  %54 = vmatprep.subr.bf16.mxu0 0
  %55 = vmatpush1.bf16.msra.mxu0 %v44
  %56 = vmatprep.subr.bf16.mxu0 0
  %57 = vmatpush1.bf16.msra.mxu0 %v45
  %58 = vmatprep.subr.bf16.mxu0 0
  %59 = vmatpush1.bf16.msra.mxu0 %v46
  %60 = vmatprep.subr.bf16.mxu0 0
  %61 = vmatpush1.bf16.msra.mxu0 %v47
  %62 = vmatprep.subr.bf16.mxu0 0
  %63 = vmatpush1.bf16.msra.mxu0 %v48
  %64 = vmatprep.subr.bf16.mxu0 0
  %65 = vmatpush1.bf16.msra.mxu0 %v49
  %66 = vmatprep.subr.bf16.mxu0 0
  %67 = vmatpush1.bf16.msra.mxu0 0
  %68 = vmatprep.subr.bf16.mxu0 0
  %69 = vmatpush1.bf16.msra.mxu0 0
  %70 = vmatprep.subr.bf16.mxu0 0
  %71 = vmatpush1.bf16.msra.mxu0 0
  %72 = vmatprep.subr.bf16.mxu0 0
  %73 = vmatpush1.bf16.msra.mxu0 0
  %74 = vmatprep.subr.bf16.mxu0 0
  %75 = vmatpush1.bf16.msra.mxu0 0
  %76 = vmatprep.subr.bf16.mxu0 0
  %77 = vmatpush1.bf16.msra.mxu0 0
  %78 = vmatprep.subr.bf16.mxu0 0
  %79 = vmatpush1.bf16.msra.mxu0 0
  %80 = vmatprep.subr.bf16.mxu0 0
  %81 = vmatpush1.bf16.msra.mxu0 0
  %82 = vmatprep.mubr.bf16.mxu0 0
  %83 = vmatmul.mubr.bf16.gmra.mrb[0].mxu0 %v25
  %v84 = vpop.f32.mrb[0].mxu0
  %v85 = vadd.f32 0.0, %v84
  %v86 = vpop.f32.mrb[0].mxu0
  %v87 = vpop.f32.mrb[0].mxu0
  %v88 = vpop.f32.mrb[0].mxu0
  %89 = vdwg.mxu0
  %v90 = vadd.f32 %v24, %v85
  %91 = vst [vmem:[#allocation2] sm:$0xff] %v90
  // Predicated region
  $region22: #{t2t_vit_forward.31} parent=0 // pred_check
    %p92 = pneg %p18
  $region23: #{t2t_vit_forward.31} parent=0 // pred_check_branch
    %94 = sbr.rel (%p92) target = $region25
  $region24: #{t2t_vit_forward.31} parent=0 // pred_region
    %v95 = vld [vmem:[#allocation2] sm:$0xff]
    %v96 = vld [vmem:[%s2] sm:$0x1]
    %v98 = vlaneseq
    %v99 = vshrl.u32 %v98, 7
    %v100 = vsub.s32 0, %v99
    %v101 = vrot.slane %v96, %v100
    %v103 = vadd.f32 %v95, %v101
    %v104 = vld [vmem:[%s3] sm:$0xff]
    %v105 = vadd.f32 %v103, %v104
    %106 = vst [vmem:[%s4] sm:$0xff] %v105
  $region25: #{t2t_vit_forward.31} parent=0 // pred_fallthru
    _
  // Predicated region
  $region26: #{t2t_vit_forward.31} parent=0 // pred_check
    _
  $region27: #{t2t_vit_forward.31} parent=0 // pred_check_branch
    %108 = sbr.rel (0) target = $region29
  $region28: #{t2t_vit_forward.31} parent=0 // pred_region
    _
  $region29: #{t2t_vit_forward.31} parent=0 // pred_fallthru
    _
  // Predicated region
  $region30: #{t2t_vit_forward.31} parent=0 // pred_check
    _
  $region31: #{t2t_vit_forward.31} parent=0 // pred_check_branch
    %110 = sbr.rel (0) target = $region33
  $region32: #{t2t_vit_forward.31} parent=0 // pred_region
    _
  $region33: #{t2t_vit_forward.31} parent=0 // pred_fallthru
    _

// kernel: t2t_vit_forward.30
$region0: #{t2t_vit_forward.30}
  #allocation0 [shape = 'u32[]', space=smem, size = 0x4, offset = 0x4, fixed_abs, tag = 'smem constant byte address 0x4 - core index']
  #allocation1 [shape = 'u32[144,128]{1,0:T(1,128)}', space=vmem, size = 0x12000, scoped, tag = 'internal scratch']
  #allocation2 [shape = 'f32[4,1]{1,0:T(4,128)}', space=vmem, size = 0x800, scoped, tag = 'scratch operand']
  #allocation3 [shape = 'f32[4,1]{1,0:T(4,128)}', space=vmem, size = 0x800, scoped, tag = 'scratch operand']
  #allocation4 [shape = 'f32[4,16]{1,0:T(4,128)}', space=vmem, size = 0x800, scoped, tag = 'scratch operand']
  %s0 = inlined_call_operand.vmem [shape: f32[4,4,16], index: 0, kind: input, shape index: {}]
  %s1 = inlined_call_operand.vmem [shape: f32[4,4,16], index: 1, kind: input, shape index: {}]
  %s2 = inlined_call_operand.vmem [shape: f32[4,4,16], index: 2, kind: input, shape index: {}]
  %s3 = inlined_call_operand.vmem [shape: f32[4,4,16], index: 3, kind: output, shape index: {}]
  %s4 = sld [smem:[#allocation0]]
  $region53: #{t2t_vit_forward.30} parent=0
    _
  %s6 = ssub.s32 1, %s4
  %s7 = scalar_select 0, %s6, %s4
  loop: start=0, step=1, limit=6
  $region2: #{t2t_vit_forward.30} parent=0 // loop_pre_header
    _
  $region3: #{t2t_vit_forward.30} parent=0 // loop_header
    %s9 = sphi 0, %s13
    %p10 = scmp.ge.s32.totalorder %s9, 6
    %s16 = sphi 0, %s35
    %s17 = sphi 0, %s31
    %s18 = sphi 0, %s27
    %s19 = sphi 0, %s16
    %s20 = sphi 0, %s17
    %s21 = sphi 0, %s18
    %s22 = sphi 0, %s19
    %s23 = sphi 0, %s20
    %s24 = sphi 0, %s21
    %s40 = sphi 0, %s42
    %s43 = sphi 0, %s40
    %s44 = sphi 0, %s43
    %s60 = sphi 0, %s44
    %s68 = sphi 0, %s70
    %s71 = sphi 0, %s68
    %s72 = sphi 0, %s71
    %s88 = sphi 0, %s72
    %s96 = sphi 0, %s98
    %s99 = sphi 0, %s96
    %s100 = sphi 0, %s99
    %s116 = sphi 0, %s100
    %s124 = sphi 0, %s126
    %s127 = sphi 0, %s124
    %s128 = sphi 0, %s127
    %s144 = sphi 0, %s128
  $region4: #{t2t_vit_forward.30} parent=0 // loop_header_branch
    %12 = sbr.rel (%p10) target = $region8
  $region5: #{t2t_vit_forward.30} parent=0 // loop_body
    %s14 = ssub.s32 %s9, 1
    %s15 = ssub.s32 %s9, 2
    %s25 = sadd.s32 1, %s18
    %p26 = scmp.ge.s32.totalorder %s25, 1
    %s27 = scalar_select %p26, 0, %s25
    %s28 = sadd.s32 1, %s17
    %s29 = scalar_select %p26, %s28, %s17
    %p30 = scmp.ge.s32.totalorder %s29, 1
    %s31 = scalar_select %p30, 0, %s29
    %s32 = sadd.s32 1, %s16
    %s33 = scalar_select %p30, %s32, %s16
    %p34 = scmp.ge.s32.totalorder %s33, 4
    %s35 = scalar_select %p34, 0, %s33
    %s36 = ssub.s32 %s16, %s35
    %s37 = ssub.s32 %s17, %s31
    %s38 = sor.u32 %s36, %s37
    %p39 = scmp.eq.s32.totalorder %s38, 0
    %s41 = sadd.s32 %s40, 1
    %s42 = scalar_select %p39, %s40, %s41
    %p45 = pneg %p39
    %p46 = scmp.eq.s32.totalorder %s9, 3
    %p47 = por %p45, %p46
    %p48 = scmp.ne.s32.totalorder %s40, %s43
    %p49 = scmp.eq.s32.totalorder %s9, 0
    %p50 = por %p48, %p49
    %p51 = scmp.ne.s32.totalorder %s40, %s43
    %p52 = scmp.eq.s32.totalorder %s14, 3
    %p53 = por %p51, %p52
    %p54 = scmp.ne.s32.totalorder %s43, %s44
    %p55 = scmp.eq.s32.totalorder %s14, 0
    %p56 = por %p54, %p55
    %p57 = scmp.ne.s32.totalorder %s43, %s44
    %p58 = scmp.eq.s32.totalorder %s15, 3
    %p59 = por %p57, %p58
    %p61 = scmp.ne.s32.totalorder %s44, %s60
    %p62 = scmp.eq.s32.totalorder %s15, 0
    %p63 = por %p61, %p62
    %s64 = ssub.s32 %s16, %s35
    %s65 = ssub.s32 %s18, %s27
    %s66 = sor.u32 %s64, %s65
    %p67 = scmp.eq.s32.totalorder %s66, 0
    %s69 = sadd.s32 %s68, 1
    %s70 = scalar_select %p67, %s68, %s69
    %p73 = pneg %p67
    %p74 = scmp.eq.s32.totalorder %s9, 3
    %p75 = por %p73, %p74
    %p76 = scmp.ne.s32.totalorder %s68, %s71
    %p77 = scmp.eq.s32.totalorder %s9, 0
    %p78 = por %p76, %p77
    %p79 = scmp.ne.s32.totalorder %s68, %s71
    %p80 = scmp.eq.s32.totalorder %s14, 3
    %p81 = por %p79, %p80
    %p82 = scmp.ne.s32.totalorder %s71, %s72
    %p83 = scmp.eq.s32.totalorder %s14, 0
    %p84 = por %p82, %p83
    %p85 = scmp.ne.s32.totalorder %s71, %s72
    %p86 = scmp.eq.s32.totalorder %s15, 3
    %p87 = por %p85, %p86
    %p89 = scmp.ne.s32.totalorder %s72, %s88
    %p90 = scmp.eq.s32.totalorder %s15, 0
    %p91 = por %p89, %p90
    %s92 = ssub.s32 %s16, %s35
    %s93 = ssub.s32 %s18, %s27
    %s94 = sor.u32 %s92, %s93
    %p95 = scmp.eq.s32.totalorder %s94, 0
    %s97 = sadd.s32 %s96, 1
    %s98 = scalar_select %p95, %s96, %s97
    %p101 = pneg %p95
    %p102 = scmp.eq.s32.totalorder %s9, 3
    %p103 = por %p101, %p102
    %p104 = scmp.ne.s32.totalorder %s96, %s99
    %p105 = scmp.eq.s32.totalorder %s9, 0
    %p106 = por %p104, %p105
    %p107 = scmp.ne.s32.totalorder %s96, %s99
    %p108 = scmp.eq.s32.totalorder %s14, 3
    %p109 = por %p107, %p108
    %p110 = scmp.ne.s32.totalorder %s99, %s100
    %p111 = scmp.eq.s32.totalorder %s14, 0
    %p112 = por %p110, %p111
    %p113 = scmp.ne.s32.totalorder %s99, %s100
    %p114 = scmp.eq.s32.totalorder %s15, 3
    %p115 = por %p113, %p114
    %p117 = scmp.ne.s32.totalorder %s100, %s116
    %p118 = scmp.eq.s32.totalorder %s15, 0
    %p119 = por %p117, %p118
    %s120 = ssub.s32 %s16, %s35
    %s121 = ssub.s32 %s17, %s31
    %s122 = sor.u32 %s120, %s121
    %p123 = scmp.eq.s32.totalorder %s122, 0
    %s125 = sadd.s32 %s124, 1
    %s126 = scalar_select %p123, %s124, %s125
    %p129 = pneg %p123
    %p130 = scmp.eq.s32.totalorder %s9, 3
    %p131 = por %p129, %p130
    %p132 = scmp.ne.s32.totalorder %s124, %s127
    %p133 = scmp.eq.s32.totalorder %s9, 0
    %p134 = por %p132, %p133
    %p135 = scmp.ne.s32.totalorder %s124, %s127
    %p136 = scmp.eq.s32.totalorder %s14, 3
    %p137 = por %p135, %p136
    %p138 = scmp.ne.s32.totalorder %s127, %s128
    %p139 = scmp.eq.s32.totalorder %s14, 0
    %p140 = por %p138, %p139
    %p141 = scmp.ne.s32.totalorder %s127, %s128
    %p142 = scmp.eq.s32.totalorder %s15, 3
    %p143 = por %p141, %p142
    %p145 = scmp.ne.s32.totalorder %s128, %s144
    %p146 = scmp.eq.s32.totalorder %s15, 0
    %p147 = por %p145, %p146
    %p148 = scmp.le.s32.totalorder 1, %s9
    %p149 = scmp.lt.s32.totalorder %s9, 5
    %p150 = pnand %p148, %p149
    %p151 = pneg %p150
    // Predicated region
    $region9: #{t2t_vit_forward.30} parent=5 // pred_check
      _
    $region10: #{t2t_vit_forward.30} parent=5 // pred_check_branch
      %153 = sbr.rel (%p150) target = $region12
    $region11: #{t2t_vit_forward.30} parent=5 // pred_region
      %s154 = ssub.s32 %s9, 1
    $region12: #{t2t_vit_forward.30} parent=5 // pred_fallthru
      _
    %p155 = scmp.lt.s32.totalorder %s9, 4
    // Predicated region
    $region13: #{t2t_vit_forward.30} parent=5 // pred_check
      %p156 = pneg %p155
    $region14: #{t2t_vit_forward.30} parent=5 // pred_check_branch
      %158 = sbr.rel (%p156) target = $region16
    $region15: #{t2t_vit_forward.30} parent=5 // pred_region
      // Predicated region
      $region17: #{t2t_vit_forward.30} parent=15 // pred_check
        %p159 = pneg %p50
      $region18: #{t2t_vit_forward.30} parent=15 // pred_check_branch
        %161 = sbr.rel (%p159) target = $region20
      $region19: #{t2t_vit_forward.30} parent=15 // pred_region
        %p162 = scmp.lt.s32.totalorder %s16, 3
        %s163 = scalar_select %p162, %s16, 3
        %p164 = scmp.lt.s32.totalorder %s17, 0
        %s165 = scalar_select %p164, %s17, 0
        %s166 = sadd.s32 %s165, %s163
        %s167 = smul.addr %s166, 4
        %s168 = scalar_lea.vmem %s0, %s167
      $region20: #{t2t_vit_forward.30} parent=15 // pred_fallthru
        _
      // Predicated region
      $region21: #{t2t_vit_forward.30} parent=15 // pred_check
        %p169 = pneg %p78
      $region22: #{t2t_vit_forward.30} parent=15 // pred_check_branch
        %171 = sbr.rel (%p169) target = $region24
      $region23: #{t2t_vit_forward.30} parent=15 // pred_region
        %p172 = scmp.lt.s32.totalorder %s16, 3
        %s173 = scalar_select %p172, %s16, 3
        %p174 = scmp.lt.s32.totalorder %s18, 0
        %s175 = scalar_select %p174, %s18, 0
        %s176 = sadd.s32 %s175, %s173
        %s177 = smul.addr %s176, 4
        %s178 = scalar_lea.vmem %s1, %s177
      $region24: #{t2t_vit_forward.30} parent=15 // pred_fallthru
        _
      // Predicated region
      $region25: #{t2t_vit_forward.30} parent=15 // pred_check
        %p179 = pneg %p106
      $region26: #{t2t_vit_forward.30} parent=15 // pred_check_branch
        %181 = sbr.rel (%p179) target = $region28
      $region27: #{t2t_vit_forward.30} parent=15 // pred_region
        %p182 = scmp.lt.s32.totalorder %s16, 3
        %s183 = scalar_select %p182, %s16, 3
        %p184 = scmp.lt.s32.totalorder %s18, 0
        %s185 = scalar_select %p184, %s18, 0
        %s186 = sadd.s32 %s185, %s183
        %s187 = smul.addr %s186, 4
        %s188 = scalar_lea.vmem %s2, %s187
      $region28: #{t2t_vit_forward.30} parent=15 // pred_fallthru
        _
    $region16: #{t2t_vit_forward.30} parent=5 // pred_fallthru
      _
    %p189 = scmp.le.s32.totalorder 1, %s9
    %p190 = scmp.lt.s32.totalorder %s9, 5
    %p191 = pnand %p189, %p190
    %p192 = pneg %p191
    // Predicated region
    $region29: #{t2t_vit_forward.30} parent=5 // pred_check
      _
    $region30: #{t2t_vit_forward.30} parent=5 // pred_check_branch
      %194 = sbr.rel (%p191) target = $region32
    $region31: #{t2t_vit_forward.30} parent=5 // pred_region
      %s195 = ssub.s32 %s9, 1
      %p196 = scmp.lt.s32.totalorder %s19, 3
      %s197 = scalar_select %p196, %s19, 3
      %p198 = scmp.lt.s32.totalorder %s20, 0
      %s199 = scalar_select %p198, %s20, 0
      %s200 = sadd.s32 %s199, %s197
      %s201 = smul.addr %s200, 4
      %s202 = scalar_lea.vmem %s0, %s201
      %p203 = pneg %p56
      %p204 = pneg %p53
      %p205 = scmp.lt.s32.totalorder %s19, 3
      %s206 = scalar_select %p205, %s19, 3
      %p207 = scmp.lt.s32.totalorder %s21, 0
      %s208 = scalar_select %p207, %s21, 0
      %s209 = sadd.s32 %s208, %s206
      %s210 = smul.addr %s209, 4
      %s211 = scalar_lea.vmem %s1, %s210
      %p212 = pneg %p84
      %p213 = pneg %p81
      %p214 = scmp.lt.s32.totalorder %s19, 3
      %s215 = scalar_select %p214, %s19, 3
      %p216 = scmp.lt.s32.totalorder %s21, 0
      %s217 = scalar_select %p216, %s21, 0
      %s218 = sadd.s32 %s217, %s215
      %s219 = smul.addr %s218, 4
      %s220 = scalar_lea.vmem %s2, %s219
      %p221 = pneg %p112
      %p222 = pneg %p109
      %p223 = pneg %p140
      %p224 = pneg %p137
      %p225 = scmp.lt.s32.totalorder %s19, 3
      %s226 = scalar_select %p225, %s19, 3
      %p227 = scmp.lt.s32.totalorder %s20, 0
      %s228 = scalar_select %p227, %s20, 0
      %s229 = sadd.s32 %s228, %s226
      %s230 = smul.addr %s229, 4
      %s231 = scalar_lea.vmem %s3, %s230
      %p232 = scmp.lt.s32.totalorder %s19, 3
      %s233 = scalar_select %p232, %s19, 3
      %p234 = scmp.lt.s32.totalorder %s20, 0
      %s235 = scalar_select %p234, %s20, 0
      %s236 = sadd.s32 %s235, %s233
      %s237 = smul.addr %s236, 4
      %s238 = scalar_lea.vmem %s0, %s237
      %p239 = scmp.lt.s32.totalorder %s19, 3
      %s240 = scalar_select %p239, %s19, 3
      %p241 = scmp.lt.s32.totalorder %s21, 0
      %s242 = scalar_select %p241, %s21, 0
      %s243 = sadd.s32 %s242, %s240
      %s244 = smul.addr %s243, 4
      %s245 = scalar_lea.vmem %s1, %s244
      %p246 = scmp.lt.s32.totalorder %s19, 3
      %s247 = scalar_select %p246, %s19, 3
      %p248 = scmp.lt.s32.totalorder %s21, 0
      %s249 = scalar_select %p248, %s21, 0
      %s250 = sadd.s32 %s249, %s247
      %s251 = smul.addr %s250, 4
      %s252 = scalar_lea.vmem %s2, %s251
      %p253 = scmp.lt.s32.totalorder %s19, 3
      %s254 = scalar_select %p253, %s19, 3
      %p255 = scmp.lt.s32.totalorder %s20, 0
      %s256 = scalar_select %p255, %s20, 0
      %s257 = sadd.s32 %s256, %s254
      %s258 = smul.addr %s257, 4
      %s259 = scalar_lea.vmem %s3, %s258
      %p261 = scmp.eq.s32.totalorder %s21, 0
      // Predicated region
      $region33: #{t2t_vit_forward.30} parent=31 // pred_check
        %p262 = pneg %p261
      $region34: #{t2t_vit_forward.30} parent=31 // pred_check_branch
        %264 = sbr.rel (%p262) target = $region36
      $region35: #{t2t_vit_forward.30} parent=31 // pred_region
        %vm265 = vcmask 3072
        %266 = vst.msk [vmem:[#allocation2] sm:$0xf] %vm265, -inf
        %267 = vst.msk [vmem:[#allocation3] sm:$0xf] %vm265, 0.0
        %vm268 = vcmask 125952
        %269 = vst.msk [vmem:[#allocation4] sm:$0xf] %vm268, 0.0
      $region36: #{t2t_vit_forward.30} parent=31 // pred_fallthru
        _
      %v270 = vld [vmem:[%s238] sm:$0xf]
      %v271 = vpack.c.bf16 %v270, %v270
      %v272 = vld [vmem:[%s245] sm:$0xf]
      %v273 = vpack.c.bf16 %v272, %v272
      %v274 = vld [vmem:[%s252] sm:$0xf]
      %v275 = vpack.c.bf16 %v274, %v274
      %vm276 = vcmask 130048
      %v278 = vsel %vm276, %v271, 0
      %v281 = vsel %vm276, %v273, 0
      %283 = vmatprep.subr.bf16.mxu0 0
      %284 = vmatpush1.bf16.xpose.msra.mxu0 %v281
      %285 = vmatprep.subr.bf16.mxu0 0
      %286 = vmatpush1.bf16.xpose.msra.mxu0 0
      %287 = vmatprep.subr.bf16.mxu0 0
      %288 = vmatpush1.bf16.xpose.msra.mxu0 0
      %289 = vmatprep.subr.bf16.mxu0 0
      %290 = vmatpush1.bf16.xpose.msra.mxu0 0
      %291 = vmatprep.subr.bf16.mxu0 0
      %292 = vmatpush1.bf16.xpose.msra.mxu0 0
      %293 = vmatprep.subr.bf16.mxu0 0
      %294 = vmatpush1.bf16.xpose.msra.mxu0 0
      %295 = vmatprep.subr.bf16.mxu0 0
      %296 = vmatpush1.bf16.xpose.msra.mxu0 0
      %297 = vmatprep.subr.bf16.mxu0 0
      %298 = vmatpush1.bf16.xpose.msra.mxu0 0
      %299 = vmatprep.subr.bf16.mxu0 0
      %300 = vmatpush1.bf16.xpose.msra.mxu0 0
      %301 = vmatprep.subr.bf16.mxu0 0
      %302 = vmatpush1.bf16.xpose.msra.mxu0 0
      %303 = vmatprep.subr.bf16.mxu0 0
      %304 = vmatpush1.bf16.xpose.msra.mxu0 0
      %305 = vmatprep.subr.bf16.mxu0 0
      %306 = vmatpush1.bf16.xpose.msra.mxu0 0
      %307 = vmatprep.subr.bf16.mxu0 0
      %308 = vmatpush1.bf16.xpose.msra.mxu0 0
      %309 = vmatprep.subr.bf16.mxu0 0
      %310 = vmatpush1.bf16.xpose.msra.mxu0 0
      %311 = vmatprep.subr.bf16.mxu0 0
      %312 = vmatpush1.bf16.xpose.msra.mxu0 0
      %313 = vmatprep.subr.bf16.mxu0 0
      %314 = vmatpush1.bf16.xpose.msra.mxu0 0
      %315 = vmatprep.mubr.bf16.mxu0 0
      %316 = vmatmul.mubr.bf16.gmra.mrb[0].mxu0 %v278
      %v317 = vpop.f32.mrb[0].mxu0
      %v318 = vadd.f32 0.0, %v317
      %v319 = vpop.f32.mrb[0].mxu0
      %v320 = vpop.f32.mrb[0].mxu0
      %v321 = vpop.f32.mrb[0].mxu0
      %322 = vdwg.mxu0
      %v323 = vmul.f32 %v318, 0.25
      %v324 = vld [vmem:[#allocation2] sm:$0xf]
      %vm325 = vcmask 27648
      %v326 = vsel %vm325, %v323, -inf
      %327 = vmax.xlane.f32.xlu0 %v326
      %v328 = vpop.xlane.xlu0 %327
      %v329 = vmax.f32 %v324, %v328
      %v330 = vsub.f32 %v324, %v329
      %v331 = vmul.f32 %v330, 1.442695
      %v332 = vpow.pop %v331
      %334 = vset.pattern.permute.xlu0 0
      %335 = vperm.xlu0 %334, %v329
      %v336 = vpop.permute.xlu0 %335
      %v338 = vsub.f32 %v323, %v336
      %v339 = vmul.f32 %v338, 1.442695
      %v340 = vpow.pop %v339
      %v341 = vld [vmem:[#allocation3] sm:$0xf]
      %v342 = vmul.f32 %v332, %v341
      %v343 = vsel %vm325, %v340, 0.0
      %344 = vadd.xlane.f32.xlu0 %v343
      %v345 = vpop.xlane.xlu0 %344
      %v346 = vadd.f32 %v342, %v345
      %vm347 = vcmask 3072
      %348 = vst.msk [vmem:[#allocation3] sm:$0xf] %vm347, %v346
      %v349 = vld [vmem:[#allocation4] sm:$0xf]
      %351 = vset.pattern.permute.xlu0 0
      %352 = vperm.xlu0 %351, %v332
      %v353 = vpop.permute.xlu0 %352
      %v355 = vmul.f32 %v353, %v349
      %v356 = vpack.c.bf16 %v340, %v340
      %vm357 = vcmask 31744
      %v359 = vsel %vm357, %v356, 0
      %vm361 = vcmask 1041408
      %v363 = vsel %vm361, %v275, 0
      %365 = vmatprep.subr.bf16.mxu0 0
      %366 = vmatpush1.bf16.msra.mxu0 %v363
      %367 = vmatprep.subr.bf16.mxu0 0
      %368 = vmatpush1.bf16.msra.mxu0 0
      %369 = vmatprep.subr.bf16.mxu0 0
      %370 = vmatpush1.bf16.msra.mxu0 0
      %371 = vmatprep.subr.bf16.mxu0 0
      %372 = vmatpush1.bf16.msra.mxu0 0
      %373 = vmatprep.subr.bf16.mxu0 0
      %374 = vmatpush1.bf16.msra.mxu0 0
      %375 = vmatprep.subr.bf16.mxu0 0
      %376 = vmatpush1.bf16.msra.mxu0 0
      %377 = vmatprep.subr.bf16.mxu0 0
      %378 = vmatpush1.bf16.msra.mxu0 0
      %379 = vmatprep.subr.bf16.mxu0 0
      %380 = vmatpush1.bf16.msra.mxu0 0
      %381 = vmatprep.subr.bf16.mxu0 0
      %382 = vmatpush1.bf16.msra.mxu0 0
      %383 = vmatprep.subr.bf16.mxu0 0
      %384 = vmatpush1.bf16.msra.mxu0 0
      %385 = vmatprep.subr.bf16.mxu0 0
      %386 = vmatpush1.bf16.msra.mxu0 0
      %387 = vmatprep.subr.bf16.mxu0 0
      %388 = vmatpush1.bf16.msra.mxu0 0
      %389 = vmatprep.subr.bf16.mxu0 0
      %390 = vmatpush1.bf16.msra.mxu0 0
      %391 = vmatprep.subr.bf16.mxu0 0
      %392 = vmatpush1.bf16.msra.mxu0 0
      %393 = vmatprep.subr.bf16.mxu0 0
      %394 = vmatpush1.bf16.msra.mxu0 0
      %395 = vmatprep.subr.bf16.mxu0 0
      %396 = vmatpush1.bf16.msra.mxu0 0
      %397 = vmatprep.mubr.bf16.mxu0 0
      %398 = vmatmul.mubr.bf16.gmra.mrb[0].mxu0 %v359
      %v399 = vpop.f32.mrb[0].mxu0
      %v400 = vadd.f32 0.0, %v399
      %v401 = vpop.f32.mrb[0].mxu0
      %v402 = vpop.f32.mrb[0].mxu0
      %v403 = vpop.f32.mrb[0].mxu0
      %404 = vdwg.mxu0
      %v405 = vadd.f32 %v355, %v400
      %vm406 = vcmask 125952
      %407 = vst.msk [vmem:[#allocation4] sm:$0xf] %vm406, %v405
      %408 = vst.msk [vmem:[#allocation2] sm:$0xf] %vm347, %v329
      // Predicated region
      $region37: #{t2t_vit_forward.30} parent=31 // pred_check
        %p409 = pneg %p261
      $region38: #{t2t_vit_forward.30} parent=31 // pred_check_branch
        %411 = sbr.rel (%p409) target = $region40
      $region39: #{t2t_vit_forward.30} parent=31 // pred_region
        %v412 = vld [vmem:[#allocation4] sm:$0xf]
        %v413 = vld [vmem:[#allocation3] sm:$0xf]
        %v414 = vrcp.pop %v413
        %416 = vset.pattern.permute.xlu0 0
        %417 = vperm.xlu0 %416, %v414
        %v418 = vpop.permute.xlu0 %417
        %v420 = vmul.f32 %v412, %v418
        %421 = vst.msk [vmem:[%s259] sm:$0xf] %vm406, %v420
      $region40: #{t2t_vit_forward.30} parent=31 // pred_fallthru
        _
      %p422 = scmp.lt.s32.totalorder %s19, 3
      %s423 = scalar_select %p422, %s19, 3
      %p424 = scmp.lt.s32.totalorder %s20, 0
      %s425 = scalar_select %p424, %s20, 0
      %s426 = sadd.s32 %s425, %s423
      %s427 = smul.addr %s426, 4
      %s428 = scalar_lea.vmem %s3, %s427
      // Predicated region
      $region41: #{t2t_vit_forward.30} parent=31 // pred_check
        %p429 = pneg %p137
      $region42: #{t2t_vit_forward.30} parent=31 // pred_check_branch
        %431 = sbr.rel (%p429) target = $region44
      $region43: #{t2t_vit_forward.30} parent=31 // pred_region
        _
      $region44: #{t2t_vit_forward.30} parent=31 // pred_fallthru
        _
    $region32: #{t2t_vit_forward.30} parent=5 // pred_fallthru
      _
    %p432 = scmp.le.s32.totalorder 2, %s9
    // Predicated region
    $region45: #{t2t_vit_forward.30} parent=5 // pred_check
      %p433 = pneg %p432
    $region46: #{t2t_vit_forward.30} parent=5 // pred_check_branch
      %435 = sbr.rel (%p433) target = $region48
    $region47: #{t2t_vit_forward.30} parent=5 // pred_region
      %s436 = ssub.s32 %s9, 2
      // Predicated region
      $region49: #{t2t_vit_forward.30} parent=47 // pred_check
        %p437 = pneg %p143
      $region50: #{t2t_vit_forward.30} parent=47 // pred_check_branch
        %439 = sbr.rel (%p437) target = $region52
      $region51: #{t2t_vit_forward.30} parent=47 // pred_region
        %p440 = scmp.lt.s32.totalorder %s22, 3
        %s441 = scalar_select %p440, %s22, 3
        %p442 = scmp.lt.s32.totalorder %s23, 0
        %s443 = scalar_select %p442, %s23, 0
        %s444 = sadd.s32 %s443, %s441
        %s445 = smul.addr %s444, 4
        %s446 = scalar_lea.vmem %s3, %s445
      $region52: #{t2t_vit_forward.30} parent=47 // pred_fallthru
        _
    $region48: #{t2t_vit_forward.30} parent=5 // pred_fallthru
      _
  $region6: #{t2t_vit_forward.30} parent=0 // loop_footer
    %s13 = sadd.s32 1, %s9
  $region7: #{t2t_vit_forward.30} parent=0 // loop_footer_branch
    %8 = sbr.rel target = $region3
  $region8: #{t2t_vit_forward.30} parent=0 // loop_exit
    _

// kernel: t2t_vit_forward.32
$region0: #{t2t_vit_forward.32}
  #allocation0 [shape = 'u32[]', space=smem, size = 0x4, offset = 0x4, fixed_abs, tag = 'smem constant byte address 0x4 - core index']
  #allocation1 [shape = 'u32[144,128]{1,0:T(1,128)}', space=vmem, size = 0x12000, scoped, tag = 'internal scratch']
  #allocation2 [shape = 'bf16[8,128]{1,0:T(8,128)(2,1)}', space=vmem, size = 0x800, scoped, tag = 'scratch operand']
  %s0 = inlined_call_operand.vmem [shape: f32[8,128], index: 0, kind: input, shape index: {}, may-alias: {0,7}]
  %s1 = inlined_call_operand.vmem [shape: f32[8,1], index: 1, kind: input, shape index: {}]
  %s2 = inlined_call_operand.vmem [shape: f32[8,1], index: 2, kind: input, shape index: {}]
  %s3 = inlined_call_operand.vmem [shape: f32[128,128], index: 3, kind: input, shape index: {}]
  %s4 = inlined_call_operand.vmem [shape: f32[1,128], index: 4, kind: input, shape index: {}]
  %s5 = inlined_call_operand.vmem [shape: f32[128,128], index: 5, kind: input, shape index: {}]
  %s6 = inlined_call_operand.vmem [shape: f32[1,128], index: 6, kind: input, shape index: {}]
  %s7 = inlined_call_operand.vmem [shape: f32[8,128], index: 7, kind: input, shape index: {}, may-alias: {0,7}]
  %s8 = inlined_call_operand.vmem [shape: f32[8,128], index: 8, kind: output, shape index: {}]
  %s9 = sld [smem:[#allocation0]]
  $region46: #{t2t_vit_forward.32} parent=0
    _
  %s11 = ssub.s32 1, %s9
  %s12 = scalar_select 0, %s11, %s9
  // Predicated region
  $region2: #{t2t_vit_forward.32} parent=0 // pred_check
    _
  $region3: #{t2t_vit_forward.32} parent=0 // pred_check_branch
    %14 = sbr.rel (0) target = $region5
  $region4: #{t2t_vit_forward.32} parent=0 // pred_region
    _
  $region5: #{t2t_vit_forward.32} parent=0 // pred_fallthru
    _
  // Predicated region
  $region6: #{t2t_vit_forward.32} parent=0 // pred_check
    _
  $region7: #{t2t_vit_forward.32} parent=0 // pred_check_branch
    %16 = sbr.rel (0) target = $region9
  $region8: #{t2t_vit_forward.32} parent=0 // pred_region
    _
  $region9: #{t2t_vit_forward.32} parent=0 // pred_fallthru
    _
  // Predicated region
  $region10: #{t2t_vit_forward.32} parent=0 // pred_check
    _
  $region11: #{t2t_vit_forward.32} parent=0 // pred_check_branch
    %18 = sbr.rel (0) target = $region13
  $region12: #{t2t_vit_forward.32} parent=0 // pred_region
    _
  $region13: #{t2t_vit_forward.32} parent=0 // pred_fallthru
    _
  // Predicated region
  $region14: #{t2t_vit_forward.32} parent=0 // pred_check
    _
  $region15: #{t2t_vit_forward.32} parent=0 // pred_check_branch
    %20 = sbr.rel (0) target = $region17
  $region16: #{t2t_vit_forward.32} parent=0 // pred_region
    _
  $region17: #{t2t_vit_forward.32} parent=0 // pred_fallthru
    _
  // Predicated region
  $region18: #{t2t_vit_forward.32} parent=0 // pred_check
    _
  $region19: #{t2t_vit_forward.32} parent=0 // pred_check_branch
    %22 = sbr.rel (0) target = $region21
  $region20: #{t2t_vit_forward.32} parent=0 // pred_region
    _
  $region21: #{t2t_vit_forward.32} parent=0 // pred_fallthru
    _
  // Predicated region
  $region22: #{t2t_vit_forward.32} parent=0 // pred_check
    _
  $region23: #{t2t_vit_forward.32} parent=0 // pred_check_branch
    %24 = sbr.rel (0) target = $region25
  $region24: #{t2t_vit_forward.32} parent=0 // pred_region
    _
  $region25: #{t2t_vit_forward.32} parent=0 // pred_fallthru
    _
  // Predicated region
  $region26: #{t2t_vit_forward.32} parent=0 // pred_check
    _
  $region27: #{t2t_vit_forward.32} parent=0 // pred_check_branch
    %26 = sbr.rel (0) target = $region29
  $region28: #{t2t_vit_forward.32} parent=0 // pred_region
    _
  $region29: #{t2t_vit_forward.32} parent=0 // pred_fallthru
    _
  // Predicated region
  $region30: #{t2t_vit_forward.32} parent=0 // pred_check
    _
  $region31: #{t2t_vit_forward.32} parent=0 // pred_check_branch
    %28 = sbr.rel (0) target = $region33
  $region32: #{t2t_vit_forward.32} parent=0 // pred_region
    _
  $region33: #{t2t_vit_forward.32} parent=0 // pred_fallthru
    _
  %p30 = scmp.eq.s32.totalorder 0, 0
  // Predicated region
  $region34: #{t2t_vit_forward.32} parent=0 // pred_check
    %p31 = pneg %p30
  $region35: #{t2t_vit_forward.32} parent=0 // pred_check_branch
    %33 = sbr.rel (%p31) target = $region37
  $region36: #{t2t_vit_forward.32} parent=0 // pred_region
    %v34 = vld [vmem:[%s0] sm:$0xff]
    %v35 = vld [vmem:[%s1] sm:$0xff]
    %37 = vset.pattern.permute.xlu0 0
    %38 = vperm.xlu0 %37, %v35
    %v39 = vpop.permute.xlu0 %38
    %v41 = vmul.f32 %v34, %v39
    %v42 = vld [vmem:[%s2] sm:$0xff]
    %44 = vset.pattern.permute.xlu0 0
    %45 = vperm.xlu0 %44, %v42
    %v46 = vpop.permute.xlu0 %45
    %v48 = vadd.f32 %v41, %v46
    %v49 = vpack.c.bf16 %v48, %v48
    %v50 = vld [vmem:[%s3] sm:$0xff]
    %v51 = vld [vmem:[%s3 + $0x8] sm:$0xff]
    %v52 = vld [vmem:[%s3 + $0x10] sm:$0xff]
    %v53 = vld [vmem:[%s3 + $0x18] sm:$0xff]
    %v54 = vld [vmem:[%s3 + $0x20] sm:$0xff]
    %v55 = vld [vmem:[%s3 + $0x28] sm:$0xff]
    %v56 = vld [vmem:[%s3 + $0x30] sm:$0xff]
    %v57 = vld [vmem:[%s3 + $0x38] sm:$0xff]
    %v58 = vld [vmem:[%s3 + $0x40] sm:$0xff]
    %v59 = vld [vmem:[%s3 + $0x48] sm:$0xff]
    %v60 = vld [vmem:[%s3 + $0x50] sm:$0xff]
    %v61 = vld [vmem:[%s3 + $0x58] sm:$0xff]
    %v62 = vld [vmem:[%s3 + $0x60] sm:$0xff]
    %v63 = vld [vmem:[%s3 + $0x68] sm:$0xff]
    %v64 = vld [vmem:[%s3 + $0x70] sm:$0xff]
    %v65 = vld [vmem:[%s3 + $0x78] sm:$0xff]
    %v66 = vpack.c.bf16 %v51, %v50
    %v67 = vpack.c.bf16 %v53, %v52
    %v68 = vpack.c.bf16 %v55, %v54
    %v69 = vpack.c.bf16 %v57, %v56
    %v70 = vpack.c.bf16 %v59, %v58
    %v71 = vpack.c.bf16 %v61, %v60
    %v72 = vpack.c.bf16 %v63, %v62
    %v73 = vpack.c.bf16 %v65, %v64
    %v74 = vld [vmem:[%s4] sm:$0x1]
    %v76 = vlaneseq
    %v77 = vshrl.u32 %v76, 7
    %v78 = vsub.s32 0, %v77
    %v79 = vrot.slane %v74, %v78
    %81 = vmatprep.subr.bf16.mxu0 0
    %82 = vmatpush1.bf16.msra.mxu0 %v66
    %83 = vmatprep.subr.bf16.mxu0 0
    %84 = vmatpush1.bf16.msra.mxu0 %v67
    %85 = vmatprep.subr.bf16.mxu0 0
    %86 = vmatpush1.bf16.msra.mxu0 %v68
    %87 = vmatprep.subr.bf16.mxu0 0
    %88 = vmatpush1.bf16.msra.mxu0 %v69
    %89 = vmatprep.subr.bf16.mxu0 0
    %90 = vmatpush1.bf16.msra.mxu0 %v70
    %91 = vmatprep.subr.bf16.mxu0 0
    %92 = vmatpush1.bf16.msra.mxu0 %v71
    %93 = vmatprep.subr.bf16.mxu0 0
    %94 = vmatpush1.bf16.msra.mxu0 %v72
    %95 = vmatprep.subr.bf16.mxu0 0
    %96 = vmatpush1.bf16.msra.mxu0 %v73
    %97 = vmatprep.subr.bf16.mxu0 0
    %98 = vmatpush1.bf16.msra.mxu0 0
    %99 = vmatprep.subr.bf16.mxu0 0
    %100 = vmatpush1.bf16.msra.mxu0 0
    %101 = vmatprep.subr.bf16.mxu0 0
    %102 = vmatpush1.bf16.msra.mxu0 0
    %103 = vmatprep.subr.bf16.mxu0 0
    %104 = vmatpush1.bf16.msra.mxu0 0
    %105 = vmatprep.subr.bf16.mxu0 0
    %106 = vmatpush1.bf16.msra.mxu0 0
    %107 = vmatprep.subr.bf16.mxu0 0
    %108 = vmatpush1.bf16.msra.mxu0 0
    %109 = vmatprep.subr.bf16.mxu0 0
    %110 = vmatpush1.bf16.msra.mxu0 0
    %111 = vmatprep.subr.bf16.mxu0 0
    %112 = vmatpush1.bf16.msra.mxu0 0
    %113 = vmatprep.mubr.bf16.mxu0 0
    %114 = vmatmul.mubr.bf16.gmra.mrb[0].mxu0 %v49
    %v115 = vpop.f32.mrb[0].mxu0
    %v116 = vadd.f32 %v79, %v115
    %v117 = vpop.f32.mrb[0].mxu0
    %v118 = vpop.f32.mrb[0].mxu0
    %v119 = vpop.f32.mrb[0].mxu0
    %120 = vdwg.mxu0
    %v121 = vmul.f32 %v116, 0.5
    %v122 = vmul.f32 %v116, 0.70710677
    %v123 = verf.f32.pop %v122
    %v124 = vadd.f32 %v123, 1.0
    %v125 = vmul.f32 %v121, %v124
    %v126 = vpack.c.bf16 %v125, %v125
    %127 = vst [vmem:[#allocation2] sm:$0xf] %v126
  $region37: #{t2t_vit_forward.32} parent=0 // pred_fallthru
    _
  %v128 = vld [vmem:[#allocation2] sm:$0xf]
  %v129 = vld [vmem:[%s5] sm:$0xff]
  %v130 = vld [vmem:[%s5 + $0x8] sm:$0xff]
  %v131 = vld [vmem:[%s5 + $0x10] sm:$0xff]
  %v132 = vld [vmem:[%s5 + $0x18] sm:$0xff]
  %v133 = vld [vmem:[%s5 + $0x20] sm:$0xff]
  %v134 = vld [vmem:[%s5 + $0x28] sm:$0xff]
  %v135 = vld [vmem:[%s5 + $0x30] sm:$0xff]
  %v136 = vld [vmem:[%s5 + $0x38] sm:$0xff]
  %v137 = vld [vmem:[%s5 + $0x40] sm:$0xff]
  %v138 = vld [vmem:[%s5 + $0x48] sm:$0xff]
  %v139 = vld [vmem:[%s5 + $0x50] sm:$0xff]
  %v140 = vld [vmem:[%s5 + $0x58] sm:$0xff]
  %v141 = vld [vmem:[%s5 + $0x60] sm:$0xff]
  %v142 = vld [vmem:[%s5 + $0x68] sm:$0xff]
  %v143 = vld [vmem:[%s5 + $0x70] sm:$0xff]
  %v144 = vld [vmem:[%s5 + $0x78] sm:$0xff]
  %v145 = vpack.c.bf16 %v130, %v129
  %v146 = vpack.c.bf16 %v132, %v131
  %v147 = vpack.c.bf16 %v134, %v133
  %v148 = vpack.c.bf16 %v136, %v135
  %v149 = vpack.c.bf16 %v138, %v137
  %v150 = vpack.c.bf16 %v140, %v139
  %v151 = vpack.c.bf16 %v142, %v141
  %v152 = vpack.c.bf16 %v144, %v143
  %v153 = vld [vmem:[%s6] sm:$0x1]
  %v155 = vlaneseq
  %v156 = vshrl.u32 %v155, 7
  %v157 = vsub.s32 0, %v156
  %v158 = vrot.slane %v153, %v157
  %160 = vmatprep.subr.bf16.mxu0 0
  %161 = vmatpush1.bf16.msra.mxu0 %v145
  %162 = vmatprep.subr.bf16.mxu0 0
  %163 = vmatpush1.bf16.msra.mxu0 %v146
  %164 = vmatprep.subr.bf16.mxu0 0
  %165 = vmatpush1.bf16.msra.mxu0 %v147
  %166 = vmatprep.subr.bf16.mxu0 0
  %167 = vmatpush1.bf16.msra.mxu0 %v148
  %168 = vmatprep.subr.bf16.mxu0 0
  %169 = vmatpush1.bf16.msra.mxu0 %v149
  %170 = vmatprep.subr.bf16.mxu0 0
  %171 = vmatpush1.bf16.msra.mxu0 %v150
  %172 = vmatprep.subr.bf16.mxu0 0
  %173 = vmatpush1.bf16.msra.mxu0 %v151
  %174 = vmatprep.subr.bf16.mxu0 0
  %175 = vmatpush1.bf16.msra.mxu0 %v152
  %176 = vmatprep.subr.bf16.mxu0 0
  %177 = vmatpush1.bf16.msra.mxu0 0
  %178 = vmatprep.subr.bf16.mxu0 0
  %179 = vmatpush1.bf16.msra.mxu0 0
  %180 = vmatprep.subr.bf16.mxu0 0
  %181 = vmatpush1.bf16.msra.mxu0 0
  %182 = vmatprep.subr.bf16.mxu0 0
  %183 = vmatpush1.bf16.msra.mxu0 0
  %184 = vmatprep.subr.bf16.mxu0 0
  %185 = vmatpush1.bf16.msra.mxu0 0
  %186 = vmatprep.subr.bf16.mxu0 0
  %187 = vmatpush1.bf16.msra.mxu0 0
  %188 = vmatprep.subr.bf16.mxu0 0
  %189 = vmatpush1.bf16.msra.mxu0 0
  %190 = vmatprep.subr.bf16.mxu0 0
  %191 = vmatpush1.bf16.msra.mxu0 0
  %192 = vmatprep.mubr.bf16.mxu0 0
  %193 = vmatmul.mubr.bf16.gmra.mrb[0].mxu0 %v128
  %v194 = vpop.f32.mrb[0].mxu0
  %v195 = vadd.f32 %v158, %v194
  %v196 = vpop.f32.mrb[0].mxu0
  %v197 = vpop.f32.mrb[0].mxu0
  %v198 = vpop.f32.mrb[0].mxu0
  %199 = vdwg.mxu0
  %v200 = vld [vmem:[%s7] sm:$0xff]
  %v201 = vadd.f32 %v195, %v200
  %202 = vst [vmem:[%s8] sm:$0xff] %v201
  // Predicated region
  $region38: #{t2t_vit_forward.32} parent=0 // pred_check
    _
  $region39: #{t2t_vit_forward.32} parent=0 // pred_check_branch
    %204 = sbr.rel (0) target = $region41
  $region40: #{t2t_vit_forward.32} parent=0 // pred_region
    _
  $region41: #{t2t_vit_forward.32} parent=0 // pred_fallthru
    _
  // Predicated region
  $region42: #{t2t_vit_forward.32} parent=0 // pred_check
    _
  $region43: #{t2t_vit_forward.32} parent=0 // pred_check_branch
    %206 = sbr.rel (0) target = $region45
  $region44: #{t2t_vit_forward.32} parent=0 // pred_region
    _
  $region45: #{t2t_vit_forward.32} parent=0 // pred_fallthru
    _

// kernel: t2t_vit_forward.37
$region0: #{t2t_vit_forward.37}
  #allocation0 [shape = 'u32[]', space=smem, size = 0x4, offset = 0x4, fixed_abs, tag = 'smem constant byte address 0x4 - core index']
  #allocation1 [shape = 'u32[144,128]{1,0:T(1,128)}', space=vmem, size = 0x12000, scoped, tag = 'internal scratch']
  #allocation2 [shape = 'f32[8,128]{1,0:T(8,128)}', space=vmem, size = 0x1000, scoped, tag = 'scratch operand']
  %s0 = inlined_call_operand.vmem [shape: f32[8,128], index: 0, kind: input, shape index: {}]
  %s1 = inlined_call_operand.vmem [shape: f32[128,128], index: 1, kind: input, shape index: {}]
  %s2 = inlined_call_operand.vmem [shape: f32[1,128], index: 2, kind: input, shape index: {}]
  %s3 = inlined_call_operand.vmem [shape: f32[1,128], index: 3, kind: input, shape index: {}]
  %s4 = inlined_call_operand.vmem [shape: f32[1,128], index: 4, kind: input, shape index: {}]
  %s5 = inlined_call_operand.vmem [shape: f32[8,128], index: 5, kind: output, shape index: {}]
  %s6 = sld [smem:[#allocation0]]
  $region38: #{t2t_vit_forward.37} parent=0
    _
  %s8 = ssub.s32 1, %s6
  %s9 = scalar_select 0, %s8, %s6
  // Predicated region
  $region2: #{t2t_vit_forward.37} parent=0 // pred_check
    _
  $region3: #{t2t_vit_forward.37} parent=0 // pred_check_branch
    %11 = sbr.rel (0) target = $region5
  $region4: #{t2t_vit_forward.37} parent=0 // pred_region
    _
  $region5: #{t2t_vit_forward.37} parent=0 // pred_fallthru
    _
  // Predicated region
  $region6: #{t2t_vit_forward.37} parent=0 // pred_check
    _
  $region7: #{t2t_vit_forward.37} parent=0 // pred_check_branch
    %13 = sbr.rel (0) target = $region9
  $region8: #{t2t_vit_forward.37} parent=0 // pred_region
    _
  $region9: #{t2t_vit_forward.37} parent=0 // pred_fallthru
    _
  // Predicated region
  $region10: #{t2t_vit_forward.37} parent=0 // pred_check
    _
  $region11: #{t2t_vit_forward.37} parent=0 // pred_check_branch
    %15 = sbr.rel (0) target = $region13
  $region12: #{t2t_vit_forward.37} parent=0 // pred_region
    _
  $region13: #{t2t_vit_forward.37} parent=0 // pred_fallthru
    _
  // Predicated region
  $region14: #{t2t_vit_forward.37} parent=0 // pred_check
    _
  $region15: #{t2t_vit_forward.37} parent=0 // pred_check_branch
    %17 = sbr.rel (0) target = $region17
  $region16: #{t2t_vit_forward.37} parent=0 // pred_region
    _
  $region17: #{t2t_vit_forward.37} parent=0 // pred_fallthru
    _
  // Predicated region
  $region18: #{t2t_vit_forward.37} parent=0 // pred_check
    _
  $region19: #{t2t_vit_forward.37} parent=0 // pred_check_branch
    %19 = sbr.rel (0) target = $region21
  $region20: #{t2t_vit_forward.37} parent=0 // pred_region
    _
  $region21: #{t2t_vit_forward.37} parent=0 // pred_fallthru
    _
  %p21 = scmp.eq.s32.totalorder 0, 0
  // Predicated region
  $region22: #{t2t_vit_forward.37} parent=0 // pred_check
    %p22 = pneg %p21
  $region23: #{t2t_vit_forward.37} parent=0 // pred_check_branch
    %24 = sbr.rel (%p22) target = $region25
  $region24: #{t2t_vit_forward.37} parent=0 // pred_region
    %25 = vst [vmem:[#allocation2] sm:$0xff] 0.0
  $region25: #{t2t_vit_forward.37} parent=0 // pred_fallthru
    _
  %v26 = vld [vmem:[%s0] sm:$0xff]
  %v27 = vld [vmem:[%s3] sm:$0x1]
  %v29 = vlaneseq
  %v30 = vshrl.u32 %v29, 7
  %v31 = vsub.s32 0, %v30
  %v32 = vrot.slane %v27, %v31
  %v34 = vmul.f32 %v26, %v32
  %v35 = vld [vmem:[%s4] sm:$0x1]
  %v37 = vlaneseq
  %v38 = vshrl.u32 %v37, 7
  %v39 = vsub.s32 0, %v38
  %v40 = vrot.slane %v35, %v39
  %v42 = vadd.f32 %v34, %v40
  %v43 = vld [vmem:[#allocation2] sm:$0xff]
  %v44 = vpack.c.bf16 %v42, %v42
  %v45 = vld [vmem:[%s1] sm:$0xff]
  %v46 = vld [vmem:[%s1 + $0x8] sm:$0xff]
  %v47 = vld [vmem:[%s1 + $0x10] sm:$0xff]
  %v48 = vld [vmem:[%s1 + $0x18] sm:$0xff]
  %v49 = vld [vmem:[%s1 + $0x20] sm:$0xff]
  %v50 = vld [vmem:[%s1 + $0x28] sm:$0xff]
  %v51 = vld [vmem:[%s1 + $0x30] sm:$0xff]
  %v52 = vld [vmem:[%s1 + $0x38] sm:$0xff]
  %v53 = vld [vmem:[%s1 + $0x40] sm:$0xff]
  %v54 = vld [vmem:[%s1 + $0x48] sm:$0xff]
  %v55 = vld [vmem:[%s1 + $0x50] sm:$0xff]
  %v56 = vld [vmem:[%s1 + $0x58] sm:$0xff]
  %v57 = vld [vmem:[%s1 + $0x60] sm:$0xff]
  %v58 = vld [vmem:[%s1 + $0x68] sm:$0xff]
  %v59 = vld [vmem:[%s1 + $0x70] sm:$0xff]
  %v60 = vld [vmem:[%s1 + $0x78] sm:$0xff]
  %v61 = vpack.c.bf16 %v46, %v45
  %v62 = vpack.c.bf16 %v48, %v47
  %v63 = vpack.c.bf16 %v50, %v49
  %v64 = vpack.c.bf16 %v52, %v51
  %v65 = vpack.c.bf16 %v54, %v53
  %v66 = vpack.c.bf16 %v56, %v55
  %v67 = vpack.c.bf16 %v58, %v57
  %v68 = vpack.c.bf16 %v60, %v59
  %69 = vmatprep.subr.bf16.mxu0 0
  %70 = vmatpush1.bf16.msra.mxu0 %v61
  %71 = vmatprep.subr.bf16.mxu0 0
  %72 = vmatpush1.bf16.msra.mxu0 %v62
  %73 = vmatprep.subr.bf16.mxu0 0
  %74 = vmatpush1.bf16.msra.mxu0 %v63
  %75 = vmatprep.subr.bf16.mxu0 0
  %76 = vmatpush1.bf16.msra.mxu0 %v64
  %77 = vmatprep.subr.bf16.mxu0 0
  %78 = vmatpush1.bf16.msra.mxu0 %v65
  %79 = vmatprep.subr.bf16.mxu0 0
  %80 = vmatpush1.bf16.msra.mxu0 %v66
  %81 = vmatprep.subr.bf16.mxu0 0
  %82 = vmatpush1.bf16.msra.mxu0 %v67
  %83 = vmatprep.subr.bf16.mxu0 0
  %84 = vmatpush1.bf16.msra.mxu0 %v68
  %85 = vmatprep.subr.bf16.mxu0 0
  %86 = vmatpush1.bf16.msra.mxu0 0
  %87 = vmatprep.subr.bf16.mxu0 0
  %88 = vmatpush1.bf16.msra.mxu0 0
  %89 = vmatprep.subr.bf16.mxu0 0
  %90 = vmatpush1.bf16.msra.mxu0 0
  %91 = vmatprep.subr.bf16.mxu0 0
  %92 = vmatpush1.bf16.msra.mxu0 0
  %93 = vmatprep.subr.bf16.mxu0 0
  %94 = vmatpush1.bf16.msra.mxu0 0
  %95 = vmatprep.subr.bf16.mxu0 0
  %96 = vmatpush1.bf16.msra.mxu0 0
  %97 = vmatprep.subr.bf16.mxu0 0
  %98 = vmatpush1.bf16.msra.mxu0 0
  %99 = vmatprep.subr.bf16.mxu0 0
  %100 = vmatpush1.bf16.msra.mxu0 0
  %101 = vmatprep.mubr.bf16.mxu0 0
  %102 = vmatmul.mubr.bf16.gmra.mrb[0].mxu0 %v44
  %v103 = vpop.f32.mrb[0].mxu0
  %v104 = vadd.f32 0.0, %v103
  %v105 = vpop.f32.mrb[0].mxu0
  %v106 = vpop.f32.mrb[0].mxu0
  %v107 = vpop.f32.mrb[0].mxu0
  %108 = vdwg.mxu0
  %v109 = vadd.f32 %v43, %v104
  %110 = vst [vmem:[#allocation2] sm:$0xff] %v109
  // Predicated region
  $region26: #{t2t_vit_forward.37} parent=0 // pred_check
    %p111 = pneg %p21
  $region27: #{t2t_vit_forward.37} parent=0 // pred_check_branch
    %113 = sbr.rel (%p111) target = $region29
  $region28: #{t2t_vit_forward.37} parent=0 // pred_region
    %v114 = vld [vmem:[#allocation2] sm:$0xff]
    %v115 = vld [vmem:[%s2] sm:$0x1]
    %v117 = vlaneseq
    %v118 = vshrl.u32 %v117, 7
    %v119 = vsub.s32 0, %v118
    %v120 = vrot.slane %v115, %v119
    %v122 = vadd.f32 %v114, %v120
    %123 = vst [vmem:[%s5] sm:$0xff] %v122
  $region29: #{t2t_vit_forward.37} parent=0 // pred_fallthru
    _
  // Predicated region
  $region30: #{t2t_vit_forward.37} parent=0 // pred_check
    _
  $region31: #{t2t_vit_forward.37} parent=0 // pred_check_branch
    %125 = sbr.rel (0) target = $region33
  $region32: #{t2t_vit_forward.37} parent=0 // pred_region
    _
  $region33: #{t2t_vit_forward.37} parent=0 // pred_fallthru
    _
  // Predicated region
  $region34: #{t2t_vit_forward.37} parent=0 // pred_check
    _
  $region35: #{t2t_vit_forward.37} parent=0 // pred_check_branch
    %127 = sbr.rel (0) target = $region37
  $region36: #{t2t_vit_forward.37} parent=0 // pred_region
    _
  $region37: #{t2t_vit_forward.37} parent=0 // pred_fallthru
    _

// kernel: t2t_vit_forward.39
$region0: #{t2t_vit_forward.39}
  #allocation0 [shape = 'u32[]', space=smem, size = 0x4, offset = 0x4, fixed_abs, tag = 'smem constant byte address 0x4 - core index']
  #allocation1 [shape = 'u32[144,128]{1,0:T(1,128)}', space=vmem, size = 0x12000, scoped, tag = 'internal scratch']
  %s0 = inlined_call_operand.vmem [shape: f32[2,10], index: 0, kind: input, shape index: {}]
  %s1 = inlined_call_operand.vmem [shape: f32[1,10], index: 1, kind: input, shape index: {}]
  %s2 = inlined_call_operand.vmem [shape: f32[1,10], index: 2, kind: input, shape index: {}]
  %s3 = inlined_call_operand.hbm [shape: f32[2,10], index: 3, kind: output, shape index: {}]
  %s4 = sld [smem:[#allocation0]]
  $region22: #{t2t_vit_forward.39} parent=0
    _
  %s6 = ssub.s32 1, %s4
  %s7 = scalar_select 0, %s6, %s4
  $region1: #{t2t_vit_forward.39} parent=0
    #allocation2 [shape = 'u8[1024]{0}', space=vmem, size = 0x400, scoped, tag = 'output window, operand 0, single buffered']
    #allocation3 [shape = 's32[1]{0}', space=sflag, size = 0x4, scoped, tag = 'scoped memory for t2t_vit_forward.39']
    %8 = vsyncpa [#allocation3], 0
    // Predicated region
    $region2: #{t2t_vit_forward.39} parent=1 // pred_check
      _
    $region3: #{t2t_vit_forward.39} parent=1 // pred_check_branch
      %10 = sbr.rel (0) target = $region5
    $region4: #{t2t_vit_forward.39} parent=1 // pred_region
      _
    $region5: #{t2t_vit_forward.39} parent=1 // pred_fallthru
      _
    // Predicated region
    $region6: #{t2t_vit_forward.39} parent=1 // pred_check
      _
    $region7: #{t2t_vit_forward.39} parent=1 // pred_check_branch
      %12 = sbr.rel (0) target = $region9
    $region8: #{t2t_vit_forward.39} parent=1 // pred_region
      _
    $region9: #{t2t_vit_forward.39} parent=1 // pred_fallthru
      _
    // Predicated region
    $region10: #{t2t_vit_forward.39} parent=1 // pred_check
      _
    $region11: #{t2t_vit_forward.39} parent=1 // pred_check_branch
      %14 = sbr.rel (0) target = $region13
    $region12: #{t2t_vit_forward.39} parent=1 // pred_region
      _
    $region13: #{t2t_vit_forward.39} parent=1 // pred_fallthru
      _
    %v15 = vld [vmem:[%s0] sm:$0x3]
    %v16 = vld [vmem:[%s1] sm:$0x1]
    %v18 = vlaneseq
    %v19 = vshrl.u32 %v18, 7
    %v20 = vsub.s32 0, %v19
    %v21 = vrot.slane %v16, %v20
    %v23 = vmul.f32 %v15, %v21
    %v24 = vld [vmem:[%s2] sm:$0x1]
    %v26 = vlaneseq
    %v27 = vshrl.u32 %v26, 7
    %v28 = vsub.s32 0, %v27
    %v29 = vrot.slane %v24, %v28
    %v31 = vadd.f32 %v23, %v29
    %vm32 = vcmask 74752
    %33 = vst.msk [vmem:[#allocation2] sm:$0x3] %vm32, %v31
    // Predicated region
    $region14: #{t2t_vit_forward.39} parent=1 // pred_check
      _
    $region15: #{t2t_vit_forward.39} parent=1 // pred_check_branch
      %35 = sbr.rel (0) target = $region17
    $region16: #{t2t_vit_forward.39} parent=1 // pred_region
      %s37 = ssub.s32 32, 32
      %38 = vsyncadd [#allocation3], %s37
      %s40 = sshll.u32 [#allocation2], 4
      %s41 = int_to_ptr.vmem [resolvable:$true] %s40
      %43 = dma.vmem_to_hbm [thread:$0]  %s41, 32, %s3, [#allocation3]
    $region17: #{t2t_vit_forward.39} parent=1 // pred_fallthru
      _
    // Predicated region
    $region18: #{t2t_vit_forward.39} parent=1 // pred_check
      _
    $region19: #{t2t_vit_forward.39} parent=1 // pred_check_branch
      %45 = sbr.rel (0) target = $region21
    $region20: #{t2t_vit_forward.39} parent=1 // pred_region
      %46 = dma.done [#allocation3], 32
    $region21: #{t2t_vit_forward.39} parent=1 // pred_fallthru
      _
    %47 = vsyncpa [#allocation3], 1

</llo_original>
